<compile_context>
chip_gen: v7x
topology: tpu7x:2x2x1
jax: 0.10.0
libtpu: 0.0.40
codegen_flags: <defaults>
</compile_context>

<pallas_src>
import numpy as np

import jax
import jax.numpy as jnp
from jax.experimental import pallas as pl
from jax.experimental.pallas import tpu as pltpu

C = 4            # conv channels (self.c)
LATENT = 2       # latent_dims
LATENT_PAD = 8   # padded latent width used inside the kernel
IMG = 28         # MNIST-like spatial size implied by fc(4*7*7)
B_TILE = 4       # images per grid step (concatenated along lanes)
WPAD = 32        # per-image lane width for kernel input/output (28 padded)


# ----------------------------------------------------------------------------
# Parameter init (PyTorch layouts / shapes, deterministic)
# ----------------------------------------------------------------------------
def init_params(key, c=C, latent_dims=LATENT):
    ks = jax.random.split(key, 20)
    s = 0.1

    def w(k, shape):
        return s * jax.random.normal(k, shape, dtype=jnp.float32)

    return {
        "conv1_w": w(ks[0], (c, 1, 3, 3)), "conv1_b": w(ks[1], (c,)),
        "conv2_w": w(ks[2], (c, c, 3, 3)), "conv2_b": w(ks[3], (c,)),
        "conv3_w": w(ks[4], (c, c, 3, 3)), "conv3_b": w(ks[5], (c,)),
        "conv4_w": w(ks[6], (c, c, 3, 3)), "conv4_b": w(ks[7], (c,)),
        "fc_w": w(ks[8], (latent_dims, c * 7 * 7)), "fc_b": w(ks[9], (latent_dims,)),
        "fc_dec_w": w(ks[10], (c * 7 * 7, latent_dims)), "fc_dec_b": w(ks[11], (c * 7 * 7,)),
        # ConvTranspose2d weights: (in_c, out_c, kh, kw)
        "t5_w": w(ks[12], (c, c, 3, 3)), "t5_b": w(ks[13], (c,)),
        "t6_w": w(ks[14], (c, c, 3, 3)), "t6_b": w(ks[15], (c,)),
        "t7_w": w(ks[16], (c, c, 3, 3)), "t7_b": w(ks[17], (c,)),
        # trans_conv8 is a plain Conv2d(4 -> 1, k=3, stride=2, padding=4)
        "t8_w": w(ks[18], (1, c, 3, 3)), "t8_b": w(ks[19], (1,)),
    }


# ----------------------------------------------------------------------------
# Host-side weight preparation: fold every layer into (A_taps, C_taps, bias)
# so the kernel only does   Y = act(sum_j A[j] @ X @ C[j] + bias)
# with X laid out as (C_in*H, W)   [rows = channel-major spatial rows,
#                                   lanes = spatial columns].
# ----------------------------------------------------------------------------
def _conv_factors(w, b, h_in, w_in, stride, padding):
    """nn.Conv2d.  w: (C_out, C_in, KH, KW)."""
    w = np.asarray(w, np.float32)
    b = np.asarray(b, np.float32)
    c_out, c_in, kh, kw = w.shape
    oh = (h_in + 2 * padding - kh) // stride + 1
    ow = (w_in + 2 * padding - kw) // stride + 1
    A = np.zeros((kw, c_out * oh, c_in * h_in), np.float32)
    for dj in range(kw):
        for co in range(c_out):
            for ci in range(c_in):
                for di in range(kh):
                    for o in range(oh):
                        h = stride * o + di - padding
                        if 0 <= h < h_in:
                            A[dj, co * oh + o, ci * h_in + h] += w[co, ci, di, dj]
    Cm = np.zeros((kw, w_in, ow), np.float32)
    for dj in range(kw):
        for o in range(ow):
            wi = stride * o + dj - padding
            if 0 <= wi < w_in:
                Cm[dj, wi, o] = 1.0
    bias = np.repeat(b, oh).reshape(c_out * oh, 1).astype(np.float32)
    return A, Cm, bias, oh, ow


def _convT_factors(w, b, h_in, w_in, stride, padding):
    """nn.ConvTranspose2d (output_padding=0).  w: (C_in, C_out, KH, KW)."""
    w = np.asarray(w, np.float32)
    b = np.asarray(b, np.float32)
    c_in, c_out, kh, kw = w.shape
    oh = (h_in - 1) * stride - 2 * padding + kh
    ow = (w_in - 1) * stride - 2 * padding + kw
    A = np.zeros((kw, c_out * oh, c_in * h_in), np.float32)
    for j in range(kw):
        for co in range(c_out):
            for ci in range(c_in):
                for i in range(kh):
                    for ih in range(h_in):
                        o = ih * stride - padding + i
                        if 0 <= o < oh:
                            A[j, co * oh + o, ci * h_in + ih] += w[ci, co, i, j]
    Cm = np.zeros((kw, w_in, ow), np.float32)
    for j in range(kw):
        for iw in range(w_in):
            o = iw * stride - padding + j
            if 0 <= o < ow:
                Cm[j, iw, o] = 1.0
    bias = np.repeat(b, oh).reshape(c_out * oh, 1).astype(np.float32)
    return A, Cm, bias, oh, ow


def _fc_factors(w, b, c, h, ww, pad_to=LATENT_PAD):
    """fc: (L, C*H*W) on the NCHW-flattened input.  Per-image result is
    (pad_to, pad_to) with the real latent at [:L, 0] and zeros elsewhere."""
    w = np.asarray(w, np.float32)
    b = np.asarray(b, np.float32)
    L = w.shape[0]
    A = np.zeros((ww, pad_to, c * h), np.float32)
    for iw in range(ww):
        for l in range(L):
            for ci in range(c):
                for hh in range(h):
                    A[iw, l, ci * h + hh] = w[l, ci * h * ww + hh * ww + iw]
    Cm = np.zeros((ww, ww, pad_to), np.float32)
    for iw in range(ww):
        Cm[iw, iw, 0] = 1.0
    bias = np.zeros((pad_to, pad_to), np.float32)
    bias[:L, 0] = b
    return A, Cm, bias


def _fc_dec_factors(w, b, c, h, ww, pad_in=LATENT_PAD):
    """fc_dec: (C*H*W, L); produces the decoder input already in (C*H, W)."""
    w = np.asarray(w, np.float32)
    b = np.asarray(b, np.float32)
    L = w.shape[1]
    A = np.zeros((ww, c * h, pad_in), np.float32)
    for o in range(ww):
        for ci in range(c):
            for hh in range(h):
                for l in range(L):
                    A[o, ci * h + hh, l] = w[ci * h * ww + hh * ww + o, l]
    Cm = np.zeros((ww, pad_in, ww), np.float32)
    for o in range(ww):
        Cm[o, 0, o] = 1.0
    bias = np.zeros((c * h, ww), np.float32)
    for ci in range(c):
        for hh in range(h):
            for o in range(ww):
                bias[ci * h + hh, o] = b[ci * h * ww + hh * ww + o]
    return A, Cm, bias


def prepare_params(params, b_tile=B_TILE):
    """One-time host-side packing.  C factors are made block-diagonal across
    the B_TILE images that share a grid step (images are concatenated along
    the lane axis); lane-varying biases are tiled accordingly."""
    layers = []
    a, cm, b, h, wd = _conv_factors(params["conv1_w"], params["conv1_b"], IMG, IMG, 2, 1)
    cm = np.pad(cm, ((0, 0), (0, WPAD - IMG), (0, 0)))      # input lanes padded 28->32
    layers.append((a, cm, b))
    a, cm, b, h, wd = _conv_factors(params["conv2_w"], params["conv2_b"], h, wd, 2, 1)
    layers.append((a, cm, b))
    a, cm, b, h, wd = _conv_factors(params["conv3_w"], params["conv3_b"], h, wd, 1, 1)
    layers.append((a, cm, b))
    a, cm, b, h, wd = _conv_factors(params["conv4_w"], params["conv4_b"], h, wd, 1, 1)
    layers.append((a, cm, b))
    layers.append(_fc_factors(params["fc_w"], params["fc_b"], C, 7, 7))
    layers.append(_fc_dec_factors(params["fc_dec_w"], params["fc_dec_b"], C, 7, 7))
    a, cm, b, h, wd = _convT_factors(params["t5_w"], params["t5_b"], 7, 7, 2, 1)
    layers.append((a, cm, b))
    a, cm, b, h, wd = _convT_factors(params["t6_w"], params["t6_b"], h, wd, 2, 1)
    layers.append((a, cm, b))
    a, cm, b, h, wd = _convT_factors(params["t7_w"], params["t7_b"], h, wd, 2, 1)
    layers.append((a, cm, b))
    a, cm, b, h, wd = _conv_factors(params["t8_w"], params["t8_b"], h, wd, 2, 4)
    cm = np.pad(cm, ((0, 0), (0, 0), (0, WPAD - wd)))        # output lanes padded 28->32
    layers.append((a, cm, b))

    eye = np.eye(b_tile, dtype=np.float32)
    flat = []
    for a, cm, bias in layers:
        cblk = np.stack([np.kron(eye, cm[j]) for j in range(cm.shape[0])])
        if bias.shape[1] > 1:                                 # lane-varying bias (fc layers)
            bias = np.tile(bias, (1, b_tile))
        flat += [jnp.asarray(a), jnp.asarray(cblk), jnp.asarray(bias)]
    return tuple(flat)


# ----------------------------------------------------------------------------
# Fused Pallas kernel: the entire forward pass for B_TILE batch elements.
# ----------------------------------------------------------------------------
_RELU_FLAGS = (True, True, True, True,   # conv1..conv4
               False, False,             # fc, fc_dec (no activation in between)
               True, True, True,         # trans_conv5..7
               False)                    # trans_conv8 (plain conv, no act)


def _fused_autoencoder_kernel(*refs):
    x_ref = refs[0]
    out_ref = refs[-1]
    prm = refs[1:-1]          # 10 layers x (A_taps, Cblk_taps, bias)

    x = x_ref[...].astype(jnp.float32)          # (28, B_TILE*32): rows=h, lanes=batch*w
    for li, relu in enumerate(_RELU_FLAGS):
        a_ref = prm[3 * li]                     # (taps, R_out, R_in)
        c_ref = prm[3 * li + 1]                 # (taps, B*W_in, B*W_out)
        b_ref = prm[3 * li + 2]                 # (R_out, 1) or (R_out, B*W_out)
        taps, r_out, r_in = a_ref.shape
        # Static association-order choice: stream the fewest MXU rows.
        a_first = r_out < r_in
        y = None
        for j in range(taps):                   # static unroll -> MXU matmuls
            if a_first:
                t = jnp.dot(
                    jnp.dot(a_ref[j], x, preferred_element_type=jnp.float32),
                    c_ref[j], preferred_element_type=jnp.float32)
            else:
                t = jnp.dot(
                    a_ref[j],
                    jnp.dot(x, c_ref[j], preferred_element_type=jnp.float32),
                    preferred_element_type=jnp.float32)
            y = t if y is None else y + t
        y = y + b_ref[...]
        if relu:
            y = jnp.maximum(y, 0.0)
        x = y                                   # stays on-chip

    out_ref[...] = x.astype(out_ref.dtype)      # (28, B_TILE*32)


@jax.jit
def autoencoder_forward(prep_params, x_nchw):
    n = x_nchw.shape[0]
    n_pad = ((n + B_TILE - 1) // B_TILE) * B_TILE
    # Layout transform (tiny, outside the kernel): (N,1,28,28) ->
    # (28, N_pad*32) with image b occupying lanes [b*32, b*32+28).
    x = x_nchw.reshape(n, IMG, IMG).astype(jnp.float32)
    x = jnp.pad(x, ((0, n_pad - n), (0, 0), (0, WPAD - IMG)))
    x2d = jnp.transpose(x, (1, 0, 2)).reshape(IMG, n_pad * WPAD)

    blk = (IMG, B_TILE * WPAD)                  # (28, 128) -> lane-aligned I/O blocks
    img_spec = pl.BlockSpec(blk, lambda i: (0, i))
    in_specs = [img_spec]
    for p in prep_params:                       # weights: resident, constant index
        nd = p.ndim
        in_specs.append(pl.BlockSpec(p.shape, lambda i, _nd=nd: (0,) * _nd))

    out2d = pl.pallas_call(
        _fused_autoencoder_kernel,
        out_shape=jax.ShapeDtypeStruct((IMG, n_pad * WPAD), jnp.float32),
        grid=(n_pad // B_TILE,),
        in_specs=in_specs,
        out_specs=img_spec,
        compiler_params=pltpu.CompilerParams(
            dimension_semantics=("parallel",),   # batch tiles: pipelines / 2 TCs on v7x
        ),
    )(x2d, *prep_params)

    out = out2d.reshape(IMG, n_pad, WPAD).transpose(1, 0, 2)[:n, :, :IMG]
    return out.reshape(n, 1, IMG, IMG)


# ----------------------------------------------------------------------------
# Pure-JAX reference (XLA convs) for a correctness cross-check.
# ----------------------------------------------------------------------------
def reference_forward(params, x):
    dn = ("NCHW", "OIHW", "NCHW")
    prec = jax.lax.Precision.HIGHEST

    def conv(x, w, b, s, p):
        y = jax.lax.conv_general_dilated(
            x, w, (s, s), [(p, p), (p, p)], dimension_numbers=dn, precision=prec)
        return y + b.reshape(1, -1, 1, 1)

    def convT(x, w, b, s, p):
        k = w.shape[2]
        w_eq = jnp.transpose(jnp.flip(w, (2, 3)), (1, 0, 2, 3))
        y = jax.lax.conv_general_dilated(
            x, w_eq, (1, 1), [(k - 1 - p, k - 1 - p)] * 2,
            lhs_dilation=(s, s), dimension_numbers=dn, precision=prec)
        return y + b.reshape(1, -1, 1, 1)

    r = lambda v: jnp.maximum(v, 0.0)
    h = r(conv(x, params["conv1_w"], params["conv1_b"], 2, 1))
    h = r(conv(h, params["conv2_w"], params["conv2_b"], 2, 1))
    h = r(conv(h, params["conv3_w"], params["conv3_b"], 1, 1))
    h = r(conv(h, params["conv4_w"], params["conv4_b"], 1, 1))
    n = x.shape[0]
    flat = h.reshape(n, -1)
    lat = jnp.dot(flat, params["fc_w"].T, precision=prec) + params["fc_b"]
    dec = jnp.dot(lat, params["fc_dec_w"].T, precision=prec) + params["fc_dec_b"]
    h = dec.reshape(n, C, 7, 7)
    h = r(convT(h, params["t5_w"], params["t5_b"], 2, 1))
    h = r(convT(h, params["t6_w"], params["t6_b"], 2, 1))
    h = r(convT(h, params["t7_w"], params["t7_b"], 2, 1))
    return conv(h, params["t8_w"], params["t8_b"], 2, 4)


# ----------------------------------------------------------------------------
if __name__ == "__main__":
    x = jax.random.normal(jax.random.PRNGKey(0), (2, 1, 28, 28), dtype=jnp.float32)
    params = init_params(jax.random.PRNGKey(1))
    prep = prepare_params(params)      # one-time host-side weight packing

    out = autoencoder_forward(prep, x)
    out = jax.block_until_ready(out)

    assert out.shape == (2, 1, 28, 28), out.shape
    assert out.dtype == jnp.float32

    ref = jax.block_until_ready(reference_forward(params, x))
    np.testing.assert_allclose(np.asarray(out), np.asarray(ref), rtol=5e-2, atol=2e-3)

    print("KERNEL_OK")
</pallas_src>

<mosaic_0001>
module attributes {stable_mosaic.version = 11 : i64} {
  func.func @_fused_autoencoder_kernel(%arg0: i32, %arg1: memref<28x128xf32, #tpu.memory_space<vmem>>, %arg2: memref<3x56x28xf32, #tpu.memory_space<vmem>>, %arg3: memref<3x128x56xf32, #tpu.memory_space<vmem>>, %arg4: memref<56x1xf32, #tpu.memory_space<vmem>>, %arg5: memref<3x28x56xf32, #tpu.memory_space<vmem>>, %arg6: memref<3x56x28xf32, #tpu.memory_space<vmem>>, %arg7: memref<28x1xf32, #tpu.memory_space<vmem>>, %arg8: memref<3x28x28xf32, #tpu.memory_space<vmem>>, %arg9: memref<3x28x28xf32, #tpu.memory_space<vmem>>, %arg10: memref<28x1xf32, #tpu.memory_space<vmem>>, %arg11: memref<3x28x28xf32, #tpu.memory_space<vmem>>, %arg12: memref<3x28x28xf32, #tpu.memory_space<vmem>>, %arg13: memref<28x1xf32, #tpu.memory_space<vmem>>, %arg14: memref<7x8x28xf32, #tpu.memory_space<vmem>>, %arg15: memref<7x28x32xf32, #tpu.memory_space<vmem>>, %arg16: memref<8x32xf32, #tpu.memory_space<vmem>>, %arg17: memref<7x28x8xf32, #tpu.memory_space<vmem>>, %arg18: memref<7x32x28xf32, #tpu.memory_space<vmem>>, %arg19: memref<28x28xf32, #tpu.memory_space<vmem>>, %arg20: memref<3x52x28xf32, #tpu.memory_space<vmem>>, %arg21: memref<3x28x52xf32, #tpu.memory_space<vmem>>, %arg22: memref<52x1xf32, #tpu.memory_space<vmem>>, %arg23: memref<3x100x52xf32, #tpu.memory_space<vmem>>, %arg24: memref<3x52x100xf32, #tpu.memory_space<vmem>>, %arg25: memref<100x1xf32, #tpu.memory_space<vmem>>, %arg26: memref<3x196x100xf32, #tpu.memory_space<vmem>>, %arg27: memref<3x100x196xf32, #tpu.memory_space<vmem>>, %arg28: memref<196x1xf32, #tpu.memory_space<vmem>>, %arg29: memref<3x28x196xf32, #tpu.memory_space<vmem>>, %arg30: memref<3x196x128xf32, #tpu.memory_space<vmem>>, %arg31: memref<28x1xf32, #tpu.memory_space<vmem>>, %arg32: memref<28x128xf32, #tpu.memory_space<vmem>>) attributes {dimension_semantics = [#tpu.dimension_semantics<parallel>], iteration_bounds = array<i64: 1>, scalar_prefetch = 0 : i64, scratch_operands = 0 : i64, tpu.core_type = #tpu.core_type<tc>, window_params = [{transform_indices = @transform_0, window_bounds = array<i64: 28, 128>}, {pipeline_mode = #tpu.pipeline_mode<synchronous>, transform_indices = @transform_1, window_bounds = array<i64: 3, 56, 28>}, {pipeline_mode = #tpu.pipeline_mode<synchronous>, transform_indices = @transform_2, window_bounds = array<i64: 3, 128, 56>}, {pipeline_mode = #tpu.pipeline_mode<synchronous>, transform_indices = @transform_3, window_bounds = array<i64: 56, 1>}, {pipeline_mode = #tpu.pipeline_mode<synchronous>, transform_indices = @transform_4, window_bounds = array<i64: 3, 28, 56>}, {pipeline_mode = #tpu.pipeline_mode<synchronous>, transform_indices = @transform_5, window_bounds = array<i64: 3, 56, 28>}, {pipeline_mode = #tpu.pipeline_mode<synchronous>, transform_indices = @transform_6, window_bounds = array<i64: 28, 1>}, {pipeline_mode = #tpu.pipeline_mode<synchronous>, transform_indices = @transform_7, window_bounds = array<i64: 3, 28, 28>}, {pipeline_mode = #tpu.pipeline_mode<synchronous>, transform_indices = @transform_8, window_bounds = array<i64: 3, 28, 28>}, {pipeline_mode = #tpu.pipeline_mode<synchronous>, transform_indices = @transform_9, window_bounds = array<i64: 28, 1>}, {pipeline_mode = #tpu.pipeline_mode<synchronous>, transform_indices = @transform_10, window_bounds = array<i64: 3, 28, 28>}, {pipeline_mode = #tpu.pipeline_mode<synchronous>, transform_indices = @transform_11, window_bounds = array<i64: 3, 28, 28>}, {pipeline_mode = #tpu.pipeline_mode<synchronous>, transform_indices = @transform_12, window_bounds = array<i64: 28, 1>}, {pipeline_mode = #tpu.pipeline_mode<synchronous>, transform_indices = @transform_13, window_bounds = array<i64: 7, 8, 28>}, {pipeline_mode = #tpu.pipeline_mode<synchronous>, transform_indices = @transform_14, window_bounds = array<i64: 7, 28, 32>}, {pipeline_mode = #tpu.pipeline_mode<synchronous>, transform_indices = @transform_15, window_bounds = array<i64: 8, 32>}, {pipeline_mode = #tpu.pipeline_mode<synchronous>, transform_indices = @transform_16, window_bounds = array<i64: 7, 28, 8>}, {pipeline_mode = #tpu.pipeline_mode<synchronous>, transform_indices = @transform_17, window_bounds = array<i64: 7, 32, 28>}, {pipeline_mode = #tpu.pipeline_mode<synchronous>, transform_indices = @transform_18, window_bounds = array<i64: 28, 28>}, {pipeline_mode = #tpu.pipeline_mode<synchronous>, transform_indices = @transform_19, window_bounds = array<i64: 3, 52, 28>}, {pipeline_mode = #tpu.pipeline_mode<synchronous>, transform_indices = @transform_20, window_bounds = array<i64: 3, 28, 52>}, {pipeline_mode = #tpu.pipeline_mode<synchronous>, transform_indices = @transform_21, window_bounds = array<i64: 52, 1>}, {pipeline_mode = #tpu.pipeline_mode<synchronous>, transform_indices = @transform_22, window_bounds = array<i64: 3, 100, 52>}, {pipeline_mode = #tpu.pipeline_mode<synchronous>, transform_indices = @transform_23, window_bounds = array<i64: 3, 52, 100>}, {pipeline_mode = #tpu.pipeline_mode<synchronous>, transform_indices = @transform_24, window_bounds = array<i64: 100, 1>}, {pipeline_mode = #tpu.pipeline_mode<synchronous>, transform_indices = @transform_25, window_bounds = array<i64: 3, 196, 100>}, {pipeline_mode = #tpu.pipeline_mode<synchronous>, transform_indices = @transform_26, window_bounds = array<i64: 3, 100, 196>}, {pipeline_mode = #tpu.pipeline_mode<synchronous>, transform_indices = @transform_27, window_bounds = array<i64: 196, 1>}, {pipeline_mode = #tpu.pipeline_mode<synchronous>, transform_indices = @transform_28, window_bounds = array<i64: 3, 28, 196>}, {pipeline_mode = #tpu.pipeline_mode<synchronous>, transform_indices = @transform_29, window_bounds = array<i64: 3, 196, 128>}, {pipeline_mode = #tpu.pipeline_mode<synchronous>, transform_indices = @transform_30, window_bounds = array<i64: 28, 1>}, {transform_indices = @transform_31, window_bounds = array<i64: 28, 128>}]} {
    %c0 = arith.constant 0 : index
    %c0_0 = arith.constant 0 : index
    %0 = vector.load %arg1[%c0, %c0_0] : memref<28x128xf32, #tpu.memory_space<vmem>>, vector<28x128xf32>
    %c0_1 = arith.constant 0 : index
    %c0_2 = arith.constant 0 : index
    %c0_3 = arith.constant 0 : index
    %1 = vector.load %arg2[%c0_1, %c0_2, %c0_3] : memref<3x56x28xf32, #tpu.memory_space<vmem>>, vector<1x56x28xf32>
    %2 = vector.shape_cast %1 : vector<1x56x28xf32> to vector<56x28xf32>
    %c0_4 = arith.constant 0 : index
    %c0_5 = arith.constant 0 : index
    %c0_6 = arith.constant 0 : index
    %3 = vector.load %arg3[%c0_4, %c0_5, %c0_6] : memref<3x128x56xf32, #tpu.memory_space<vmem>>, vector<1x128x56xf32>
    %4 = vector.shape_cast %3 : vector<1x128x56xf32> to vector<128x56xf32>
    %cst = arith.constant dense<0.000000e+00> : vector<28x56xf32>
    %5 = tpu.matmul %0, %4, %cst {dimension_numbers = #tpu.dot_dimension_numbers<[1], [0], [0], [1], [0, 0, 1, 1], [], []>} : vector<28x128xf32>, vector<128x56xf32>, vector<28x56xf32> -> vector<28x56xf32>
    %cst_7 = arith.constant dense<0.000000e+00> : vector<56x56xf32>
    %6 = tpu.matmul %2, %5, %cst_7 {dimension_numbers = #tpu.dot_dimension_numbers<[1], [0], [0], [1], [0, 0, 1, 1], [], []>} : vector<56x28xf32>, vector<28x56xf32>, vector<56x56xf32> -> vector<56x56xf32>
    %c1 = arith.constant 1 : index
    %c0_8 = arith.constant 0 : index
    %c0_9 = arith.constant 0 : index
    %7 = vector.load %arg2[%c1, %c0_8, %c0_9] : memref<3x56x28xf32, #tpu.memory_space<vmem>>, vector<1x56x28xf32>
    %8 = vector.shape_cast %7 : vector<1x56x28xf32> to vector<56x28xf32>
    %c1_10 = arith.constant 1 : index
    %c0_11 = arith.constant 0 : index
    %c0_12 = arith.constant 0 : index
    %9 = vector.load %arg3[%c1_10, %c0_11, %c0_12] : memref<3x128x56xf32, #tpu.memory_space<vmem>>, vector<1x128x56xf32>
    %10 = vector.shape_cast %9 : vector<1x128x56xf32> to vector<128x56xf32>
    %cst_13 = arith.constant dense<0.000000e+00> : vector<28x56xf32>
    %11 = tpu.matmul %0, %10, %cst_13 {dimension_numbers = #tpu.dot_dimension_numbers<[1], [0], [0], [1], [0, 0, 1, 1], [], []>} : vector<28x128xf32>, vector<128x56xf32>, vector<28x56xf32> -> vector<28x56xf32>
    %cst_14 = arith.constant dense<0.000000e+00> : vector<56x56xf32>
    %12 = tpu.matmul %8, %11, %cst_14 {dimension_numbers = #tpu.dot_dimension_numbers<[1], [0], [0], [1], [0, 0, 1, 1], [], []>} : vector<56x28xf32>, vector<28x56xf32>, vector<56x56xf32> -> vector<56x56xf32>
    %13 = arith.addf %6, %12 : vector<56x56xf32>
    %c2 = arith.constant 2 : index
    %c0_15 = arith.constant 0 : index
    %c0_16 = arith.constant 0 : index
    %14 = vector.load %arg2[%c2, %c0_15, %c0_16] : memref<3x56x28xf32, #tpu.memory_space<vmem>>, vector<1x56x28xf32>
    %15 = vector.shape_cast %14 : vector<1x56x28xf32> to vector<56x28xf32>
    %c2_17 = arith.constant 2 : index
    %c0_18 = arith.constant 0 : index
    %c0_19 = arith.constant 0 : index
    %16 = vector.load %arg3[%c2_17, %c0_18, %c0_19] : memref<3x128x56xf32, #tpu.memory_space<vmem>>, vector<1x128x56xf32>
    %17 = vector.shape_cast %16 : vector<1x128x56xf32> to vector<128x56xf32>
    %cst_20 = arith.constant dense<0.000000e+00> : vector<28x56xf32>
    %18 = tpu.matmul %0, %17, %cst_20 {dimension_numbers = #tpu.dot_dimension_numbers<[1], [0], [0], [1], [0, 0, 1, 1], [], []>} : vector<28x128xf32>, vector<128x56xf32>, vector<28x56xf32> -> vector<28x56xf32>
    %cst_21 = arith.constant dense<0.000000e+00> : vector<56x56xf32>
    %19 = tpu.matmul %15, %18, %cst_21 {dimension_numbers = #tpu.dot_dimension_numbers<[1], [0], [0], [1], [0, 0, 1, 1], [], []>} : vector<56x28xf32>, vector<28x56xf32>, vector<56x56xf32> -> vector<56x56xf32>
    %20 = arith.addf %13, %19 : vector<56x56xf32>
    %c0_22 = arith.constant 0 : index
    %c0_23 = arith.constant 0 : index
    %21 = vector.load %arg4[%c0_22, %c0_23] : memref<56x1xf32, #tpu.memory_space<vmem>>, vector<56x1xf32>
    %22 = vector.broadcast %21 : vector<56x1xf32> to vector<56x56xf32>
    %23 = arith.addf %20, %22 : vector<56x56xf32>
    %cst_24 = arith.constant 0.000000e+00 : f32
    %24 = vector.broadcast %cst_24 : f32 to vector<56x56xf32>
    %25 = arith.maximumf %23, %24 : vector<56x56xf32>
    %c0_25 = arith.constant 0 : index
    %c0_26 = arith.constant 0 : index
    %c0_27 = arith.constant 0 : index
    %26 = vector.load %arg5[%c0_25, %c0_26, %c0_27] : memref<3x28x56xf32, #tpu.memory_space<vmem>>, vector<1x28x56xf32>
    %27 = vector.shape_cast %26 : vector<1x28x56xf32> to vector<28x56xf32>
    %cst_28 = arith.constant dense<0.000000e+00> : vector<28x56xf32>
    %28 = tpu.matmul %27, %25, %cst_28 {dimension_numbers = #tpu.dot_dimension_numbers<[1], [0], [0], [1], [0, 0, 1, 1], [], []>} : vector<28x56xf32>, vector<56x56xf32>, vector<28x56xf32> -> vector<28x56xf32>
    %c0_29 = arith.constant 0 : index
    %c0_30 = arith.constant 0 : index
    %c0_31 = arith.constant 0 : index
    %29 = vector.load %arg6[%c0_29, %c0_30, %c0_31] : memref<3x56x28xf32, #tpu.memory_space<vmem>>, vector<1x56x28xf32>
    %30 = vector.shape_cast %29 : vector<1x56x28xf32> to vector<56x28xf32>
    %cst_32 = arith.constant dense<0.000000e+00> : vector<28x28xf32>
    %31 = tpu.matmul %28, %30, %cst_32 {dimension_numbers = #tpu.dot_dimension_numbers<[1], [0], [0], [1], [0, 0, 1, 1], [], []>} : vector<28x56xf32>, vector<56x28xf32>, vector<28x28xf32> -> vector<28x28xf32>
    %c1_33 = arith.constant 1 : index
    %c0_34 = arith.constant 0 : index
    %c0_35 = arith.constant 0 : index
    %32 = vector.load %arg5[%c1_33, %c0_34, %c0_35] : memref<3x28x56xf32, #tpu.memory_space<vmem>>, vector<1x28x56xf32>
    %33 = vector.shape_cast %32 : vector<1x28x56xf32> to vector<28x56xf32>
    %cst_36 = arith.constant dense<0.000000e+00> : vector<28x56xf32>
    %34 = tpu.matmul %33, %25, %cst_36 {dimension_numbers = #tpu.dot_dimension_numbers<[1], [0], [0], [1], [0, 0, 1, 1], [], []>} : vector<28x56xf32>, vector<56x56xf32>, vector<28x56xf32> -> vector<28x56xf32>
    %c1_37 = arith.constant 1 : index
    %c0_38 = arith.constant 0 : index
    %c0_39 = arith.constant 0 : index
    %35 = vector.load %arg6[%c1_37, %c0_38, %c0_39] : memref<3x56x28xf32, #tpu.memory_space<vmem>>, vector<1x56x28xf32>
    %36 = vector.shape_cast %35 : vector<1x56x28xf32> to vector<56x28xf32>
    %cst_40 = arith.constant dense<0.000000e+00> : vector<28x28xf32>
    %37 = tpu.matmul %34, %36, %cst_40 {dimension_numbers = #tpu.dot_dimension_numbers<[1], [0], [0], [1], [0, 0, 1, 1], [], []>} : vector<28x56xf32>, vector<56x28xf32>, vector<28x28xf32> -> vector<28x28xf32>
    %38 = arith.addf %31, %37 : vector<28x28xf32>
    %c2_41 = arith.constant 2 : index
    %c0_42 = arith.constant 0 : index
    %c0_43 = arith.constant 0 : index
    %39 = vector.load %arg5[%c2_41, %c0_42, %c0_43] : memref<3x28x56xf32, #tpu.memory_space<vmem>>, vector<1x28x56xf32>
    %40 = vector.shape_cast %39 : vector<1x28x56xf32> to vector<28x56xf32>
    %cst_44 = arith.constant dense<0.000000e+00> : vector<28x56xf32>
    %41 = tpu.matmul %40, %25, %cst_44 {dimension_numbers = #tpu.dot_dimension_numbers<[1], [0], [0], [1], [0, 0, 1, 1], [], []>} : vector<28x56xf32>, vector<56x56xf32>, vector<28x56xf32> -> vector<28x56xf32>
    %c2_45 = arith.constant 2 : index
    %c0_46 = arith.constant 0 : index
    %c0_47 = arith.constant 0 : index
    %42 = vector.load %arg6[%c2_45, %c0_46, %c0_47] : memref<3x56x28xf32, #tpu.memory_space<vmem>>, vector<1x56x28xf32>
    %43 = vector.shape_cast %42 : vector<1x56x28xf32> to vector<56x28xf32>
    %cst_48 = arith.constant dense<0.000000e+00> : vector<28x28xf32>
    %44 = tpu.matmul %41, %43, %cst_48 {dimension_numbers = #tpu.dot_dimension_numbers<[1], [0], [0], [1], [0, 0, 1, 1], [], []>} : vector<28x56xf32>, vector<56x28xf32>, vector<28x28xf32> -> vector<28x28xf32>
    %45 = arith.addf %38, %44 : vector<28x28xf32>
    %c0_49 = arith.constant 0 : index
    %c0_50 = arith.constant 0 : index
    %46 = vector.load %arg7[%c0_49, %c0_50] : memref<28x1xf32, #tpu.memory_space<vmem>>, vector<28x1xf32>
    %47 = vector.broadcast %46 : vector<28x1xf32> to vector<28x28xf32>
    %48 = arith.addf %45, %47 : vector<28x28xf32>
    %cst_51 = arith.constant 0.000000e+00 : f32
    %49 = vector.broadcast %cst_51 : f32 to vector<28x28xf32>
    %50 = arith.maximumf %48, %49 : vector<28x28xf32>
    %c0_52 = arith.constant 0 : index
    %c0_53 = arith.constant 0 : index
    %c0_54 = arith.constant 0 : index
    %51 = vector.load %arg8[%c0_52, %c0_53, %c0_54] : memref<3x28x28xf32, #tpu.memory_space<vmem>>, vector<1x28x28xf32>
    %52 = vector.shape_cast %51 : vector<1x28x28xf32> to vector<28x28xf32>
    %c0_55 = arith.constant 0 : index
    %c0_56 = arith.constant 0 : index
    %c0_57 = arith.constant 0 : index
    %53 = vector.load %arg9[%c0_55, %c0_56, %c0_57] : memref<3x28x28xf32, #tpu.memory_space<vmem>>, vector<1x28x28xf32>
    %54 = vector.shape_cast %53 : vector<1x28x28xf32> to vector<28x28xf32>
    %cst_58 = arith.constant dense<0.000000e+00> : vector<28x28xf32>
    %55 = tpu.matmul %50, %54, %cst_58 {dimension_numbers = #tpu.dot_dimension_numbers<[1], [0], [0], [1], [0, 0, 1, 1], [], []>} : vector<28x28xf32>, vector<28x28xf32>, vector<28x28xf32> -> vector<28x28xf32>
    %cst_59 = arith.constant dense<0.000000e+00> : vector<28x28xf32>
    %56 = tpu.matmul %52, %55, %cst_59 {dimension_numbers = #tpu.dot_dimension_numbers<[1], [0], [0], [1], [0, 0, 1, 1], [], []>} : vector<28x28xf32>, vector<28x28xf32>, vector<28x28xf32> -> vector<28x28xf32>
    %c1_60 = arith.constant 1 : index
    %c0_61 = arith.constant 0 : index
    %c0_62 = arith.constant 0 : index
    %57 = vector.load %arg8[%c1_60, %c0_61, %c0_62] : memref<3x28x28xf32, #tpu.memory_space<vmem>>, vector<1x28x28xf32>
    %58 = vector.shape_cast %57 : vector<1x28x28xf32> to vector<28x28xf32>
    %c1_63 = arith.constant 1 : index
    %c0_64 = arith.constant 0 : index
    %c0_65 = arith.constant 0 : index
    %59 = vector.load %arg9[%c1_63, %c0_64, %c0_65] : memref<3x28x28xf32, #tpu.memory_space<vmem>>, vector<1x28x28xf32>
    %60 = vector.shape_cast %59 : vector<1x28x28xf32> to vector<28x28xf32>
    %cst_66 = arith.constant dense<0.000000e+00> : vector<28x28xf32>
    %61 = tpu.matmul %50, %60, %cst_66 {dimension_numbers = #tpu.dot_dimension_numbers<[1], [0], [0], [1], [0, 0, 1, 1], [], []>} : vector<28x28xf32>, vector<28x28xf32>, vector<28x28xf32> -> vector<28x28xf32>
    %cst_67 = arith.constant dense<0.000000e+00> : vector<28x28xf32>
    %62 = tpu.matmul %58, %61, %cst_67 {dimension_numbers = #tpu.dot_dimension_numbers<[1], [0], [0], [1], [0, 0, 1, 1], [], []>} : vector<28x28xf32>, vector<28x28xf32>, vector<28x28xf32> -> vector<28x28xf32>
    %63 = arith.addf %56, %62 : vector<28x28xf32>
    %c2_68 = arith.constant 2 : index
    %c0_69 = arith.constant 0 : index
    %c0_70 = arith.constant 0 : index
    %64 = vector.load %arg8[%c2_68, %c0_69, %c0_70] : memref<3x28x28xf32, #tpu.memory_space<vmem>>, vector<1x28x28xf32>
    %65 = vector.shape_cast %64 : vector<1x28x28xf32> to vector<28x28xf32>
    %c2_71 = arith.constant 2 : index
    %c0_72 = arith.constant 0 : index
    %c0_73 = arith.constant 0 : index
    %66 = vector.load %arg9[%c2_71, %c0_72, %c0_73] : memref<3x28x28xf32, #tpu.memory_space<vmem>>, vector<1x28x28xf32>
    %67 = vector.shape_cast %66 : vector<1x28x28xf32> to vector<28x28xf32>
    %cst_74 = arith.constant dense<0.000000e+00> : vector<28x28xf32>
    %68 = tpu.matmul %50, %67, %cst_74 {dimension_numbers = #tpu.dot_dimension_numbers<[1], [0], [0], [1], [0, 0, 1, 1], [], []>} : vector<28x28xf32>, vector<28x28xf32>, vector<28x28xf32> -> vector<28x28xf32>
    %cst_75 = arith.constant dense<0.000000e+00> : vector<28x28xf32>
    %69 = tpu.matmul %65, %68, %cst_75 {dimension_numbers = #tpu.dot_dimension_numbers<[1], [0], [0], [1], [0, 0, 1, 1], [], []>} : vector<28x28xf32>, vector<28x28xf32>, vector<28x28xf32> -> vector<28x28xf32>
    %70 = arith.addf %63, %69 : vector<28x28xf32>
    %c0_76 = arith.constant 0 : index
    %c0_77 = arith.constant 0 : index
    %71 = vector.load %arg10[%c0_76, %c0_77] : memref<28x1xf32, #tpu.memory_space<vmem>>, vector<28x1xf32>
    %72 = vector.broadcast %71 : vector<28x1xf32> to vector<28x28xf32>
    %73 = arith.addf %70, %72 : vector<28x28xf32>
    %cst_78 = arith.constant 0.000000e+00 : f32
    %74 = vector.broadcast %cst_78 : f32 to vector<28x28xf32>
    %75 = arith.maximumf %73, %74 : vector<28x28xf32>
    %c0_79 = arith.constant 0 : index
    %c0_80 = arith.constant 0 : index
    %c0_81 = arith.constant 0 : index
    %76 = vector.load %arg11[%c0_79, %c0_80, %c0_81] : memref<3x28x28xf32, #tpu.memory_space<vmem>>, vector<1x28x28xf32>
    %77 = vector.shape_cast %76 : vector<1x28x28xf32> to vector<28x28xf32>
    %c0_82 = arith.constant 0 : index
    %c0_83 = arith.constant 0 : index
    %c0_84 = arith.constant 0 : index
    %78 = vector.load %arg12[%c0_82, %c0_83, %c0_84] : memref<3x28x28xf32, #tpu.memory_space<vmem>>, vector<1x28x28xf32>
    %79 = vector.shape_cast %78 : vector<1x28x28xf32> to vector<28x28xf32>
    %cst_85 = arith.constant dense<0.000000e+00> : vector<28x28xf32>
    %80 = tpu.matmul %75, %79, %cst_85 {dimension_numbers = #tpu.dot_dimension_numbers<[1], [0], [0], [1], [0, 0, 1, 1], [], []>} : vector<28x28xf32>, vector<28x28xf32>, vector<28x28xf32> -> vector<28x28xf32>
    %cst_86 = arith.constant dense<0.000000e+00> : vector<28x28xf32>
    %81 = tpu.matmul %77, %80, %cst_86 {dimension_numbers = #tpu.dot_dimension_numbers<[1], [0], [0], [1], [0, 0, 1, 1], [], []>} : vector<28x28xf32>, vector<28x28xf32>, vector<28x28xf32> -> vector<28x28xf32>
    %c1_87 = arith.constant 1 : index
    %c0_88 = arith.constant 0 : index
    %c0_89 = arith.constant 0 : index
    %82 = vector.load %arg11[%c1_87, %c0_88, %c0_89] : memref<3x28x28xf32, #tpu.memory_space<vmem>>, vector<1x28x28xf32>
    %83 = vector.shape_cast %82 : vector<1x28x28xf32> to vector<28x28xf32>
    %c1_90 = arith.constant 1 : index
    %c0_91 = arith.constant 0 : index
    %c0_92 = arith.constant 0 : index
    %84 = vector.load %arg12[%c1_90, %c0_91, %c0_92] : memref<3x28x28xf32, #tpu.memory_space<vmem>>, vector<1x28x28xf32>
    %85 = vector.shape_cast %84 : vector<1x28x28xf32> to vector<28x28xf32>
    %cst_93 = arith.constant dense<0.000000e+00> : vector<28x28xf32>
    %86 = tpu.matmul %75, %85, %cst_93 {dimension_numbers = #tpu.dot_dimension_numbers<[1], [0], [0], [1], [0, 0, 1, 1], [], []>} : vector<28x28xf32>, vector<28x28xf32>, vector<28x28xf32> -> vector<28x28xf32>
    %cst_94 = arith.constant dense<0.000000e+00> : vector<28x28xf32>
    %87 = tpu.matmul %83, %86, %cst_94 {dimension_numbers = #tpu.dot_dimension_numbers<[1], [0], [0], [1], [0, 0, 1, 1], [], []>} : vector<28x28xf32>, vector<28x28xf32>, vector<28x28xf32> -> vector<28x28xf32>
    %88 = arith.addf %81, %87 : vector<28x28xf32>
    %c2_95 = arith.constant 2 : index
    %c0_96 = arith.constant 0 : index
    %c0_97 = arith.constant 0 : index
    %89 = vector.load %arg11[%c2_95, %c0_96, %c0_97] : memref<3x28x28xf32, #tpu.memory_space<vmem>>, vector<1x28x28xf32>
    %90 = vector.shape_cast %89 : vector<1x28x28xf32> to vector<28x28xf32>
    %c2_98 = arith.constant 2 : index
    %c0_99 = arith.constant 0 : index
    %c0_100 = arith.constant 0 : index
    %91 = vector.load %arg12[%c2_98, %c0_99, %c0_100] : memref<3x28x28xf32, #tpu.memory_space<vmem>>, vector<1x28x28xf32>
    %92 = vector.shape_cast %91 : vector<1x28x28xf32> to vector<28x28xf32>
    %cst_101 = arith.constant dense<0.000000e+00> : vector<28x28xf32>
    %93 = tpu.matmul %75, %92, %cst_101 {dimension_numbers = #tpu.dot_dimension_numbers<[1], [0], [0], [1], [0, 0, 1, 1], [], []>} : vector<28x28xf32>, vector<28x28xf32>, vector<28x28xf32> -> vector<28x28xf32>
    %cst_102 = arith.constant dense<0.000000e+00> : vector<28x28xf32>
    %94 = tpu.matmul %90, %93, %cst_102 {dimension_numbers = #tpu.dot_dimension_numbers<[1], [0], [0], [1], [0, 0, 1, 1], [], []>} : vector<28x28xf32>, vector<28x28xf32>, vector<28x28xf32> -> vector<28x28xf32>
    %95 = arith.addf %88, %94 : vector<28x28xf32>
    %c0_103 = arith.constant 0 : index
    %c0_104 = arith.constant 0 : index
    %96 = vector.load %arg13[%c0_103, %c0_104] : memref<28x1xf32, #tpu.memory_space<vmem>>, vector<28x1xf32>
    %97 = vector.broadcast %96 : vector<28x1xf32> to vector<28x28xf32>
    %98 = arith.addf %95, %97 : vector<28x28xf32>
    %cst_105 = arith.constant 0.000000e+00 : f32
    %99 = vector.broadcast %cst_105 : f32 to vector<28x28xf32>
    %100 = arith.maximumf %98, %99 : vector<28x28xf32>
    %c0_106 = arith.constant 0 : index
    %c0_107 = arith.constant 0 : index
    %c0_108 = arith.constant 0 : index
    %101 = vector.load %arg14[%c0_106, %c0_107, %c0_108] : memref<7x8x28xf32, #tpu.memory_space<vmem>>, vector<1x8x28xf32>
    %102 = vector.shape_cast %101 : vector<1x8x28xf32> to vector<8x28xf32>
    %cst_109 = arith.constant dense<0.000000e+00> : vector<8x28xf32>
    %103 = tpu.matmul %102, %100, %cst_109 {dimension_numbers = #tpu.dot_dimension_numbers<[1], [0], [0], [1], [0, 0, 1, 1], [], []>} : vector<8x28xf32>, vector<28x28xf32>, vector<8x28xf32> -> vector<8x28xf32>
    %c0_110 = arith.constant 0 : index
    %c0_111 = arith.constant 0 : index
    %c0_112 = arith.constant 0 : index
    %104 = vector.load %arg15[%c0_110, %c0_111, %c0_112] : memref<7x28x32xf32, #tpu.memory_space<vmem>>, vector<1x28x32xf32>
    %105 = vector.shape_cast %104 : vector<1x28x32xf32> to vector<28x32xf32>
    %cst_113 = arith.constant dense<0.000000e+00> : vector<8x32xf32>
    %106 = tpu.matmul %103, %105, %cst_113 {dimension_numbers = #tpu.dot_dimension_numbers<[1], [0], [0], [1], [0, 0, 1, 1], [], []>} : vector<8x28xf32>, vector<28x32xf32>, vector<8x32xf32> -> vector<8x32xf32>
    %c1_114 = arith.constant 1 : index
    %c0_115 = arith.constant 0 : index
    %c0_116 = arith.constant 0 : index
    %107 = vector.load %arg14[%c1_114, %c0_115, %c0_116] : memref<7x8x28xf32, #tpu.memory_space<vmem>>, vector<1x8x28xf32>
    %108 = vector.shape_cast %107 : vector<1x8x28xf32> to vector<8x28xf32>
    %cst_117 = arith.constant dense<0.000000e+00> : vector<8x28xf32>
    %109 = tpu.matmul %108, %100, %cst_117 {dimension_numbers = #tpu.dot_dimension_numbers<[1], [0], [0], [1], [0, 0, 1, 1], [], []>} : vector<8x28xf32>, vector<28x28xf32>, vector<8x28xf32> -> vector<8x28xf32>
    %c1_118 = arith.constant 1 : index
    %c0_119 = arith.constant 0 : index
    %c0_120 = arith.constant 0 : index
    %110 = vector.load %arg15[%c1_118, %c0_119, %c0_120] : memref<7x28x32xf32, #tpu.memory_space<vmem>>, vector<1x28x32xf32>
    %111 = vector.shape_cast %110 : vector<1x28x32xf32> to vector<28x32xf32>
    %cst_121 = arith.constant dense<0.000000e+00> : vector<8x32xf32>
    %112 = tpu.matmul %109, %111, %cst_121 {dimension_numbers = #tpu.dot_dimension_numbers<[1], [0], [0], [1], [0, 0, 1, 1], [], []>} : vector<8x28xf32>, vector<28x32xf32>, vector<8x32xf32> -> vector<8x32xf32>
    %113 = arith.addf %106, %112 : vector<8x32xf32>
    %c2_122 = arith.constant 2 : index
    %c0_123 = arith.constant 0 : index
    %c0_124 = arith.constant 0 : index
    %114 = vector.load %arg14[%c2_122, %c0_123, %c0_124] : memref<7x8x28xf32, #tpu.memory_space<vmem>>, vector<1x8x28xf32>
    %115 = vector.shape_cast %114 : vector<1x8x28xf32> to vector<8x28xf32>
    %cst_125 = arith.constant dense<0.000000e+00> : vector<8x28xf32>
    %116 = tpu.matmul %115, %100, %cst_125 {dimension_numbers = #tpu.dot_dimension_numbers<[1], [0], [0], [1], [0, 0, 1, 1], [], []>} : vector<8x28xf32>, vector<28x28xf32>, vector<8x28xf32> -> vector<8x28xf32>
    %c2_126 = arith.constant 2 : index
    %c0_127 = arith.constant 0 : index
    %c0_128 = arith.constant 0 : index
    %117 = vector.load %arg15[%c2_126, %c0_127, %c0_128] : memref<7x28x32xf32, #tpu.memory_space<vmem>>, vector<1x28x32xf32>
    %118 = vector.shape_cast %117 : vector<1x28x32xf32> to vector<28x32xf32>
    %cst_129 = arith.constant dense<0.000000e+00> : vector<8x32xf32>
    %119 = tpu.matmul %116, %118, %cst_129 {dimension_numbers = #tpu.dot_dimension_numbers<[1], [0], [0], [1], [0, 0, 1, 1], [], []>} : vector<8x28xf32>, vector<28x32xf32>, vector<8x32xf32> -> vector<8x32xf32>
    %120 = arith.addf %113, %119 : vector<8x32xf32>
    %c3 = arith.constant 3 : index
    %c0_130 = arith.constant 0 : index
    %c0_131 = arith.constant 0 : index
    %121 = vector.load %arg14[%c3, %c0_130, %c0_131] : memref<7x8x28xf32, #tpu.memory_space<vmem>>, vector<1x8x28xf32>
    %122 = vector.shape_cast %121 : vector<1x8x28xf32> to vector<8x28xf32>
    %cst_132 = arith.constant dense<0.000000e+00> : vector<8x28xf32>
    %123 = tpu.matmul %122, %100, %cst_132 {dimension_numbers = #tpu.dot_dimension_numbers<[1], [0], [0], [1], [0, 0, 1, 1], [], []>} : vector<8x28xf32>, vector<28x28xf32>, vector<8x28xf32> -> vector<8x28xf32>
    %c3_133 = arith.constant 3 : index
    %c0_134 = arith.constant 0 : index
    %c0_135 = arith.constant 0 : index
    %124 = vector.load %arg15[%c3_133, %c0_134, %c0_135] : memref<7x28x32xf32, #tpu.memory_space<vmem>>, vector<1x28x32xf32>
    %125 = vector.shape_cast %124 : vector<1x28x32xf32> to vector<28x32xf32>
    %cst_136 = arith.constant dense<0.000000e+00> : vector<8x32xf32>
    %126 = tpu.matmul %123, %125, %cst_136 {dimension_numbers = #tpu.dot_dimension_numbers<[1], [0], [0], [1], [0, 0, 1, 1], [], []>} : vector<8x28xf32>, vector<28x32xf32>, vector<8x32xf32> -> vector<8x32xf32>
    %127 = arith.addf %120, %126 : vector<8x32xf32>
    %c4 = arith.constant 4 : index
    %c0_137 = arith.constant 0 : index
    %c0_138 = arith.constant 0 : index
    %128 = vector.load %arg14[%c4, %c0_137, %c0_138] : memref<7x8x28xf32, #tpu.memory_space<vmem>>, vector<1x8x28xf32>
    %129 = vector.shape_cast %128 : vector<1x8x28xf32> to vector<8x28xf32>
    %cst_139 = arith.constant dense<0.000000e+00> : vector<8x28xf32>
    %130 = tpu.matmul %129, %100, %cst_139 {dimension_numbers = #tpu.dot_dimension_numbers<[1], [0], [0], [1], [0, 0, 1, 1], [], []>} : vector<8x28xf32>, vector<28x28xf32>, vector<8x28xf32> -> vector<8x28xf32>
    %c4_140 = arith.constant 4 : index
    %c0_141 = arith.constant 0 : index
    %c0_142 = arith.constant 0 : index
    %131 = vector.load %arg15[%c4_140, %c0_141, %c0_142] : memref<7x28x32xf32, #tpu.memory_space<vmem>>, vector<1x28x32xf32>
    %132 = vector.shape_cast %131 : vector<1x28x32xf32> to vector<28x32xf32>
    %cst_143 = arith.constant dense<0.000000e+00> : vector<8x32xf32>
    %133 = tpu.matmul %130, %132, %cst_143 {dimension_numbers = #tpu.dot_dimension_numbers<[1], [0], [0], [1], [0, 0, 1, 1], [], []>} : vector<8x28xf32>, vector<28x32xf32>, vector<8x32xf32> -> vector<8x32xf32>
    %134 = arith.addf %127, %133 : vector<8x32xf32>
    %c5 = arith.constant 5 : index
    %c0_144 = arith.constant 0 : index
    %c0_145 = arith.constant 0 : index
    %135 = vector.load %arg14[%c5, %c0_144, %c0_145] : memref<7x8x28xf32, #tpu.memory_space<vmem>>, vector<1x8x28xf32>
    %136 = vector.shape_cast %135 : vector<1x8x28xf32> to vector<8x28xf32>
    %cst_146 = arith.constant dense<0.000000e+00> : vector<8x28xf32>
    %137 = tpu.matmul %136, %100, %cst_146 {dimension_numbers = #tpu.dot_dimension_numbers<[1], [0], [0], [1], [0, 0, 1, 1], [], []>} : vector<8x28xf32>, vector<28x28xf32>, vector<8x28xf32> -> vector<8x28xf32>
    %c5_147 = arith.constant 5 : index
    %c0_148 = arith.constant 0 : index
    %c0_149 = arith.constant 0 : index
    %138 = vector.load %arg15[%c5_147, %c0_148, %c0_149] : memref<7x28x32xf32, #tpu.memory_space<vmem>>, vector<1x28x32xf32>
    %139 = vector.shape_cast %138 : vector<1x28x32xf32> to vector<28x32xf32>
    %cst_150 = arith.constant dense<0.000000e+00> : vector<8x32xf32>
    %140 = tpu.matmul %137, %139, %cst_150 {dimension_numbers = #tpu.dot_dimension_numbers<[1], [0], [0], [1], [0, 0, 1, 1], [], []>} : vector<8x28xf32>, vector<28x32xf32>, vector<8x32xf32> -> vector<8x32xf32>
    %141 = arith.addf %134, %140 : vector<8x32xf32>
    %c6 = arith.constant 6 : index
    %c0_151 = arith.constant 0 : index
    %c0_152 = arith.constant 0 : index
    %142 = vector.load %arg14[%c6, %c0_151, %c0_152] : memref<7x8x28xf32, #tpu.memory_space<vmem>>, vector<1x8x28xf32>
    %143 = vector.shape_cast %142 : vector<1x8x28xf32> to vector<8x28xf32>
    %cst_153 = arith.constant dense<0.000000e+00> : vector<8x28xf32>
    %144 = tpu.matmul %143, %100, %cst_153 {dimension_numbers = #tpu.dot_dimension_numbers<[1], [0], [0], [1], [0, 0, 1, 1], [], []>} : vector<8x28xf32>, vector<28x28xf32>, vector<8x28xf32> -> vector<8x28xf32>
    %c6_154 = arith.constant 6 : index
    %c0_155 = arith.constant 0 : index
    %c0_156 = arith.constant 0 : index
    %145 = vector.load %arg15[%c6_154, %c0_155, %c0_156] : memref<7x28x32xf32, #tpu.memory_space<vmem>>, vector<1x28x32xf32>
    %146 = vector.shape_cast %145 : vector<1x28x32xf32> to vector<28x32xf32>
    %cst_157 = arith.constant dense<0.000000e+00> : vector<8x32xf32>
    %147 = tpu.matmul %144, %146, %cst_157 {dimension_numbers = #tpu.dot_dimension_numbers<[1], [0], [0], [1], [0, 0, 1, 1], [], []>} : vector<8x28xf32>, vector<28x32xf32>, vector<8x32xf32> -> vector<8x32xf32>
    %148 = arith.addf %141, %147 : vector<8x32xf32>
    %c0_158 = arith.constant 0 : index
    %c0_159 = arith.constant 0 : index
    %149 = vector.load %arg16[%c0_158, %c0_159] : memref<8x32xf32, #tpu.memory_space<vmem>>, vector<8x32xf32>
    %150 = arith.addf %148, %149 : vector<8x32xf32>
    %c0_160 = arith.constant 0 : index
    %c0_161 = arith.constant 0 : index
    %c0_162 = arith.constant 0 : index
    %151 = vector.load %arg17[%c0_160, %c0_161, %c0_162] : memref<7x28x8xf32, #tpu.memory_space<vmem>>, vector<1x28x8xf32>
    %152 = vector.shape_cast %151 : vector<1x28x8xf32> to vector<28x8xf32>
    %c0_163 = arith.constant 0 : index
    %c0_164 = arith.constant 0 : index
    %c0_165 = arith.constant 0 : index
    %153 = vector.load %arg18[%c0_163, %c0_164, %c0_165] : memref<7x32x28xf32, #tpu.memory_space<vmem>>, vector<1x32x28xf32>
    %154 = vector.shape_cast %153 : vector<1x32x28xf32> to vector<32x28xf32>
    %cst_166 = arith.constant dense<0.000000e+00> : vector<8x28xf32>
    %155 = tpu.matmul %150, %154, %cst_166 {dimension_numbers = #tpu.dot_dimension_numbers<[1], [0], [0], [1], [0, 0, 1, 1], [], []>} : vector<8x32xf32>, vector<32x28xf32>, vector<8x28xf32> -> vector<8x28xf32>
    %cst_167 = arith.constant dense<0.000000e+00> : vector<28x28xf32>
    %156 = tpu.matmul %152, %155, %cst_167 {dimension_numbers = #tpu.dot_dimension_numbers<[1], [0], [0], [1], [0, 0, 1, 1], [], []>} : vector<28x8xf32>, vector<8x28xf32>, vector<28x28xf32> -> vector<28x28xf32>
    %c1_168 = arith.constant 1 : index
    %c0_169 = arith.constant 0 : index
    %c0_170 = arith.constant 0 : index
    %157 = vector.load %arg17[%c1_168, %c0_169, %c0_170] : memref<7x28x8xf32, #tpu.memory_space<vmem>>, vector<1x28x8xf32>
    %158 = vector.shape_cast %157 : vector<1x28x8xf32> to vector<28x8xf32>
    %c1_171 = arith.constant 1 : index
    %c0_172 = arith.constant 0 : index
    %c0_173 = arith.constant 0 : index
    %159 = vector.load %arg18[%c1_171, %c0_172, %c0_173] : memref<7x32x28xf32, #tpu.memory_space<vmem>>, vector<1x32x28xf32>
    %160 = vector.shape_cast %159 : vector<1x32x28xf32> to vector<32x28xf32>
    %cst_174 = arith.constant dense<0.000000e+00> : vector<8x28xf32>
    %161 = tpu.matmul %150, %160, %cst_174 {dimension_numbers = #tpu.dot_dimension_numbers<[1], [0], [0], [1], [0, 0, 1, 1], [], []>} : vector<8x32xf32>, vector<32x28xf32>, vector<8x28xf32> -> vector<8x28xf32>
    %cst_175 = arith.constant dense<0.000000e+00> : vector<28x28xf32>
    %162 = tpu.matmul %158, %161, %cst_175 {dimension_numbers = #tpu.dot_dimension_numbers<[1], [0], [0], [1], [0, 0, 1, 1], [], []>} : vector<28x8xf32>, vector<8x28xf32>, vector<28x28xf32> -> vector<28x28xf32>
    %163 = arith.addf %156, %162 : vector<28x28xf32>
    %c2_176 = arith.constant 2 : index
    %c0_177 = arith.constant 0 : index
    %c0_178 = arith.constant 0 : index
    %164 = vector.load %arg17[%c2_176, %c0_177, %c0_178] : memref<7x28x8xf32, #tpu.memory_space<vmem>>, vector<1x28x8xf32>
    %165 = vector.shape_cast %164 : vector<1x28x8xf32> to vector<28x8xf32>
    %c2_179 = arith.constant 2 : index
    %c0_180 = arith.constant 0 : index
    %c0_181 = arith.constant 0 : index
    %166 = vector.load %arg18[%c2_179, %c0_180, %c0_181] : memref<7x32x28xf32, #tpu.memory_space<vmem>>, vector<1x32x28xf32>
    %167 = vector.shape_cast %166 : vector<1x32x28xf32> to vector<32x28xf32>
    %cst_182 = arith.constant dense<0.000000e+00> : vector<8x28xf32>
    %168 = tpu.matmul %150, %167, %cst_182 {dimension_numbers = #tpu.dot_dimension_numbers<[1], [0], [0], [1], [0, 0, 1, 1], [], []>} : vector<8x32xf32>, vector<32x28xf32>, vector<8x28xf32> -> vector<8x28xf32>
    %cst_183 = arith.constant dense<0.000000e+00> : vector<28x28xf32>
    %169 = tpu.matmul %165, %168, %cst_183 {dimension_numbers = #tpu.dot_dimension_numbers<[1], [0], [0], [1], [0, 0, 1, 1], [], []>} : vector<28x8xf32>, vector<8x28xf32>, vector<28x28xf32> -> vector<28x28xf32>
    %170 = arith.addf %163, %169 : vector<28x28xf32>
    %c3_184 = arith.constant 3 : index
    %c0_185 = arith.constant 0 : index
    %c0_186 = arith.constant 0 : index
    %171 = vector.load %arg17[%c3_184, %c0_185, %c0_186] : memref<7x28x8xf32, #tpu.memory_space<vmem>>, vector<1x28x8xf32>
    %172 = vector.shape_cast %171 : vector<1x28x8xf32> to vector<28x8xf32>
    %c3_187 = arith.constant 3 : index
    %c0_188 = arith.constant 0 : index
    %c0_189 = arith.constant 0 : index
    %173 = vector.load %arg18[%c3_187, %c0_188, %c0_189] : memref<7x32x28xf32, #tpu.memory_space<vmem>>, vector<1x32x28xf32>
    %174 = vector.shape_cast %173 : vector<1x32x28xf32> to vector<32x28xf32>
    %cst_190 = arith.constant dense<0.000000e+00> : vector<8x28xf32>
    %175 = tpu.matmul %150, %174, %cst_190 {dimension_numbers = #tpu.dot_dimension_numbers<[1], [0], [0], [1], [0, 0, 1, 1], [], []>} : vector<8x32xf32>, vector<32x28xf32>, vector<8x28xf32> -> vector<8x28xf32>
    %cst_191 = arith.constant dense<0.000000e+00> : vector<28x28xf32>
    %176 = tpu.matmul %172, %175, %cst_191 {dimension_numbers = #tpu.dot_dimension_numbers<[1], [0], [0], [1], [0, 0, 1, 1], [], []>} : vector<28x8xf32>, vector<8x28xf32>, vector<28x28xf32> -> vector<28x28xf32>
    %177 = arith.addf %170, %176 : vector<28x28xf32>
    %c4_192 = arith.constant 4 : index
    %c0_193 = arith.constant 0 : index
    %c0_194 = arith.constant 0 : index
    %178 = vector.load %arg17[%c4_192, %c0_193, %c0_194] : memref<7x28x8xf32, #tpu.memory_space<vmem>>, vector<1x28x8xf32>
    %179 = vector.shape_cast %178 : vector<1x28x8xf32> to vector<28x8xf32>
    %c4_195 = arith.constant 4 : index
    %c0_196 = arith.constant 0 : index
    %c0_197 = arith.constant 0 : index
    %180 = vector.load %arg18[%c4_195, %c0_196, %c0_197] : memref<7x32x28xf32, #tpu.memory_space<vmem>>, vector<1x32x28xf32>
    %181 = vector.shape_cast %180 : vector<1x32x28xf32> to vector<32x28xf32>
    %cst_198 = arith.constant dense<0.000000e+00> : vector<8x28xf32>
    %182 = tpu.matmul %150, %181, %cst_198 {dimension_numbers = #tpu.dot_dimension_numbers<[1], [0], [0], [1], [0, 0, 1, 1], [], []>} : vector<8x32xf32>, vector<32x28xf32>, vector<8x28xf32> -> vector<8x28xf32>
    %cst_199 = arith.constant dense<0.000000e+00> : vector<28x28xf32>
    %183 = tpu.matmul %179, %182, %cst_199 {dimension_numbers = #tpu.dot_dimension_numbers<[1], [0], [0], [1], [0, 0, 1, 1], [], []>} : vector<28x8xf32>, vector<8x28xf32>, vector<28x28xf32> -> vector<28x28xf32>
    %184 = arith.addf %177, %183 : vector<28x28xf32>
    %c5_200 = arith.constant 5 : index
    %c0_201 = arith.constant 0 : index
    %c0_202 = arith.constant 0 : index
    %185 = vector.load %arg17[%c5_200, %c0_201, %c0_202] : memref<7x28x8xf32, #tpu.memory_space<vmem>>, vector<1x28x8xf32>
    %186 = vector.shape_cast %185 : vector<1x28x8xf32> to vector<28x8xf32>
    %c5_203 = arith.constant 5 : index
    %c0_204 = arith.constant 0 : index
    %c0_205 = arith.constant 0 : index
    %187 = vector.load %arg18[%c5_203, %c0_204, %c0_205] : memref<7x32x28xf32, #tpu.memory_space<vmem>>, vector<1x32x28xf32>
    %188 = vector.shape_cast %187 : vector<1x32x28xf32> to vector<32x28xf32>
    %cst_206 = arith.constant dense<0.000000e+00> : vector<8x28xf32>
    %189 = tpu.matmul %150, %188, %cst_206 {dimension_numbers = #tpu.dot_dimension_numbers<[1], [0], [0], [1], [0, 0, 1, 1], [], []>} : vector<8x32xf32>, vector<32x28xf32>, vector<8x28xf32> -> vector<8x28xf32>
    %cst_207 = arith.constant dense<0.000000e+00> : vector<28x28xf32>
    %190 = tpu.matmul %186, %189, %cst_207 {dimension_numbers = #tpu.dot_dimension_numbers<[1], [0], [0], [1], [0, 0, 1, 1], [], []>} : vector<28x8xf32>, vector<8x28xf32>, vector<28x28xf32> -> vector<28x28xf32>
    %191 = arith.addf %184, %190 : vector<28x28xf32>
    %c6_208 = arith.constant 6 : index
    %c0_209 = arith.constant 0 : index
    %c0_210 = arith.constant 0 : index
    %192 = vector.load %arg17[%c6_208, %c0_209, %c0_210] : memref<7x28x8xf32, #tpu.memory_space<vmem>>, vector<1x28x8xf32>
    %193 = vector.shape_cast %192 : vector<1x28x8xf32> to vector<28x8xf32>
    %c6_211 = arith.constant 6 : index
    %c0_212 = arith.constant 0 : index
    %c0_213 = arith.constant 0 : index
    %194 = vector.load %arg18[%c6_211, %c0_212, %c0_213] : memref<7x32x28xf32, #tpu.memory_space<vmem>>, vector<1x32x28xf32>
    %195 = vector.shape_cast %194 : vector<1x32x28xf32> to vector<32x28xf32>
    %cst_214 = arith.constant dense<0.000000e+00> : vector<8x28xf32>
    %196 = tpu.matmul %150, %195, %cst_214 {dimension_numbers = #tpu.dot_dimension_numbers<[1], [0], [0], [1], [0, 0, 1, 1], [], []>} : vector<8x32xf32>, vector<32x28xf32>, vector<8x28xf32> -> vector<8x28xf32>
    %cst_215 = arith.constant dense<0.000000e+00> : vector<28x28xf32>
    %197 = tpu.matmul %193, %196, %cst_215 {dimension_numbers = #tpu.dot_dimension_numbers<[1], [0], [0], [1], [0, 0, 1, 1], [], []>} : vector<28x8xf32>, vector<8x28xf32>, vector<28x28xf32> -> vector<28x28xf32>
    %198 = arith.addf %191, %197 : vector<28x28xf32>
    %c0_216 = arith.constant 0 : index
    %c0_217 = arith.constant 0 : index
    %199 = vector.load %arg19[%c0_216, %c0_217] : memref<28x28xf32, #tpu.memory_space<vmem>>, vector<28x28xf32>
    %200 = arith.addf %198, %199 : vector<28x28xf32>
    %c0_218 = arith.constant 0 : index
    %c0_219 = arith.constant 0 : index
    %c0_220 = arith.constant 0 : index
    %201 = vector.load %arg20[%c0_218, %c0_219, %c0_220] : memref<3x52x28xf32, #tpu.memory_space<vmem>>, vector<1x52x28xf32>
    %202 = vector.shape_cast %201 : vector<1x52x28xf32> to vector<52x28xf32>
    %c0_221 = arith.constant 0 : index
    %c0_222 = arith.constant 0 : index
    %c0_223 = arith.constant 0 : index
    %203 = vector.load %arg21[%c0_221, %c0_222, %c0_223] : memref<3x28x52xf32, #tpu.memory_space<vmem>>, vector<1x28x52xf32>
    %204 = vector.shape_cast %203 : vector<1x28x52xf32> to vector<28x52xf32>
    %cst_224 = arith.constant dense<0.000000e+00> : vector<28x52xf32>
    %205 = tpu.matmul %200, %204, %cst_224 {dimension_numbers = #tpu.dot_dimension_numbers<[1], [0], [0], [1], [0, 0, 1, 1], [], []>} : vector<28x28xf32>, vector<28x52xf32>, vector<28x52xf32> -> vector<28x52xf32>
    %cst_225 = arith.constant dense<0.000000e+00> : vector<52x52xf32>
    %206 = tpu.matmul %202, %205, %cst_225 {dimension_numbers = #tpu.dot_dimension_numbers<[1], [0], [0], [1], [0, 0, 1, 1], [], []>} : vector<52x28xf32>, vector<28x52xf32>, vector<52x52xf32> -> vector<52x52xf32>
    %c1_226 = arith.constant 1 : index
    %c0_227 = arith.constant 0 : index
    %c0_228 = arith.constant 0 : index
    %207 = vector.load %arg20[%c1_226, %c0_227, %c0_228] : memref<3x52x28xf32, #tpu.memory_space<vmem>>, vector<1x52x28xf32>
    %208 = vector.shape_cast %207 : vector<1x52x28xf32> to vector<52x28xf32>
    %c1_229 = arith.constant 1 : index
    %c0_230 = arith.constant 0 : index
    %c0_231 = arith.constant 0 : index
    %209 = vector.load %arg21[%c1_229, %c0_230, %c0_231] : memref<3x28x52xf32, #tpu.memory_space<vmem>>, vector<1x28x52xf32>
    %210 = vector.shape_cast %209 : vector<1x28x52xf32> to vector<28x52xf32>
    %cst_232 = arith.constant dense<0.000000e+00> : vector<28x52xf32>
    %211 = tpu.matmul %200, %210, %cst_232 {dimension_numbers = #tpu.dot_dimension_numbers<[1], [0], [0], [1], [0, 0, 1, 1], [], []>} : vector<28x28xf32>, vector<28x52xf32>, vector<28x52xf32> -> vector<28x52xf32>
    %cst_233 = arith.constant dense<0.000000e+00> : vector<52x52xf32>
    %212 = tpu.matmul %208, %211, %cst_233 {dimension_numbers = #tpu.dot_dimension_numbers<[1], [0], [0], [1], [0, 0, 1, 1], [], []>} : vector<52x28xf32>, vector<28x52xf32>, vector<52x52xf32> -> vector<52x52xf32>
    %213 = arith.addf %206, %212 : vector<52x52xf32>
    %c2_234 = arith.constant 2 : index
    %c0_235 = arith.constant 0 : index
    %c0_236 = arith.constant 0 : index
    %214 = vector.load %arg20[%c2_234, %c0_235, %c0_236] : memref<3x52x28xf32, #tpu.memory_space<vmem>>, vector<1x52x28xf32>
    %215 = vector.shape_cast %214 : vector<1x52x28xf32> to vector<52x28xf32>
    %c2_237 = arith.constant 2 : index
    %c0_238 = arith.constant 0 : index
    %c0_239 = arith.constant 0 : index
    %216 = vector.load %arg21[%c2_237, %c0_238, %c0_239] : memref<3x28x52xf32, #tpu.memory_space<vmem>>, vector<1x28x52xf32>
    %217 = vector.shape_cast %216 : vector<1x28x52xf32> to vector<28x52xf32>
    %cst_240 = arith.constant dense<0.000000e+00> : vector<28x52xf32>
    %218 = tpu.matmul %200, %217, %cst_240 {dimension_numbers = #tpu.dot_dimension_numbers<[1], [0], [0], [1], [0, 0, 1, 1], [], []>} : vector<28x28xf32>, vector<28x52xf32>, vector<28x52xf32> -> vector<28x52xf32>
    %cst_241 = arith.constant dense<0.000000e+00> : vector<52x52xf32>
    %219 = tpu.matmul %215, %218, %cst_241 {dimension_numbers = #tpu.dot_dimension_numbers<[1], [0], [0], [1], [0, 0, 1, 1], [], []>} : vector<52x28xf32>, vector<28x52xf32>, vector<52x52xf32> -> vector<52x52xf32>
    %220 = arith.addf %213, %219 : vector<52x52xf32>
    %c0_242 = arith.constant 0 : index
    %c0_243 = arith.constant 0 : index
    %221 = vector.load %arg22[%c0_242, %c0_243] : memref<52x1xf32, #tpu.memory_space<vmem>>, vector<52x1xf32>
    %222 = vector.broadcast %221 : vector<52x1xf32> to vector<52x52xf32>
    %223 = arith.addf %220, %222 : vector<52x52xf32>
    %cst_244 = arith.constant 0.000000e+00 : f32
    %224 = vector.broadcast %cst_244 : f32 to vector<52x52xf32>
    %225 = arith.maximumf %223, %224 : vector<52x52xf32>
    %c0_245 = arith.constant 0 : index
    %c0_246 = arith.constant 0 : index
    %c0_247 = arith.constant 0 : index
    %226 = vector.load %arg23[%c0_245, %c0_246, %c0_247] : memref<3x100x52xf32, #tpu.memory_space<vmem>>, vector<1x100x52xf32>
    %227 = vector.shape_cast %226 : vector<1x100x52xf32> to vector<100x52xf32>
    %c0_248 = arith.constant 0 : index
    %c0_249 = arith.constant 0 : index
    %c0_250 = arith.constant 0 : index
    %228 = vector.load %arg24[%c0_248, %c0_249, %c0_250] : memref<3x52x100xf32, #tpu.memory_space<vmem>>, vector<1x52x100xf32>
    %229 = vector.shape_cast %228 : vector<1x52x100xf32> to vector<52x100xf32>
    %cst_251 = arith.constant dense<0.000000e+00> : vector<52x100xf32>
    %230 = tpu.matmul %225, %229, %cst_251 {dimension_numbers = #tpu.dot_dimension_numbers<[1], [0], [0], [1], [0, 0, 1, 1], [], []>} : vector<52x52xf32>, vector<52x100xf32>, vector<52x100xf32> -> vector<52x100xf32>
    %cst_252 = arith.constant dense<0.000000e+00> : vector<100x100xf32>
    %231 = tpu.matmul %227, %230, %cst_252 {dimension_numbers = #tpu.dot_dimension_numbers<[1], [0], [0], [1], [0, 0, 1, 1], [], []>} : vector<100x52xf32>, vector<52x100xf32>, vector<100x100xf32> -> vector<100x100xf32>
    %c1_253 = arith.constant 1 : index
    %c0_254 = arith.constant 0 : index
    %c0_255 = arith.constant 0 : index
    %232 = vector.load %arg23[%c1_253, %c0_254, %c0_255] : memref<3x100x52xf32, #tpu.memory_space<vmem>>, vector<1x100x52xf32>
    %233 = vector.shape_cast %232 : vector<1x100x52xf32> to vector<100x52xf32>
    %c1_256 = arith.constant 1 : index
    %c0_257 = arith.constant 0 : index
    %c0_258 = arith.constant 0 : index
    %234 = vector.load %arg24[%c1_256, %c0_257, %c0_258] : memref<3x52x100xf32, #tpu.memory_space<vmem>>, vector<1x52x100xf32>
    %235 = vector.shape_cast %234 : vector<1x52x100xf32> to vector<52x100xf32>
    %cst_259 = arith.constant dense<0.000000e+00> : vector<52x100xf32>
    %236 = tpu.matmul %225, %235, %cst_259 {dimension_numbers = #tpu.dot_dimension_numbers<[1], [0], [0], [1], [0, 0, 1, 1], [], []>} : vector<52x52xf32>, vector<52x100xf32>, vector<52x100xf32> -> vector<52x100xf32>
    %cst_260 = arith.constant dense<0.000000e+00> : vector<100x100xf32>
    %237 = tpu.matmul %233, %236, %cst_260 {dimension_numbers = #tpu.dot_dimension_numbers<[1], [0], [0], [1], [0, 0, 1, 1], [], []>} : vector<100x52xf32>, vector<52x100xf32>, vector<100x100xf32> -> vector<100x100xf32>
    %238 = arith.addf %231, %237 : vector<100x100xf32>
    %c2_261 = arith.constant 2 : index
    %c0_262 = arith.constant 0 : index
    %c0_263 = arith.constant 0 : index
    %239 = vector.load %arg23[%c2_261, %c0_262, %c0_263] : memref<3x100x52xf32, #tpu.memory_space<vmem>>, vector<1x100x52xf32>
    %240 = vector.shape_cast %239 : vector<1x100x52xf32> to vector<100x52xf32>
    %c2_264 = arith.constant 2 : index
    %c0_265 = arith.constant 0 : index
    %c0_266 = arith.constant 0 : index
    %241 = vector.load %arg24[%c2_264, %c0_265, %c0_266] : memref<3x52x100xf32, #tpu.memory_space<vmem>>, vector<1x52x100xf32>
    %242 = vector.shape_cast %241 : vector<1x52x100xf32> to vector<52x100xf32>
    %cst_267 = arith.constant dense<0.000000e+00> : vector<52x100xf32>
    %243 = tpu.matmul %225, %242, %cst_267 {dimension_numbers = #tpu.dot_dimension_numbers<[1], [0], [0], [1], [0, 0, 1, 1], [], []>} : vector<52x52xf32>, vector<52x100xf32>, vector<52x100xf32> -> vector<52x100xf32>
    %cst_268 = arith.constant dense<0.000000e+00> : vector<100x100xf32>
    %244 = tpu.matmul %240, %243, %cst_268 {dimension_numbers = #tpu.dot_dimension_numbers<[1], [0], [0], [1], [0, 0, 1, 1], [], []>} : vector<100x52xf32>, vector<52x100xf32>, vector<100x100xf32> -> vector<100x100xf32>
    %245 = arith.addf %238, %244 : vector<100x100xf32>
    %c0_269 = arith.constant 0 : index
    %c0_270 = arith.constant 0 : index
    %246 = vector.load %arg25[%c0_269, %c0_270] : memref<100x1xf32, #tpu.memory_space<vmem>>, vector<100x1xf32>
    %247 = vector.broadcast %246 : vector<100x1xf32> to vector<100x100xf32>
    %248 = arith.addf %245, %247 : vector<100x100xf32>
    %cst_271 = arith.constant 0.000000e+00 : f32
    %249 = vector.broadcast %cst_271 : f32 to vector<100x100xf32>
    %250 = arith.maximumf %248, %249 : vector<100x100xf32>
    %c0_272 = arith.constant 0 : index
    %c0_273 = arith.constant 0 : index
    %c0_274 = arith.constant 0 : index
    %251 = vector.load %arg26[%c0_272, %c0_273, %c0_274] : memref<3x196x100xf32, #tpu.memory_space<vmem>>, vector<1x196x100xf32>
    %252 = vector.shape_cast %251 : vector<1x196x100xf32> to vector<196x100xf32>
    %c0_275 = arith.constant 0 : index
    %c0_276 = arith.constant 0 : index
    %c0_277 = arith.constant 0 : index
    %253 = vector.load %arg27[%c0_275, %c0_276, %c0_277] : memref<3x100x196xf32, #tpu.memory_space<vmem>>, vector<1x100x196xf32>
    %254 = vector.shape_cast %253 : vector<1x100x196xf32> to vector<100x196xf32>
    %cst_278 = arith.constant dense<0.000000e+00> : vector<100x196xf32>
    %255 = tpu.matmul %250, %254, %cst_278 {dimension_numbers = #tpu.dot_dimension_numbers<[1], [0], [0], [1], [0, 0, 1, 1], [], []>} : vector<100x100xf32>, vector<100x196xf32>, vector<100x196xf32> -> vector<100x196xf32>
    %cst_279 = arith.constant dense<0.000000e+00> : vector<196x196xf32>
    %256 = tpu.matmul %252, %255, %cst_279 {dimension_numbers = #tpu.dot_dimension_numbers<[1], [0], [0], [1], [0, 0, 1, 1], [], []>} : vector<196x100xf32>, vector<100x196xf32>, vector<196x196xf32> -> vector<196x196xf32>
    %c1_280 = arith.constant 1 : index
    %c0_281 = arith.constant 0 : index
    %c0_282 = arith.constant 0 : index
    %257 = vector.load %arg26[%c1_280, %c0_281, %c0_282] : memref<3x196x100xf32, #tpu.memory_space<vmem>>, vector<1x196x100xf32>
    %258 = vector.shape_cast %257 : vector<1x196x100xf32> to vector<196x100xf32>
    %c1_283 = arith.constant 1 : index
    %c0_284 = arith.constant 0 : index
    %c0_285 = arith.constant 0 : index
    %259 = vector.load %arg27[%c1_283, %c0_284, %c0_285] : memref<3x100x196xf32, #tpu.memory_space<vmem>>, vector<1x100x196xf32>
    %260 = vector.shape_cast %259 : vector<1x100x196xf32> to vector<100x196xf32>
    %cst_286 = arith.constant dense<0.000000e+00> : vector<100x196xf32>
    %261 = tpu.matmul %250, %260, %cst_286 {dimension_numbers = #tpu.dot_dimension_numbers<[1], [0], [0], [1], [0, 0, 1, 1], [], []>} : vector<100x100xf32>, vector<100x196xf32>, vector<100x196xf32> -> vector<100x196xf32>
    %cst_287 = arith.constant dense<0.000000e+00> : vector<196x196xf32>
    %262 = tpu.matmul %258, %261, %cst_287 {dimension_numbers = #tpu.dot_dimension_numbers<[1], [0], [0], [1], [0, 0, 1, 1], [], []>} : vector<196x100xf32>, vector<100x196xf32>, vector<196x196xf32> -> vector<196x196xf32>
    %263 = arith.addf %256, %262 : vector<196x196xf32>
    %c2_288 = arith.constant 2 : index
    %c0_289 = arith.constant 0 : index
    %c0_290 = arith.constant 0 : index
    %264 = vector.load %arg26[%c2_288, %c0_289, %c0_290] : memref<3x196x100xf32, #tpu.memory_space<vmem>>, vector<1x196x100xf32>
    %265 = vector.shape_cast %264 : vector<1x196x100xf32> to vector<196x100xf32>
    %c2_291 = arith.constant 2 : index
    %c0_292 = arith.constant 0 : index
    %c0_293 = arith.constant 0 : index
    %266 = vector.load %arg27[%c2_291, %c0_292, %c0_293] : memref<3x100x196xf32, #tpu.memory_space<vmem>>, vector<1x100x196xf32>
    %267 = vector.shape_cast %266 : vector<1x100x196xf32> to vector<100x196xf32>
    %cst_294 = arith.constant dense<0.000000e+00> : vector<100x196xf32>
    %268 = tpu.matmul %250, %267, %cst_294 {dimension_numbers = #tpu.dot_dimension_numbers<[1], [0], [0], [1], [0, 0, 1, 1], [], []>} : vector<100x100xf32>, vector<100x196xf32>, vector<100x196xf32> -> vector<100x196xf32>
    %cst_295 = arith.constant dense<0.000000e+00> : vector<196x196xf32>
    %269 = tpu.matmul %265, %268, %cst_295 {dimension_numbers = #tpu.dot_dimension_numbers<[1], [0], [0], [1], [0, 0, 1, 1], [], []>} : vector<196x100xf32>, vector<100x196xf32>, vector<196x196xf32> -> vector<196x196xf32>
    %270 = arith.addf %263, %269 : vector<196x196xf32>
    %c0_296 = arith.constant 0 : index
    %c0_297 = arith.constant 0 : index
    %271 = vector.load %arg28[%c0_296, %c0_297] : memref<196x1xf32, #tpu.memory_space<vmem>>, vector<196x1xf32>
    %272 = vector.broadcast %271 : vector<196x1xf32> to vector<196x196xf32>
    %273 = arith.addf %270, %272 : vector<196x196xf32>
    %cst_298 = arith.constant 0.000000e+00 : f32
    %274 = vector.broadcast %cst_298 : f32 to vector<196x196xf32>
    %275 = arith.maximumf %273, %274 : vector<196x196xf32>
    %c0_299 = arith.constant 0 : index
    %c0_300 = arith.constant 0 : index
    %c0_301 = arith.constant 0 : index
    %276 = vector.load %arg29[%c0_299, %c0_300, %c0_301] : memref<3x28x196xf32, #tpu.memory_space<vmem>>, vector<1x28x196xf32>
    %277 = vector.shape_cast %276 : vector<1x28x196xf32> to vector<28x196xf32>
    %cst_302 = arith.constant dense<0.000000e+00> : vector<28x196xf32>
    %278 = tpu.matmul %277, %275, %cst_302 {dimension_numbers = #tpu.dot_dimension_numbers<[1], [0], [0], [1], [0, 0, 1, 1], [], []>} : vector<28x196xf32>, vector<196x196xf32>, vector<28x196xf32> -> vector<28x196xf32>
    %c0_303 = arith.constant 0 : index
    %c0_304 = arith.constant 0 : index
    %c0_305 = arith.constant 0 : index
    %279 = vector.load %arg30[%c0_303, %c0_304, %c0_305] : memref<3x196x128xf32, #tpu.memory_space<vmem>>, vector<1x196x128xf32>
    %280 = vector.shape_cast %279 : vector<1x196x128xf32> to vector<196x128xf32>
    %cst_306 = arith.constant dense<0.000000e+00> : vector<28x128xf32>
    %281 = tpu.matmul %278, %280, %cst_306 {dimension_numbers = #tpu.dot_dimension_numbers<[1], [0], [0], [1], [0, 0, 1, 1], [], []>} : vector<28x196xf32>, vector<196x128xf32>, vector<28x128xf32> -> vector<28x128xf32>
    %c1_307 = arith.constant 1 : index
    %c0_308 = arith.constant 0 : index
    %c0_309 = arith.constant 0 : index
    %282 = vector.load %arg29[%c1_307, %c0_308, %c0_309] : memref<3x28x196xf32, #tpu.memory_space<vmem>>, vector<1x28x196xf32>
    %283 = vector.shape_cast %282 : vector<1x28x196xf32> to vector<28x196xf32>
    %cst_310 = arith.constant dense<0.000000e+00> : vector<28x196xf32>
    %284 = tpu.matmul %283, %275, %cst_310 {dimension_numbers = #tpu.dot_dimension_numbers<[1], [0], [0], [1], [0, 0, 1, 1], [], []>} : vector<28x196xf32>, vector<196x196xf32>, vector<28x196xf32> -> vector<28x196xf32>
    %c1_311 = arith.constant 1 : index
    %c0_312 = arith.constant 0 : index
    %c0_313 = arith.constant 0 : index
    %285 = vector.load %arg30[%c1_311, %c0_312, %c0_313] : memref<3x196x128xf32, #tpu.memory_space<vmem>>, vector<1x196x128xf32>
    %286 = vector.shape_cast %285 : vector<1x196x128xf32> to vector<196x128xf32>
    %cst_314 = arith.constant dense<0.000000e+00> : vector<28x128xf32>
    %287 = tpu.matmul %284, %286, %cst_314 {dimension_numbers = #tpu.dot_dimension_numbers<[1], [0], [0], [1], [0, 0, 1, 1], [], []>} : vector<28x196xf32>, vector<196x128xf32>, vector<28x128xf32> -> vector<28x128xf32>
    %288 = arith.addf %281, %287 : vector<28x128xf32>
    %c2_315 = arith.constant 2 : index
    %c0_316 = arith.constant 0 : index
    %c0_317 = arith.constant 0 : index
    %289 = vector.load %arg29[%c2_315, %c0_316, %c0_317] : memref<3x28x196xf32, #tpu.memory_space<vmem>>, vector<1x28x196xf32>
    %290 = vector.shape_cast %289 : vector<1x28x196xf32> to vector<28x196xf32>
    %cst_318 = arith.constant dense<0.000000e+00> : vector<28x196xf32>
    %291 = tpu.matmul %290, %275, %cst_318 {dimension_numbers = #tpu.dot_dimension_numbers<[1], [0], [0], [1], [0, 0, 1, 1], [], []>} : vector<28x196xf32>, vector<196x196xf32>, vector<28x196xf32> -> vector<28x196xf32>
    %c2_319 = arith.constant 2 : index
    %c0_320 = arith.constant 0 : index
    %c0_321 = arith.constant 0 : index
    %292 = vector.load %arg30[%c2_319, %c0_320, %c0_321] : memref<3x196x128xf32, #tpu.memory_space<vmem>>, vector<1x196x128xf32>
    %293 = vector.shape_cast %292 : vector<1x196x128xf32> to vector<196x128xf32>
    %cst_322 = arith.constant dense<0.000000e+00> : vector<28x128xf32>
    %294 = tpu.matmul %291, %293, %cst_322 {dimension_numbers = #tpu.dot_dimension_numbers<[1], [0], [0], [1], [0, 0, 1, 1], [], []>} : vector<28x196xf32>, vector<196x128xf32>, vector<28x128xf32> -> vector<28x128xf32>
    %295 = arith.addf %288, %294 : vector<28x128xf32>
    %c0_323 = arith.constant 0 : index
    %c0_324 = arith.constant 0 : index
    %296 = vector.load %arg31[%c0_323, %c0_324] : memref<28x1xf32, #tpu.memory_space<vmem>>, vector<28x1xf32>
    %297 = vector.broadcast %296 : vector<28x1xf32> to vector<28x128xf32>
    %298 = arith.addf %295, %297 : vector<28x128xf32>
    %c0_325 = arith.constant 0 : index
    %c0_326 = arith.constant 0 : index
    %299 = vector.load %arg32[%c0_325, %c0_326] : memref<28x128xf32, #tpu.memory_space<vmem>>, vector<28x128xf32>
    tpu.vector_store %arg32[%c0_325, %c0_326], %298 {strides = array<i32>} : memref<28x128xf32, #tpu.memory_space<vmem>>, vector<28x128xf32>,
    return
  }
  func.func @transform_0(%arg0: i32) -> (i32, i32) {
    %c0_i32 = arith.constant 0 : i32
    %c0_i32_0 = arith.constant 0 : i32
    return %c0_i32, %arg0 : i32, i32
  }
  func.func @transform_1(%arg0: i32) -> (i32, i32, i32) {
    %c0_i32 = arith.constant 0 : i32
    %c0_i32_0 = arith.constant 0 : i32
    %c0_i32_1 = arith.constant 0 : i32
    %c0_i32_2 = arith.constant 0 : i32
    return %c0_i32, %c0_i32_0, %c0_i32_1 : i32, i32, i32
  }
  func.func @transform_2(%arg0: i32) -> (i32, i32, i32) {
    %c0_i32 = arith.constant 0 : i32
    %c0_i32_0 = arith.constant 0 : i32
    %c0_i32_1 = arith.constant 0 : i32
    %c0_i32_2 = arith.constant 0 : i32
    return %c0_i32, %c0_i32_0, %c0_i32_1 : i32, i32, i32
  }
  func.func @transform_3(%arg0: i32) -> (i32, i32) {
    %c0_i32 = arith.constant 0 : i32
    %c0_i32_0 = arith.constant 0 : i32
    %c0_i32_1 = arith.constant 0 : i32
    return %c0_i32, %c0_i32_0 : i32, i32
  }
  func.func @transform_4(%arg0: i32) -> (i32, i32, i32) {
    %c0_i32 = arith.constant 0 : i32
    %c0_i32_0 = arith.constant 0 : i32
    %c0_i32_1 = arith.constant 0 : i32
    %c0_i32_2 = arith.constant 0 : i32
    return %c0_i32, %c0_i32_0, %c0_i32_1 : i32, i32, i32
  }
  func.func @transform_5(%arg0: i32) -> (i32, i32, i32) {
    %c0_i32 = arith.constant 0 : i32
    %c0_i32_0 = arith.constant 0 : i32
    %c0_i32_1 = arith.constant 0 : i32
    %c0_i32_2 = arith.constant 0 : i32
    return %c0_i32, %c0_i32_0, %c0_i32_1 : i32, i32, i32
  }
  func.func @transform_6(%arg0: i32) -> (i32, i32) {
    %c0_i32 = arith.constant 0 : i32
    %c0_i32_0 = arith.constant 0 : i32
    %c0_i32_1 = arith.constant 0 : i32
    return %c0_i32, %c0_i32_0 : i32, i32
  }
  func.func @transform_7(%arg0: i32) -> (i32, i32, i32) {
    %c0_i32 = arith.constant 0 : i32
    %c0_i32_0 = arith.constant 0 : i32
    %c0_i32_1 = arith.constant 0 : i32
    %c0_i32_2 = arith.constant 0 : i32
    return %c0_i32, %c0_i32_0, %c0_i32_1 : i32, i32, i32
  }
  func.func @transform_8(%arg0: i32) -> (i32, i32, i32) {
    %c0_i32 = arith.constant 0 : i32
    %c0_i32_0 = arith.constant 0 : i32
    %c0_i32_1 = arith.constant 0 : i32
    %c0_i32_2 = arith.constant 0 : i32
    return %c0_i32, %c0_i32_0, %c0_i32_1 : i32, i32, i32
  }
  func.func @transform_9(%arg0: i32) -> (i32, i32) {
    %c0_i32 = arith.constant 0 : i32
    %c0_i32_0 = arith.constant 0 : i32
    %c0_i32_1 = arith.constant 0 : i32
    return %c0_i32, %c0_i32_0 : i32, i32
  }
  func.func @transform_10(%arg0: i32) -> (i32, i32, i32) {
    %c0_i32 = arith.constant 0 : i32
    %c0_i32_0 = arith.constant 0 : i32
    %c0_i32_1 = arith.constant 0 : i32
    %c0_i32_2 = arith.constant 0 : i32
    return %c0_i32, %c0_i32_0, %c0_i32_1 : i32, i32, i32
  }
  func.func @transform_11(%arg0: i32) -> (i32, i32, i32) {
    %c0_i32 = arith.constant 0 : i32
    %c0_i32_0 = arith.constant 0 : i32
    %c0_i32_1 = arith.constant 0 : i32
    %c0_i32_2 = arith.constant 0 : i32
    return %c0_i32, %c0_i32_0, %c0_i32_1 : i32, i32, i32
  }
  func.func @transform_12(%arg0: i32) -> (i32, i32) {
    %c0_i32 = arith.constant 0 : i32
    %c0_i32_0 = arith.constant 0 : i32
    %c0_i32_1 = arith.constant 0 : i32
    return %c0_i32, %c0_i32_0 : i32, i32
  }
  func.func @transform_13(%arg0: i32) -> (i32, i32, i32) {
    %c0_i32 = arith.constant 0 : i32
    %c0_i32_0 = arith.constant 0 : i32
    %c0_i32_1 = arith.constant 0 : i32
    %c0_i32_2 = arith.constant 0 : i32
    return %c0_i32, %c0_i32_0, %c0_i32_1 : i32, i32, i32
  }
  func.func @transform_14(%arg0: i32) -> (i32, i32, i32) {
    %c0_i32 = arith.constant 0 : i32
    %c0_i32_0 = arith.constant 0 : i32
    %c0_i32_1 = arith.constant 0 : i32
    %c0_i32_2 = arith.constant 0 : i32
    return %c0_i32, %c0_i32_0, %c0_i32_1 : i32, i32, i32
  }
  func.func @transform_15(%arg0: i32) -> (i32, i32) {
    %c0_i32 = arith.constant 0 : i32
    %c0_i32_0 = arith.constant 0 : i32
    %c0_i32_1 = arith.constant 0 : i32
    return %c0_i32, %c0_i32_0 : i32, i32
  }
  func.func @transform_16(%arg0: i32) -> (i32, i32, i32) {
    %c0_i32 = arith.constant 0 : i32
    %c0_i32_0 = arith.constant 0 : i32
    %c0_i32_1 = arith.constant 0 : i32
    %c0_i32_2 = arith.constant 0 : i32
    return %c0_i32, %c0_i32_0, %c0_i32_1 : i32, i32, i32
  }
  func.func @transform_17(%arg0: i32) -> (i32, i32, i32) {
    %c0_i32 = arith.constant 0 : i32
    %c0_i32_0 = arith.constant 0 : i32
    %c0_i32_1 = arith.constant 0 : i32
    %c0_i32_2 = arith.constant 0 : i32
    return %c0_i32, %c0_i32_0, %c0_i32_1 : i32, i32, i32
  }
  func.func @transform_18(%arg0: i32) -> (i32, i32) {
    %c0_i32 = arith.constant 0 : i32
    %c0_i32_0 = arith.constant 0 : i32
    %c0_i32_1 = arith.constant 0 : i32
    return %c0_i32, %c0_i32_0 : i32, i32
  }
  func.func @transform_19(%arg0: i32) -> (i32, i32, i32) {
    %c0_i32 = arith.constant 0 : i32
    %c0_i32_0 = arith.constant 0 : i32
    %c0_i32_1 = arith.constant 0 : i32
    %c0_i32_2 = arith.constant 0 : i32
    return %c0_i32, %c0_i32_0, %c0_i32_1 : i32, i32, i32
  }
  func.func @transform_20(%arg0: i32) -> (i32, i32, i32) {
    %c0_i32 = arith.constant 0 : i32
    %c0_i32_0 = arith.constant 0 : i32
    %c0_i32_1 = arith.constant 0 : i32
    %c0_i32_2 = arith.constant 0 : i32
    return %c0_i32, %c0_i32_0, %c0_i32_1 : i32, i32, i32
  }
  func.func @transform_21(%arg0: i32) -> (i32, i32) {
    %c0_i32 = arith.constant 0 : i32
    %c0_i32_0 = arith.constant 0 : i32
    %c0_i32_1 = arith.constant 0 : i32
    return %c0_i32, %c0_i32_0 : i32, i32
  }
  func.func @transform_22(%arg0: i32) -> (i32, i32, i32) {
    %c0_i32 = arith.constant 0 : i32
    %c0_i32_0 = arith.constant 0 : i32
    %c0_i32_1 = arith.constant 0 : i32
    %c0_i32_2 = arith.constant 0 : i32
    return %c0_i32, %c0_i32_0, %c0_i32_1 : i32, i32, i32
  }
  func.func @transform_23(%arg0: i32) -> (i32, i32, i32) {
    %c0_i32 = arith.constant 0 : i32
    %c0_i32_0 = arith.constant 0 : i32
    %c0_i32_1 = arith.constant 0 : i32
    %c0_i32_2 = arith.constant 0 : i32
    return %c0_i32, %c0_i32_0, %c0_i32_1 : i32, i32, i32
  }
  func.func @transform_24(%arg0: i32) -> (i32, i32) {
    %c0_i32 = arith.constant 0 : i32
    %c0_i32_0 = arith.constant 0 : i32
    %c0_i32_1 = arith.constant 0 : i32
    return %c0_i32, %c0_i32_0 : i32, i32
  }
  func.func @transform_25(%arg0: i32) -> (i32, i32, i32) {
    %c0_i32 = arith.constant 0 : i32
    %c0_i32_0 = arith.constant 0 : i32
    %c0_i32_1 = arith.constant 0 : i32
    %c0_i32_2 = arith.constant 0 : i32
    return %c0_i32, %c0_i32_0, %c0_i32_1 : i32, i32, i32
  }
  func.func @transform_26(%arg0: i32) -> (i32, i32, i32) {
    %c0_i32 = arith.constant 0 : i32
    %c0_i32_0 = arith.constant 0 : i32
    %c0_i32_1 = arith.constant 0 : i32
    %c0_i32_2 = arith.constant 0 : i32
    return %c0_i32, %c0_i32_0, %c0_i32_1 : i32, i32, i32
  }
  func.func @transform_27(%arg0: i32) -> (i32, i32) {
    %c0_i32 = arith.constant 0 : i32
    %c0_i32_0 = arith.constant 0 : i32
    %c0_i32_1 = arith.constant 0 : i32
    return %c0_i32, %c0_i32_0 : i32, i32
  }
  func.func @transform_28(%arg0: i32) -> (i32, i32, i32) {
    %c0_i32 = arith.constant 0 : i32
    %c0_i32_0 = arith.constant 0 : i32
    %c0_i32_1 = arith.constant 0 : i32
    %c0_i32_2 = arith.constant 0 : i32
    return %c0_i32, %c0_i32_0, %c0_i32_1 : i32, i32, i32
  }
  func.func @transform_29(%arg0: i32) -> (i32, i32, i32) {
    %c0_i32 = arith.constant 0 : i32
    %c0_i32_0 = arith.constant 0 : i32
    %c0_i32_1 = arith.constant 0 : i32
    %c0_i32_2 = arith.constant 0 : i32
    return %c0_i32, %c0_i32_0, %c0_i32_1 : i32, i32, i32
  }
  func.func @transform_30(%arg0: i32) -> (i32, i32) {
    %c0_i32 = arith.constant 0 : i32
    %c0_i32_0 = arith.constant 0 : i32
    %c0_i32_1 = arith.constant 0 : i32
    return %c0_i32, %c0_i32_0 : i32, i32
  }
  func.func @transform_31(%arg0: i32) -> (i32, i32) {
    %c0_i32 = arith.constant 0 : i32
    %c0_i32_0 = arith.constant 0 : i32
    return %c0_i32, %arg0 : i32, i32
  }
}

</mosaic_0001>

<llo_original>
// kernel: autoencoder_forward.1
$region0: #{autoencoder_forward.1}
  #allocation0 [shape = 'u32[]', space=smem, size = 0x4, offset = 0x4, fixed_abs, tag = 'smem constant byte address 0x4 - core index']
  #allocation1 [shape = 'u32[144,128]{1,0:T(1,128)}', space=vmem, size = 0x12000, scoped, tag = 'internal scratch']
  %s0 = inlined_call_operand.smem [shape: u32[32], index: -1, kind: input, shape index: {}]
  %s1 = sld [smem:[%s0]]
  %s2 = scalar_lea.smem %s0, 1
  %s3 = sld [smem:[%s2]]
  %s4 = scalar_lea.smem %s0, 2
  %s5 = sld [smem:[%s4]]
  %s6 = scalar_lea.smem %s0, 3
  %s7 = sld [smem:[%s6]]
  %s8 = scalar_lea.smem %s0, 4
  %s9 = sld [smem:[%s8]]
  %s10 = scalar_lea.smem %s0, 5
  %s11 = sld [smem:[%s10]]
  %s12 = scalar_lea.smem %s0, 6
  %s13 = sld [smem:[%s12]]
  %s14 = scalar_lea.smem %s0, 7
  %s15 = sld [smem:[%s14]]
  %s16 = scalar_lea.smem %s0, 8
  %s17 = sld [smem:[%s16]]
  %s18 = scalar_lea.smem %s0, 9
  %s19 = sld [smem:[%s18]]
  %s20 = scalar_lea.smem %s0, 10
  %s21 = sld [smem:[%s20]]
  %s22 = scalar_lea.smem %s0, 11
  %s23 = sld [smem:[%s22]]
  %s24 = scalar_lea.smem %s0, 12
  %s25 = sld [smem:[%s24]]
  %s26 = scalar_lea.smem %s0, 13
  %s27 = sld [smem:[%s26]]
  %s28 = scalar_lea.smem %s0, 14
  %s29 = sld [smem:[%s28]]
  %s30 = scalar_lea.smem %s0, 15
  %s31 = sld [smem:[%s30]]
  %s32 = scalar_lea.smem %s0, 16
  %s33 = sld [smem:[%s32]]
  %s34 = scalar_lea.smem %s0, 17
  %s35 = sld [smem:[%s34]]
  %s36 = scalar_lea.smem %s0, 18
  %s37 = sld [smem:[%s36]]
  %s38 = scalar_lea.smem %s0, 19
  %s39 = sld [smem:[%s38]]
  %s40 = scalar_lea.smem %s0, 20
  %s41 = sld [smem:[%s40]]
  %s42 = scalar_lea.smem %s0, 21
  %s43 = sld [smem:[%s42]]
  %s44 = scalar_lea.smem %s0, 22
  %s45 = sld [smem:[%s44]]
  %s46 = scalar_lea.smem %s0, 23
  %s47 = sld [smem:[%s46]]
  %s48 = scalar_lea.smem %s0, 24
  %s49 = sld [smem:[%s48]]
  %s50 = scalar_lea.smem %s0, 25
  %s51 = sld [smem:[%s50]]
  %s52 = scalar_lea.smem %s0, 26
  %s53 = sld [smem:[%s52]]
  %s54 = scalar_lea.smem %s0, 27
  %s55 = sld [smem:[%s54]]
  %s56 = scalar_lea.smem %s0, 28
  %s57 = sld [smem:[%s56]]
  %s58 = scalar_lea.smem %s0, 29
  %s59 = sld [smem:[%s58]]
  %s60 = scalar_lea.smem %s0, 30
  %s61 = sld [smem:[%s60]]
  %s62 = scalar_lea.smem %s0, 31
  %s63 = sld [smem:[%s62]]
  %s64 = sld [smem:[#allocation0]]
  $region134: #{autoencoder_forward.1} parent=0
    _
  %s66 = ssub.s32 1, %s64
  %s67 = scalar_select 0, %s66, %s64
  // Predicated region
  $region2: #{autoencoder_forward.1} parent=0 // pred_check
    _
  $region3: #{autoencoder_forward.1} parent=0 // pred_check_branch
    %69 = sbr.rel (0) target = $region5
  $region4: #{autoencoder_forward.1} parent=0 // pred_region
    _
  $region5: #{autoencoder_forward.1} parent=0 // pred_fallthru
    _
  // Predicated region
  $region6: #{autoencoder_forward.1} parent=0 // pred_check
    _
  $region7: #{autoencoder_forward.1} parent=0 // pred_check_branch
    %71 = sbr.rel (0) target = $region9
  $region8: #{autoencoder_forward.1} parent=0 // pred_region
    _
  $region9: #{autoencoder_forward.1} parent=0 // pred_fallthru
    _
  // Predicated region
  $region10: #{autoencoder_forward.1} parent=0 // pred_check
    _
  $region11: #{autoencoder_forward.1} parent=0 // pred_check_branch
    %73 = sbr.rel (0) target = $region13
  $region12: #{autoencoder_forward.1} parent=0 // pred_region
    _
  $region13: #{autoencoder_forward.1} parent=0 // pred_fallthru
    _
  // Predicated region
  $region14: #{autoencoder_forward.1} parent=0 // pred_check
    _
  $region15: #{autoencoder_forward.1} parent=0 // pred_check_branch
    %75 = sbr.rel (0) target = $region17
  $region16: #{autoencoder_forward.1} parent=0 // pred_region
    _
  $region17: #{autoencoder_forward.1} parent=0 // pred_fallthru
    _
  // Predicated region
  $region18: #{autoencoder_forward.1} parent=0 // pred_check
    _
  $region19: #{autoencoder_forward.1} parent=0 // pred_check_branch
    %77 = sbr.rel (0) target = $region21
  $region20: #{autoencoder_forward.1} parent=0 // pred_region
    _
  $region21: #{autoencoder_forward.1} parent=0 // pred_fallthru
    _
  // Predicated region
  $region22: #{autoencoder_forward.1} parent=0 // pred_check
    _
  $region23: #{autoencoder_forward.1} parent=0 // pred_check_branch
    %79 = sbr.rel (0) target = $region25
  $region24: #{autoencoder_forward.1} parent=0 // pred_region
    _
  $region25: #{autoencoder_forward.1} parent=0 // pred_fallthru
    _
  // Predicated region
  $region26: #{autoencoder_forward.1} parent=0 // pred_check
    _
  $region27: #{autoencoder_forward.1} parent=0 // pred_check_branch
    %81 = sbr.rel (0) target = $region29
  $region28: #{autoencoder_forward.1} parent=0 // pred_region
    _
  $region29: #{autoencoder_forward.1} parent=0 // pred_fallthru
    _
  // Predicated region
  $region30: #{autoencoder_forward.1} parent=0 // pred_check
    _
  $region31: #{autoencoder_forward.1} parent=0 // pred_check_branch
    %83 = sbr.rel (0) target = $region33
  $region32: #{autoencoder_forward.1} parent=0 // pred_region
    _
  $region33: #{autoencoder_forward.1} parent=0 // pred_fallthru
    _
  // Predicated region
  $region34: #{autoencoder_forward.1} parent=0 // pred_check
    _
  $region35: #{autoencoder_forward.1} parent=0 // pred_check_branch
    %85 = sbr.rel (0) target = $region37
  $region36: #{autoencoder_forward.1} parent=0 // pred_region
    _
  $region37: #{autoencoder_forward.1} parent=0 // pred_fallthru
    _
  // Predicated region
  $region38: #{autoencoder_forward.1} parent=0 // pred_check
    _
  $region39: #{autoencoder_forward.1} parent=0 // pred_check_branch
    %87 = sbr.rel (0) target = $region41
  $region40: #{autoencoder_forward.1} parent=0 // pred_region
    _
  $region41: #{autoencoder_forward.1} parent=0 // pred_fallthru
    _
  // Predicated region
  $region42: #{autoencoder_forward.1} parent=0 // pred_check
    _
  $region43: #{autoencoder_forward.1} parent=0 // pred_check_branch
    %89 = sbr.rel (0) target = $region45
  $region44: #{autoencoder_forward.1} parent=0 // pred_region
    _
  $region45: #{autoencoder_forward.1} parent=0 // pred_fallthru
    _
  // Predicated region
  $region46: #{autoencoder_forward.1} parent=0 // pred_check
    _
  $region47: #{autoencoder_forward.1} parent=0 // pred_check_branch
    %91 = sbr.rel (0) target = $region49
  $region48: #{autoencoder_forward.1} parent=0 // pred_region
    _
  $region49: #{autoencoder_forward.1} parent=0 // pred_fallthru
    _
  // Predicated region
  $region50: #{autoencoder_forward.1} parent=0 // pred_check
    _
  $region51: #{autoencoder_forward.1} parent=0 // pred_check_branch
    %93 = sbr.rel (0) target = $region53
  $region52: #{autoencoder_forward.1} parent=0 // pred_region
    _
  $region53: #{autoencoder_forward.1} parent=0 // pred_fallthru
    _
  // Predicated region
  $region54: #{autoencoder_forward.1} parent=0 // pred_check
    _
  $region55: #{autoencoder_forward.1} parent=0 // pred_check_branch
    %95 = sbr.rel (0) target = $region57
  $region56: #{autoencoder_forward.1} parent=0 // pred_region
    _
  $region57: #{autoencoder_forward.1} parent=0 // pred_fallthru
    _
  // Predicated region
  $region58: #{autoencoder_forward.1} parent=0 // pred_check
    _
  $region59: #{autoencoder_forward.1} parent=0 // pred_check_branch
    %97 = sbr.rel (0) target = $region61
  $region60: #{autoencoder_forward.1} parent=0 // pred_region
    _
  $region61: #{autoencoder_forward.1} parent=0 // pred_fallthru
    _
  // Predicated region
  $region62: #{autoencoder_forward.1} parent=0 // pred_check
    _
  $region63: #{autoencoder_forward.1} parent=0 // pred_check_branch
    %99 = sbr.rel (0) target = $region65
  $region64: #{autoencoder_forward.1} parent=0 // pred_region
    _
  $region65: #{autoencoder_forward.1} parent=0 // pred_fallthru
    _
  // Predicated region
  $region66: #{autoencoder_forward.1} parent=0 // pred_check
    _
  $region67: #{autoencoder_forward.1} parent=0 // pred_check_branch
    %101 = sbr.rel (0) target = $region69
  $region68: #{autoencoder_forward.1} parent=0 // pred_region
    _
  $region69: #{autoencoder_forward.1} parent=0 // pred_fallthru
    _
  // Predicated region
  $region70: #{autoencoder_forward.1} parent=0 // pred_check
    _
  $region71: #{autoencoder_forward.1} parent=0 // pred_check_branch
    %103 = sbr.rel (0) target = $region73
  $region72: #{autoencoder_forward.1} parent=0 // pred_region
    _
  $region73: #{autoencoder_forward.1} parent=0 // pred_fallthru
    _
  // Predicated region
  $region74: #{autoencoder_forward.1} parent=0 // pred_check
    _
  $region75: #{autoencoder_forward.1} parent=0 // pred_check_branch
    %105 = sbr.rel (0) target = $region77
  $region76: #{autoencoder_forward.1} parent=0 // pred_region
    _
  $region77: #{autoencoder_forward.1} parent=0 // pred_fallthru
    _
  // Predicated region
  $region78: #{autoencoder_forward.1} parent=0 // pred_check
    _
  $region79: #{autoencoder_forward.1} parent=0 // pred_check_branch
    %107 = sbr.rel (0) target = $region81
  $region80: #{autoencoder_forward.1} parent=0 // pred_region
    _
  $region81: #{autoencoder_forward.1} parent=0 // pred_fallthru
    _
  // Predicated region
  $region82: #{autoencoder_forward.1} parent=0 // pred_check
    _
  $region83: #{autoencoder_forward.1} parent=0 // pred_check_branch
    %109 = sbr.rel (0) target = $region85
  $region84: #{autoencoder_forward.1} parent=0 // pred_region
    _
  $region85: #{autoencoder_forward.1} parent=0 // pred_fallthru
    _
  // Predicated region
  $region86: #{autoencoder_forward.1} parent=0 // pred_check
    _
  $region87: #{autoencoder_forward.1} parent=0 // pred_check_branch
    %111 = sbr.rel (0) target = $region89
  $region88: #{autoencoder_forward.1} parent=0 // pred_region
    _
  $region89: #{autoencoder_forward.1} parent=0 // pred_fallthru
    _
  // Predicated region
  $region90: #{autoencoder_forward.1} parent=0 // pred_check
    _
  $region91: #{autoencoder_forward.1} parent=0 // pred_check_branch
    %113 = sbr.rel (0) target = $region93
  $region92: #{autoencoder_forward.1} parent=0 // pred_region
    _
  $region93: #{autoencoder_forward.1} parent=0 // pred_fallthru
    _
  // Predicated region
  $region94: #{autoencoder_forward.1} parent=0 // pred_check
    _
  $region95: #{autoencoder_forward.1} parent=0 // pred_check_branch
    %115 = sbr.rel (0) target = $region97
  $region96: #{autoencoder_forward.1} parent=0 // pred_region
    _
  $region97: #{autoencoder_forward.1} parent=0 // pred_fallthru
    _
  // Predicated region
  $region98: #{autoencoder_forward.1} parent=0 // pred_check
    _
  $region99: #{autoencoder_forward.1} parent=0 // pred_check_branch
    %117 = sbr.rel (0) target = $region101
  $region100: #{autoencoder_forward.1} parent=0 // pred_region
    _
  $region101: #{autoencoder_forward.1} parent=0 // pred_fallthru
    _
  // Predicated region
  $region102: #{autoencoder_forward.1} parent=0 // pred_check
    _
  $region103: #{autoencoder_forward.1} parent=0 // pred_check_branch
    %119 = sbr.rel (0) target = $region105
  $region104: #{autoencoder_forward.1} parent=0 // pred_region
    _
  $region105: #{autoencoder_forward.1} parent=0 // pred_fallthru
    _
  // Predicated region
  $region106: #{autoencoder_forward.1} parent=0 // pred_check
    _
  $region107: #{autoencoder_forward.1} parent=0 // pred_check_branch
    %121 = sbr.rel (0) target = $region109
  $region108: #{autoencoder_forward.1} parent=0 // pred_region
    _
  $region109: #{autoencoder_forward.1} parent=0 // pred_fallthru
    _
  // Predicated region
  $region110: #{autoencoder_forward.1} parent=0 // pred_check
    _
  $region111: #{autoencoder_forward.1} parent=0 // pred_check_branch
    %123 = sbr.rel (0) target = $region113
  $region112: #{autoencoder_forward.1} parent=0 // pred_region
    _
  $region113: #{autoencoder_forward.1} parent=0 // pred_fallthru
    _
  // Predicated region
  $region114: #{autoencoder_forward.1} parent=0 // pred_check
    _
  $region115: #{autoencoder_forward.1} parent=0 // pred_check_branch
    %125 = sbr.rel (0) target = $region117
  $region116: #{autoencoder_forward.1} parent=0 // pred_region
    _
  $region117: #{autoencoder_forward.1} parent=0 // pred_fallthru
    _
  // Predicated region
  $region118: #{autoencoder_forward.1} parent=0 // pred_check
    _
  $region119: #{autoencoder_forward.1} parent=0 // pred_check_branch
    %127 = sbr.rel (0) target = $region121
  $region120: #{autoencoder_forward.1} parent=0 // pred_region
    _
  $region121: #{autoencoder_forward.1} parent=0 // pred_fallthru
    _
  // Predicated region
  $region122: #{autoencoder_forward.1} parent=0 // pred_check
    _
  $region123: #{autoencoder_forward.1} parent=0 // pred_check_branch
    %129 = sbr.rel (0) target = $region125
  $region124: #{autoencoder_forward.1} parent=0 // pred_region
    _
  $region125: #{autoencoder_forward.1} parent=0 // pred_fallthru
    _
  %v130 = vld [vmem:[%s1] sm:$0xff]
  %v131 = vld [vmem:[%s1 + $0x8] sm:$0xff]
  %v132 = vld [vmem:[%s1 + $0x10] sm:$0xff]
  %v133 = vld [vmem:[%s1 + $0x18] sm:$0xf]
  %v134 = vld [vmem:[%s3] sm:$0xff]
  %v135 = vld [vmem:[%s3 + $0x8] sm:$0xff]
  %v136 = vld [vmem:[%s3 + $0x10] sm:$0xff]
  %v137 = vld [vmem:[%s3 + $0x18] sm:$0xff]
  %v138 = vld [vmem:[%s3 + $0x20] sm:$0xff]
  %v139 = vld [vmem:[%s3 + $0x28] sm:$0xff]
  %v140 = vld [vmem:[%s3 + $0x30] sm:$0xff]
  %v141 = vld [vmem:[%s5] sm:$0xff]
  %v142 = vld [vmem:[%s5 + $0x8] sm:$0xff]
  %v143 = vld [vmem:[%s5 + $0x10] sm:$0xff]
  %v144 = vld [vmem:[%s5 + $0x18] sm:$0xff]
  %v145 = vld [vmem:[%s5 + $0x20] sm:$0xff]
  %v146 = vld [vmem:[%s5 + $0x28] sm:$0xff]
  %v147 = vld [vmem:[%s5 + $0x30] sm:$0xff]
  %v148 = vld [vmem:[%s5 + $0x38] sm:$0xff]
  %v149 = vld [vmem:[%s5 + $0x40] sm:$0xff]
  %v150 = vld [vmem:[%s5 + $0x48] sm:$0xff]
  %v151 = vld [vmem:[%s5 + $0x50] sm:$0xff]
  %v152 = vld [vmem:[%s5 + $0x58] sm:$0xff]
  %v153 = vld [vmem:[%s5 + $0x60] sm:$0xff]
  %v154 = vld [vmem:[%s5 + $0x68] sm:$0xff]
  %v155 = vld [vmem:[%s5 + $0x70] sm:$0xff]
  %v156 = vld [vmem:[%s5 + $0x78] sm:$0xff]
  %157 = vmatprep.subr.mxu0 0.0
  %158 = vmatpush1.msra.mxu0 %v141
  %159 = vmatprep.subr.mxu0 0.0
  %160 = vmatpush1.msra.mxu0 %v142
  %161 = vmatprep.subr.mxu0 0.0
  %162 = vmatpush1.msra.mxu0 %v143
  %163 = vmatprep.subr.mxu0 0.0
  %164 = vmatpush1.msra.mxu0 %v144
  %165 = vmatprep.subr.mxu0 0.0
  %166 = vmatpush1.msra.mxu0 %v145
  %167 = vmatprep.subr.mxu0 0.0
  %168 = vmatpush1.msra.mxu0 %v146
  %169 = vmatprep.subr.mxu0 0.0
  %170 = vmatpush1.msra.mxu0 %v147
  %171 = vmatprep.subr.mxu0 0.0
  %172 = vmatpush1.msra.mxu0 %v148
  %173 = vmatprep.subr.mxu0 0.0
  %174 = vmatpush1.msra.mxu0 %v149
  %175 = vmatprep.subr.mxu0 0.0
  %176 = vmatpush1.msra.mxu0 %v150
  %177 = vmatprep.subr.mxu0 0.0
  %178 = vmatpush1.msra.mxu0 %v151
  %179 = vmatprep.subr.mxu0 0.0
  %180 = vmatpush1.msra.mxu0 %v152
  %181 = vmatprep.subr.mxu0 0.0
  %182 = vmatpush1.msra.mxu0 %v153
  %183 = vmatprep.subr.mxu0 0.0
  %184 = vmatpush1.msra.mxu0 %v154
  %185 = vmatprep.subr.mxu0 0.0
  %186 = vmatpush1.msra.mxu0 %v155
  %187 = vmatprep.subr.mxu0 0.0
  %188 = vmatpush1.msra.mxu0 %v156
  %189 = vmatprep.subr.mxu0 0.0
  %190 = vmatpush1.msra.mxu0 0.0
  %191 = vmatprep.subr.mxu0 0.0
  %192 = vmatpush1.msra.mxu0 0.0
  %193 = vmatprep.subr.mxu0 0.0
  %194 = vmatpush1.msra.mxu0 0.0
  %195 = vmatprep.subr.mxu0 0.0
  %196 = vmatpush1.msra.mxu0 0.0
  %197 = vmatprep.subr.mxu0 0.0
  %198 = vmatpush1.msra.mxu0 0.0
  %199 = vmatprep.subr.mxu0 0.0
  %200 = vmatpush1.msra.mxu0 0.0
  %201 = vmatprep.subr.mxu0 0.0
  %202 = vmatpush1.msra.mxu0 0.0
  %203 = vmatprep.subr.mxu0 0.0
  %204 = vmatpush1.msra.mxu0 0.0
  %205 = vmatprep.subr.mxu0 0.0
  %206 = vmatpush1.msra.mxu0 0.0
  %207 = vmatprep.subr.mxu0 0.0
  %208 = vmatpush1.msra.mxu0 0.0
  %209 = vmatprep.subr.mxu0 0.0
  %210 = vmatpush1.msra.mxu0 0.0
  %211 = vmatprep.subr.mxu0 0.0
  %212 = vmatpush1.msra.mxu0 0.0
  %213 = vmatprep.subr.mxu0 0.0
  %214 = vmatpush1.msra.mxu0 0.0
  %215 = vmatprep.subr.mxu0 0.0
  %216 = vmatpush1.msra.mxu0 0.0
  %217 = vmatprep.subr.mxu0 0.0
  %218 = vmatpush1.msra.mxu0 0.0
  %219 = vmatprep.subr.mxu0 0.0
  %220 = vmatpush1.msra.mxu0 0.0
  %221 = vmatprep.mubr.f32.mxu0 0.0
  %222 = vmatmul.mubr.f32.gmra.mrb[0].mxu0 %v130
  %v223 = vpop.f32.mrb[0].mxu0
  %v224 = vadd.f32 0.0, %v223
  %v225 = vpop.f32.mrb[0].mxu0
  %226 = vmatprep.mubr.f32.mxu0 0.0
  %227 = vmatmul.mubr.f32.gmra.mrb[0].mxu0 %v131
  %v228 = vpop.f32.mrb[0].mxu0
  %v229 = vadd.f32 0.0, %v228
  %v230 = vpop.f32.mrb[0].mxu0
  %231 = vmatprep.mubr.f32.mxu0 0.0
  %232 = vmatmul.mubr.f32.gmra.mrb[0].mxu0 %v132
  %v233 = vpop.f32.mrb[0].mxu0
  %v234 = vadd.f32 0.0, %v233
  %v235 = vpop.f32.mrb[0].mxu0
  %236 = vmatprep.mubr.f32.mxu0 0.0
  %237 = vmatmul.mubr.f32.gmra.mrb[0].mxu0 %v133
  %v238 = vpop.f32.mrb[0].mxu0
  %v239 = vadd.f32 0.0, %v238
  %v240 = vpop.f32.mrb[0].mxu0
  %241 = vdwg.mxu0
  %s242 = scalar_lea.vmem %s3, 56
  %v243 = vld [vmem:[%s242] sm:$0xff]
  %v244 = vld [vmem:[%s242 + $0x8] sm:$0xff]
  %v245 = vld [vmem:[%s242 + $0x10] sm:$0xff]
  %v246 = vld [vmem:[%s242 + $0x18] sm:$0xff]
  %v247 = vld [vmem:[%s242 + $0x20] sm:$0xff]
  %v248 = vld [vmem:[%s242 + $0x28] sm:$0xff]
  %v249 = vld [vmem:[%s242 + $0x30] sm:$0xff]
  %s250 = scalar_lea.vmem %s5, 128
  %v251 = vld [vmem:[%s250] sm:$0xff]
  %v252 = vld [vmem:[%s250 + $0x8] sm:$0xff]
  %v253 = vld [vmem:[%s250 + $0x10] sm:$0xff]
  %v254 = vld [vmem:[%s250 + $0x18] sm:$0xff]
  %v255 = vld [vmem:[%s250 + $0x20] sm:$0xff]
  %v256 = vld [vmem:[%s250 + $0x28] sm:$0xff]
  %v257 = vld [vmem:[%s250 + $0x30] sm:$0xff]
  %v258 = vld [vmem:[%s250 + $0x38] sm:$0xff]
  %v259 = vld [vmem:[%s250 + $0x40] sm:$0xff]
  %v260 = vld [vmem:[%s250 + $0x48] sm:$0xff]
  %v261 = vld [vmem:[%s250 + $0x50] sm:$0xff]
  %v262 = vld [vmem:[%s250 + $0x58] sm:$0xff]
  %v263 = vld [vmem:[%s250 + $0x60] sm:$0xff]
  %v264 = vld [vmem:[%s250 + $0x68] sm:$0xff]
  %v265 = vld [vmem:[%s250 + $0x70] sm:$0xff]
  %v266 = vld [vmem:[%s250 + $0x78] sm:$0xff]
  %267 = vmatprep.subr.mxu0 0.0
  %268 = vmatpush1.msra.mxu0 %v251
  %269 = vmatprep.subr.mxu0 0.0
  %270 = vmatpush1.msra.mxu0 %v252
  %271 = vmatprep.subr.mxu0 0.0
  %272 = vmatpush1.msra.mxu0 %v253
  %273 = vmatprep.subr.mxu0 0.0
  %274 = vmatpush1.msra.mxu0 %v254
  %275 = vmatprep.subr.mxu0 0.0
  %276 = vmatpush1.msra.mxu0 %v255
  %277 = vmatprep.subr.mxu0 0.0
  %278 = vmatpush1.msra.mxu0 %v256
  %279 = vmatprep.subr.mxu0 0.0
  %280 = vmatpush1.msra.mxu0 %v257
  %281 = vmatprep.subr.mxu0 0.0
  %282 = vmatpush1.msra.mxu0 %v258
  %283 = vmatprep.subr.mxu0 0.0
  %284 = vmatpush1.msra.mxu0 %v259
  %285 = vmatprep.subr.mxu0 0.0
  %286 = vmatpush1.msra.mxu0 %v260
  %287 = vmatprep.subr.mxu0 0.0
  %288 = vmatpush1.msra.mxu0 %v261
  %289 = vmatprep.subr.mxu0 0.0
  %290 = vmatpush1.msra.mxu0 %v262
  %291 = vmatprep.subr.mxu0 0.0
  %292 = vmatpush1.msra.mxu0 %v263
  %293 = vmatprep.subr.mxu0 0.0
  %294 = vmatpush1.msra.mxu0 %v264
  %295 = vmatprep.subr.mxu0 0.0
  %296 = vmatpush1.msra.mxu0 %v265
  %297 = vmatprep.subr.mxu0 0.0
  %298 = vmatpush1.msra.mxu0 %v266
  %299 = vmatprep.subr.mxu0 0.0
  %300 = vmatpush1.msra.mxu0 0.0
  %301 = vmatprep.subr.mxu0 0.0
  %302 = vmatpush1.msra.mxu0 0.0
  %303 = vmatprep.subr.mxu0 0.0
  %304 = vmatpush1.msra.mxu0 0.0
  %305 = vmatprep.subr.mxu0 0.0
  %306 = vmatpush1.msra.mxu0 0.0
  %307 = vmatprep.subr.mxu0 0.0
  %308 = vmatpush1.msra.mxu0 0.0
  %309 = vmatprep.subr.mxu0 0.0
  %310 = vmatpush1.msra.mxu0 0.0
  %311 = vmatprep.subr.mxu0 0.0
  %312 = vmatpush1.msra.mxu0 0.0
  %313 = vmatprep.subr.mxu0 0.0
  %314 = vmatpush1.msra.mxu0 0.0
  %315 = vmatprep.subr.mxu0 0.0
  %316 = vmatpush1.msra.mxu0 0.0
  %317 = vmatprep.subr.mxu0 0.0
  %318 = vmatpush1.msra.mxu0 0.0
  %319 = vmatprep.subr.mxu0 0.0
  %320 = vmatpush1.msra.mxu0 0.0
  %321 = vmatprep.subr.mxu0 0.0
  %322 = vmatpush1.msra.mxu0 0.0
  %323 = vmatprep.subr.mxu0 0.0
  %324 = vmatpush1.msra.mxu0 0.0
  %325 = vmatprep.subr.mxu0 0.0
  %326 = vmatpush1.msra.mxu0 0.0
  %327 = vmatprep.subr.mxu0 0.0
  %328 = vmatpush1.msra.mxu0 0.0
  %329 = vmatprep.subr.mxu0 0.0
  %330 = vmatpush1.msra.mxu0 0.0
  %331 = vmatprep.mubr.f32.mxu0 0.0
  %332 = vmatmul.mubr.f32.gmra.mrb[0].mxu0 %v130
  %v333 = vpop.f32.mrb[0].mxu0
  %v334 = vadd.f32 0.0, %v333
  %v335 = vpop.f32.mrb[0].mxu0
  %336 = vmatprep.mubr.f32.mxu0 0.0
  %337 = vmatmul.mubr.f32.gmra.mrb[0].mxu0 %v131
  %v338 = vpop.f32.mrb[0].mxu0
  %v339 = vadd.f32 0.0, %v338
  %v340 = vpop.f32.mrb[0].mxu0
  %341 = vmatprep.mubr.f32.mxu0 0.0
  %342 = vmatmul.mubr.f32.gmra.mrb[0].mxu0 %v132
  %v343 = vpop.f32.mrb[0].mxu0
  %v344 = vadd.f32 0.0, %v343
  %v345 = vpop.f32.mrb[0].mxu0
  %346 = vmatprep.mubr.f32.mxu0 0.0
  %347 = vmatmul.mubr.f32.gmra.mrb[0].mxu0 %v133
  %v348 = vpop.f32.mrb[0].mxu0
  %v349 = vadd.f32 0.0, %v348
  %v350 = vpop.f32.mrb[0].mxu0
  %351 = vdwg.mxu0
  %vm352 = vcmask 228352
  %v354 = vsel %vm352, %v243, 0
  %v357 = vsel %vm352, %v244, 0
  %v360 = vsel %vm352, %v245, 0
  %v363 = vsel %vm352, %v246, 0
  %v366 = vsel %vm352, %v247, 0
  %v369 = vsel %vm352, %v248, 0
  %v372 = vsel %vm352, %v249, 0
  %vm374 = vcmask 1043456
  %v376 = vsel %vm374, %v349, 0
  %378 = vmatprep.subr.mxu0 0.0
  %379 = vmatpush1.msra.mxu0 %v334
  %380 = vmatprep.subr.mxu0 0.0
  %381 = vmatpush1.msra.mxu0 %v339
  %382 = vmatprep.subr.mxu0 0.0
  %383 = vmatpush1.msra.mxu0 %v344
  %384 = vmatprep.subr.mxu0 0.0
  %385 = vmatpush1.msra.mxu0 %v376
  %386 = vmatprep.subr.mxu0 0.0
  %387 = vmatpush1.msra.mxu0 0.0
  %388 = vmatprep.subr.mxu0 0.0
  %389 = vmatpush1.msra.mxu0 0.0
  %390 = vmatprep.subr.mxu0 0.0
  %391 = vmatpush1.msra.mxu0 0.0
  %392 = vmatprep.subr.mxu0 0.0
  %393 = vmatpush1.msra.mxu0 0.0
  %394 = vmatprep.subr.mxu0 0.0
  %395 = vmatpush1.msra.mxu0 0.0
  %396 = vmatprep.subr.mxu0 0.0
  %397 = vmatpush1.msra.mxu0 0.0
  %398 = vmatprep.subr.mxu0 0.0
  %399 = vmatpush1.msra.mxu0 0.0
  %400 = vmatprep.subr.mxu0 0.0
  %401 = vmatpush1.msra.mxu0 0.0
  %402 = vmatprep.subr.mxu0 0.0
  %403 = vmatpush1.msra.mxu0 0.0
  %404 = vmatprep.subr.mxu0 0.0
  %405 = vmatpush1.msra.mxu0 0.0
  %406 = vmatprep.subr.mxu0 0.0
  %407 = vmatpush1.msra.mxu0 0.0
  %408 = vmatprep.subr.mxu0 0.0
  %409 = vmatpush1.msra.mxu0 0.0
  %410 = vmatprep.subr.mxu0 0.0
  %411 = vmatpush1.msra.mxu0 0.0
  %412 = vmatprep.subr.mxu0 0.0
  %413 = vmatpush1.msra.mxu0 0.0
  %414 = vmatprep.subr.mxu0 0.0
  %415 = vmatpush1.msra.mxu0 0.0
  %416 = vmatprep.subr.mxu0 0.0
  %417 = vmatpush1.msra.mxu0 0.0
  %418 = vmatprep.subr.mxu0 0.0
  %419 = vmatpush1.msra.mxu0 0.0
  %420 = vmatprep.subr.mxu0 0.0
  %421 = vmatpush1.msra.mxu0 0.0
  %422 = vmatprep.subr.mxu0 0.0
  %423 = vmatpush1.msra.mxu0 0.0
  %424 = vmatprep.subr.mxu0 0.0
  %425 = vmatpush1.msra.mxu0 0.0
  %426 = vmatprep.subr.mxu0 0.0
  %427 = vmatpush1.msra.mxu0 0.0
  %428 = vmatprep.subr.mxu0 0.0
  %429 = vmatpush1.msra.mxu0 0.0
  %430 = vmatprep.subr.mxu0 0.0
  %431 = vmatpush1.msra.mxu0 0.0
  %432 = vmatprep.subr.mxu0 0.0
  %433 = vmatpush1.msra.mxu0 0.0
  %434 = vmatprep.subr.mxu0 0.0
  %435 = vmatpush1.msra.mxu0 0.0
  %436 = vmatprep.subr.mxu0 0.0
  %437 = vmatpush1.msra.mxu0 0.0
  %438 = vmatprep.subr.mxu0 0.0
  %439 = vmatpush1.msra.mxu0 0.0
  %440 = vmatprep.subr.mxu0 0.0
  %441 = vmatpush1.msra.mxu0 0.0
  %442 = vmatprep.mubr.f32.mxu0 0.0
  %443 = vmatmul.mubr.f32.gmra.mrb[0].mxu0 %v354
  %v444 = vpop.f32.mrb[0].mxu0
  %v445 = vadd.f32 0.0, %v444
  %v446 = vpop.f32.mrb[0].mxu0
  %447 = vmatprep.mubr.f32.mxu0 0.0
  %448 = vmatmul.mubr.f32.gmra.mrb[0].mxu0 %v357
  %v449 = vpop.f32.mrb[0].mxu0
  %v450 = vadd.f32 0.0, %v449
  %v451 = vpop.f32.mrb[0].mxu0
  %452 = vmatprep.mubr.f32.mxu0 0.0
  %453 = vmatmul.mubr.f32.gmra.mrb[0].mxu0 %v360
  %v454 = vpop.f32.mrb[0].mxu0
  %v455 = vadd.f32 0.0, %v454
  %v456 = vpop.f32.mrb[0].mxu0
  %457 = vmatprep.mubr.f32.mxu0 0.0
  %458 = vmatmul.mubr.f32.gmra.mrb[0].mxu0 %v363
  %v459 = vpop.f32.mrb[0].mxu0
  %v460 = vadd.f32 0.0, %v459
  %v461 = vpop.f32.mrb[0].mxu0
  %462 = vmatprep.mubr.f32.mxu0 0.0
  %463 = vmatmul.mubr.f32.gmra.mrb[0].mxu0 %v366
  %v464 = vpop.f32.mrb[0].mxu0
  %v465 = vadd.f32 0.0, %v464
  %v466 = vpop.f32.mrb[0].mxu0
  %467 = vmatprep.mubr.f32.mxu0 0.0
  %468 = vmatmul.mubr.f32.gmra.mrb[0].mxu0 %v369
  %v469 = vpop.f32.mrb[0].mxu0
  %v470 = vadd.f32 0.0, %v469
  %v471 = vpop.f32.mrb[0].mxu0
  %472 = vmatprep.mubr.f32.mxu0 0.0
  %473 = vmatmul.mubr.f32.gmra.mrb[0].mxu0 %v372
  %v474 = vpop.f32.mrb[0].mxu0
  %v475 = vadd.f32 0.0, %v474
  %v476 = vpop.f32.mrb[0].mxu0
  %477 = vdwg.mxu0
  %v479 = vsel %vm352, %v134, 0
  %v482 = vsel %vm352, %v135, 0
  %v485 = vsel %vm352, %v136, 0
  %v488 = vsel %vm352, %v137, 0
  %v491 = vsel %vm352, %v138, 0
  %v494 = vsel %vm352, %v139, 0
  %v497 = vsel %vm352, %v140, 0
  %v500 = vsel %vm374, %v239, 0
  %502 = vmatprep.subr.mxu0 0.0
  %503 = vmatpush1.msra.mxu0 %v224
  %504 = vmatprep.subr.mxu0 0.0
  %505 = vmatpush1.msra.mxu0 %v229
  %506 = vmatprep.subr.mxu0 0.0
  %507 = vmatpush1.msra.mxu0 %v234
  %508 = vmatprep.subr.mxu0 0.0
  %509 = vmatpush1.msra.mxu0 %v500
  %510 = vmatprep.subr.mxu0 0.0
  %511 = vmatpush1.msra.mxu0 0.0
  %512 = vmatprep.subr.mxu0 0.0
  %513 = vmatpush1.msra.mxu0 0.0
  %514 = vmatprep.subr.mxu0 0.0
  %515 = vmatpush1.msra.mxu0 0.0
  %516 = vmatprep.subr.mxu0 0.0
  %517 = vmatpush1.msra.mxu0 0.0
  %518 = vmatprep.subr.mxu0 0.0
  %519 = vmatpush1.msra.mxu0 0.0
  %520 = vmatprep.subr.mxu0 0.0
  %521 = vmatpush1.msra.mxu0 0.0
  %522 = vmatprep.subr.mxu0 0.0
  %523 = vmatpush1.msra.mxu0 0.0
  %524 = vmatprep.subr.mxu0 0.0
  %525 = vmatpush1.msra.mxu0 0.0
  %526 = vmatprep.subr.mxu0 0.0
  %527 = vmatpush1.msra.mxu0 0.0
  %528 = vmatprep.subr.mxu0 0.0
  %529 = vmatpush1.msra.mxu0 0.0
  %530 = vmatprep.subr.mxu0 0.0
  %531 = vmatpush1.msra.mxu0 0.0
  %532 = vmatprep.subr.mxu0 0.0
  %533 = vmatpush1.msra.mxu0 0.0
  %534 = vmatprep.subr.mxu0 0.0
  %535 = vmatpush1.msra.mxu0 0.0
  %536 = vmatprep.subr.mxu0 0.0
  %537 = vmatpush1.msra.mxu0 0.0
  %538 = vmatprep.subr.mxu0 0.0
  %539 = vmatpush1.msra.mxu0 0.0
  %540 = vmatprep.subr.mxu0 0.0
  %541 = vmatpush1.msra.mxu0 0.0
  %542 = vmatprep.subr.mxu0 0.0
  %543 = vmatpush1.msra.mxu0 0.0
  %544 = vmatprep.subr.mxu0 0.0
  %545 = vmatpush1.msra.mxu0 0.0
  %546 = vmatprep.subr.mxu0 0.0
  %547 = vmatpush1.msra.mxu0 0.0
  %548 = vmatprep.subr.mxu0 0.0
  %549 = vmatpush1.msra.mxu0 0.0
  %550 = vmatprep.subr.mxu0 0.0
  %551 = vmatpush1.msra.mxu0 0.0
  %552 = vmatprep.subr.mxu0 0.0
  %553 = vmatpush1.msra.mxu0 0.0
  %554 = vmatprep.subr.mxu0 0.0
  %555 = vmatpush1.msra.mxu0 0.0
  %556 = vmatprep.subr.mxu0 0.0
  %557 = vmatpush1.msra.mxu0 0.0
  %558 = vmatprep.subr.mxu0 0.0
  %559 = vmatpush1.msra.mxu0 0.0
  %560 = vmatprep.subr.mxu0 0.0
  %561 = vmatpush1.msra.mxu0 0.0
  %562 = vmatprep.subr.mxu0 0.0
  %563 = vmatpush1.msra.mxu0 0.0
  %564 = vmatprep.subr.mxu0 0.0
  %565 = vmatpush1.msra.mxu0 0.0
  %566 = vmatprep.mubr.f32.mxu0 0.0
  %567 = vmatmul.mubr.f32.gmra.mrb[0].mxu0 %v479
  %v568 = vpop.f32.mrb[0].mxu0
  %v569 = vadd.f32 %v445, %v568
  %v570 = vpop.f32.mrb[0].mxu0
  %571 = vmatprep.mubr.f32.mxu0 0.0
  %572 = vmatmul.mubr.f32.gmra.mrb[0].mxu0 %v482
  %v573 = vpop.f32.mrb[0].mxu0
  %v574 = vadd.f32 %v450, %v573
  %v575 = vpop.f32.mrb[0].mxu0
  %576 = vmatprep.mubr.f32.mxu0 0.0
  %577 = vmatmul.mubr.f32.gmra.mrb[0].mxu0 %v485
  %v578 = vpop.f32.mrb[0].mxu0
  %v579 = vadd.f32 %v455, %v578
  %v580 = vpop.f32.mrb[0].mxu0
  %581 = vmatprep.mubr.f32.mxu0 0.0
  %582 = vmatmul.mubr.f32.gmra.mrb[0].mxu0 %v488
  %v583 = vpop.f32.mrb[0].mxu0
  %v584 = vadd.f32 %v460, %v583
  %v585 = vpop.f32.mrb[0].mxu0
  %586 = vmatprep.mubr.f32.mxu0 0.0
  %587 = vmatmul.mubr.f32.gmra.mrb[0].mxu0 %v491
  %v588 = vpop.f32.mrb[0].mxu0
  %v589 = vadd.f32 %v465, %v588
  %v590 = vpop.f32.mrb[0].mxu0
  %591 = vmatprep.mubr.f32.mxu0 0.0
  %592 = vmatmul.mubr.f32.gmra.mrb[0].mxu0 %v494
  %v593 = vpop.f32.mrb[0].mxu0
  %v594 = vadd.f32 %v470, %v593
  %v595 = vpop.f32.mrb[0].mxu0
  %596 = vmatprep.mubr.f32.mxu0 0.0
  %597 = vmatmul.mubr.f32.gmra.mrb[0].mxu0 %v497
  %v598 = vpop.f32.mrb[0].mxu0
  %v599 = vadd.f32 %v475, %v598
  %v600 = vpop.f32.mrb[0].mxu0
  %601 = vdwg.mxu0
  %s602 = scalar_lea.vmem %s3, 112
  %v603 = vld [vmem:[%s602] sm:$0xff]
  %v604 = vld [vmem:[%s602 + $0x8] sm:$0xff]
  %v605 = vld [vmem:[%s602 + $0x10] sm:$0xff]
  %v606 = vld [vmem:[%s602 + $0x18] sm:$0xff]
  %v607 = vld [vmem:[%s602 + $0x20] sm:$0xff]
  %v608 = vld [vmem:[%s602 + $0x28] sm:$0xff]
  %v609 = vld [vmem:[%s602 + $0x30] sm:$0xff]
  %s610 = scalar_lea.vmem %s5, 256
  %v611 = vld [vmem:[%s610] sm:$0xff]
  %v612 = vld [vmem:[%s610 + $0x8] sm:$0xff]
  %v613 = vld [vmem:[%s610 + $0x10] sm:$0xff]
  %v614 = vld [vmem:[%s610 + $0x18] sm:$0xff]
  %v615 = vld [vmem:[%s610 + $0x20] sm:$0xff]
  %v616 = vld [vmem:[%s610 + $0x28] sm:$0xff]
  %v617 = vld [vmem:[%s610 + $0x30] sm:$0xff]
  %v618 = vld [vmem:[%s610 + $0x38] sm:$0xff]
  %v619 = vld [vmem:[%s610 + $0x40] sm:$0xff]
  %v620 = vld [vmem:[%s610 + $0x48] sm:$0xff]
  %v621 = vld [vmem:[%s610 + $0x50] sm:$0xff]
  %v622 = vld [vmem:[%s610 + $0x58] sm:$0xff]
  %v623 = vld [vmem:[%s610 + $0x60] sm:$0xff]
  %v624 = vld [vmem:[%s610 + $0x68] sm:$0xff]
  %v625 = vld [vmem:[%s610 + $0x70] sm:$0xff]
  %v626 = vld [vmem:[%s610 + $0x78] sm:$0xff]
  %627 = vmatprep.subr.mxu0 0.0
  %628 = vmatpush1.msra.mxu0 %v611
  %629 = vmatprep.subr.mxu0 0.0
  %630 = vmatpush1.msra.mxu0 %v612
  %631 = vmatprep.subr.mxu0 0.0
  %632 = vmatpush1.msra.mxu0 %v613
  %633 = vmatprep.subr.mxu0 0.0
  %634 = vmatpush1.msra.mxu0 %v614
  %635 = vmatprep.subr.mxu0 0.0
  %636 = vmatpush1.msra.mxu0 %v615
  %637 = vmatprep.subr.mxu0 0.0
  %638 = vmatpush1.msra.mxu0 %v616
  %639 = vmatprep.subr.mxu0 0.0
  %640 = vmatpush1.msra.mxu0 %v617
  %641 = vmatprep.subr.mxu0 0.0
  %642 = vmatpush1.msra.mxu0 %v618
  %643 = vmatprep.subr.mxu0 0.0
  %644 = vmatpush1.msra.mxu0 %v619
  %645 = vmatprep.subr.mxu0 0.0
  %646 = vmatpush1.msra.mxu0 %v620
  %647 = vmatprep.subr.mxu0 0.0
  %648 = vmatpush1.msra.mxu0 %v621
  %649 = vmatprep.subr.mxu0 0.0
  %650 = vmatpush1.msra.mxu0 %v622
  %651 = vmatprep.subr.mxu0 0.0
  %652 = vmatpush1.msra.mxu0 %v623
  %653 = vmatprep.subr.mxu0 0.0
  %654 = vmatpush1.msra.mxu0 %v624
  %655 = vmatprep.subr.mxu0 0.0
  %656 = vmatpush1.msra.mxu0 %v625
  %657 = vmatprep.subr.mxu0 0.0
  %658 = vmatpush1.msra.mxu0 %v626
  %659 = vmatprep.subr.mxu0 0.0
  %660 = vmatpush1.msra.mxu0 0.0
  %661 = vmatprep.subr.mxu0 0.0
  %662 = vmatpush1.msra.mxu0 0.0
  %663 = vmatprep.subr.mxu0 0.0
  %664 = vmatpush1.msra.mxu0 0.0
  %665 = vmatprep.subr.mxu0 0.0
  %666 = vmatpush1.msra.mxu0 0.0
  %667 = vmatprep.subr.mxu0 0.0
  %668 = vmatpush1.msra.mxu0 0.0
  %669 = vmatprep.subr.mxu0 0.0
  %670 = vmatpush1.msra.mxu0 0.0
  %671 = vmatprep.subr.mxu0 0.0
  %672 = vmatpush1.msra.mxu0 0.0
  %673 = vmatprep.subr.mxu0 0.0
  %674 = vmatpush1.msra.mxu0 0.0
  %675 = vmatprep.subr.mxu0 0.0
  %676 = vmatpush1.msra.mxu0 0.0
  %677 = vmatprep.subr.mxu0 0.0
  %678 = vmatpush1.msra.mxu0 0.0
  %679 = vmatprep.subr.mxu0 0.0
  %680 = vmatpush1.msra.mxu0 0.0
  %681 = vmatprep.subr.mxu0 0.0
  %682 = vmatpush1.msra.mxu0 0.0
  %683 = vmatprep.subr.mxu0 0.0
  %684 = vmatpush1.msra.mxu0 0.0
  %685 = vmatprep.subr.mxu0 0.0
  %686 = vmatpush1.msra.mxu0 0.0
  %687 = vmatprep.subr.mxu0 0.0
  %688 = vmatpush1.msra.mxu0 0.0
  %689 = vmatprep.subr.mxu0 0.0
  %690 = vmatpush1.msra.mxu0 0.0
  %691 = vmatprep.mubr.f32.mxu0 0.0
  %692 = vmatmul.mubr.f32.gmra.mrb[0].mxu0 %v130
  %v693 = vpop.f32.mrb[0].mxu0
  %v694 = vadd.f32 0.0, %v693
  %v695 = vpop.f32.mrb[0].mxu0
  %696 = vmatprep.mubr.f32.mxu0 0.0
  %697 = vmatmul.mubr.f32.gmra.mrb[0].mxu0 %v131
  %v698 = vpop.f32.mrb[0].mxu0
  %v699 = vadd.f32 0.0, %v698
  %v700 = vpop.f32.mrb[0].mxu0
  %701 = vmatprep.mubr.f32.mxu0 0.0
  %702 = vmatmul.mubr.f32.gmra.mrb[0].mxu0 %v132
  %v703 = vpop.f32.mrb[0].mxu0
  %v704 = vadd.f32 0.0, %v703
  %v705 = vpop.f32.mrb[0].mxu0
  %706 = vmatprep.mubr.f32.mxu0 0.0
  %707 = vmatmul.mubr.f32.gmra.mrb[0].mxu0 %v133
  %v708 = vpop.f32.mrb[0].mxu0
  %v709 = vadd.f32 0.0, %v708
  %v710 = vpop.f32.mrb[0].mxu0
  %711 = vdwg.mxu0
  %v713 = vsel %vm352, %v603, 0
  %v716 = vsel %vm352, %v604, 0
  %v719 = vsel %vm352, %v605, 0
  %v722 = vsel %vm352, %v606, 0
  %v725 = vsel %vm352, %v607, 0
  %v728 = vsel %vm352, %v608, 0
  %v731 = vsel %vm352, %v609, 0
  %v734 = vsel %vm374, %v709, 0
  %736 = vmatprep.subr.mxu0 0.0
  %737 = vmatpush1.msra.mxu0 %v694
  %738 = vmatprep.subr.mxu0 0.0
  %739 = vmatpush1.msra.mxu0 %v699
  %740 = vmatprep.subr.mxu0 0.0
  %741 = vmatpush1.msra.mxu0 %v704
  %742 = vmatprep.subr.mxu0 0.0
  %743 = vmatpush1.msra.mxu0 %v734
  %744 = vmatprep.subr.mxu0 0.0
  %745 = vmatpush1.msra.mxu0 0.0
  %746 = vmatprep.subr.mxu0 0.0
  %747 = vmatpush1.msra.mxu0 0.0
  %748 = vmatprep.subr.mxu0 0.0
  %749 = vmatpush1.msra.mxu0 0.0
  %750 = vmatprep.subr.mxu0 0.0
  %751 = vmatpush1.msra.mxu0 0.0
  %752 = vmatprep.subr.mxu0 0.0
  %753 = vmatpush1.msra.mxu0 0.0
  %754 = vmatprep.subr.mxu0 0.0
  %755 = vmatpush1.msra.mxu0 0.0
  %756 = vmatprep.subr.mxu0 0.0
  %757 = vmatpush1.msra.mxu0 0.0
  %758 = vmatprep.subr.mxu0 0.0
  %759 = vmatpush1.msra.mxu0 0.0
  %760 = vmatprep.subr.mxu0 0.0
  %761 = vmatpush1.msra.mxu0 0.0
  %762 = vmatprep.subr.mxu0 0.0
  %763 = vmatpush1.msra.mxu0 0.0
  %764 = vmatprep.subr.mxu0 0.0
  %765 = vmatpush1.msra.mxu0 0.0
  %766 = vmatprep.subr.mxu0 0.0
  %767 = vmatpush1.msra.mxu0 0.0
  %768 = vmatprep.subr.mxu0 0.0
  %769 = vmatpush1.msra.mxu0 0.0
  %770 = vmatprep.subr.mxu0 0.0
  %771 = vmatpush1.msra.mxu0 0.0
  %772 = vmatprep.subr.mxu0 0.0
  %773 = vmatpush1.msra.mxu0 0.0
  %774 = vmatprep.subr.mxu0 0.0
  %775 = vmatpush1.msra.mxu0 0.0
  %776 = vmatprep.subr.mxu0 0.0
  %777 = vmatpush1.msra.mxu0 0.0
  %778 = vmatprep.subr.mxu0 0.0
  %779 = vmatpush1.msra.mxu0 0.0
  %780 = vmatprep.subr.mxu0 0.0
  %781 = vmatpush1.msra.mxu0 0.0
  %782 = vmatprep.subr.mxu0 0.0
  %783 = vmatpush1.msra.mxu0 0.0
  %784 = vmatprep.subr.mxu0 0.0
  %785 = vmatpush1.msra.mxu0 0.0
  %786 = vmatprep.subr.mxu0 0.0
  %787 = vmatpush1.msra.mxu0 0.0
  %788 = vmatprep.subr.mxu0 0.0
  %789 = vmatpush1.msra.mxu0 0.0
  %790 = vmatprep.subr.mxu0 0.0
  %791 = vmatpush1.msra.mxu0 0.0
  %792 = vmatprep.subr.mxu0 0.0
  %793 = vmatpush1.msra.mxu0 0.0
  %794 = vmatprep.subr.mxu0 0.0
  %795 = vmatpush1.msra.mxu0 0.0
  %796 = vmatprep.subr.mxu0 0.0
  %797 = vmatpush1.msra.mxu0 0.0
  %798 = vmatprep.subr.mxu0 0.0
  %799 = vmatpush1.msra.mxu0 0.0
  %800 = vmatprep.mubr.f32.mxu0 0.0
  %801 = vmatmul.mubr.f32.gmra.mrb[0].mxu0 %v713
  %v802 = vpop.f32.mrb[0].mxu0
  %v803 = vadd.f32 0.0, %v802
  %v804 = vpop.f32.mrb[0].mxu0
  %805 = vmatprep.mubr.f32.mxu0 0.0
  %806 = vmatmul.mubr.f32.gmra.mrb[0].mxu0 %v716
  %v807 = vpop.f32.mrb[0].mxu0
  %v808 = vadd.f32 0.0, %v807
  %v809 = vpop.f32.mrb[0].mxu0
  %810 = vmatprep.mubr.f32.mxu0 0.0
  %811 = vmatmul.mubr.f32.gmra.mrb[0].mxu0 %v719
  %v812 = vpop.f32.mrb[0].mxu0
  %v813 = vadd.f32 0.0, %v812
  %v814 = vpop.f32.mrb[0].mxu0
  %815 = vmatprep.mubr.f32.mxu0 0.0
  %816 = vmatmul.mubr.f32.gmra.mrb[0].mxu0 %v722
  %v817 = vpop.f32.mrb[0].mxu0
  %v818 = vadd.f32 0.0, %v817
  %v819 = vpop.f32.mrb[0].mxu0
  %820 = vmatprep.mubr.f32.mxu0 0.0
  %821 = vmatmul.mubr.f32.gmra.mrb[0].mxu0 %v725
  %v822 = vpop.f32.mrb[0].mxu0
  %v823 = vadd.f32 0.0, %v822
  %v824 = vpop.f32.mrb[0].mxu0
  %825 = vmatprep.mubr.f32.mxu0 0.0
  %826 = vmatmul.mubr.f32.gmra.mrb[0].mxu0 %v728
  %v827 = vpop.f32.mrb[0].mxu0
  %v828 = vadd.f32 0.0, %v827
  %v829 = vpop.f32.mrb[0].mxu0
  %830 = vmatprep.mubr.f32.mxu0 0.0
  %831 = vmatmul.mubr.f32.gmra.mrb[0].mxu0 %v731
  %v832 = vpop.f32.mrb[0].mxu0
  %v833 = vadd.f32 0.0, %v832
  %v834 = vpop.f32.mrb[0].mxu0
  %835 = vdwg.mxu0
  %v836 = vadd.f32 %v569, %v803
  %v837 = vadd.f32 %v574, %v808
  %v838 = vadd.f32 %v579, %v813
  %v839 = vadd.f32 %v584, %v818
  %v840 = vadd.f32 %v589, %v823
  %v841 = vadd.f32 %v594, %v828
  %v842 = vadd.f32 %v599, %v833
  %v843 = vld [vmem:[%s7] sm:$0xff]
  %v844 = vld [vmem:[%s7 + $0x8] sm:$0xff]
  %v845 = vld [vmem:[%s7 + $0x10] sm:$0xff]
  %v846 = vld [vmem:[%s7 + $0x18] sm:$0xff]
  %v847 = vld [vmem:[%s7 + $0x20] sm:$0xff]
  %v848 = vld [vmem:[%s7 + $0x28] sm:$0xff]
  %v849 = vld [vmem:[%s7 + $0x30] sm:$0xff]
  %851 = vset.pattern.permute.xlu0 0
  %852 = vperm.xlu0 %851, %v843
  %v853 = vpop.permute.xlu0 %852
  %856 = vset.pattern.permute.xlu0 0
  %857 = vperm.xlu0 %856, %v844
  %v858 = vpop.permute.xlu0 %857
  %861 = vset.pattern.permute.xlu0 0
  %862 = vperm.xlu0 %861, %v845
  %v863 = vpop.permute.xlu0 %862
  %866 = vset.pattern.permute.xlu0 0
  %867 = vperm.xlu0 %866, %v846
  %v868 = vpop.permute.xlu0 %867
  %871 = vset.pattern.permute.xlu0 0
  %872 = vperm.xlu0 %871, %v847
  %v873 = vpop.permute.xlu0 %872
  %876 = vset.pattern.permute.xlu0 0
  %877 = vperm.xlu0 %876, %v848
  %v878 = vpop.permute.xlu0 %877
  %881 = vset.pattern.permute.xlu0 0
  %882 = vperm.xlu0 %881, %v849
  %v883 = vpop.permute.xlu0 %882
  %v885 = vadd.f32 %v836, %v853
  %v886 = vadd.f32 %v837, %v858
  %v887 = vadd.f32 %v838, %v863
  %v888 = vadd.f32 %v839, %v868
  %v889 = vadd.f32 %v840, %v873
  %v890 = vadd.f32 %v841, %v878
  %v891 = vadd.f32 %v842, %v883
  %v892 = vmax.f32 %v885, 0.0
  %v893 = vmax.f32 %v886, 0.0
  %v894 = vmax.f32 %v887, 0.0
  %v895 = vmax.f32 %v888, 0.0
  %v896 = vmax.f32 %v889, 0.0
  %v897 = vmax.f32 %v890, 0.0
  %v898 = vmax.f32 %v891, 0.0
  %v899 = vld [vmem:[%s9] sm:$0xff]
  %v900 = vld [vmem:[%s9 + $0x8] sm:$0xff]
  %v901 = vld [vmem:[%s9 + $0x10] sm:$0xff]
  %v902 = vld [vmem:[%s9 + $0x18] sm:$0xf]
  %vm903 = vcmask 457728
  %v905 = vsel %vm903, %v899, 0
  %v908 = vsel %vm903, %v900, 0
  %v911 = vsel %vm903, %v901, 0
  %v914 = vsel %vm903, %v902, 0
  %916 = vmatprep.subr.mxu0 0.0
  %917 = vmatpush1.msra.mxu0 %v892
  %918 = vmatprep.subr.mxu0 0.0
  %919 = vmatpush1.msra.mxu0 %v893
  %920 = vmatprep.subr.mxu0 0.0
  %921 = vmatpush1.msra.mxu0 %v894
  %922 = vmatprep.subr.mxu0 0.0
  %923 = vmatpush1.msra.mxu0 %v895
  %924 = vmatprep.subr.mxu0 0.0
  %925 = vmatpush1.msra.mxu0 %v896
  %926 = vmatprep.subr.mxu0 0.0
  %927 = vmatpush1.msra.mxu0 %v897
  %928 = vmatprep.subr.mxu0 0.0
  %929 = vmatpush1.msra.mxu0 %v898
  %930 = vmatprep.subr.mxu0 0.0
  %931 = vmatpush1.msra.mxu0 0.0
  %932 = vmatprep.subr.mxu0 0.0
  %933 = vmatpush1.msra.mxu0 0.0
  %934 = vmatprep.subr.mxu0 0.0
  %935 = vmatpush1.msra.mxu0 0.0
  %936 = vmatprep.subr.mxu0 0.0
  %937 = vmatpush1.msra.mxu0 0.0
  %938 = vmatprep.subr.mxu0 0.0
  %939 = vmatpush1.msra.mxu0 0.0
  %940 = vmatprep.subr.mxu0 0.0
  %941 = vmatpush1.msra.mxu0 0.0
  %942 = vmatprep.subr.mxu0 0.0
  %943 = vmatpush1.msra.mxu0 0.0
  %944 = vmatprep.subr.mxu0 0.0
  %945 = vmatpush1.msra.mxu0 0.0
  %946 = vmatprep.subr.mxu0 0.0
  %947 = vmatpush1.msra.mxu0 0.0
  %948 = vmatprep.subr.mxu0 0.0
  %949 = vmatpush1.msra.mxu0 0.0
  %950 = vmatprep.subr.mxu0 0.0
  %951 = vmatpush1.msra.mxu0 0.0
  %952 = vmatprep.subr.mxu0 0.0
  %953 = vmatpush1.msra.mxu0 0.0
  %954 = vmatprep.subr.mxu0 0.0
  %955 = vmatpush1.msra.mxu0 0.0
  %956 = vmatprep.subr.mxu0 0.0
  %957 = vmatpush1.msra.mxu0 0.0
  %958 = vmatprep.subr.mxu0 0.0
  %959 = vmatpush1.msra.mxu0 0.0
  %960 = vmatprep.subr.mxu0 0.0
  %961 = vmatpush1.msra.mxu0 0.0
  %962 = vmatprep.subr.mxu0 0.0
  %963 = vmatpush1.msra.mxu0 0.0
  %964 = vmatprep.subr.mxu0 0.0
  %965 = vmatpush1.msra.mxu0 0.0
  %966 = vmatprep.subr.mxu0 0.0
  %967 = vmatpush1.msra.mxu0 0.0
  %968 = vmatprep.subr.mxu0 0.0
  %969 = vmatpush1.msra.mxu0 0.0
  %970 = vmatprep.subr.mxu0 0.0
  %971 = vmatpush1.msra.mxu0 0.0
  %972 = vmatprep.subr.mxu0 0.0
  %973 = vmatpush1.msra.mxu0 0.0
  %974 = vmatprep.subr.mxu0 0.0
  %975 = vmatpush1.msra.mxu0 0.0
  %976 = vmatprep.subr.mxu0 0.0
  %977 = vmatpush1.msra.mxu0 0.0
  %978 = vmatprep.subr.mxu0 0.0
  %979 = vmatpush1.msra.mxu0 0.0
  %980 = vmatprep.mubr.f32.mxu0 0.0
  %981 = vmatmul.mubr.f32.gmra.mrb[0].mxu0 %v905
  %v982 = vpop.f32.mrb[0].mxu0
  %v983 = vadd.f32 0.0, %v982
  %v984 = vpop.f32.mrb[0].mxu0
  %985 = vmatprep.mubr.f32.mxu0 0.0
  %986 = vmatmul.mubr.f32.gmra.mrb[0].mxu0 %v908
  %v987 = vpop.f32.mrb[0].mxu0
  %v988 = vadd.f32 0.0, %v987
  %v989 = vpop.f32.mrb[0].mxu0
  %990 = vmatprep.mubr.f32.mxu0 0.0
  %991 = vmatmul.mubr.f32.gmra.mrb[0].mxu0 %v911
  %v992 = vpop.f32.mrb[0].mxu0
  %v993 = vadd.f32 0.0, %v992
  %v994 = vpop.f32.mrb[0].mxu0
  %995 = vmatprep.mubr.f32.mxu0 0.0
  %996 = vmatmul.mubr.f32.gmra.mrb[0].mxu0 %v914
  %v997 = vpop.f32.mrb[0].mxu0
  %v998 = vadd.f32 0.0, %v997
  %v999 = vpop.f32.mrb[0].mxu0
  %1000 = vdwg.mxu0
  %v1001 = vld [vmem:[%s11] sm:$0xff]
  %v1002 = vld [vmem:[%s11 + $0x8] sm:$0xff]
  %v1003 = vld [vmem:[%s11 + $0x10] sm:$0xff]
  %v1004 = vld [vmem:[%s11 + $0x18] sm:$0xff]
  %v1005 = vld [vmem:[%s11 + $0x20] sm:$0xff]
  %v1006 = vld [vmem:[%s11 + $0x28] sm:$0xff]
  %v1007 = vld [vmem:[%s11 + $0x30] sm:$0xff]
  %s1008 = scalar_lea.vmem %s9, 32
  %v1009 = vld [vmem:[%s1008] sm:$0xff]
  %v1010 = vld [vmem:[%s1008 + $0x8] sm:$0xff]
  %v1011 = vld [vmem:[%s1008 + $0x10] sm:$0xff]
  %v1012 = vld [vmem:[%s1008 + $0x18] sm:$0xf]
  %v1014 = vsel %vm903, %v1009, 0
  %v1017 = vsel %vm903, %v1010, 0
  %v1020 = vsel %vm903, %v1011, 0
  %v1023 = vsel %vm903, %v1012, 0
  %1025 = vmatprep.subr.mxu0 0.0
  %1026 = vmatpush1.msra.mxu0 %v892
  %1027 = vmatprep.subr.mxu0 0.0
  %1028 = vmatpush1.msra.mxu0 %v893
  %1029 = vmatprep.subr.mxu0 0.0
  %1030 = vmatpush1.msra.mxu0 %v894
  %1031 = vmatprep.subr.mxu0 0.0
  %1032 = vmatpush1.msra.mxu0 %v895
  %1033 = vmatprep.subr.mxu0 0.0
  %1034 = vmatpush1.msra.mxu0 %v896
  %1035 = vmatprep.subr.mxu0 0.0
  %1036 = vmatpush1.msra.mxu0 %v897
  %1037 = vmatprep.subr.mxu0 0.0
  %1038 = vmatpush1.msra.mxu0 %v898
  %1039 = vmatprep.subr.mxu0 0.0
  %1040 = vmatpush1.msra.mxu0 0.0
  %1041 = vmatprep.subr.mxu0 0.0
  %1042 = vmatpush1.msra.mxu0 0.0
  %1043 = vmatprep.subr.mxu0 0.0
  %1044 = vmatpush1.msra.mxu0 0.0
  %1045 = vmatprep.subr.mxu0 0.0
  %1046 = vmatpush1.msra.mxu0 0.0
  %1047 = vmatprep.subr.mxu0 0.0
  %1048 = vmatpush1.msra.mxu0 0.0
  %1049 = vmatprep.subr.mxu0 0.0
  %1050 = vmatpush1.msra.mxu0 0.0
  %1051 = vmatprep.subr.mxu0 0.0
  %1052 = vmatpush1.msra.mxu0 0.0
  %1053 = vmatprep.subr.mxu0 0.0
  %1054 = vmatpush1.msra.mxu0 0.0
  %1055 = vmatprep.subr.mxu0 0.0
  %1056 = vmatpush1.msra.mxu0 0.0
  %1057 = vmatprep.subr.mxu0 0.0
  %1058 = vmatpush1.msra.mxu0 0.0
  %1059 = vmatprep.subr.mxu0 0.0
  %1060 = vmatpush1.msra.mxu0 0.0
  %1061 = vmatprep.subr.mxu0 0.0
  %1062 = vmatpush1.msra.mxu0 0.0
  %1063 = vmatprep.subr.mxu0 0.0
  %1064 = vmatpush1.msra.mxu0 0.0
  %1065 = vmatprep.subr.mxu0 0.0
  %1066 = vmatpush1.msra.mxu0 0.0
  %1067 = vmatprep.subr.mxu0 0.0
  %1068 = vmatpush1.msra.mxu0 0.0
  %1069 = vmatprep.subr.mxu0 0.0
  %1070 = vmatpush1.msra.mxu0 0.0
  %1071 = vmatprep.subr.mxu0 0.0
  %1072 = vmatpush1.msra.mxu0 0.0
  %1073 = vmatprep.subr.mxu0 0.0
  %1074 = vmatpush1.msra.mxu0 0.0
  %1075 = vmatprep.subr.mxu0 0.0
  %1076 = vmatpush1.msra.mxu0 0.0
  %1077 = vmatprep.subr.mxu0 0.0
  %1078 = vmatpush1.msra.mxu0 0.0
  %1079 = vmatprep.subr.mxu0 0.0
  %1080 = vmatpush1.msra.mxu0 0.0
  %1081 = vmatprep.subr.mxu0 0.0
  %1082 = vmatpush1.msra.mxu0 0.0
  %1083 = vmatprep.subr.mxu0 0.0
  %1084 = vmatpush1.msra.mxu0 0.0
  %1085 = vmatprep.subr.mxu0 0.0
  %1086 = vmatpush1.msra.mxu0 0.0
  %1087 = vmatprep.subr.mxu0 0.0
  %1088 = vmatpush1.msra.mxu0 0.0
  %1089 = vmatprep.mubr.f32.mxu0 0.0
  %1090 = vmatmul.mubr.f32.gmra.mrb[0].mxu0 %v1014
  %v1091 = vpop.f32.mrb[0].mxu0
  %v1092 = vadd.f32 0.0, %v1091
  %v1093 = vpop.f32.mrb[0].mxu0
  %1094 = vmatprep.mubr.f32.mxu0 0.0
  %1095 = vmatmul.mubr.f32.gmra.mrb[0].mxu0 %v1017
  %v1096 = vpop.f32.mrb[0].mxu0
  %v1097 = vadd.f32 0.0, %v1096
  %v1098 = vpop.f32.mrb[0].mxu0
  %1099 = vmatprep.mubr.f32.mxu0 0.0
  %1100 = vmatmul.mubr.f32.gmra.mrb[0].mxu0 %v1020
  %v1101 = vpop.f32.mrb[0].mxu0
  %v1102 = vadd.f32 0.0, %v1101
  %v1103 = vpop.f32.mrb[0].mxu0
  %1104 = vmatprep.mubr.f32.mxu0 0.0
  %1105 = vmatmul.mubr.f32.gmra.mrb[0].mxu0 %v1023
  %v1106 = vpop.f32.mrb[0].mxu0
  %v1107 = vadd.f32 0.0, %v1106
  %v1108 = vpop.f32.mrb[0].mxu0
  %1109 = vdwg.mxu0
  %s1110 = scalar_lea.vmem %s11, 56
  %v1111 = vld [vmem:[%s1110] sm:$0xff]
  %v1112 = vld [vmem:[%s1110 + $0x8] sm:$0xff]
  %v1113 = vld [vmem:[%s1110 + $0x10] sm:$0xff]
  %v1114 = vld [vmem:[%s1110 + $0x18] sm:$0xff]
  %v1115 = vld [vmem:[%s1110 + $0x20] sm:$0xff]
  %v1116 = vld [vmem:[%s1110 + $0x28] sm:$0xff]
  %v1117 = vld [vmem:[%s1110 + $0x30] sm:$0xff]
  %v1119 = vsel %vm903, %v1092, 0
  %v1122 = vsel %vm903, %v1097, 0
  %v1125 = vsel %vm903, %v1102, 0
  %v1128 = vsel %vm903, %v1107, 0
  %1130 = vmatprep.subr.mxu0 0.0
  %1131 = vmatpush1.msra.mxu0 %v1111
  %1132 = vmatprep.subr.mxu0 0.0
  %1133 = vmatpush1.msra.mxu0 %v1112
  %1134 = vmatprep.subr.mxu0 0.0
  %1135 = vmatpush1.msra.mxu0 %v1113
  %1136 = vmatprep.subr.mxu0 0.0
  %1137 = vmatpush1.msra.mxu0 %v1114
  %1138 = vmatprep.subr.mxu0 0.0
  %1139 = vmatpush1.msra.mxu0 %v1115
  %1140 = vmatprep.subr.mxu0 0.0
  %1141 = vmatpush1.msra.mxu0 %v1116
  %1142 = vmatprep.subr.mxu0 0.0
  %1143 = vmatpush1.msra.mxu0 %v1117
  %1144 = vmatprep.subr.mxu0 0.0
  %1145 = vmatpush1.msra.mxu0 0.0
  %1146 = vmatprep.subr.mxu0 0.0
  %1147 = vmatpush1.msra.mxu0 0.0
  %1148 = vmatprep.subr.mxu0 0.0
  %1149 = vmatpush1.msra.mxu0 0.0
  %1150 = vmatprep.subr.mxu0 0.0
  %1151 = vmatpush1.msra.mxu0 0.0
  %1152 = vmatprep.subr.mxu0 0.0
  %1153 = vmatpush1.msra.mxu0 0.0
  %1154 = vmatprep.subr.mxu0 0.0
  %1155 = vmatpush1.msra.mxu0 0.0
  %1156 = vmatprep.subr.mxu0 0.0
  %1157 = vmatpush1.msra.mxu0 0.0
  %1158 = vmatprep.subr.mxu0 0.0
  %1159 = vmatpush1.msra.mxu0 0.0
  %1160 = vmatprep.subr.mxu0 0.0
  %1161 = vmatpush1.msra.mxu0 0.0
  %1162 = vmatprep.subr.mxu0 0.0
  %1163 = vmatpush1.msra.mxu0 0.0
  %1164 = vmatprep.subr.mxu0 0.0
  %1165 = vmatpush1.msra.mxu0 0.0
  %1166 = vmatprep.subr.mxu0 0.0
  %1167 = vmatpush1.msra.mxu0 0.0
  %1168 = vmatprep.subr.mxu0 0.0
  %1169 = vmatpush1.msra.mxu0 0.0
  %1170 = vmatprep.subr.mxu0 0.0
  %1171 = vmatpush1.msra.mxu0 0.0
  %1172 = vmatprep.subr.mxu0 0.0
  %1173 = vmatpush1.msra.mxu0 0.0
  %1174 = vmatprep.subr.mxu0 0.0
  %1175 = vmatpush1.msra.mxu0 0.0
  %1176 = vmatprep.subr.mxu0 0.0
  %1177 = vmatpush1.msra.mxu0 0.0
  %1178 = vmatprep.subr.mxu0 0.0
  %1179 = vmatpush1.msra.mxu0 0.0
  %1180 = vmatprep.subr.mxu0 0.0
  %1181 = vmatpush1.msra.mxu0 0.0
  %1182 = vmatprep.subr.mxu0 0.0
  %1183 = vmatpush1.msra.mxu0 0.0
  %1184 = vmatprep.subr.mxu0 0.0
  %1185 = vmatpush1.msra.mxu0 0.0
  %1186 = vmatprep.subr.mxu0 0.0
  %1187 = vmatpush1.msra.mxu0 0.0
  %1188 = vmatprep.subr.mxu0 0.0
  %1189 = vmatpush1.msra.mxu0 0.0
  %1190 = vmatprep.subr.mxu0 0.0
  %1191 = vmatpush1.msra.mxu0 0.0
  %1192 = vmatprep.subr.mxu0 0.0
  %1193 = vmatpush1.msra.mxu0 0.0
  %1194 = vmatprep.mubr.f32.mxu0 0.0
  %1195 = vmatmul.mubr.f32.gmra.mrb[0].mxu0 %v1119
  %v1196 = vpop.f32.mrb[0].mxu0
  %v1197 = vadd.f32 0.0, %v1196
  %v1198 = vpop.f32.mrb[0].mxu0
  %1199 = vmatprep.mubr.f32.mxu0 0.0
  %1200 = vmatmul.mubr.f32.gmra.mrb[0].mxu0 %v1122
  %v1201 = vpop.f32.mrb[0].mxu0
  %v1202 = vadd.f32 0.0, %v1201
  %v1203 = vpop.f32.mrb[0].mxu0
  %1204 = vmatprep.mubr.f32.mxu0 0.0
  %1205 = vmatmul.mubr.f32.gmra.mrb[0].mxu0 %v1125
  %v1206 = vpop.f32.mrb[0].mxu0
  %v1207 = vadd.f32 0.0, %v1206
  %v1208 = vpop.f32.mrb[0].mxu0
  %1209 = vmatprep.mubr.f32.mxu0 0.0
  %1210 = vmatmul.mubr.f32.gmra.mrb[0].mxu0 %v1128
  %v1211 = vpop.f32.mrb[0].mxu0
  %v1212 = vadd.f32 0.0, %v1211
  %v1213 = vpop.f32.mrb[0].mxu0
  %1214 = vdwg.mxu0
  %v1216 = vsel %vm903, %v983, 0
  %v1219 = vsel %vm903, %v988, 0
  %v1222 = vsel %vm903, %v993, 0
  %v1225 = vsel %vm903, %v998, 0
  %1227 = vmatprep.subr.mxu0 0.0
  %1228 = vmatpush1.msra.mxu0 %v1001
  %1229 = vmatprep.subr.mxu0 0.0
  %1230 = vmatpush1.msra.mxu0 %v1002
  %1231 = vmatprep.subr.mxu0 0.0
  %1232 = vmatpush1.msra.mxu0 %v1003
  %1233 = vmatprep.subr.mxu0 0.0
  %1234 = vmatpush1.msra.mxu0 %v1004
  %1235 = vmatprep.subr.mxu0 0.0
  %1236 = vmatpush1.msra.mxu0 %v1005
  %1237 = vmatprep.subr.mxu0 0.0
  %1238 = vmatpush1.msra.mxu0 %v1006
  %1239 = vmatprep.subr.mxu0 0.0
  %1240 = vmatpush1.msra.mxu0 %v1007
  %1241 = vmatprep.subr.mxu0 0.0
  %1242 = vmatpush1.msra.mxu0 0.0
  %1243 = vmatprep.subr.mxu0 0.0
  %1244 = vmatpush1.msra.mxu0 0.0
  %1245 = vmatprep.subr.mxu0 0.0
  %1246 = vmatpush1.msra.mxu0 0.0
  %1247 = vmatprep.subr.mxu0 0.0
  %1248 = vmatpush1.msra.mxu0 0.0
  %1249 = vmatprep.subr.mxu0 0.0
  %1250 = vmatpush1.msra.mxu0 0.0
  %1251 = vmatprep.subr.mxu0 0.0
  %1252 = vmatpush1.msra.mxu0 0.0
  %1253 = vmatprep.subr.mxu0 0.0
  %1254 = vmatpush1.msra.mxu0 0.0
  %1255 = vmatprep.subr.mxu0 0.0
  %1256 = vmatpush1.msra.mxu0 0.0
  %1257 = vmatprep.subr.mxu0 0.0
  %1258 = vmatpush1.msra.mxu0 0.0
  %1259 = vmatprep.subr.mxu0 0.0
  %1260 = vmatpush1.msra.mxu0 0.0
  %1261 = vmatprep.subr.mxu0 0.0
  %1262 = vmatpush1.msra.mxu0 0.0
  %1263 = vmatprep.subr.mxu0 0.0
  %1264 = vmatpush1.msra.mxu0 0.0
  %1265 = vmatprep.subr.mxu0 0.0
  %1266 = vmatpush1.msra.mxu0 0.0
  %1267 = vmatprep.subr.mxu0 0.0
  %1268 = vmatpush1.msra.mxu0 0.0
  %1269 = vmatprep.subr.mxu0 0.0
  %1270 = vmatpush1.msra.mxu0 0.0
  %1271 = vmatprep.subr.mxu0 0.0
  %1272 = vmatpush1.msra.mxu0 0.0
  %1273 = vmatprep.subr.mxu0 0.0
  %1274 = vmatpush1.msra.mxu0 0.0
  %1275 = vmatprep.subr.mxu0 0.0
  %1276 = vmatpush1.msra.mxu0 0.0
  %1277 = vmatprep.subr.mxu0 0.0
  %1278 = vmatpush1.msra.mxu0 0.0
  %1279 = vmatprep.subr.mxu0 0.0
  %1280 = vmatpush1.msra.mxu0 0.0
  %1281 = vmatprep.subr.mxu0 0.0
  %1282 = vmatpush1.msra.mxu0 0.0
  %1283 = vmatprep.subr.mxu0 0.0
  %1284 = vmatpush1.msra.mxu0 0.0
  %1285 = vmatprep.subr.mxu0 0.0
  %1286 = vmatpush1.msra.mxu0 0.0
  %1287 = vmatprep.subr.mxu0 0.0
  %1288 = vmatpush1.msra.mxu0 0.0
  %1289 = vmatprep.subr.mxu0 0.0
  %1290 = vmatpush1.msra.mxu0 0.0
  %1291 = vmatprep.mubr.f32.mxu0 0.0
  %1292 = vmatmul.mubr.f32.gmra.mrb[0].mxu0 %v1216
  %v1293 = vpop.f32.mrb[0].mxu0
  %v1294 = vadd.f32 %v1197, %v1293
  %v1295 = vpop.f32.mrb[0].mxu0
  %1296 = vmatprep.mubr.f32.mxu0 0.0
  %1297 = vmatmul.mubr.f32.gmra.mrb[0].mxu0 %v1219
  %v1298 = vpop.f32.mrb[0].mxu0
  %v1299 = vadd.f32 %v1202, %v1298
  %v1300 = vpop.f32.mrb[0].mxu0
  %1301 = vmatprep.mubr.f32.mxu0 0.0
  %1302 = vmatmul.mubr.f32.gmra.mrb[0].mxu0 %v1222
  %v1303 = vpop.f32.mrb[0].mxu0
  %v1304 = vadd.f32 %v1207, %v1303
  %v1305 = vpop.f32.mrb[0].mxu0
  %1306 = vmatprep.mubr.f32.mxu0 0.0
  %1307 = vmatmul.mubr.f32.gmra.mrb[0].mxu0 %v1225
  %v1308 = vpop.f32.mrb[0].mxu0
  %v1309 = vadd.f32 %v1212, %v1308
  %v1310 = vpop.f32.mrb[0].mxu0
  %1311 = vdwg.mxu0
  %s1312 = scalar_lea.vmem %s9, 64
  %v1313 = vld [vmem:[%s1312] sm:$0xff]
  %v1314 = vld [vmem:[%s1312 + $0x8] sm:$0xff]
  %v1315 = vld [vmem:[%s1312 + $0x10] sm:$0xff]
  %v1316 = vld [vmem:[%s1312 + $0x18] sm:$0xf]
  %v1318 = vsel %vm903, %v1313, 0
  %v1321 = vsel %vm903, %v1314, 0
  %v1324 = vsel %vm903, %v1315, 0
  %v1327 = vsel %vm903, %v1316, 0
  %1329 = vmatprep.subr.mxu0 0.0
  %1330 = vmatpush1.msra.mxu0 %v892
  %1331 = vmatprep.subr.mxu0 0.0
  %1332 = vmatpush1.msra.mxu0 %v893
  %1333 = vmatprep.subr.mxu0 0.0
  %1334 = vmatpush1.msra.mxu0 %v894
  %1335 = vmatprep.subr.mxu0 0.0
  %1336 = vmatpush1.msra.mxu0 %v895
  %1337 = vmatprep.subr.mxu0 0.0
  %1338 = vmatpush1.msra.mxu0 %v896
  %1339 = vmatprep.subr.mxu0 0.0
  %1340 = vmatpush1.msra.mxu0 %v897
  %1341 = vmatprep.subr.mxu0 0.0
  %1342 = vmatpush1.msra.mxu0 %v898
  %1343 = vmatprep.subr.mxu0 0.0
  %1344 = vmatpush1.msra.mxu0 0.0
  %1345 = vmatprep.subr.mxu0 0.0
  %1346 = vmatpush1.msra.mxu0 0.0
  %1347 = vmatprep.subr.mxu0 0.0
  %1348 = vmatpush1.msra.mxu0 0.0
  %1349 = vmatprep.subr.mxu0 0.0
  %1350 = vmatpush1.msra.mxu0 0.0
  %1351 = vmatprep.subr.mxu0 0.0
  %1352 = vmatpush1.msra.mxu0 0.0
  %1353 = vmatprep.subr.mxu0 0.0
  %1354 = vmatpush1.msra.mxu0 0.0
  %1355 = vmatprep.subr.mxu0 0.0
  %1356 = vmatpush1.msra.mxu0 0.0
  %1357 = vmatprep.subr.mxu0 0.0
  %1358 = vmatpush1.msra.mxu0 0.0
  %1359 = vmatprep.subr.mxu0 0.0
  %1360 = vmatpush1.msra.mxu0 0.0
  %1361 = vmatprep.subr.mxu0 0.0
  %1362 = vmatpush1.msra.mxu0 0.0
  %1363 = vmatprep.subr.mxu0 0.0
  %1364 = vmatpush1.msra.mxu0 0.0
  %1365 = vmatprep.subr.mxu0 0.0
  %1366 = vmatpush1.msra.mxu0 0.0
  %1367 = vmatprep.subr.mxu0 0.0
  %1368 = vmatpush1.msra.mxu0 0.0
  %1369 = vmatprep.subr.mxu0 0.0
  %1370 = vmatpush1.msra.mxu0 0.0
  %1371 = vmatprep.subr.mxu0 0.0
  %1372 = vmatpush1.msra.mxu0 0.0
  %1373 = vmatprep.subr.mxu0 0.0
  %1374 = vmatpush1.msra.mxu0 0.0
  %1375 = vmatprep.subr.mxu0 0.0
  %1376 = vmatpush1.msra.mxu0 0.0
  %1377 = vmatprep.subr.mxu0 0.0
  %1378 = vmatpush1.msra.mxu0 0.0
  %1379 = vmatprep.subr.mxu0 0.0
  %1380 = vmatpush1.msra.mxu0 0.0
  %1381 = vmatprep.subr.mxu0 0.0
  %1382 = vmatpush1.msra.mxu0 0.0
  %1383 = vmatprep.subr.mxu0 0.0
  %1384 = vmatpush1.msra.mxu0 0.0
  %1385 = vmatprep.subr.mxu0 0.0
  %1386 = vmatpush1.msra.mxu0 0.0
  %1387 = vmatprep.subr.mxu0 0.0
  %1388 = vmatpush1.msra.mxu0 0.0
  %1389 = vmatprep.subr.mxu0 0.0
  %1390 = vmatpush1.msra.mxu0 0.0
  %1391 = vmatprep.subr.mxu0 0.0
  %1392 = vmatpush1.msra.mxu0 0.0
  %1393 = vmatprep.mubr.f32.mxu0 0.0
  %1394 = vmatmul.mubr.f32.gmra.mrb[0].mxu0 %v1318
  %v1395 = vpop.f32.mrb[0].mxu0
  %v1396 = vadd.f32 0.0, %v1395
  %v1397 = vpop.f32.mrb[0].mxu0
  %1398 = vmatprep.mubr.f32.mxu0 0.0
  %1399 = vmatmul.mubr.f32.gmra.mrb[0].mxu0 %v1321
  %v1400 = vpop.f32.mrb[0].mxu0
  %v1401 = vadd.f32 0.0, %v1400
  %v1402 = vpop.f32.mrb[0].mxu0
  %1403 = vmatprep.mubr.f32.mxu0 0.0
  %1404 = vmatmul.mubr.f32.gmra.mrb[0].mxu0 %v1324
  %v1405 = vpop.f32.mrb[0].mxu0
  %v1406 = vadd.f32 0.0, %v1405
  %v1407 = vpop.f32.mrb[0].mxu0
  %1408 = vmatprep.mubr.f32.mxu0 0.0
  %1409 = vmatmul.mubr.f32.gmra.mrb[0].mxu0 %v1327
  %v1410 = vpop.f32.mrb[0].mxu0
  %v1411 = vadd.f32 0.0, %v1410
  %v1412 = vpop.f32.mrb[0].mxu0
  %1413 = vdwg.mxu0
  %s1414 = scalar_lea.vmem %s11, 112
  %v1415 = vld [vmem:[%s1414] sm:$0xff]
  %v1416 = vld [vmem:[%s1414 + $0x8] sm:$0xff]
  %v1417 = vld [vmem:[%s1414 + $0x10] sm:$0xff]
  %v1418 = vld [vmem:[%s1414 + $0x18] sm:$0xff]
  %v1419 = vld [vmem:[%s1414 + $0x20] sm:$0xff]
  %v1420 = vld [vmem:[%s1414 + $0x28] sm:$0xff]
  %v1421 = vld [vmem:[%s1414 + $0x30] sm:$0xff]
  %v1423 = vsel %vm903, %v1396, 0
  %v1426 = vsel %vm903, %v1401, 0
  %v1429 = vsel %vm903, %v1406, 0
  %v1432 = vsel %vm903, %v1411, 0
  %1434 = vmatprep.subr.mxu0 0.0
  %1435 = vmatpush1.msra.mxu0 %v1415
  %1436 = vmatprep.subr.mxu0 0.0
  %1437 = vmatpush1.msra.mxu0 %v1416
  %1438 = vmatprep.subr.mxu0 0.0
  %1439 = vmatpush1.msra.mxu0 %v1417
  %1440 = vmatprep.subr.mxu0 0.0
  %1441 = vmatpush1.msra.mxu0 %v1418
  %1442 = vmatprep.subr.mxu0 0.0
  %1443 = vmatpush1.msra.mxu0 %v1419
  %1444 = vmatprep.subr.mxu0 0.0
  %1445 = vmatpush1.msra.mxu0 %v1420
  %1446 = vmatprep.subr.mxu0 0.0
  %1447 = vmatpush1.msra.mxu0 %v1421
  %1448 = vmatprep.subr.mxu0 0.0
  %1449 = vmatpush1.msra.mxu0 0.0
  %1450 = vmatprep.subr.mxu0 0.0
  %1451 = vmatpush1.msra.mxu0 0.0
  %1452 = vmatprep.subr.mxu0 0.0
  %1453 = vmatpush1.msra.mxu0 0.0
  %1454 = vmatprep.subr.mxu0 0.0
  %1455 = vmatpush1.msra.mxu0 0.0
  %1456 = vmatprep.subr.mxu0 0.0
  %1457 = vmatpush1.msra.mxu0 0.0
  %1458 = vmatprep.subr.mxu0 0.0
  %1459 = vmatpush1.msra.mxu0 0.0
  %1460 = vmatprep.subr.mxu0 0.0
  %1461 = vmatpush1.msra.mxu0 0.0
  %1462 = vmatprep.subr.mxu0 0.0
  %1463 = vmatpush1.msra.mxu0 0.0
  %1464 = vmatprep.subr.mxu0 0.0
  %1465 = vmatpush1.msra.mxu0 0.0
  %1466 = vmatprep.subr.mxu0 0.0
  %1467 = vmatpush1.msra.mxu0 0.0
  %1468 = vmatprep.subr.mxu0 0.0
  %1469 = vmatpush1.msra.mxu0 0.0
  %1470 = vmatprep.subr.mxu0 0.0
  %1471 = vmatpush1.msra.mxu0 0.0
  %1472 = vmatprep.subr.mxu0 0.0
  %1473 = vmatpush1.msra.mxu0 0.0
  %1474 = vmatprep.subr.mxu0 0.0
  %1475 = vmatpush1.msra.mxu0 0.0
  %1476 = vmatprep.subr.mxu0 0.0
  %1477 = vmatpush1.msra.mxu0 0.0
  %1478 = vmatprep.subr.mxu0 0.0
  %1479 = vmatpush1.msra.mxu0 0.0
  %1480 = vmatprep.subr.mxu0 0.0
  %1481 = vmatpush1.msra.mxu0 0.0
  %1482 = vmatprep.subr.mxu0 0.0
  %1483 = vmatpush1.msra.mxu0 0.0
  %1484 = vmatprep.subr.mxu0 0.0
  %1485 = vmatpush1.msra.mxu0 0.0
  %1486 = vmatprep.subr.mxu0 0.0
  %1487 = vmatpush1.msra.mxu0 0.0
  %1488 = vmatprep.subr.mxu0 0.0
  %1489 = vmatpush1.msra.mxu0 0.0
  %1490 = vmatprep.subr.mxu0 0.0
  %1491 = vmatpush1.msra.mxu0 0.0
  %1492 = vmatprep.subr.mxu0 0.0
  %1493 = vmatpush1.msra.mxu0 0.0
  %1494 = vmatprep.subr.mxu0 0.0
  %1495 = vmatpush1.msra.mxu0 0.0
  %1496 = vmatprep.subr.mxu0 0.0
  %1497 = vmatpush1.msra.mxu0 0.0
  %1498 = vmatprep.mubr.f32.mxu0 0.0
  %1499 = vmatmul.mubr.f32.gmra.mrb[0].mxu0 %v1423
  %v1500 = vpop.f32.mrb[0].mxu0
  %v1501 = vadd.f32 0.0, %v1500
  %v1502 = vpop.f32.mrb[0].mxu0
  %1503 = vmatprep.mubr.f32.mxu0 0.0
  %1504 = vmatmul.mubr.f32.gmra.mrb[0].mxu0 %v1426
  %v1505 = vpop.f32.mrb[0].mxu0
  %v1506 = vadd.f32 0.0, %v1505
  %v1507 = vpop.f32.mrb[0].mxu0
  %1508 = vmatprep.mubr.f32.mxu0 0.0
  %1509 = vmatmul.mubr.f32.gmra.mrb[0].mxu0 %v1429
  %v1510 = vpop.f32.mrb[0].mxu0
  %v1511 = vadd.f32 0.0, %v1510
  %v1512 = vpop.f32.mrb[0].mxu0
  %1513 = vmatprep.mubr.f32.mxu0 0.0
  %1514 = vmatmul.mubr.f32.gmra.mrb[0].mxu0 %v1432
  %v1515 = vpop.f32.mrb[0].mxu0
  %v1516 = vadd.f32 0.0, %v1515
  %v1517 = vpop.f32.mrb[0].mxu0
  %1518 = vdwg.mxu0
  %v1519 = vadd.f32 %v1294, %v1501
  %v1520 = vadd.f32 %v1299, %v1506
  %v1521 = vadd.f32 %v1304, %v1511
  %v1522 = vadd.f32 %v1309, %v1516
  %v1523 = vld [vmem:[%s13] sm:$0xff]
  %v1524 = vld [vmem:[%s13 + $0x8] sm:$0xff]
  %v1525 = vld [vmem:[%s13 + $0x10] sm:$0xff]
  %v1526 = vld [vmem:[%s13 + $0x18] sm:$0xf]
  %1528 = vset.pattern.permute.xlu0 0
  %1529 = vperm.xlu0 %1528, %v1523
  %v1530 = vpop.permute.xlu0 %1529
  %1533 = vset.pattern.permute.xlu0 0
  %1534 = vperm.xlu0 %1533, %v1524
  %v1535 = vpop.permute.xlu0 %1534
  %1538 = vset.pattern.permute.xlu0 0
  %1539 = vperm.xlu0 %1538, %v1525
  %v1540 = vpop.permute.xlu0 %1539
  %1543 = vset.pattern.permute.xlu0 0
  %1544 = vperm.xlu0 %1543, %v1526
  %v1545 = vpop.permute.xlu0 %1544
  %v1547 = vadd.f32 %v1519, %v1530
  %v1548 = vadd.f32 %v1520, %v1535
  %v1549 = vadd.f32 %v1521, %v1540
  %v1550 = vadd.f32 %v1522, %v1545
  %v1551 = vmax.f32 %v1547, 0.0
  %v1552 = vmax.f32 %v1548, 0.0
  %v1553 = vmax.f32 %v1549, 0.0
  %v1554 = vmax.f32 %v1550, 0.0
  %v1555 = vld [vmem:[%s15] sm:$0xff]
  %v1556 = vld [vmem:[%s15 + $0x8] sm:$0xff]
  %v1557 = vld [vmem:[%s15 + $0x10] sm:$0xff]
  %v1558 = vld [vmem:[%s15 + $0x18] sm:$0xf]
  %v1559 = vld [vmem:[%s17] sm:$0xff]
  %v1560 = vld [vmem:[%s17 + $0x8] sm:$0xff]
  %v1561 = vld [vmem:[%s17 + $0x10] sm:$0xff]
  %v1562 = vld [vmem:[%s17 + $0x18] sm:$0xf]
  %v1564 = vsel %vm352, %v1551, 0
  %v1567 = vsel %vm352, %v1552, 0
  %v1570 = vsel %vm352, %v1553, 0
  %v1573 = vsel %vm352, %v1554, 0
  %v1576 = vsel %vm374, %v1562, 0
  %1578 = vmatprep.subr.mxu0 0.0
  %1579 = vmatpush1.msra.mxu0 %v1559
  %1580 = vmatprep.subr.mxu0 0.0
  %1581 = vmatpush1.msra.mxu0 %v1560
  %1582 = vmatprep.subr.mxu0 0.0
  %1583 = vmatpush1.msra.mxu0 %v1561
  %1584 = vmatprep.subr.mxu0 0.0
  %1585 = vmatpush1.msra.mxu0 %v1576
  %1586 = vmatprep.subr.mxu0 0.0
  %1587 = vmatpush1.msra.mxu0 0.0
  %1588 = vmatprep.subr.mxu0 0.0
  %1589 = vmatpush1.msra.mxu0 0.0
  %1590 = vmatprep.subr.mxu0 0.0
  %1591 = vmatpush1.msra.mxu0 0.0
  %1592 = vmatprep.subr.mxu0 0.0
  %1593 = vmatpush1.msra.mxu0 0.0
  %1594 = vmatprep.subr.mxu0 0.0
  %1595 = vmatpush1.msra.mxu0 0.0
  %1596 = vmatprep.subr.mxu0 0.0
  %1597 = vmatpush1.msra.mxu0 0.0
  %1598 = vmatprep.subr.mxu0 0.0
  %1599 = vmatpush1.msra.mxu0 0.0
  %1600 = vmatprep.subr.mxu0 0.0
  %1601 = vmatpush1.msra.mxu0 0.0
  %1602 = vmatprep.subr.mxu0 0.0
  %1603 = vmatpush1.msra.mxu0 0.0
  %1604 = vmatprep.subr.mxu0 0.0
  %1605 = vmatpush1.msra.mxu0 0.0
  %1606 = vmatprep.subr.mxu0 0.0
  %1607 = vmatpush1.msra.mxu0 0.0
  %1608 = vmatprep.subr.mxu0 0.0
  %1609 = vmatpush1.msra.mxu0 0.0
  %1610 = vmatprep.subr.mxu0 0.0
  %1611 = vmatpush1.msra.mxu0 0.0
  %1612 = vmatprep.subr.mxu0 0.0
  %1613 = vmatpush1.msra.mxu0 0.0
  %1614 = vmatprep.subr.mxu0 0.0
  %1615 = vmatpush1.msra.mxu0 0.0
  %1616 = vmatprep.subr.mxu0 0.0
  %1617 = vmatpush1.msra.mxu0 0.0
  %1618 = vmatprep.subr.mxu0 0.0
  %1619 = vmatpush1.msra.mxu0 0.0
  %1620 = vmatprep.subr.mxu0 0.0
  %1621 = vmatpush1.msra.mxu0 0.0
  %1622 = vmatprep.subr.mxu0 0.0
  %1623 = vmatpush1.msra.mxu0 0.0
  %1624 = vmatprep.subr.mxu0 0.0
  %1625 = vmatpush1.msra.mxu0 0.0
  %1626 = vmatprep.subr.mxu0 0.0
  %1627 = vmatpush1.msra.mxu0 0.0
  %1628 = vmatprep.subr.mxu0 0.0
  %1629 = vmatpush1.msra.mxu0 0.0
  %1630 = vmatprep.subr.mxu0 0.0
  %1631 = vmatpush1.msra.mxu0 0.0
  %1632 = vmatprep.subr.mxu0 0.0
  %1633 = vmatpush1.msra.mxu0 0.0
  %1634 = vmatprep.subr.mxu0 0.0
  %1635 = vmatpush1.msra.mxu0 0.0
  %1636 = vmatprep.subr.mxu0 0.0
  %1637 = vmatpush1.msra.mxu0 0.0
  %1638 = vmatprep.subr.mxu0 0.0
  %1639 = vmatpush1.msra.mxu0 0.0
  %1640 = vmatprep.subr.mxu0 0.0
  %1641 = vmatpush1.msra.mxu0 0.0
  %1642 = vmatprep.mubr.f32.mxu0 0.0
  %1643 = vmatmul.mubr.f32.gmra.mrb[0].mxu0 %v1564
  %v1644 = vpop.f32.mrb[0].mxu0
  %v1645 = vadd.f32 0.0, %v1644
  %v1646 = vpop.f32.mrb[0].mxu0
  %1647 = vmatprep.mubr.f32.mxu0 0.0
  %1648 = vmatmul.mubr.f32.gmra.mrb[0].mxu0 %v1567
  %v1649 = vpop.f32.mrb[0].mxu0
  %v1650 = vadd.f32 0.0, %v1649
  %v1651 = vpop.f32.mrb[0].mxu0
  %1652 = vmatprep.mubr.f32.mxu0 0.0
  %1653 = vmatmul.mubr.f32.gmra.mrb[0].mxu0 %v1570
  %v1654 = vpop.f32.mrb[0].mxu0
  %v1655 = vadd.f32 0.0, %v1654
  %v1656 = vpop.f32.mrb[0].mxu0
  %1657 = vmatprep.mubr.f32.mxu0 0.0
  %1658 = vmatmul.mubr.f32.gmra.mrb[0].mxu0 %v1573
  %v1659 = vpop.f32.mrb[0].mxu0
  %v1660 = vadd.f32 0.0, %v1659
  %v1661 = vpop.f32.mrb[0].mxu0
  %1662 = vdwg.mxu0
  %s1663 = scalar_lea.vmem %s15, 32
  %v1664 = vld [vmem:[%s1663] sm:$0xff]
  %v1665 = vld [vmem:[%s1663 + $0x8] sm:$0xff]
  %v1666 = vld [vmem:[%s1663 + $0x10] sm:$0xff]
  %v1667 = vld [vmem:[%s1663 + $0x18] sm:$0xf]
  %s1668 = scalar_lea.vmem %s17, 32
  %v1669 = vld [vmem:[%s1668] sm:$0xff]
  %v1670 = vld [vmem:[%s1668 + $0x8] sm:$0xff]
  %v1671 = vld [vmem:[%s1668 + $0x10] sm:$0xff]
  %v1672 = vld [vmem:[%s1668 + $0x18] sm:$0xf]
  %v1674 = vsel %vm374, %v1672, 0
  %1676 = vmatprep.subr.mxu0 0.0
  %1677 = vmatpush1.msra.mxu0 %v1669
  %1678 = vmatprep.subr.mxu0 0.0
  %1679 = vmatpush1.msra.mxu0 %v1670
  %1680 = vmatprep.subr.mxu0 0.0
  %1681 = vmatpush1.msra.mxu0 %v1671
  %1682 = vmatprep.subr.mxu0 0.0
  %1683 = vmatpush1.msra.mxu0 %v1674
  %1684 = vmatprep.subr.mxu0 0.0
  %1685 = vmatpush1.msra.mxu0 0.0
  %1686 = vmatprep.subr.mxu0 0.0
  %1687 = vmatpush1.msra.mxu0 0.0
  %1688 = vmatprep.subr.mxu0 0.0
  %1689 = vmatpush1.msra.mxu0 0.0
  %1690 = vmatprep.subr.mxu0 0.0
  %1691 = vmatpush1.msra.mxu0 0.0
  %1692 = vmatprep.subr.mxu0 0.0
  %1693 = vmatpush1.msra.mxu0 0.0
  %1694 = vmatprep.subr.mxu0 0.0
  %1695 = vmatpush1.msra.mxu0 0.0
  %1696 = vmatprep.subr.mxu0 0.0
  %1697 = vmatpush1.msra.mxu0 0.0
  %1698 = vmatprep.subr.mxu0 0.0
  %1699 = vmatpush1.msra.mxu0 0.0
  %1700 = vmatprep.subr.mxu0 0.0
  %1701 = vmatpush1.msra.mxu0 0.0
  %1702 = vmatprep.subr.mxu0 0.0
  %1703 = vmatpush1.msra.mxu0 0.0
  %1704 = vmatprep.subr.mxu0 0.0
  %1705 = vmatpush1.msra.mxu0 0.0
  %1706 = vmatprep.subr.mxu0 0.0
  %1707 = vmatpush1.msra.mxu0 0.0
  %1708 = vmatprep.subr.mxu0 0.0
  %1709 = vmatpush1.msra.mxu0 0.0
  %1710 = vmatprep.subr.mxu0 0.0
  %1711 = vmatpush1.msra.mxu0 0.0
  %1712 = vmatprep.subr.mxu0 0.0
  %1713 = vmatpush1.msra.mxu0 0.0
  %1714 = vmatprep.subr.mxu0 0.0
  %1715 = vmatpush1.msra.mxu0 0.0
  %1716 = vmatprep.subr.mxu0 0.0
  %1717 = vmatpush1.msra.mxu0 0.0
  %1718 = vmatprep.subr.mxu0 0.0
  %1719 = vmatpush1.msra.mxu0 0.0
  %1720 = vmatprep.subr.mxu0 0.0
  %1721 = vmatpush1.msra.mxu0 0.0
  %1722 = vmatprep.subr.mxu0 0.0
  %1723 = vmatpush1.msra.mxu0 0.0
  %1724 = vmatprep.subr.mxu0 0.0
  %1725 = vmatpush1.msra.mxu0 0.0
  %1726 = vmatprep.subr.mxu0 0.0
  %1727 = vmatpush1.msra.mxu0 0.0
  %1728 = vmatprep.subr.mxu0 0.0
  %1729 = vmatpush1.msra.mxu0 0.0
  %1730 = vmatprep.subr.mxu0 0.0
  %1731 = vmatpush1.msra.mxu0 0.0
  %1732 = vmatprep.subr.mxu0 0.0
  %1733 = vmatpush1.msra.mxu0 0.0
  %1734 = vmatprep.subr.mxu0 0.0
  %1735 = vmatpush1.msra.mxu0 0.0
  %1736 = vmatprep.subr.mxu0 0.0
  %1737 = vmatpush1.msra.mxu0 0.0
  %1738 = vmatprep.subr.mxu0 0.0
  %1739 = vmatpush1.msra.mxu0 0.0
  %1740 = vmatprep.mubr.f32.mxu0 0.0
  %1741 = vmatmul.mubr.f32.gmra.mrb[0].mxu0 %v1564
  %v1742 = vpop.f32.mrb[0].mxu0
  %v1743 = vadd.f32 0.0, %v1742
  %v1744 = vpop.f32.mrb[0].mxu0
  %1745 = vmatprep.mubr.f32.mxu0 0.0
  %1746 = vmatmul.mubr.f32.gmra.mrb[0].mxu0 %v1567
  %v1747 = vpop.f32.mrb[0].mxu0
  %v1748 = vadd.f32 0.0, %v1747
  %v1749 = vpop.f32.mrb[0].mxu0
  %1750 = vmatprep.mubr.f32.mxu0 0.0
  %1751 = vmatmul.mubr.f32.gmra.mrb[0].mxu0 %v1570
  %v1752 = vpop.f32.mrb[0].mxu0
  %v1753 = vadd.f32 0.0, %v1752
  %v1754 = vpop.f32.mrb[0].mxu0
  %1755 = vmatprep.mubr.f32.mxu0 0.0
  %1756 = vmatmul.mubr.f32.gmra.mrb[0].mxu0 %v1573
  %v1757 = vpop.f32.mrb[0].mxu0
  %v1758 = vadd.f32 0.0, %v1757
  %v1759 = vpop.f32.mrb[0].mxu0
  %1760 = vdwg.mxu0
  %v1762 = vsel %vm352, %v1664, 0
  %v1765 = vsel %vm352, %v1665, 0
  %v1768 = vsel %vm352, %v1666, 0
  %v1771 = vsel %vm352, %v1667, 0
  %v1774 = vsel %vm374, %v1758, 0
  %1776 = vmatprep.subr.mxu0 0.0
  %1777 = vmatpush1.msra.mxu0 %v1743
  %1778 = vmatprep.subr.mxu0 0.0
  %1779 = vmatpush1.msra.mxu0 %v1748
  %1780 = vmatprep.subr.mxu0 0.0
  %1781 = vmatpush1.msra.mxu0 %v1753
  %1782 = vmatprep.subr.mxu0 0.0
  %1783 = vmatpush1.msra.mxu0 %v1774
  %1784 = vmatprep.subr.mxu0 0.0
  %1785 = vmatpush1.msra.mxu0 0.0
  %1786 = vmatprep.subr.mxu0 0.0
  %1787 = vmatpush1.msra.mxu0 0.0
  %1788 = vmatprep.subr.mxu0 0.0
  %1789 = vmatpush1.msra.mxu0 0.0
  %1790 = vmatprep.subr.mxu0 0.0
  %1791 = vmatpush1.msra.mxu0 0.0
  %1792 = vmatprep.subr.mxu0 0.0
  %1793 = vmatpush1.msra.mxu0 0.0
  %1794 = vmatprep.subr.mxu0 0.0
  %1795 = vmatpush1.msra.mxu0 0.0
  %1796 = vmatprep.subr.mxu0 0.0
  %1797 = vmatpush1.msra.mxu0 0.0
  %1798 = vmatprep.subr.mxu0 0.0
  %1799 = vmatpush1.msra.mxu0 0.0
  %1800 = vmatprep.subr.mxu0 0.0
  %1801 = vmatpush1.msra.mxu0 0.0
  %1802 = vmatprep.subr.mxu0 0.0
  %1803 = vmatpush1.msra.mxu0 0.0
  %1804 = vmatprep.subr.mxu0 0.0
  %1805 = vmatpush1.msra.mxu0 0.0
  %1806 = vmatprep.subr.mxu0 0.0
  %1807 = vmatpush1.msra.mxu0 0.0
  %1808 = vmatprep.subr.mxu0 0.0
  %1809 = vmatpush1.msra.mxu0 0.0
  %1810 = vmatprep.subr.mxu0 0.0
  %1811 = vmatpush1.msra.mxu0 0.0
  %1812 = vmatprep.subr.mxu0 0.0
  %1813 = vmatpush1.msra.mxu0 0.0
  %1814 = vmatprep.subr.mxu0 0.0
  %1815 = vmatpush1.msra.mxu0 0.0
  %1816 = vmatprep.subr.mxu0 0.0
  %1817 = vmatpush1.msra.mxu0 0.0
  %1818 = vmatprep.subr.mxu0 0.0
  %1819 = vmatpush1.msra.mxu0 0.0
  %1820 = vmatprep.subr.mxu0 0.0
  %1821 = vmatpush1.msra.mxu0 0.0
  %1822 = vmatprep.subr.mxu0 0.0
  %1823 = vmatpush1.msra.mxu0 0.0
  %1824 = vmatprep.subr.mxu0 0.0
  %1825 = vmatpush1.msra.mxu0 0.0
  %1826 = vmatprep.subr.mxu0 0.0
  %1827 = vmatpush1.msra.mxu0 0.0
  %1828 = vmatprep.subr.mxu0 0.0
  %1829 = vmatpush1.msra.mxu0 0.0
  %1830 = vmatprep.subr.mxu0 0.0
  %1831 = vmatpush1.msra.mxu0 0.0
  %1832 = vmatprep.subr.mxu0 0.0
  %1833 = vmatpush1.msra.mxu0 0.0
  %1834 = vmatprep.subr.mxu0 0.0
  %1835 = vmatpush1.msra.mxu0 0.0
  %1836 = vmatprep.subr.mxu0 0.0
  %1837 = vmatpush1.msra.mxu0 0.0
  %1838 = vmatprep.subr.mxu0 0.0
  %1839 = vmatpush1.msra.mxu0 0.0
  %1840 = vmatprep.mubr.f32.mxu0 0.0
  %1841 = vmatmul.mubr.f32.gmra.mrb[0].mxu0 %v1762
  %v1842 = vpop.f32.mrb[0].mxu0
  %v1843 = vadd.f32 0.0, %v1842
  %v1844 = vpop.f32.mrb[0].mxu0
  %1845 = vmatprep.mubr.f32.mxu0 0.0
  %1846 = vmatmul.mubr.f32.gmra.mrb[0].mxu0 %v1765
  %v1847 = vpop.f32.mrb[0].mxu0
  %v1848 = vadd.f32 0.0, %v1847
  %v1849 = vpop.f32.mrb[0].mxu0
  %1850 = vmatprep.mubr.f32.mxu0 0.0
  %1851 = vmatmul.mubr.f32.gmra.mrb[0].mxu0 %v1768
  %v1852 = vpop.f32.mrb[0].mxu0
  %v1853 = vadd.f32 0.0, %v1852
  %v1854 = vpop.f32.mrb[0].mxu0
  %1855 = vmatprep.mubr.f32.mxu0 0.0
  %1856 = vmatmul.mubr.f32.gmra.mrb[0].mxu0 %v1771
  %v1857 = vpop.f32.mrb[0].mxu0
  %v1858 = vadd.f32 0.0, %v1857
  %v1859 = vpop.f32.mrb[0].mxu0
  %1860 = vdwg.mxu0
  %v1862 = vsel %vm352, %v1555, 0
  %v1865 = vsel %vm352, %v1556, 0
  %v1868 = vsel %vm352, %v1557, 0
  %v1871 = vsel %vm352, %v1558, 0
  %v1874 = vsel %vm374, %v1660, 0
  %1876 = vmatprep.subr.mxu0 0.0
  %1877 = vmatpush1.msra.mxu0 %v1645
  %1878 = vmatprep.subr.mxu0 0.0
  %1879 = vmatpush1.msra.mxu0 %v1650
  %1880 = vmatprep.subr.mxu0 0.0
  %1881 = vmatpush1.msra.mxu0 %v1655
  %1882 = vmatprep.subr.mxu0 0.0
  %1883 = vmatpush1.msra.mxu0 %v1874
  %1884 = vmatprep.subr.mxu0 0.0
  %1885 = vmatpush1.msra.mxu0 0.0
  %1886 = vmatprep.subr.mxu0 0.0
  %1887 = vmatpush1.msra.mxu0 0.0
  %1888 = vmatprep.subr.mxu0 0.0
  %1889 = vmatpush1.msra.mxu0 0.0
  %1890 = vmatprep.subr.mxu0 0.0
  %1891 = vmatpush1.msra.mxu0 0.0
  %1892 = vmatprep.subr.mxu0 0.0
  %1893 = vmatpush1.msra.mxu0 0.0
  %1894 = vmatprep.subr.mxu0 0.0
  %1895 = vmatpush1.msra.mxu0 0.0
  %1896 = vmatprep.subr.mxu0 0.0
  %1897 = vmatpush1.msra.mxu0 0.0
  %1898 = vmatprep.subr.mxu0 0.0
  %1899 = vmatpush1.msra.mxu0 0.0
  %1900 = vmatprep.subr.mxu0 0.0
  %1901 = vmatpush1.msra.mxu0 0.0
  %1902 = vmatprep.subr.mxu0 0.0
  %1903 = vmatpush1.msra.mxu0 0.0
  %1904 = vmatprep.subr.mxu0 0.0
  %1905 = vmatpush1.msra.mxu0 0.0
  %1906 = vmatprep.subr.mxu0 0.0
  %1907 = vmatpush1.msra.mxu0 0.0
  %1908 = vmatprep.subr.mxu0 0.0
  %1909 = vmatpush1.msra.mxu0 0.0
  %1910 = vmatprep.subr.mxu0 0.0
  %1911 = vmatpush1.msra.mxu0 0.0
  %1912 = vmatprep.subr.mxu0 0.0
  %1913 = vmatpush1.msra.mxu0 0.0
  %1914 = vmatprep.subr.mxu0 0.0
  %1915 = vmatpush1.msra.mxu0 0.0
  %1916 = vmatprep.subr.mxu0 0.0
  %1917 = vmatpush1.msra.mxu0 0.0
  %1918 = vmatprep.subr.mxu0 0.0
  %1919 = vmatpush1.msra.mxu0 0.0
  %1920 = vmatprep.subr.mxu0 0.0
  %1921 = vmatpush1.msra.mxu0 0.0
  %1922 = vmatprep.subr.mxu0 0.0
  %1923 = vmatpush1.msra.mxu0 0.0
  %1924 = vmatprep.subr.mxu0 0.0
  %1925 = vmatpush1.msra.mxu0 0.0
  %1926 = vmatprep.subr.mxu0 0.0
  %1927 = vmatpush1.msra.mxu0 0.0
  %1928 = vmatprep.subr.mxu0 0.0
  %1929 = vmatpush1.msra.mxu0 0.0
  %1930 = vmatprep.subr.mxu0 0.0
  %1931 = vmatpush1.msra.mxu0 0.0
  %1932 = vmatprep.subr.mxu0 0.0
  %1933 = vmatpush1.msra.mxu0 0.0
  %1934 = vmatprep.subr.mxu0 0.0
  %1935 = vmatpush1.msra.mxu0 0.0
  %1936 = vmatprep.subr.mxu0 0.0
  %1937 = vmatpush1.msra.mxu0 0.0
  %1938 = vmatprep.subr.mxu0 0.0
  %1939 = vmatpush1.msra.mxu0 0.0
  %1940 = vmatprep.mubr.f32.mxu0 0.0
  %1941 = vmatmul.mubr.f32.gmra.mrb[0].mxu0 %v1862
  %v1942 = vpop.f32.mrb[0].mxu0
  %v1943 = vadd.f32 %v1843, %v1942
  %v1944 = vpop.f32.mrb[0].mxu0
  %1945 = vmatprep.mubr.f32.mxu0 0.0
  %1946 = vmatmul.mubr.f32.gmra.mrb[0].mxu0 %v1865
  %v1947 = vpop.f32.mrb[0].mxu0
  %v1948 = vadd.f32 %v1848, %v1947
  %v1949 = vpop.f32.mrb[0].mxu0
  %1950 = vmatprep.mubr.f32.mxu0 0.0
  %1951 = vmatmul.mubr.f32.gmra.mrb[0].mxu0 %v1868
  %v1952 = vpop.f32.mrb[0].mxu0
  %v1953 = vadd.f32 %v1853, %v1952
  %v1954 = vpop.f32.mrb[0].mxu0
  %1955 = vmatprep.mubr.f32.mxu0 0.0
  %1956 = vmatmul.mubr.f32.gmra.mrb[0].mxu0 %v1871
  %v1957 = vpop.f32.mrb[0].mxu0
  %v1958 = vadd.f32 %v1858, %v1957
  %v1959 = vpop.f32.mrb[0].mxu0
  %1960 = vdwg.mxu0
  %s1961 = scalar_lea.vmem %s15, 64
  %v1962 = vld [vmem:[%s1961] sm:$0xff]
  %v1963 = vld [vmem:[%s1961 + $0x8] sm:$0xff]
  %v1964 = vld [vmem:[%s1961 + $0x10] sm:$0xff]
  %v1965 = vld [vmem:[%s1961 + $0x18] sm:$0xf]
  %s1966 = scalar_lea.vmem %s17, 64
  %v1967 = vld [vmem:[%s1966] sm:$0xff]
  %v1968 = vld [vmem:[%s1966 + $0x8] sm:$0xff]
  %v1969 = vld [vmem:[%s1966 + $0x10] sm:$0xff]
  %v1970 = vld [vmem:[%s1966 + $0x18] sm:$0xf]
  %v1972 = vsel %vm374, %v1970, 0
  %1974 = vmatprep.subr.mxu0 0.0
  %1975 = vmatpush1.msra.mxu0 %v1967
  %1976 = vmatprep.subr.mxu0 0.0
  %1977 = vmatpush1.msra.mxu0 %v1968
  %1978 = vmatprep.subr.mxu0 0.0
  %1979 = vmatpush1.msra.mxu0 %v1969
  %1980 = vmatprep.subr.mxu0 0.0
  %1981 = vmatpush1.msra.mxu0 %v1972
  %1982 = vmatprep.subr.mxu0 0.0
  %1983 = vmatpush1.msra.mxu0 0.0
  %1984 = vmatprep.subr.mxu0 0.0
  %1985 = vmatpush1.msra.mxu0 0.0
  %1986 = vmatprep.subr.mxu0 0.0
  %1987 = vmatpush1.msra.mxu0 0.0
  %1988 = vmatprep.subr.mxu0 0.0
  %1989 = vmatpush1.msra.mxu0 0.0
  %1990 = vmatprep.subr.mxu0 0.0
  %1991 = vmatpush1.msra.mxu0 0.0
  %1992 = vmatprep.subr.mxu0 0.0
  %1993 = vmatpush1.msra.mxu0 0.0
  %1994 = vmatprep.subr.mxu0 0.0
  %1995 = vmatpush1.msra.mxu0 0.0
  %1996 = vmatprep.subr.mxu0 0.0
  %1997 = vmatpush1.msra.mxu0 0.0
  %1998 = vmatprep.subr.mxu0 0.0
  %1999 = vmatpush1.msra.mxu0 0.0
  %2000 = vmatprep.subr.mxu0 0.0
  %2001 = vmatpush1.msra.mxu0 0.0
  %2002 = vmatprep.subr.mxu0 0.0
  %2003 = vmatpush1.msra.mxu0 0.0
  %2004 = vmatprep.subr.mxu0 0.0
  %2005 = vmatpush1.msra.mxu0 0.0
  %2006 = vmatprep.subr.mxu0 0.0
  %2007 = vmatpush1.msra.mxu0 0.0
  %2008 = vmatprep.subr.mxu0 0.0
  %2009 = vmatpush1.msra.mxu0 0.0
  %2010 = vmatprep.subr.mxu0 0.0
  %2011 = vmatpush1.msra.mxu0 0.0
  %2012 = vmatprep.subr.mxu0 0.0
  %2013 = vmatpush1.msra.mxu0 0.0
  %2014 = vmatprep.subr.mxu0 0.0
  %2015 = vmatpush1.msra.mxu0 0.0
  %2016 = vmatprep.subr.mxu0 0.0
  %2017 = vmatpush1.msra.mxu0 0.0
  %2018 = vmatprep.subr.mxu0 0.0
  %2019 = vmatpush1.msra.mxu0 0.0
  %2020 = vmatprep.subr.mxu0 0.0
  %2021 = vmatpush1.msra.mxu0 0.0
  %2022 = vmatprep.subr.mxu0 0.0
  %2023 = vmatpush1.msra.mxu0 0.0
  %2024 = vmatprep.subr.mxu0 0.0
  %2025 = vmatpush1.msra.mxu0 0.0
  %2026 = vmatprep.subr.mxu0 0.0
  %2027 = vmatpush1.msra.mxu0 0.0
  %2028 = vmatprep.subr.mxu0 0.0
  %2029 = vmatpush1.msra.mxu0 0.0
  %2030 = vmatprep.subr.mxu0 0.0
  %2031 = vmatpush1.msra.mxu0 0.0
  %2032 = vmatprep.subr.mxu0 0.0
  %2033 = vmatpush1.msra.mxu0 0.0
  %2034 = vmatprep.subr.mxu0 0.0
  %2035 = vmatpush1.msra.mxu0 0.0
  %2036 = vmatprep.subr.mxu0 0.0
  %2037 = vmatpush1.msra.mxu0 0.0
  %2038 = vmatprep.mubr.f32.mxu0 0.0
  %2039 = vmatmul.mubr.f32.gmra.mrb[0].mxu0 %v1564
  %v2040 = vpop.f32.mrb[0].mxu0
  %v2041 = vadd.f32 0.0, %v2040
  %v2042 = vpop.f32.mrb[0].mxu0
  %2043 = vmatprep.mubr.f32.mxu0 0.0
  %2044 = vmatmul.mubr.f32.gmra.mrb[0].mxu0 %v1567
  %v2045 = vpop.f32.mrb[0].mxu0
  %v2046 = vadd.f32 0.0, %v2045
  %v2047 = vpop.f32.mrb[0].mxu0
  %2048 = vmatprep.mubr.f32.mxu0 0.0
  %2049 = vmatmul.mubr.f32.gmra.mrb[0].mxu0 %v1570
  %v2050 = vpop.f32.mrb[0].mxu0
  %v2051 = vadd.f32 0.0, %v2050
  %v2052 = vpop.f32.mrb[0].mxu0
  %2053 = vmatprep.mubr.f32.mxu0 0.0
  %2054 = vmatmul.mubr.f32.gmra.mrb[0].mxu0 %v1573
  %v2055 = vpop.f32.mrb[0].mxu0
  %v2056 = vadd.f32 0.0, %v2055
  %v2057 = vpop.f32.mrb[0].mxu0
  %2058 = vdwg.mxu0
  %v2060 = vsel %vm352, %v1962, 0
  %v2063 = vsel %vm352, %v1963, 0
  %v2066 = vsel %vm352, %v1964, 0
  %v2069 = vsel %vm352, %v1965, 0
  %v2072 = vsel %vm374, %v2056, 0
  %2074 = vmatprep.subr.mxu0 0.0
  %2075 = vmatpush1.msra.mxu0 %v2041
  %2076 = vmatprep.subr.mxu0 0.0
  %2077 = vmatpush1.msra.mxu0 %v2046
  %2078 = vmatprep.subr.mxu0 0.0
  %2079 = vmatpush1.msra.mxu0 %v2051
  %2080 = vmatprep.subr.mxu0 0.0
  %2081 = vmatpush1.msra.mxu0 %v2072
  %2082 = vmatprep.subr.mxu0 0.0
  %2083 = vmatpush1.msra.mxu0 0.0
  %2084 = vmatprep.subr.mxu0 0.0
  %2085 = vmatpush1.msra.mxu0 0.0
  %2086 = vmatprep.subr.mxu0 0.0
  %2087 = vmatpush1.msra.mxu0 0.0
  %2088 = vmatprep.subr.mxu0 0.0
  %2089 = vmatpush1.msra.mxu0 0.0
  %2090 = vmatprep.subr.mxu0 0.0
  %2091 = vmatpush1.msra.mxu0 0.0
  %2092 = vmatprep.subr.mxu0 0.0
  %2093 = vmatpush1.msra.mxu0 0.0
  %2094 = vmatprep.subr.mxu0 0.0
  %2095 = vmatpush1.msra.mxu0 0.0
  %2096 = vmatprep.subr.mxu0 0.0
  %2097 = vmatpush1.msra.mxu0 0.0
  %2098 = vmatprep.subr.mxu0 0.0
  %2099 = vmatpush1.msra.mxu0 0.0
  %2100 = vmatprep.subr.mxu0 0.0
  %2101 = vmatpush1.msra.mxu0 0.0
  %2102 = vmatprep.subr.mxu0 0.0
  %2103 = vmatpush1.msra.mxu0 0.0
  %2104 = vmatprep.subr.mxu0 0.0
  %2105 = vmatpush1.msra.mxu0 0.0
  %2106 = vmatprep.subr.mxu0 0.0
  %2107 = vmatpush1.msra.mxu0 0.0
  %2108 = vmatprep.subr.mxu0 0.0
  %2109 = vmatpush1.msra.mxu0 0.0
  %2110 = vmatprep.subr.mxu0 0.0
  %2111 = vmatpush1.msra.mxu0 0.0
  %2112 = vmatprep.subr.mxu0 0.0
  %2113 = vmatpush1.msra.mxu0 0.0
  %2114 = vmatprep.subr.mxu0 0.0
  %2115 = vmatpush1.msra.mxu0 0.0
  %2116 = vmatprep.subr.mxu0 0.0
  %2117 = vmatpush1.msra.mxu0 0.0
  %2118 = vmatprep.subr.mxu0 0.0
  %2119 = vmatpush1.msra.mxu0 0.0
  %2120 = vmatprep.subr.mxu0 0.0
  %2121 = vmatpush1.msra.mxu0 0.0
  %2122 = vmatprep.subr.mxu0 0.0
  %2123 = vmatpush1.msra.mxu0 0.0
  %2124 = vmatprep.subr.mxu0 0.0
  %2125 = vmatpush1.msra.mxu0 0.0
  %2126 = vmatprep.subr.mxu0 0.0
  %2127 = vmatpush1.msra.mxu0 0.0
  %2128 = vmatprep.subr.mxu0 0.0
  %2129 = vmatpush1.msra.mxu0 0.0
  %2130 = vmatprep.subr.mxu0 0.0
  %2131 = vmatpush1.msra.mxu0 0.0
  %2132 = vmatprep.subr.mxu0 0.0
  %2133 = vmatpush1.msra.mxu0 0.0
  %2134 = vmatprep.subr.mxu0 0.0
  %2135 = vmatpush1.msra.mxu0 0.0
  %2136 = vmatprep.subr.mxu0 0.0
  %2137 = vmatpush1.msra.mxu0 0.0
  %2138 = vmatprep.mubr.f32.mxu0 0.0
  %2139 = vmatmul.mubr.f32.gmra.mrb[0].mxu0 %v2060
  %v2140 = vpop.f32.mrb[0].mxu0
  %v2141 = vadd.f32 0.0, %v2140
  %v2142 = vpop.f32.mrb[0].mxu0
  %2143 = vmatprep.mubr.f32.mxu0 0.0
  %2144 = vmatmul.mubr.f32.gmra.mrb[0].mxu0 %v2063
  %v2145 = vpop.f32.mrb[0].mxu0
  %v2146 = vadd.f32 0.0, %v2145
  %v2147 = vpop.f32.mrb[0].mxu0
  %2148 = vmatprep.mubr.f32.mxu0 0.0
  %2149 = vmatmul.mubr.f32.gmra.mrb[0].mxu0 %v2066
  %v2150 = vpop.f32.mrb[0].mxu0
  %v2151 = vadd.f32 0.0, %v2150
  %v2152 = vpop.f32.mrb[0].mxu0
  %2153 = vmatprep.mubr.f32.mxu0 0.0
  %2154 = vmatmul.mubr.f32.gmra.mrb[0].mxu0 %v2069
  %v2155 = vpop.f32.mrb[0].mxu0
  %v2156 = vadd.f32 0.0, %v2155
  %v2157 = vpop.f32.mrb[0].mxu0
  %2158 = vdwg.mxu0
  %v2159 = vadd.f32 %v1943, %v2141
  %v2160 = vadd.f32 %v1948, %v2146
  %v2161 = vadd.f32 %v1953, %v2151
  %v2162 = vadd.f32 %v1958, %v2156
  %v2163 = vld [vmem:[%s19] sm:$0xff]
  %v2164 = vld [vmem:[%s19 + $0x8] sm:$0xff]
  %v2165 = vld [vmem:[%s19 + $0x10] sm:$0xff]
  %v2166 = vld [vmem:[%s19 + $0x18] sm:$0xf]
  %2168 = vset.pattern.permute.xlu0 0
  %2169 = vperm.xlu0 %2168, %v2163
  %v2170 = vpop.permute.xlu0 %2169
  %2173 = vset.pattern.permute.xlu0 0
  %2174 = vperm.xlu0 %2173, %v2164
  %v2175 = vpop.permute.xlu0 %2174
  %2178 = vset.pattern.permute.xlu0 0
  %2179 = vperm.xlu0 %2178, %v2165
  %v2180 = vpop.permute.xlu0 %2179
  %2183 = vset.pattern.permute.xlu0 0
  %2184 = vperm.xlu0 %2183, %v2166
  %v2185 = vpop.permute.xlu0 %2184
  %v2187 = vadd.f32 %v2159, %v2170
  %v2188 = vadd.f32 %v2160, %v2175
  %v2189 = vadd.f32 %v2161, %v2180
  %v2190 = vadd.f32 %v2162, %v2185
  %v2191 = vmax.f32 %v2187, 0.0
  %v2192 = vmax.f32 %v2188, 0.0
  %v2193 = vmax.f32 %v2189, 0.0
  %v2194 = vmax.f32 %v2190, 0.0
  %v2195 = vld [vmem:[%s21] sm:$0xff]
  %v2196 = vld [vmem:[%s21 + $0x8] sm:$0xff]
  %v2197 = vld [vmem:[%s21 + $0x10] sm:$0xff]
  %v2198 = vld [vmem:[%s21 + $0x18] sm:$0xf]
  %v2199 = vld [vmem:[%s23] sm:$0xff]
  %v2200 = vld [vmem:[%s23 + $0x8] sm:$0xff]
  %v2201 = vld [vmem:[%s23 + $0x10] sm:$0xff]
  %v2202 = vld [vmem:[%s23 + $0x18] sm:$0xf]
  %v2204 = vsel %vm352, %v2191, 0
  %v2207 = vsel %vm352, %v2192, 0
  %v2210 = vsel %vm352, %v2193, 0
  %v2213 = vsel %vm352, %v2194, 0
  %v2216 = vsel %vm374, %v2202, 0
  %2218 = vmatprep.subr.mxu0 0.0
  %2219 = vmatpush1.msra.mxu0 %v2199
  %2220 = vmatprep.subr.mxu0 0.0
  %2221 = vmatpush1.msra.mxu0 %v2200
  %2222 = vmatprep.subr.mxu0 0.0
  %2223 = vmatpush1.msra.mxu0 %v2201
  %2224 = vmatprep.subr.mxu0 0.0
  %2225 = vmatpush1.msra.mxu0 %v2216
  %2226 = vmatprep.subr.mxu0 0.0
  %2227 = vmatpush1.msra.mxu0 0.0
  %2228 = vmatprep.subr.mxu0 0.0
  %2229 = vmatpush1.msra.mxu0 0.0
  %2230 = vmatprep.subr.mxu0 0.0
  %2231 = vmatpush1.msra.mxu0 0.0
  %2232 = vmatprep.subr.mxu0 0.0
  %2233 = vmatpush1.msra.mxu0 0.0
  %2234 = vmatprep.subr.mxu0 0.0
  %2235 = vmatpush1.msra.mxu0 0.0
  %2236 = vmatprep.subr.mxu0 0.0
  %2237 = vmatpush1.msra.mxu0 0.0
  %2238 = vmatprep.subr.mxu0 0.0
  %2239 = vmatpush1.msra.mxu0 0.0
  %2240 = vmatprep.subr.mxu0 0.0
  %2241 = vmatpush1.msra.mxu0 0.0
  %2242 = vmatprep.subr.mxu0 0.0
  %2243 = vmatpush1.msra.mxu0 0.0
  %2244 = vmatprep.subr.mxu0 0.0
  %2245 = vmatpush1.msra.mxu0 0.0
  %2246 = vmatprep.subr.mxu0 0.0
  %2247 = vmatpush1.msra.mxu0 0.0
  %2248 = vmatprep.subr.mxu0 0.0
  %2249 = vmatpush1.msra.mxu0 0.0
  %2250 = vmatprep.subr.mxu0 0.0
  %2251 = vmatpush1.msra.mxu0 0.0
  %2252 = vmatprep.subr.mxu0 0.0
  %2253 = vmatpush1.msra.mxu0 0.0
  %2254 = vmatprep.subr.mxu0 0.0
  %2255 = vmatpush1.msra.mxu0 0.0
  %2256 = vmatprep.subr.mxu0 0.0
  %2257 = vmatpush1.msra.mxu0 0.0
  %2258 = vmatprep.subr.mxu0 0.0
  %2259 = vmatpush1.msra.mxu0 0.0
  %2260 = vmatprep.subr.mxu0 0.0
  %2261 = vmatpush1.msra.mxu0 0.0
  %2262 = vmatprep.subr.mxu0 0.0
  %2263 = vmatpush1.msra.mxu0 0.0
  %2264 = vmatprep.subr.mxu0 0.0
  %2265 = vmatpush1.msra.mxu0 0.0
  %2266 = vmatprep.subr.mxu0 0.0
  %2267 = vmatpush1.msra.mxu0 0.0
  %2268 = vmatprep.subr.mxu0 0.0
  %2269 = vmatpush1.msra.mxu0 0.0
  %2270 = vmatprep.subr.mxu0 0.0
  %2271 = vmatpush1.msra.mxu0 0.0
  %2272 = vmatprep.subr.mxu0 0.0
  %2273 = vmatpush1.msra.mxu0 0.0
  %2274 = vmatprep.subr.mxu0 0.0
  %2275 = vmatpush1.msra.mxu0 0.0
  %2276 = vmatprep.subr.mxu0 0.0
  %2277 = vmatpush1.msra.mxu0 0.0
  %2278 = vmatprep.subr.mxu0 0.0
  %2279 = vmatpush1.msra.mxu0 0.0
  %2280 = vmatprep.subr.mxu0 0.0
  %2281 = vmatpush1.msra.mxu0 0.0
  %2282 = vmatprep.mubr.f32.mxu0 0.0
  %2283 = vmatmul.mubr.f32.gmra.mrb[0].mxu0 %v2204
  %v2284 = vpop.f32.mrb[0].mxu0
  %v2285 = vadd.f32 0.0, %v2284
  %v2286 = vpop.f32.mrb[0].mxu0
  %2287 = vmatprep.mubr.f32.mxu0 0.0
  %2288 = vmatmul.mubr.f32.gmra.mrb[0].mxu0 %v2207
  %v2289 = vpop.f32.mrb[0].mxu0
  %v2290 = vadd.f32 0.0, %v2289
  %v2291 = vpop.f32.mrb[0].mxu0
  %2292 = vmatprep.mubr.f32.mxu0 0.0
  %2293 = vmatmul.mubr.f32.gmra.mrb[0].mxu0 %v2210
  %v2294 = vpop.f32.mrb[0].mxu0
  %v2295 = vadd.f32 0.0, %v2294
  %v2296 = vpop.f32.mrb[0].mxu0
  %2297 = vmatprep.mubr.f32.mxu0 0.0
  %2298 = vmatmul.mubr.f32.gmra.mrb[0].mxu0 %v2213
  %v2299 = vpop.f32.mrb[0].mxu0
  %v2300 = vadd.f32 0.0, %v2299
  %v2301 = vpop.f32.mrb[0].mxu0
  %2302 = vdwg.mxu0
  %s2303 = scalar_lea.vmem %s21, 32
  %v2304 = vld [vmem:[%s2303] sm:$0xff]
  %v2305 = vld [vmem:[%s2303 + $0x8] sm:$0xff]
  %v2306 = vld [vmem:[%s2303 + $0x10] sm:$0xff]
  %v2307 = vld [vmem:[%s2303 + $0x18] sm:$0xf]
  %s2308 = scalar_lea.vmem %s23, 32
  %v2309 = vld [vmem:[%s2308] sm:$0xff]
  %v2310 = vld [vmem:[%s2308 + $0x8] sm:$0xff]
  %v2311 = vld [vmem:[%s2308 + $0x10] sm:$0xff]
  %v2312 = vld [vmem:[%s2308 + $0x18] sm:$0xf]
  %v2314 = vsel %vm374, %v2312, 0
  %2316 = vmatprep.subr.mxu0 0.0
  %2317 = vmatpush1.msra.mxu0 %v2309
  %2318 = vmatprep.subr.mxu0 0.0
  %2319 = vmatpush1.msra.mxu0 %v2310
  %2320 = vmatprep.subr.mxu0 0.0
  %2321 = vmatpush1.msra.mxu0 %v2311
  %2322 = vmatprep.subr.mxu0 0.0
  %2323 = vmatpush1.msra.mxu0 %v2314
  %2324 = vmatprep.subr.mxu0 0.0
  %2325 = vmatpush1.msra.mxu0 0.0
  %2326 = vmatprep.subr.mxu0 0.0
  %2327 = vmatpush1.msra.mxu0 0.0
  %2328 = vmatprep.subr.mxu0 0.0
  %2329 = vmatpush1.msra.mxu0 0.0
  %2330 = vmatprep.subr.mxu0 0.0
  %2331 = vmatpush1.msra.mxu0 0.0
  %2332 = vmatprep.subr.mxu0 0.0
  %2333 = vmatpush1.msra.mxu0 0.0
  %2334 = vmatprep.subr.mxu0 0.0
  %2335 = vmatpush1.msra.mxu0 0.0
  %2336 = vmatprep.subr.mxu0 0.0
  %2337 = vmatpush1.msra.mxu0 0.0
  %2338 = vmatprep.subr.mxu0 0.0
  %2339 = vmatpush1.msra.mxu0 0.0
  %2340 = vmatprep.subr.mxu0 0.0
  %2341 = vmatpush1.msra.mxu0 0.0
  %2342 = vmatprep.subr.mxu0 0.0
  %2343 = vmatpush1.msra.mxu0 0.0
  %2344 = vmatprep.subr.mxu0 0.0
  %2345 = vmatpush1.msra.mxu0 0.0
  %2346 = vmatprep.subr.mxu0 0.0
  %2347 = vmatpush1.msra.mxu0 0.0
  %2348 = vmatprep.subr.mxu0 0.0
  %2349 = vmatpush1.msra.mxu0 0.0
  %2350 = vmatprep.subr.mxu0 0.0
  %2351 = vmatpush1.msra.mxu0 0.0
  %2352 = vmatprep.subr.mxu0 0.0
  %2353 = vmatpush1.msra.mxu0 0.0
  %2354 = vmatprep.subr.mxu0 0.0
  %2355 = vmatpush1.msra.mxu0 0.0
  %2356 = vmatprep.subr.mxu0 0.0
  %2357 = vmatpush1.msra.mxu0 0.0
  %2358 = vmatprep.subr.mxu0 0.0
  %2359 = vmatpush1.msra.mxu0 0.0
  %2360 = vmatprep.subr.mxu0 0.0
  %2361 = vmatpush1.msra.mxu0 0.0
  %2362 = vmatprep.subr.mxu0 0.0
  %2363 = vmatpush1.msra.mxu0 0.0
  %2364 = vmatprep.subr.mxu0 0.0
  %2365 = vmatpush1.msra.mxu0 0.0
  %2366 = vmatprep.subr.mxu0 0.0
  %2367 = vmatpush1.msra.mxu0 0.0
  %2368 = vmatprep.subr.mxu0 0.0
  %2369 = vmatpush1.msra.mxu0 0.0
  %2370 = vmatprep.subr.mxu0 0.0
  %2371 = vmatpush1.msra.mxu0 0.0
  %2372 = vmatprep.subr.mxu0 0.0
  %2373 = vmatpush1.msra.mxu0 0.0
  %2374 = vmatprep.subr.mxu0 0.0
  %2375 = vmatpush1.msra.mxu0 0.0
  %2376 = vmatprep.subr.mxu0 0.0
  %2377 = vmatpush1.msra.mxu0 0.0
  %2378 = vmatprep.subr.mxu0 0.0
  %2379 = vmatpush1.msra.mxu0 0.0
  %2380 = vmatprep.mubr.f32.mxu0 0.0
  %2381 = vmatmul.mubr.f32.gmra.mrb[0].mxu0 %v2204
  %v2382 = vpop.f32.mrb[0].mxu0
  %v2383 = vadd.f32 0.0, %v2382
  %v2384 = vpop.f32.mrb[0].mxu0
  %2385 = vmatprep.mubr.f32.mxu0 0.0
  %2386 = vmatmul.mubr.f32.gmra.mrb[0].mxu0 %v2207
  %v2387 = vpop.f32.mrb[0].mxu0
  %v2388 = vadd.f32 0.0, %v2387
  %v2389 = vpop.f32.mrb[0].mxu0
  %2390 = vmatprep.mubr.f32.mxu0 0.0
  %2391 = vmatmul.mubr.f32.gmra.mrb[0].mxu0 %v2210
  %v2392 = vpop.f32.mrb[0].mxu0
  %v2393 = vadd.f32 0.0, %v2392
  %v2394 = vpop.f32.mrb[0].mxu0
  %2395 = vmatprep.mubr.f32.mxu0 0.0
  %2396 = vmatmul.mubr.f32.gmra.mrb[0].mxu0 %v2213
  %v2397 = vpop.f32.mrb[0].mxu0
  %v2398 = vadd.f32 0.0, %v2397
  %v2399 = vpop.f32.mrb[0].mxu0
  %2400 = vdwg.mxu0
  %v2402 = vsel %vm352, %v2304, 0
  %v2405 = vsel %vm352, %v2305, 0
  %v2408 = vsel %vm352, %v2306, 0
  %v2411 = vsel %vm352, %v2307, 0
  %v2414 = vsel %vm374, %v2398, 0
  %2416 = vmatprep.subr.mxu0 0.0
  %2417 = vmatpush1.msra.mxu0 %v2383
  %2418 = vmatprep.subr.mxu0 0.0
  %2419 = vmatpush1.msra.mxu0 %v2388
  %2420 = vmatprep.subr.mxu0 0.0
  %2421 = vmatpush1.msra.mxu0 %v2393
  %2422 = vmatprep.subr.mxu0 0.0
  %2423 = vmatpush1.msra.mxu0 %v2414
  %2424 = vmatprep.subr.mxu0 0.0
  %2425 = vmatpush1.msra.mxu0 0.0
  %2426 = vmatprep.subr.mxu0 0.0
  %2427 = vmatpush1.msra.mxu0 0.0
  %2428 = vmatprep.subr.mxu0 0.0
  %2429 = vmatpush1.msra.mxu0 0.0
  %2430 = vmatprep.subr.mxu0 0.0
  %2431 = vmatpush1.msra.mxu0 0.0
  %2432 = vmatprep.subr.mxu0 0.0
  %2433 = vmatpush1.msra.mxu0 0.0
  %2434 = vmatprep.subr.mxu0 0.0
  %2435 = vmatpush1.msra.mxu0 0.0
  %2436 = vmatprep.subr.mxu0 0.0
  %2437 = vmatpush1.msra.mxu0 0.0
  %2438 = vmatprep.subr.mxu0 0.0
  %2439 = vmatpush1.msra.mxu0 0.0
  %2440 = vmatprep.subr.mxu0 0.0
  %2441 = vmatpush1.msra.mxu0 0.0
  %2442 = vmatprep.subr.mxu0 0.0
  %2443 = vmatpush1.msra.mxu0 0.0
  %2444 = vmatprep.subr.mxu0 0.0
  %2445 = vmatpush1.msra.mxu0 0.0
  %2446 = vmatprep.subr.mxu0 0.0
  %2447 = vmatpush1.msra.mxu0 0.0
  %2448 = vmatprep.subr.mxu0 0.0
  %2449 = vmatpush1.msra.mxu0 0.0
  %2450 = vmatprep.subr.mxu0 0.0
  %2451 = vmatpush1.msra.mxu0 0.0
  %2452 = vmatprep.subr.mxu0 0.0
  %2453 = vmatpush1.msra.mxu0 0.0
  %2454 = vmatprep.subr.mxu0 0.0
  %2455 = vmatpush1.msra.mxu0 0.0
  %2456 = vmatprep.subr.mxu0 0.0
  %2457 = vmatpush1.msra.mxu0 0.0
  %2458 = vmatprep.subr.mxu0 0.0
  %2459 = vmatpush1.msra.mxu0 0.0
  %2460 = vmatprep.subr.mxu0 0.0
  %2461 = vmatpush1.msra.mxu0 0.0
  %2462 = vmatprep.subr.mxu0 0.0
  %2463 = vmatpush1.msra.mxu0 0.0
  %2464 = vmatprep.subr.mxu0 0.0
  %2465 = vmatpush1.msra.mxu0 0.0
  %2466 = vmatprep.subr.mxu0 0.0
  %2467 = vmatpush1.msra.mxu0 0.0
  %2468 = vmatprep.subr.mxu0 0.0
  %2469 = vmatpush1.msra.mxu0 0.0
  %2470 = vmatprep.subr.mxu0 0.0
  %2471 = vmatpush1.msra.mxu0 0.0
  %2472 = vmatprep.subr.mxu0 0.0
  %2473 = vmatpush1.msra.mxu0 0.0
  %2474 = vmatprep.subr.mxu0 0.0
  %2475 = vmatpush1.msra.mxu0 0.0
  %2476 = vmatprep.subr.mxu0 0.0
  %2477 = vmatpush1.msra.mxu0 0.0
  %2478 = vmatprep.subr.mxu0 0.0
  %2479 = vmatpush1.msra.mxu0 0.0
  %2480 = vmatprep.mubr.f32.mxu0 0.0
  %2481 = vmatmul.mubr.f32.gmra.mrb[0].mxu0 %v2402
  %v2482 = vpop.f32.mrb[0].mxu0
  %v2483 = vadd.f32 0.0, %v2482
  %v2484 = vpop.f32.mrb[0].mxu0
  %2485 = vmatprep.mubr.f32.mxu0 0.0
  %2486 = vmatmul.mubr.f32.gmra.mrb[0].mxu0 %v2405
  %v2487 = vpop.f32.mrb[0].mxu0
  %v2488 = vadd.f32 0.0, %v2487
  %v2489 = vpop.f32.mrb[0].mxu0
  %2490 = vmatprep.mubr.f32.mxu0 0.0
  %2491 = vmatmul.mubr.f32.gmra.mrb[0].mxu0 %v2408
  %v2492 = vpop.f32.mrb[0].mxu0
  %v2493 = vadd.f32 0.0, %v2492
  %v2494 = vpop.f32.mrb[0].mxu0
  %2495 = vmatprep.mubr.f32.mxu0 0.0
  %2496 = vmatmul.mubr.f32.gmra.mrb[0].mxu0 %v2411
  %v2497 = vpop.f32.mrb[0].mxu0
  %v2498 = vadd.f32 0.0, %v2497
  %v2499 = vpop.f32.mrb[0].mxu0
  %2500 = vdwg.mxu0
  %v2502 = vsel %vm352, %v2195, 0
  %v2505 = vsel %vm352, %v2196, 0
  %v2508 = vsel %vm352, %v2197, 0
  %v2511 = vsel %vm352, %v2198, 0
  %v2514 = vsel %vm374, %v2300, 0
  %2516 = vmatprep.subr.mxu0 0.0
  %2517 = vmatpush1.msra.mxu0 %v2285
  %2518 = vmatprep.subr.mxu0 0.0
  %2519 = vmatpush1.msra.mxu0 %v2290
  %2520 = vmatprep.subr.mxu0 0.0
  %2521 = vmatpush1.msra.mxu0 %v2295
  %2522 = vmatprep.subr.mxu0 0.0
  %2523 = vmatpush1.msra.mxu0 %v2514
  %2524 = vmatprep.subr.mxu0 0.0
  %2525 = vmatpush1.msra.mxu0 0.0
  %2526 = vmatprep.subr.mxu0 0.0
  %2527 = vmatpush1.msra.mxu0 0.0
  %2528 = vmatprep.subr.mxu0 0.0
  %2529 = vmatpush1.msra.mxu0 0.0
  %2530 = vmatprep.subr.mxu0 0.0
  %2531 = vmatpush1.msra.mxu0 0.0
  %2532 = vmatprep.subr.mxu0 0.0
  %2533 = vmatpush1.msra.mxu0 0.0
  %2534 = vmatprep.subr.mxu0 0.0
  %2535 = vmatpush1.msra.mxu0 0.0
  %2536 = vmatprep.subr.mxu0 0.0
  %2537 = vmatpush1.msra.mxu0 0.0
  %2538 = vmatprep.subr.mxu0 0.0
  %2539 = vmatpush1.msra.mxu0 0.0
  %2540 = vmatprep.subr.mxu0 0.0
  %2541 = vmatpush1.msra.mxu0 0.0
  %2542 = vmatprep.subr.mxu0 0.0
  %2543 = vmatpush1.msra.mxu0 0.0
  %2544 = vmatprep.subr.mxu0 0.0
  %2545 = vmatpush1.msra.mxu0 0.0
  %2546 = vmatprep.subr.mxu0 0.0
  %2547 = vmatpush1.msra.mxu0 0.0
  %2548 = vmatprep.subr.mxu0 0.0
  %2549 = vmatpush1.msra.mxu0 0.0
  %2550 = vmatprep.subr.mxu0 0.0
  %2551 = vmatpush1.msra.mxu0 0.0
  %2552 = vmatprep.subr.mxu0 0.0
  %2553 = vmatpush1.msra.mxu0 0.0
  %2554 = vmatprep.subr.mxu0 0.0
  %2555 = vmatpush1.msra.mxu0 0.0
  %2556 = vmatprep.subr.mxu0 0.0
  %2557 = vmatpush1.msra.mxu0 0.0
  %2558 = vmatprep.subr.mxu0 0.0
  %2559 = vmatpush1.msra.mxu0 0.0
  %2560 = vmatprep.subr.mxu0 0.0
  %2561 = vmatpush1.msra.mxu0 0.0
  %2562 = vmatprep.subr.mxu0 0.0
  %2563 = vmatpush1.msra.mxu0 0.0
  %2564 = vmatprep.subr.mxu0 0.0
  %2565 = vmatpush1.msra.mxu0 0.0
  %2566 = vmatprep.subr.mxu0 0.0
  %2567 = vmatpush1.msra.mxu0 0.0
  %2568 = vmatprep.subr.mxu0 0.0
  %2569 = vmatpush1.msra.mxu0 0.0
  %2570 = vmatprep.subr.mxu0 0.0
  %2571 = vmatpush1.msra.mxu0 0.0
  %2572 = vmatprep.subr.mxu0 0.0
  %2573 = vmatpush1.msra.mxu0 0.0
  %2574 = vmatprep.subr.mxu0 0.0
  %2575 = vmatpush1.msra.mxu0 0.0
  %2576 = vmatprep.subr.mxu0 0.0
  %2577 = vmatpush1.msra.mxu0 0.0
  %2578 = vmatprep.subr.mxu0 0.0
  %2579 = vmatpush1.msra.mxu0 0.0
  %2580 = vmatprep.mubr.f32.mxu0 0.0
  %2581 = vmatmul.mubr.f32.gmra.mrb[0].mxu0 %v2502
  %v2582 = vpop.f32.mrb[0].mxu0
  %v2583 = vadd.f32 %v2483, %v2582
  %v2584 = vpop.f32.mrb[0].mxu0
  %2585 = vmatprep.mubr.f32.mxu0 0.0
  %2586 = vmatmul.mubr.f32.gmra.mrb[0].mxu0 %v2505
  %v2587 = vpop.f32.mrb[0].mxu0
  %v2588 = vadd.f32 %v2488, %v2587
  %v2589 = vpop.f32.mrb[0].mxu0
  %2590 = vmatprep.mubr.f32.mxu0 0.0
  %2591 = vmatmul.mubr.f32.gmra.mrb[0].mxu0 %v2508
  %v2592 = vpop.f32.mrb[0].mxu0
  %v2593 = vadd.f32 %v2493, %v2592
  %v2594 = vpop.f32.mrb[0].mxu0
  %2595 = vmatprep.mubr.f32.mxu0 0.0
  %2596 = vmatmul.mubr.f32.gmra.mrb[0].mxu0 %v2511
  %v2597 = vpop.f32.mrb[0].mxu0
  %v2598 = vadd.f32 %v2498, %v2597
  %v2599 = vpop.f32.mrb[0].mxu0
  %2600 = vdwg.mxu0
  %s2601 = scalar_lea.vmem %s21, 64
  %v2602 = vld [vmem:[%s2601] sm:$0xff]
  %v2603 = vld [vmem:[%s2601 + $0x8] sm:$0xff]
  %v2604 = vld [vmem:[%s2601 + $0x10] sm:$0xff]
  %v2605 = vld [vmem:[%s2601 + $0x18] sm:$0xf]
  %s2606 = scalar_lea.vmem %s23, 64
  %v2607 = vld [vmem:[%s2606] sm:$0xff]
  %v2608 = vld [vmem:[%s2606 + $0x8] sm:$0xff]
  %v2609 = vld [vmem:[%s2606 + $0x10] sm:$0xff]
  %v2610 = vld [vmem:[%s2606 + $0x18] sm:$0xf]
  %v2612 = vsel %vm374, %v2610, 0
  %2614 = vmatprep.subr.mxu0 0.0
  %2615 = vmatpush1.msra.mxu0 %v2607
  %2616 = vmatprep.subr.mxu0 0.0
  %2617 = vmatpush1.msra.mxu0 %v2608
  %2618 = vmatprep.subr.mxu0 0.0
  %2619 = vmatpush1.msra.mxu0 %v2609
  %2620 = vmatprep.subr.mxu0 0.0
  %2621 = vmatpush1.msra.mxu0 %v2612
  %2622 = vmatprep.subr.mxu0 0.0
  %2623 = vmatpush1.msra.mxu0 0.0
  %2624 = vmatprep.subr.mxu0 0.0
  %2625 = vmatpush1.msra.mxu0 0.0
  %2626 = vmatprep.subr.mxu0 0.0
  %2627 = vmatpush1.msra.mxu0 0.0
  %2628 = vmatprep.subr.mxu0 0.0
  %2629 = vmatpush1.msra.mxu0 0.0
  %2630 = vmatprep.subr.mxu0 0.0
  %2631 = vmatpush1.msra.mxu0 0.0
  %2632 = vmatprep.subr.mxu0 0.0
  %2633 = vmatpush1.msra.mxu0 0.0
  %2634 = vmatprep.subr.mxu0 0.0
  %2635 = vmatpush1.msra.mxu0 0.0
  %2636 = vmatprep.subr.mxu0 0.0
  %2637 = vmatpush1.msra.mxu0 0.0
  %2638 = vmatprep.subr.mxu0 0.0
  %2639 = vmatpush1.msra.mxu0 0.0
  %2640 = vmatprep.subr.mxu0 0.0
  %2641 = vmatpush1.msra.mxu0 0.0
  %2642 = vmatprep.subr.mxu0 0.0
  %2643 = vmatpush1.msra.mxu0 0.0
  %2644 = vmatprep.subr.mxu0 0.0
  %2645 = vmatpush1.msra.mxu0 0.0
  %2646 = vmatprep.subr.mxu0 0.0
  %2647 = vmatpush1.msra.mxu0 0.0
  %2648 = vmatprep.subr.mxu0 0.0
  %2649 = vmatpush1.msra.mxu0 0.0
  %2650 = vmatprep.subr.mxu0 0.0
  %2651 = vmatpush1.msra.mxu0 0.0
  %2652 = vmatprep.subr.mxu0 0.0
  %2653 = vmatpush1.msra.mxu0 0.0
  %2654 = vmatprep.subr.mxu0 0.0
  %2655 = vmatpush1.msra.mxu0 0.0
  %2656 = vmatprep.subr.mxu0 0.0
  %2657 = vmatpush1.msra.mxu0 0.0
  %2658 = vmatprep.subr.mxu0 0.0
  %2659 = vmatpush1.msra.mxu0 0.0
  %2660 = vmatprep.subr.mxu0 0.0
  %2661 = vmatpush1.msra.mxu0 0.0
  %2662 = vmatprep.subr.mxu0 0.0
  %2663 = vmatpush1.msra.mxu0 0.0
  %2664 = vmatprep.subr.mxu0 0.0
  %2665 = vmatpush1.msra.mxu0 0.0
  %2666 = vmatprep.subr.mxu0 0.0
  %2667 = vmatpush1.msra.mxu0 0.0
  %2668 = vmatprep.subr.mxu0 0.0
  %2669 = vmatpush1.msra.mxu0 0.0
  %2670 = vmatprep.subr.mxu0 0.0
  %2671 = vmatpush1.msra.mxu0 0.0
  %2672 = vmatprep.subr.mxu0 0.0
  %2673 = vmatpush1.msra.mxu0 0.0
  %2674 = vmatprep.subr.mxu0 0.0
  %2675 = vmatpush1.msra.mxu0 0.0
  %2676 = vmatprep.subr.mxu0 0.0
  %2677 = vmatpush1.msra.mxu0 0.0
  %2678 = vmatprep.mubr.f32.mxu0 0.0
  %2679 = vmatmul.mubr.f32.gmra.mrb[0].mxu0 %v2204
  %v2680 = vpop.f32.mrb[0].mxu0
  %v2681 = vadd.f32 0.0, %v2680
  %v2682 = vpop.f32.mrb[0].mxu0
  %2683 = vmatprep.mubr.f32.mxu0 0.0
  %2684 = vmatmul.mubr.f32.gmra.mrb[0].mxu0 %v2207
  %v2685 = vpop.f32.mrb[0].mxu0
  %v2686 = vadd.f32 0.0, %v2685
  %v2687 = vpop.f32.mrb[0].mxu0
  %2688 = vmatprep.mubr.f32.mxu0 0.0
  %2689 = vmatmul.mubr.f32.gmra.mrb[0].mxu0 %v2210
  %v2690 = vpop.f32.mrb[0].mxu0
  %v2691 = vadd.f32 0.0, %v2690
  %v2692 = vpop.f32.mrb[0].mxu0
  %2693 = vmatprep.mubr.f32.mxu0 0.0
  %2694 = vmatmul.mubr.f32.gmra.mrb[0].mxu0 %v2213
  %v2695 = vpop.f32.mrb[0].mxu0
  %v2696 = vadd.f32 0.0, %v2695
  %v2697 = vpop.f32.mrb[0].mxu0
  %2698 = vdwg.mxu0
  %v2700 = vsel %vm352, %v2602, 0
  %v2703 = vsel %vm352, %v2603, 0
  %v2706 = vsel %vm352, %v2604, 0
  %v2709 = vsel %vm352, %v2605, 0
  %v2712 = vsel %vm374, %v2696, 0
  %2714 = vmatprep.subr.mxu0 0.0
  %2715 = vmatpush1.msra.mxu0 %v2681
  %2716 = vmatprep.subr.mxu0 0.0
  %2717 = vmatpush1.msra.mxu0 %v2686
  %2718 = vmatprep.subr.mxu0 0.0
  %2719 = vmatpush1.msra.mxu0 %v2691
  %2720 = vmatprep.subr.mxu0 0.0
  %2721 = vmatpush1.msra.mxu0 %v2712
  %2722 = vmatprep.subr.mxu0 0.0
  %2723 = vmatpush1.msra.mxu0 0.0
  %2724 = vmatprep.subr.mxu0 0.0
  %2725 = vmatpush1.msra.mxu0 0.0
  %2726 = vmatprep.subr.mxu0 0.0
  %2727 = vmatpush1.msra.mxu0 0.0
  %2728 = vmatprep.subr.mxu0 0.0
  %2729 = vmatpush1.msra.mxu0 0.0
  %2730 = vmatprep.subr.mxu0 0.0
  %2731 = vmatpush1.msra.mxu0 0.0
  %2732 = vmatprep.subr.mxu0 0.0
  %2733 = vmatpush1.msra.mxu0 0.0
  %2734 = vmatprep.subr.mxu0 0.0
  %2735 = vmatpush1.msra.mxu0 0.0
  %2736 = vmatprep.subr.mxu0 0.0
  %2737 = vmatpush1.msra.mxu0 0.0
  %2738 = vmatprep.subr.mxu0 0.0
  %2739 = vmatpush1.msra.mxu0 0.0
  %2740 = vmatprep.subr.mxu0 0.0
  %2741 = vmatpush1.msra.mxu0 0.0
  %2742 = vmatprep.subr.mxu0 0.0
  %2743 = vmatpush1.msra.mxu0 0.0
  %2744 = vmatprep.subr.mxu0 0.0
  %2745 = vmatpush1.msra.mxu0 0.0
  %2746 = vmatprep.subr.mxu0 0.0
  %2747 = vmatpush1.msra.mxu0 0.0
  %2748 = vmatprep.subr.mxu0 0.0
  %2749 = vmatpush1.msra.mxu0 0.0
  %2750 = vmatprep.subr.mxu0 0.0
  %2751 = vmatpush1.msra.mxu0 0.0
  %2752 = vmatprep.subr.mxu0 0.0
  %2753 = vmatpush1.msra.mxu0 0.0
  %2754 = vmatprep.subr.mxu0 0.0
  %2755 = vmatpush1.msra.mxu0 0.0
  %2756 = vmatprep.subr.mxu0 0.0
  %2757 = vmatpush1.msra.mxu0 0.0
  %2758 = vmatprep.subr.mxu0 0.0
  %2759 = vmatpush1.msra.mxu0 0.0
  %2760 = vmatprep.subr.mxu0 0.0
  %2761 = vmatpush1.msra.mxu0 0.0
  %2762 = vmatprep.subr.mxu0 0.0
  %2763 = vmatpush1.msra.mxu0 0.0
  %2764 = vmatprep.subr.mxu0 0.0
  %2765 = vmatpush1.msra.mxu0 0.0
  %2766 = vmatprep.subr.mxu0 0.0
  %2767 = vmatpush1.msra.mxu0 0.0
  %2768 = vmatprep.subr.mxu0 0.0
  %2769 = vmatpush1.msra.mxu0 0.0
  %2770 = vmatprep.subr.mxu0 0.0
  %2771 = vmatpush1.msra.mxu0 0.0
  %2772 = vmatprep.subr.mxu0 0.0
  %2773 = vmatpush1.msra.mxu0 0.0
  %2774 = vmatprep.subr.mxu0 0.0
  %2775 = vmatpush1.msra.mxu0 0.0
  %2776 = vmatprep.subr.mxu0 0.0
  %2777 = vmatpush1.msra.mxu0 0.0
  %2778 = vmatprep.mubr.f32.mxu0 0.0
  %2779 = vmatmul.mubr.f32.gmra.mrb[0].mxu0 %v2700
  %v2780 = vpop.f32.mrb[0].mxu0
  %v2781 = vadd.f32 0.0, %v2780
  %v2782 = vpop.f32.mrb[0].mxu0
  %2783 = vmatprep.mubr.f32.mxu0 0.0
  %2784 = vmatmul.mubr.f32.gmra.mrb[0].mxu0 %v2703
  %v2785 = vpop.f32.mrb[0].mxu0
  %v2786 = vadd.f32 0.0, %v2785
  %v2787 = vpop.f32.mrb[0].mxu0
  %2788 = vmatprep.mubr.f32.mxu0 0.0
  %2789 = vmatmul.mubr.f32.gmra.mrb[0].mxu0 %v2706
  %v2790 = vpop.f32.mrb[0].mxu0
  %v2791 = vadd.f32 0.0, %v2790
  %v2792 = vpop.f32.mrb[0].mxu0
  %2793 = vmatprep.mubr.f32.mxu0 0.0
  %2794 = vmatmul.mubr.f32.gmra.mrb[0].mxu0 %v2709
  %v2795 = vpop.f32.mrb[0].mxu0
  %v2796 = vadd.f32 0.0, %v2795
  %v2797 = vpop.f32.mrb[0].mxu0
  %2798 = vdwg.mxu0
  %v2799 = vadd.f32 %v2583, %v2781
  %v2800 = vadd.f32 %v2588, %v2786
  %v2801 = vadd.f32 %v2593, %v2791
  %v2802 = vadd.f32 %v2598, %v2796
  %v2803 = vld [vmem:[%s25] sm:$0xff]
  %v2804 = vld [vmem:[%s25 + $0x8] sm:$0xff]
  %v2805 = vld [vmem:[%s25 + $0x10] sm:$0xff]
  %v2806 = vld [vmem:[%s25 + $0x18] sm:$0xf]
  %2808 = vset.pattern.permute.xlu0 0
  %2809 = vperm.xlu0 %2808, %v2803
  %v2810 = vpop.permute.xlu0 %2809
  %2813 = vset.pattern.permute.xlu0 0
  %2814 = vperm.xlu0 %2813, %v2804
  %v2815 = vpop.permute.xlu0 %2814
  %2818 = vset.pattern.permute.xlu0 0
  %2819 = vperm.xlu0 %2818, %v2805
  %v2820 = vpop.permute.xlu0 %2819
  %2823 = vset.pattern.permute.xlu0 0
  %2824 = vperm.xlu0 %2823, %v2806
  %v2825 = vpop.permute.xlu0 %2824
  %v2827 = vadd.f32 %v2799, %v2810
  %v2828 = vadd.f32 %v2800, %v2815
  %v2829 = vadd.f32 %v2801, %v2820
  %v2830 = vadd.f32 %v2802, %v2825
  %v2831 = vmax.f32 %v2827, 0.0
  %v2832 = vmax.f32 %v2828, 0.0
  %v2833 = vmax.f32 %v2829, 0.0
  %v2834 = vmax.f32 %v2830, 0.0
  %v2835 = vld [vmem:[%s27] sm:$0xff]
  %v2837 = vsel %vm352, %v2835, 0
  %v2840 = vsel %vm374, %v2834, 0
  %2842 = vmatprep.subr.mxu0 0.0
  %2843 = vmatpush1.msra.mxu0 %v2831
  %2844 = vmatprep.subr.mxu0 0.0
  %2845 = vmatpush1.msra.mxu0 %v2832
  %2846 = vmatprep.subr.mxu0 0.0
  %2847 = vmatpush1.msra.mxu0 %v2833
  %2848 = vmatprep.subr.mxu0 0.0
  %2849 = vmatpush1.msra.mxu0 %v2840
  %2850 = vmatprep.subr.mxu0 0.0
  %2851 = vmatpush1.msra.mxu0 0.0
  %2852 = vmatprep.subr.mxu0 0.0
  %2853 = vmatpush1.msra.mxu0 0.0
  %2854 = vmatprep.subr.mxu0 0.0
  %2855 = vmatpush1.msra.mxu0 0.0
  %2856 = vmatprep.subr.mxu0 0.0
  %2857 = vmatpush1.msra.mxu0 0.0
  %2858 = vmatprep.subr.mxu0 0.0
  %2859 = vmatpush1.msra.mxu0 0.0
  %2860 = vmatprep.subr.mxu0 0.0
  %2861 = vmatpush1.msra.mxu0 0.0
  %2862 = vmatprep.subr.mxu0 0.0
  %2863 = vmatpush1.msra.mxu0 0.0
  %2864 = vmatprep.subr.mxu0 0.0
  %2865 = vmatpush1.msra.mxu0 0.0
  %2866 = vmatprep.subr.mxu0 0.0
  %2867 = vmatpush1.msra.mxu0 0.0
  %2868 = vmatprep.subr.mxu0 0.0
  %2869 = vmatpush1.msra.mxu0 0.0
  %2870 = vmatprep.subr.mxu0 0.0
  %2871 = vmatpush1.msra.mxu0 0.0
  %2872 = vmatprep.subr.mxu0 0.0
  %2873 = vmatpush1.msra.mxu0 0.0
  %2874 = vmatprep.subr.mxu0 0.0
  %2875 = vmatpush1.msra.mxu0 0.0
  %2876 = vmatprep.subr.mxu0 0.0
  %2877 = vmatpush1.msra.mxu0 0.0
  %2878 = vmatprep.subr.mxu0 0.0
  %2879 = vmatpush1.msra.mxu0 0.0
  %2880 = vmatprep.subr.mxu0 0.0
  %2881 = vmatpush1.msra.mxu0 0.0
  %2882 = vmatprep.subr.mxu0 0.0
  %2883 = vmatpush1.msra.mxu0 0.0
  %2884 = vmatprep.subr.mxu0 0.0
  %2885 = vmatpush1.msra.mxu0 0.0
  %2886 = vmatprep.subr.mxu0 0.0
  %2887 = vmatpush1.msra.mxu0 0.0
  %2888 = vmatprep.subr.mxu0 0.0
  %2889 = vmatpush1.msra.mxu0 0.0
  %2890 = vmatprep.subr.mxu0 0.0
  %2891 = vmatpush1.msra.mxu0 0.0
  %2892 = vmatprep.subr.mxu0 0.0
  %2893 = vmatpush1.msra.mxu0 0.0
  %2894 = vmatprep.subr.mxu0 0.0
  %2895 = vmatpush1.msra.mxu0 0.0
  %2896 = vmatprep.subr.mxu0 0.0
  %2897 = vmatpush1.msra.mxu0 0.0
  %2898 = vmatprep.subr.mxu0 0.0
  %2899 = vmatpush1.msra.mxu0 0.0
  %2900 = vmatprep.subr.mxu0 0.0
  %2901 = vmatpush1.msra.mxu0 0.0
  %2902 = vmatprep.subr.mxu0 0.0
  %2903 = vmatpush1.msra.mxu0 0.0
  %2904 = vmatprep.subr.mxu0 0.0
  %2905 = vmatpush1.msra.mxu0 0.0
  %2906 = vmatprep.mubr.f32.mxu0 0.0
  %2907 = vmatmul.mubr.f32.gmra.mrb[0].mxu0 %v2837
  %v2908 = vpop.f32.mrb[0].mxu0
  %v2909 = vadd.f32 0.0, %v2908
  %v2910 = vpop.f32.mrb[0].mxu0
  %2911 = vdwg.mxu0
  %v2912 = vld [vmem:[%s29] sm:$0xff]
  %v2913 = vld [vmem:[%s29 + $0x8] sm:$0xff]
  %v2914 = vld [vmem:[%s29 + $0x10] sm:$0xff]
  %v2915 = vld [vmem:[%s29 + $0x18] sm:$0xf]
  %s2916 = scalar_lea.vmem %s27, 8
  %v2917 = vld [vmem:[%s2916] sm:$0xff]
  %v2919 = vsel %vm352, %v2917, 0
  %2921 = vmatprep.subr.mxu0 0.0
  %2922 = vmatpush1.msra.mxu0 %v2831
  %2923 = vmatprep.subr.mxu0 0.0
  %2924 = vmatpush1.msra.mxu0 %v2832
  %2925 = vmatprep.subr.mxu0 0.0
  %2926 = vmatpush1.msra.mxu0 %v2833
  %2927 = vmatprep.subr.mxu0 0.0
  %2928 = vmatpush1.msra.mxu0 %v2840
  %2929 = vmatprep.subr.mxu0 0.0
  %2930 = vmatpush1.msra.mxu0 0.0
  %2931 = vmatprep.subr.mxu0 0.0
  %2932 = vmatpush1.msra.mxu0 0.0
  %2933 = vmatprep.subr.mxu0 0.0
  %2934 = vmatpush1.msra.mxu0 0.0
  %2935 = vmatprep.subr.mxu0 0.0
  %2936 = vmatpush1.msra.mxu0 0.0
  %2937 = vmatprep.subr.mxu0 0.0
  %2938 = vmatpush1.msra.mxu0 0.0
  %2939 = vmatprep.subr.mxu0 0.0
  %2940 = vmatpush1.msra.mxu0 0.0
  %2941 = vmatprep.subr.mxu0 0.0
  %2942 = vmatpush1.msra.mxu0 0.0
  %2943 = vmatprep.subr.mxu0 0.0
  %2944 = vmatpush1.msra.mxu0 0.0
  %2945 = vmatprep.subr.mxu0 0.0
  %2946 = vmatpush1.msra.mxu0 0.0
  %2947 = vmatprep.subr.mxu0 0.0
  %2948 = vmatpush1.msra.mxu0 0.0
  %2949 = vmatprep.subr.mxu0 0.0
  %2950 = vmatpush1.msra.mxu0 0.0
  %2951 = vmatprep.subr.mxu0 0.0
  %2952 = vmatpush1.msra.mxu0 0.0
  %2953 = vmatprep.subr.mxu0 0.0
  %2954 = vmatpush1.msra.mxu0 0.0
  %2955 = vmatprep.subr.mxu0 0.0
  %2956 = vmatpush1.msra.mxu0 0.0
  %2957 = vmatprep.subr.mxu0 0.0
  %2958 = vmatpush1.msra.mxu0 0.0
  %2959 = vmatprep.subr.mxu0 0.0
  %2960 = vmatpush1.msra.mxu0 0.0
  %2961 = vmatprep.subr.mxu0 0.0
  %2962 = vmatpush1.msra.mxu0 0.0
  %2963 = vmatprep.subr.mxu0 0.0
  %2964 = vmatpush1.msra.mxu0 0.0
  %2965 = vmatprep.subr.mxu0 0.0
  %2966 = vmatpush1.msra.mxu0 0.0
  %2967 = vmatprep.subr.mxu0 0.0
  %2968 = vmatpush1.msra.mxu0 0.0
  %2969 = vmatprep.subr.mxu0 0.0
  %2970 = vmatpush1.msra.mxu0 0.0
  %2971 = vmatprep.subr.mxu0 0.0
  %2972 = vmatpush1.msra.mxu0 0.0
  %2973 = vmatprep.subr.mxu0 0.0
  %2974 = vmatpush1.msra.mxu0 0.0
  %2975 = vmatprep.subr.mxu0 0.0
  %2976 = vmatpush1.msra.mxu0 0.0
  %2977 = vmatprep.subr.mxu0 0.0
  %2978 = vmatpush1.msra.mxu0 0.0
  %2979 = vmatprep.subr.mxu0 0.0
  %2980 = vmatpush1.msra.mxu0 0.0
  %2981 = vmatprep.subr.mxu0 0.0
  %2982 = vmatpush1.msra.mxu0 0.0
  %2983 = vmatprep.subr.mxu0 0.0
  %2984 = vmatpush1.msra.mxu0 0.0
  %2985 = vmatprep.mubr.f32.mxu0 0.0
  %2986 = vmatmul.mubr.f32.gmra.mrb[0].mxu0 %v2919
  %v2987 = vpop.f32.mrb[0].mxu0
  %v2988 = vadd.f32 0.0, %v2987
  %v2989 = vpop.f32.mrb[0].mxu0
  %2990 = vdwg.mxu0
  %s2991 = scalar_lea.vmem %s29, 32
  %v2992 = vld [vmem:[%s2991] sm:$0xff]
  %v2993 = vld [vmem:[%s2991 + $0x8] sm:$0xff]
  %v2994 = vld [vmem:[%s2991 + $0x10] sm:$0xff]
  %v2995 = vld [vmem:[%s2991 + $0x18] sm:$0xf]
  %v2997 = vsel %vm352, %v2988, 0
  %v3000 = vsel %vm374, %v2995, 0
  %3002 = vmatprep.subr.mxu0 0.0
  %3003 = vmatpush1.msra.mxu0 %v2992
  %3004 = vmatprep.subr.mxu0 0.0
  %3005 = vmatpush1.msra.mxu0 %v2993
  %3006 = vmatprep.subr.mxu0 0.0
  %3007 = vmatpush1.msra.mxu0 %v2994
  %3008 = vmatprep.subr.mxu0 0.0
  %3009 = vmatpush1.msra.mxu0 %v3000
  %3010 = vmatprep.subr.mxu0 0.0
  %3011 = vmatpush1.msra.mxu0 0.0
  %3012 = vmatprep.subr.mxu0 0.0
  %3013 = vmatpush1.msra.mxu0 0.0
  %3014 = vmatprep.subr.mxu0 0.0
  %3015 = vmatpush1.msra.mxu0 0.0
  %3016 = vmatprep.subr.mxu0 0.0
  %3017 = vmatpush1.msra.mxu0 0.0
  %3018 = vmatprep.subr.mxu0 0.0
  %3019 = vmatpush1.msra.mxu0 0.0
  %3020 = vmatprep.subr.mxu0 0.0
  %3021 = vmatpush1.msra.mxu0 0.0
  %3022 = vmatprep.subr.mxu0 0.0
  %3023 = vmatpush1.msra.mxu0 0.0
  %3024 = vmatprep.subr.mxu0 0.0
  %3025 = vmatpush1.msra.mxu0 0.0
  %3026 = vmatprep.subr.mxu0 0.0
  %3027 = vmatpush1.msra.mxu0 0.0
  %3028 = vmatprep.subr.mxu0 0.0
  %3029 = vmatpush1.msra.mxu0 0.0
  %3030 = vmatprep.subr.mxu0 0.0
  %3031 = vmatpush1.msra.mxu0 0.0
  %3032 = vmatprep.subr.mxu0 0.0
  %3033 = vmatpush1.msra.mxu0 0.0
  %3034 = vmatprep.subr.mxu0 0.0
  %3035 = vmatpush1.msra.mxu0 0.0
  %3036 = vmatprep.subr.mxu0 0.0
  %3037 = vmatpush1.msra.mxu0 0.0
  %3038 = vmatprep.subr.mxu0 0.0
  %3039 = vmatpush1.msra.mxu0 0.0
  %3040 = vmatprep.subr.mxu0 0.0
  %3041 = vmatpush1.msra.mxu0 0.0
  %3042 = vmatprep.subr.mxu0 0.0
  %3043 = vmatpush1.msra.mxu0 0.0
  %3044 = vmatprep.subr.mxu0 0.0
  %3045 = vmatpush1.msra.mxu0 0.0
  %3046 = vmatprep.subr.mxu0 0.0
  %3047 = vmatpush1.msra.mxu0 0.0
  %3048 = vmatprep.subr.mxu0 0.0
  %3049 = vmatpush1.msra.mxu0 0.0
  %3050 = vmatprep.subr.mxu0 0.0
  %3051 = vmatpush1.msra.mxu0 0.0
  %3052 = vmatprep.subr.mxu0 0.0
  %3053 = vmatpush1.msra.mxu0 0.0
  %3054 = vmatprep.subr.mxu0 0.0
  %3055 = vmatpush1.msra.mxu0 0.0
  %3056 = vmatprep.subr.mxu0 0.0
  %3057 = vmatpush1.msra.mxu0 0.0
  %3058 = vmatprep.subr.mxu0 0.0
  %3059 = vmatpush1.msra.mxu0 0.0
  %3060 = vmatprep.subr.mxu0 0.0
  %3061 = vmatpush1.msra.mxu0 0.0
  %3062 = vmatprep.subr.mxu0 0.0
  %3063 = vmatpush1.msra.mxu0 0.0
  %3064 = vmatprep.subr.mxu0 0.0
  %3065 = vmatpush1.msra.mxu0 0.0
  %3066 = vmatprep.mubr.f32.mxu0 0.0
  %3067 = vmatmul.mubr.f32.gmra.mrb[0].mxu0 %v2997
  %v3068 = vpop.f32.mrb[0].mxu0
  %v3069 = vadd.f32 0.0, %v3068
  %v3070 = vpop.f32.mrb[0].mxu0
  %3071 = vdwg.mxu0
  %v3073 = vsel %vm352, %v2909, 0
  %v3076 = vsel %vm374, %v2915, 0
  %3078 = vmatprep.subr.mxu0 0.0
  %3079 = vmatpush1.msra.mxu0 %v2912
  %3080 = vmatprep.subr.mxu0 0.0
  %3081 = vmatpush1.msra.mxu0 %v2913
  %3082 = vmatprep.subr.mxu0 0.0
  %3083 = vmatpush1.msra.mxu0 %v2914
  %3084 = vmatprep.subr.mxu0 0.0
  %3085 = vmatpush1.msra.mxu0 %v3076
  %3086 = vmatprep.subr.mxu0 0.0
  %3087 = vmatpush1.msra.mxu0 0.0
  %3088 = vmatprep.subr.mxu0 0.0
  %3089 = vmatpush1.msra.mxu0 0.0
  %3090 = vmatprep.subr.mxu0 0.0
  %3091 = vmatpush1.msra.mxu0 0.0
  %3092 = vmatprep.subr.mxu0 0.0
  %3093 = vmatpush1.msra.mxu0 0.0
  %3094 = vmatprep.subr.mxu0 0.0
  %3095 = vmatpush1.msra.mxu0 0.0
  %3096 = vmatprep.subr.mxu0 0.0
  %3097 = vmatpush1.msra.mxu0 0.0
  %3098 = vmatprep.subr.mxu0 0.0
  %3099 = vmatpush1.msra.mxu0 0.0
  %3100 = vmatprep.subr.mxu0 0.0
  %3101 = vmatpush1.msra.mxu0 0.0
  %3102 = vmatprep.subr.mxu0 0.0
  %3103 = vmatpush1.msra.mxu0 0.0
  %3104 = vmatprep.subr.mxu0 0.0
  %3105 = vmatpush1.msra.mxu0 0.0
  %3106 = vmatprep.subr.mxu0 0.0
  %3107 = vmatpush1.msra.mxu0 0.0
  %3108 = vmatprep.subr.mxu0 0.0
  %3109 = vmatpush1.msra.mxu0 0.0
  %3110 = vmatprep.subr.mxu0 0.0
  %3111 = vmatpush1.msra.mxu0 0.0
  %3112 = vmatprep.subr.mxu0 0.0
  %3113 = vmatpush1.msra.mxu0 0.0
  %3114 = vmatprep.subr.mxu0 0.0
  %3115 = vmatpush1.msra.mxu0 0.0
  %3116 = vmatprep.subr.mxu0 0.0
  %3117 = vmatpush1.msra.mxu0 0.0
  %3118 = vmatprep.subr.mxu0 0.0
  %3119 = vmatpush1.msra.mxu0 0.0
  %3120 = vmatprep.subr.mxu0 0.0
  %3121 = vmatpush1.msra.mxu0 0.0
  %3122 = vmatprep.subr.mxu0 0.0
  %3123 = vmatpush1.msra.mxu0 0.0
  %3124 = vmatprep.subr.mxu0 0.0
  %3125 = vmatpush1.msra.mxu0 0.0
  %3126 = vmatprep.subr.mxu0 0.0
  %3127 = vmatpush1.msra.mxu0 0.0
  %3128 = vmatprep.subr.mxu0 0.0
  %3129 = vmatpush1.msra.mxu0 0.0
  %3130 = vmatprep.subr.mxu0 0.0
  %3131 = vmatpush1.msra.mxu0 0.0
  %3132 = vmatprep.subr.mxu0 0.0
  %3133 = vmatpush1.msra.mxu0 0.0
  %3134 = vmatprep.subr.mxu0 0.0
  %3135 = vmatpush1.msra.mxu0 0.0
  %3136 = vmatprep.subr.mxu0 0.0
  %3137 = vmatpush1.msra.mxu0 0.0
  %3138 = vmatprep.subr.mxu0 0.0
  %3139 = vmatpush1.msra.mxu0 0.0
  %3140 = vmatprep.subr.mxu0 0.0
  %3141 = vmatpush1.msra.mxu0 0.0
  %3142 = vmatprep.mubr.f32.mxu0 0.0
  %3143 = vmatmul.mubr.f32.gmra.mrb[0].mxu0 %v3073
  %v3144 = vpop.f32.mrb[0].mxu0
  %v3145 = vadd.f32 %v3069, %v3144
  %v3146 = vpop.f32.mrb[0].mxu0
  %3147 = vdwg.mxu0
  %s3148 = scalar_lea.vmem %s27, 16
  %v3149 = vld [vmem:[%s3148] sm:$0xff]
  %v3151 = vsel %vm352, %v3149, 0
  %3153 = vmatprep.subr.mxu0 0.0
  %3154 = vmatpush1.msra.mxu0 %v2831
  %3155 = vmatprep.subr.mxu0 0.0
  %3156 = vmatpush1.msra.mxu0 %v2832
  %3157 = vmatprep.subr.mxu0 0.0
  %3158 = vmatpush1.msra.mxu0 %v2833
  %3159 = vmatprep.subr.mxu0 0.0
  %3160 = vmatpush1.msra.mxu0 %v2840
  %3161 = vmatprep.subr.mxu0 0.0
  %3162 = vmatpush1.msra.mxu0 0.0
  %3163 = vmatprep.subr.mxu0 0.0
  %3164 = vmatpush1.msra.mxu0 0.0
  %3165 = vmatprep.subr.mxu0 0.0
  %3166 = vmatpush1.msra.mxu0 0.0
  %3167 = vmatprep.subr.mxu0 0.0
  %3168 = vmatpush1.msra.mxu0 0.0
  %3169 = vmatprep.subr.mxu0 0.0
  %3170 = vmatpush1.msra.mxu0 0.0
  %3171 = vmatprep.subr.mxu0 0.0
  %3172 = vmatpush1.msra.mxu0 0.0
  %3173 = vmatprep.subr.mxu0 0.0
  %3174 = vmatpush1.msra.mxu0 0.0
  %3175 = vmatprep.subr.mxu0 0.0
  %3176 = vmatpush1.msra.mxu0 0.0
  %3177 = vmatprep.subr.mxu0 0.0
  %3178 = vmatpush1.msra.mxu0 0.0
  %3179 = vmatprep.subr.mxu0 0.0
  %3180 = vmatpush1.msra.mxu0 0.0
  %3181 = vmatprep.subr.mxu0 0.0
  %3182 = vmatpush1.msra.mxu0 0.0
  %3183 = vmatprep.subr.mxu0 0.0
  %3184 = vmatpush1.msra.mxu0 0.0
  %3185 = vmatprep.subr.mxu0 0.0
  %3186 = vmatpush1.msra.mxu0 0.0
  %3187 = vmatprep.subr.mxu0 0.0
  %3188 = vmatpush1.msra.mxu0 0.0
  %3189 = vmatprep.subr.mxu0 0.0
  %3190 = vmatpush1.msra.mxu0 0.0
  %3191 = vmatprep.subr.mxu0 0.0
  %3192 = vmatpush1.msra.mxu0 0.0
  %3193 = vmatprep.subr.mxu0 0.0
  %3194 = vmatpush1.msra.mxu0 0.0
  %3195 = vmatprep.subr.mxu0 0.0
  %3196 = vmatpush1.msra.mxu0 0.0
  %3197 = vmatprep.subr.mxu0 0.0
  %3198 = vmatpush1.msra.mxu0 0.0
  %3199 = vmatprep.subr.mxu0 0.0
  %3200 = vmatpush1.msra.mxu0 0.0
  %3201 = vmatprep.subr.mxu0 0.0
  %3202 = vmatpush1.msra.mxu0 0.0
  %3203 = vmatprep.subr.mxu0 0.0
  %3204 = vmatpush1.msra.mxu0 0.0
  %3205 = vmatprep.subr.mxu0 0.0
  %3206 = vmatpush1.msra.mxu0 0.0
  %3207 = vmatprep.subr.mxu0 0.0
  %3208 = vmatpush1.msra.mxu0 0.0
  %3209 = vmatprep.subr.mxu0 0.0
  %3210 = vmatpush1.msra.mxu0 0.0
  %3211 = vmatprep.subr.mxu0 0.0
  %3212 = vmatpush1.msra.mxu0 0.0
  %3213 = vmatprep.subr.mxu0 0.0
  %3214 = vmatpush1.msra.mxu0 0.0
  %3215 = vmatprep.subr.mxu0 0.0
  %3216 = vmatpush1.msra.mxu0 0.0
  %3217 = vmatprep.mubr.f32.mxu0 0.0
  %3218 = vmatmul.mubr.f32.gmra.mrb[0].mxu0 %v3151
  %v3219 = vpop.f32.mrb[0].mxu0
  %v3220 = vadd.f32 0.0, %v3219
  %v3221 = vpop.f32.mrb[0].mxu0
  %3222 = vdwg.mxu0
  %s3223 = scalar_lea.vmem %s29, 64
  %v3224 = vld [vmem:[%s3223] sm:$0xff]
  %v3225 = vld [vmem:[%s3223 + $0x8] sm:$0xff]
  %v3226 = vld [vmem:[%s3223 + $0x10] sm:$0xff]
  %v3227 = vld [vmem:[%s3223 + $0x18] sm:$0xf]
  %v3229 = vsel %vm352, %v3220, 0
  %v3232 = vsel %vm374, %v3227, 0
  %3234 = vmatprep.subr.mxu0 0.0
  %3235 = vmatpush1.msra.mxu0 %v3224
  %3236 = vmatprep.subr.mxu0 0.0
  %3237 = vmatpush1.msra.mxu0 %v3225
  %3238 = vmatprep.subr.mxu0 0.0
  %3239 = vmatpush1.msra.mxu0 %v3226
  %3240 = vmatprep.subr.mxu0 0.0
  %3241 = vmatpush1.msra.mxu0 %v3232
  %3242 = vmatprep.subr.mxu0 0.0
  %3243 = vmatpush1.msra.mxu0 0.0
  %3244 = vmatprep.subr.mxu0 0.0
  %3245 = vmatpush1.msra.mxu0 0.0
  %3246 = vmatprep.subr.mxu0 0.0
  %3247 = vmatpush1.msra.mxu0 0.0
  %3248 = vmatprep.subr.mxu0 0.0
  %3249 = vmatpush1.msra.mxu0 0.0
  %3250 = vmatprep.subr.mxu0 0.0
  %3251 = vmatpush1.msra.mxu0 0.0
  %3252 = vmatprep.subr.mxu0 0.0
  %3253 = vmatpush1.msra.mxu0 0.0
  %3254 = vmatprep.subr.mxu0 0.0
  %3255 = vmatpush1.msra.mxu0 0.0
  %3256 = vmatprep.subr.mxu0 0.0
  %3257 = vmatpush1.msra.mxu0 0.0
  %3258 = vmatprep.subr.mxu0 0.0
  %3259 = vmatpush1.msra.mxu0 0.0
  %3260 = vmatprep.subr.mxu0 0.0
  %3261 = vmatpush1.msra.mxu0 0.0
  %3262 = vmatprep.subr.mxu0 0.0
  %3263 = vmatpush1.msra.mxu0 0.0
  %3264 = vmatprep.subr.mxu0 0.0
  %3265 = vmatpush1.msra.mxu0 0.0
  %3266 = vmatprep.subr.mxu0 0.0
  %3267 = vmatpush1.msra.mxu0 0.0
  %3268 = vmatprep.subr.mxu0 0.0
  %3269 = vmatpush1.msra.mxu0 0.0
  %3270 = vmatprep.subr.mxu0 0.0
  %3271 = vmatpush1.msra.mxu0 0.0
  %3272 = vmatprep.subr.mxu0 0.0
  %3273 = vmatpush1.msra.mxu0 0.0
  %3274 = vmatprep.subr.mxu0 0.0
  %3275 = vmatpush1.msra.mxu0 0.0
  %3276 = vmatprep.subr.mxu0 0.0
  %3277 = vmatpush1.msra.mxu0 0.0
  %3278 = vmatprep.subr.mxu0 0.0
  %3279 = vmatpush1.msra.mxu0 0.0
  %3280 = vmatprep.subr.mxu0 0.0
  %3281 = vmatpush1.msra.mxu0 0.0
  %3282 = vmatprep.subr.mxu0 0.0
  %3283 = vmatpush1.msra.mxu0 0.0
  %3284 = vmatprep.subr.mxu0 0.0
  %3285 = vmatpush1.msra.mxu0 0.0
  %3286 = vmatprep.subr.mxu0 0.0
  %3287 = vmatpush1.msra.mxu0 0.0
  %3288 = vmatprep.subr.mxu0 0.0
  %3289 = vmatpush1.msra.mxu0 0.0
  %3290 = vmatprep.subr.mxu0 0.0
  %3291 = vmatpush1.msra.mxu0 0.0
  %3292 = vmatprep.subr.mxu0 0.0
  %3293 = vmatpush1.msra.mxu0 0.0
  %3294 = vmatprep.subr.mxu0 0.0
  %3295 = vmatpush1.msra.mxu0 0.0
  %3296 = vmatprep.subr.mxu0 0.0
  %3297 = vmatpush1.msra.mxu0 0.0
  %3298 = vmatprep.mubr.f32.mxu0 0.0
  %3299 = vmatmul.mubr.f32.gmra.mrb[0].mxu0 %v3229
  %v3300 = vpop.f32.mrb[0].mxu0
  %v3301 = vadd.f32 0.0, %v3300
  %v3302 = vpop.f32.mrb[0].mxu0
  %3303 = vdwg.mxu0
  %v3304 = vadd.f32 %v3145, %v3301
  %s3305 = scalar_lea.vmem %s27, 24
  %v3306 = vld [vmem:[%s3305] sm:$0xff]
  %v3308 = vsel %vm352, %v3306, 0
  %3310 = vmatprep.subr.mxu0 0.0
  %3311 = vmatpush1.msra.mxu0 %v2831
  %3312 = vmatprep.subr.mxu0 0.0
  %3313 = vmatpush1.msra.mxu0 %v2832
  %3314 = vmatprep.subr.mxu0 0.0
  %3315 = vmatpush1.msra.mxu0 %v2833
  %3316 = vmatprep.subr.mxu0 0.0
  %3317 = vmatpush1.msra.mxu0 %v2840
  %3318 = vmatprep.subr.mxu0 0.0
  %3319 = vmatpush1.msra.mxu0 0.0
  %3320 = vmatprep.subr.mxu0 0.0
  %3321 = vmatpush1.msra.mxu0 0.0
  %3322 = vmatprep.subr.mxu0 0.0
  %3323 = vmatpush1.msra.mxu0 0.0
  %3324 = vmatprep.subr.mxu0 0.0
  %3325 = vmatpush1.msra.mxu0 0.0
  %3326 = vmatprep.subr.mxu0 0.0
  %3327 = vmatpush1.msra.mxu0 0.0
  %3328 = vmatprep.subr.mxu0 0.0
  %3329 = vmatpush1.msra.mxu0 0.0
  %3330 = vmatprep.subr.mxu0 0.0
  %3331 = vmatpush1.msra.mxu0 0.0
  %3332 = vmatprep.subr.mxu0 0.0
  %3333 = vmatpush1.msra.mxu0 0.0
  %3334 = vmatprep.subr.mxu0 0.0
  %3335 = vmatpush1.msra.mxu0 0.0
  %3336 = vmatprep.subr.mxu0 0.0
  %3337 = vmatpush1.msra.mxu0 0.0
  %3338 = vmatprep.subr.mxu0 0.0
  %3339 = vmatpush1.msra.mxu0 0.0
  %3340 = vmatprep.subr.mxu0 0.0
  %3341 = vmatpush1.msra.mxu0 0.0
  %3342 = vmatprep.subr.mxu0 0.0
  %3343 = vmatpush1.msra.mxu0 0.0
  %3344 = vmatprep.subr.mxu0 0.0
  %3345 = vmatpush1.msra.mxu0 0.0
  %3346 = vmatprep.subr.mxu0 0.0
  %3347 = vmatpush1.msra.mxu0 0.0
  %3348 = vmatprep.subr.mxu0 0.0
  %3349 = vmatpush1.msra.mxu0 0.0
  %3350 = vmatprep.subr.mxu0 0.0
  %3351 = vmatpush1.msra.mxu0 0.0
  %3352 = vmatprep.subr.mxu0 0.0
  %3353 = vmatpush1.msra.mxu0 0.0
  %3354 = vmatprep.subr.mxu0 0.0
  %3355 = vmatpush1.msra.mxu0 0.0
  %3356 = vmatprep.subr.mxu0 0.0
  %3357 = vmatpush1.msra.mxu0 0.0
  %3358 = vmatprep.subr.mxu0 0.0
  %3359 = vmatpush1.msra.mxu0 0.0
  %3360 = vmatprep.subr.mxu0 0.0
  %3361 = vmatpush1.msra.mxu0 0.0
  %3362 = vmatprep.subr.mxu0 0.0
  %3363 = vmatpush1.msra.mxu0 0.0
  %3364 = vmatprep.subr.mxu0 0.0
  %3365 = vmatpush1.msra.mxu0 0.0
  %3366 = vmatprep.subr.mxu0 0.0
  %3367 = vmatpush1.msra.mxu0 0.0
  %3368 = vmatprep.subr.mxu0 0.0
  %3369 = vmatpush1.msra.mxu0 0.0
  %3370 = vmatprep.subr.mxu0 0.0
  %3371 = vmatpush1.msra.mxu0 0.0
  %3372 = vmatprep.subr.mxu0 0.0
  %3373 = vmatpush1.msra.mxu0 0.0
  %3374 = vmatprep.mubr.f32.mxu0 0.0
  %3375 = vmatmul.mubr.f32.gmra.mrb[0].mxu0 %v3308
  %v3376 = vpop.f32.mrb[0].mxu0
  %v3377 = vadd.f32 0.0, %v3376
  %v3378 = vpop.f32.mrb[0].mxu0
  %3379 = vdwg.mxu0
  %s3380 = scalar_lea.vmem %s29, 96
  %v3381 = vld [vmem:[%s3380] sm:$0xff]
  %v3382 = vld [vmem:[%s3380 + $0x8] sm:$0xff]
  %v3383 = vld [vmem:[%s3380 + $0x10] sm:$0xff]
  %v3384 = vld [vmem:[%s3380 + $0x18] sm:$0xf]
  %v3386 = vsel %vm352, %v3377, 0
  %v3389 = vsel %vm374, %v3384, 0
  %3391 = vmatprep.subr.mxu0 0.0
  %3392 = vmatpush1.msra.mxu0 %v3381
  %3393 = vmatprep.subr.mxu0 0.0
  %3394 = vmatpush1.msra.mxu0 %v3382
  %3395 = vmatprep.subr.mxu0 0.0
  %3396 = vmatpush1.msra.mxu0 %v3383
  %3397 = vmatprep.subr.mxu0 0.0
  %3398 = vmatpush1.msra.mxu0 %v3389
  %3399 = vmatprep.subr.mxu0 0.0
  %3400 = vmatpush1.msra.mxu0 0.0
  %3401 = vmatprep.subr.mxu0 0.0
  %3402 = vmatpush1.msra.mxu0 0.0
  %3403 = vmatprep.subr.mxu0 0.0
  %3404 = vmatpush1.msra.mxu0 0.0
  %3405 = vmatprep.subr.mxu0 0.0
  %3406 = vmatpush1.msra.mxu0 0.0
  %3407 = vmatprep.subr.mxu0 0.0
  %3408 = vmatpush1.msra.mxu0 0.0
  %3409 = vmatprep.subr.mxu0 0.0
  %3410 = vmatpush1.msra.mxu0 0.0
  %3411 = vmatprep.subr.mxu0 0.0
  %3412 = vmatpush1.msra.mxu0 0.0
  %3413 = vmatprep.subr.mxu0 0.0
  %3414 = vmatpush1.msra.mxu0 0.0
  %3415 = vmatprep.subr.mxu0 0.0
  %3416 = vmatpush1.msra.mxu0 0.0
  %3417 = vmatprep.subr.mxu0 0.0
  %3418 = vmatpush1.msra.mxu0 0.0
  %3419 = vmatprep.subr.mxu0 0.0
  %3420 = vmatpush1.msra.mxu0 0.0
  %3421 = vmatprep.subr.mxu0 0.0
  %3422 = vmatpush1.msra.mxu0 0.0
  %3423 = vmatprep.subr.mxu0 0.0
  %3424 = vmatpush1.msra.mxu0 0.0
  %3425 = vmatprep.subr.mxu0 0.0
  %3426 = vmatpush1.msra.mxu0 0.0
  %3427 = vmatprep.subr.mxu0 0.0
  %3428 = vmatpush1.msra.mxu0 0.0
  %3429 = vmatprep.subr.mxu0 0.0
  %3430 = vmatpush1.msra.mxu0 0.0
  %3431 = vmatprep.subr.mxu0 0.0
  %3432 = vmatpush1.msra.mxu0 0.0
  %3433 = vmatprep.subr.mxu0 0.0
  %3434 = vmatpush1.msra.mxu0 0.0
  %3435 = vmatprep.subr.mxu0 0.0
  %3436 = vmatpush1.msra.mxu0 0.0
  %3437 = vmatprep.subr.mxu0 0.0
  %3438 = vmatpush1.msra.mxu0 0.0
  %3439 = vmatprep.subr.mxu0 0.0
  %3440 = vmatpush1.msra.mxu0 0.0
  %3441 = vmatprep.subr.mxu0 0.0
  %3442 = vmatpush1.msra.mxu0 0.0
  %3443 = vmatprep.subr.mxu0 0.0
  %3444 = vmatpush1.msra.mxu0 0.0
  %3445 = vmatprep.subr.mxu0 0.0
  %3446 = vmatpush1.msra.mxu0 0.0
  %3447 = vmatprep.subr.mxu0 0.0
  %3448 = vmatpush1.msra.mxu0 0.0
  %3449 = vmatprep.subr.mxu0 0.0
  %3450 = vmatpush1.msra.mxu0 0.0
  %3451 = vmatprep.subr.mxu0 0.0
  %3452 = vmatpush1.msra.mxu0 0.0
  %3453 = vmatprep.subr.mxu0 0.0
  %3454 = vmatpush1.msra.mxu0 0.0
  %3455 = vmatprep.mubr.f32.mxu0 0.0
  %3456 = vmatmul.mubr.f32.gmra.mrb[0].mxu0 %v3386
  %v3457 = vpop.f32.mrb[0].mxu0
  %v3458 = vadd.f32 0.0, %v3457
  %v3459 = vpop.f32.mrb[0].mxu0
  %3460 = vdwg.mxu0
  %v3461 = vadd.f32 %v3304, %v3458
  %s3462 = scalar_lea.vmem %s27, 32
  %v3463 = vld [vmem:[%s3462] sm:$0xff]
  %v3465 = vsel %vm352, %v3463, 0
  %3467 = vmatprep.subr.mxu0 0.0
  %3468 = vmatpush1.msra.mxu0 %v2831
  %3469 = vmatprep.subr.mxu0 0.0
  %3470 = vmatpush1.msra.mxu0 %v2832
  %3471 = vmatprep.subr.mxu0 0.0
  %3472 = vmatpush1.msra.mxu0 %v2833
  %3473 = vmatprep.subr.mxu0 0.0
  %3474 = vmatpush1.msra.mxu0 %v2840
  %3475 = vmatprep.subr.mxu0 0.0
  %3476 = vmatpush1.msra.mxu0 0.0
  %3477 = vmatprep.subr.mxu0 0.0
  %3478 = vmatpush1.msra.mxu0 0.0
  %3479 = vmatprep.subr.mxu0 0.0
  %3480 = vmatpush1.msra.mxu0 0.0
  %3481 = vmatprep.subr.mxu0 0.0
  %3482 = vmatpush1.msra.mxu0 0.0
  %3483 = vmatprep.subr.mxu0 0.0
  %3484 = vmatpush1.msra.mxu0 0.0
  %3485 = vmatprep.subr.mxu0 0.0
  %3486 = vmatpush1.msra.mxu0 0.0
  %3487 = vmatprep.subr.mxu0 0.0
  %3488 = vmatpush1.msra.mxu0 0.0
  %3489 = vmatprep.subr.mxu0 0.0
  %3490 = vmatpush1.msra.mxu0 0.0
  %3491 = vmatprep.subr.mxu0 0.0
  %3492 = vmatpush1.msra.mxu0 0.0
  %3493 = vmatprep.subr.mxu0 0.0
  %3494 = vmatpush1.msra.mxu0 0.0
  %3495 = vmatprep.subr.mxu0 0.0
  %3496 = vmatpush1.msra.mxu0 0.0
  %3497 = vmatprep.subr.mxu0 0.0
  %3498 = vmatpush1.msra.mxu0 0.0
  %3499 = vmatprep.subr.mxu0 0.0
  %3500 = vmatpush1.msra.mxu0 0.0
  %3501 = vmatprep.subr.mxu0 0.0
  %3502 = vmatpush1.msra.mxu0 0.0
  %3503 = vmatprep.subr.mxu0 0.0
  %3504 = vmatpush1.msra.mxu0 0.0
  %3505 = vmatprep.subr.mxu0 0.0
  %3506 = vmatpush1.msra.mxu0 0.0
  %3507 = vmatprep.subr.mxu0 0.0
  %3508 = vmatpush1.msra.mxu0 0.0
  %3509 = vmatprep.subr.mxu0 0.0
  %3510 = vmatpush1.msra.mxu0 0.0
  %3511 = vmatprep.subr.mxu0 0.0
  %3512 = vmatpush1.msra.mxu0 0.0
  %3513 = vmatprep.subr.mxu0 0.0
  %3514 = vmatpush1.msra.mxu0 0.0
  %3515 = vmatprep.subr.mxu0 0.0
  %3516 = vmatpush1.msra.mxu0 0.0
  %3517 = vmatprep.subr.mxu0 0.0
  %3518 = vmatpush1.msra.mxu0 0.0
  %3519 = vmatprep.subr.mxu0 0.0
  %3520 = vmatpush1.msra.mxu0 0.0
  %3521 = vmatprep.subr.mxu0 0.0
  %3522 = vmatpush1.msra.mxu0 0.0
  %3523 = vmatprep.subr.mxu0 0.0
  %3524 = vmatpush1.msra.mxu0 0.0
  %3525 = vmatprep.subr.mxu0 0.0
  %3526 = vmatpush1.msra.mxu0 0.0
  %3527 = vmatprep.subr.mxu0 0.0
  %3528 = vmatpush1.msra.mxu0 0.0
  %3529 = vmatprep.subr.mxu0 0.0
  %3530 = vmatpush1.msra.mxu0 0.0
  %3531 = vmatprep.mubr.f32.mxu0 0.0
  %3532 = vmatmul.mubr.f32.gmra.mrb[0].mxu0 %v3465
  %v3533 = vpop.f32.mrb[0].mxu0
  %v3534 = vadd.f32 0.0, %v3533
  %v3535 = vpop.f32.mrb[0].mxu0
  %3536 = vdwg.mxu0
  %s3537 = scalar_lea.vmem %s29, 128
  %v3538 = vld [vmem:[%s3537] sm:$0xff]
  %v3539 = vld [vmem:[%s3537 + $0x8] sm:$0xff]
  %v3540 = vld [vmem:[%s3537 + $0x10] sm:$0xff]
  %v3541 = vld [vmem:[%s3537 + $0x18] sm:$0xf]
  %v3543 = vsel %vm352, %v3534, 0
  %v3546 = vsel %vm374, %v3541, 0
  %3548 = vmatprep.subr.mxu0 0.0
  %3549 = vmatpush1.msra.mxu0 %v3538
  %3550 = vmatprep.subr.mxu0 0.0
  %3551 = vmatpush1.msra.mxu0 %v3539
  %3552 = vmatprep.subr.mxu0 0.0
  %3553 = vmatpush1.msra.mxu0 %v3540
  %3554 = vmatprep.subr.mxu0 0.0
  %3555 = vmatpush1.msra.mxu0 %v3546
  %3556 = vmatprep.subr.mxu0 0.0
  %3557 = vmatpush1.msra.mxu0 0.0
  %3558 = vmatprep.subr.mxu0 0.0
  %3559 = vmatpush1.msra.mxu0 0.0
  %3560 = vmatprep.subr.mxu0 0.0
  %3561 = vmatpush1.msra.mxu0 0.0
  %3562 = vmatprep.subr.mxu0 0.0
  %3563 = vmatpush1.msra.mxu0 0.0
  %3564 = vmatprep.subr.mxu0 0.0
  %3565 = vmatpush1.msra.mxu0 0.0
  %3566 = vmatprep.subr.mxu0 0.0
  %3567 = vmatpush1.msra.mxu0 0.0
  %3568 = vmatprep.subr.mxu0 0.0
  %3569 = vmatpush1.msra.mxu0 0.0
  %3570 = vmatprep.subr.mxu0 0.0
  %3571 = vmatpush1.msra.mxu0 0.0
  %3572 = vmatprep.subr.mxu0 0.0
  %3573 = vmatpush1.msra.mxu0 0.0
  %3574 = vmatprep.subr.mxu0 0.0
  %3575 = vmatpush1.msra.mxu0 0.0
  %3576 = vmatprep.subr.mxu0 0.0
  %3577 = vmatpush1.msra.mxu0 0.0
  %3578 = vmatprep.subr.mxu0 0.0
  %3579 = vmatpush1.msra.mxu0 0.0
  %3580 = vmatprep.subr.mxu0 0.0
  %3581 = vmatpush1.msra.mxu0 0.0
  %3582 = vmatprep.subr.mxu0 0.0
  %3583 = vmatpush1.msra.mxu0 0.0
  %3584 = vmatprep.subr.mxu0 0.0
  %3585 = vmatpush1.msra.mxu0 0.0
  %3586 = vmatprep.subr.mxu0 0.0
  %3587 = vmatpush1.msra.mxu0 0.0
  %3588 = vmatprep.subr.mxu0 0.0
  %3589 = vmatpush1.msra.mxu0 0.0
  %3590 = vmatprep.subr.mxu0 0.0
  %3591 = vmatpush1.msra.mxu0 0.0
  %3592 = vmatprep.subr.mxu0 0.0
  %3593 = vmatpush1.msra.mxu0 0.0
  %3594 = vmatprep.subr.mxu0 0.0
  %3595 = vmatpush1.msra.mxu0 0.0
  %3596 = vmatprep.subr.mxu0 0.0
  %3597 = vmatpush1.msra.mxu0 0.0
  %3598 = vmatprep.subr.mxu0 0.0
  %3599 = vmatpush1.msra.mxu0 0.0
  %3600 = vmatprep.subr.mxu0 0.0
  %3601 = vmatpush1.msra.mxu0 0.0
  %3602 = vmatprep.subr.mxu0 0.0
  %3603 = vmatpush1.msra.mxu0 0.0
  %3604 = vmatprep.subr.mxu0 0.0
  %3605 = vmatpush1.msra.mxu0 0.0
  %3606 = vmatprep.subr.mxu0 0.0
  %3607 = vmatpush1.msra.mxu0 0.0
  %3608 = vmatprep.subr.mxu0 0.0
  %3609 = vmatpush1.msra.mxu0 0.0
  %3610 = vmatprep.subr.mxu0 0.0
  %3611 = vmatpush1.msra.mxu0 0.0
  %3612 = vmatprep.mubr.f32.mxu0 0.0
  %3613 = vmatmul.mubr.f32.gmra.mrb[0].mxu0 %v3543
  %v3614 = vpop.f32.mrb[0].mxu0
  %v3615 = vadd.f32 0.0, %v3614
  %v3616 = vpop.f32.mrb[0].mxu0
  %3617 = vdwg.mxu0
  %v3618 = vadd.f32 %v3461, %v3615
  %s3619 = scalar_lea.vmem %s27, 40
  %v3620 = vld [vmem:[%s3619] sm:$0xff]
  %v3622 = vsel %vm352, %v3620, 0
  %3624 = vmatprep.subr.mxu0 0.0
  %3625 = vmatpush1.msra.mxu0 %v2831
  %3626 = vmatprep.subr.mxu0 0.0
  %3627 = vmatpush1.msra.mxu0 %v2832
  %3628 = vmatprep.subr.mxu0 0.0
  %3629 = vmatpush1.msra.mxu0 %v2833
  %3630 = vmatprep.subr.mxu0 0.0
  %3631 = vmatpush1.msra.mxu0 %v2840
  %3632 = vmatprep.subr.mxu0 0.0
  %3633 = vmatpush1.msra.mxu0 0.0
  %3634 = vmatprep.subr.mxu0 0.0
  %3635 = vmatpush1.msra.mxu0 0.0
  %3636 = vmatprep.subr.mxu0 0.0
  %3637 = vmatpush1.msra.mxu0 0.0
  %3638 = vmatprep.subr.mxu0 0.0
  %3639 = vmatpush1.msra.mxu0 0.0
  %3640 = vmatprep.subr.mxu0 0.0
  %3641 = vmatpush1.msra.mxu0 0.0
  %3642 = vmatprep.subr.mxu0 0.0
  %3643 = vmatpush1.msra.mxu0 0.0
  %3644 = vmatprep.subr.mxu0 0.0
  %3645 = vmatpush1.msra.mxu0 0.0
  %3646 = vmatprep.subr.mxu0 0.0
  %3647 = vmatpush1.msra.mxu0 0.0
  %3648 = vmatprep.subr.mxu0 0.0
  %3649 = vmatpush1.msra.mxu0 0.0
  %3650 = vmatprep.subr.mxu0 0.0
  %3651 = vmatpush1.msra.mxu0 0.0
  %3652 = vmatprep.subr.mxu0 0.0
  %3653 = vmatpush1.msra.mxu0 0.0
  %3654 = vmatprep.subr.mxu0 0.0
  %3655 = vmatpush1.msra.mxu0 0.0
  %3656 = vmatprep.subr.mxu0 0.0
  %3657 = vmatpush1.msra.mxu0 0.0
  %3658 = vmatprep.subr.mxu0 0.0
  %3659 = vmatpush1.msra.mxu0 0.0
  %3660 = vmatprep.subr.mxu0 0.0
  %3661 = vmatpush1.msra.mxu0 0.0
  %3662 = vmatprep.subr.mxu0 0.0
  %3663 = vmatpush1.msra.mxu0 0.0
  %3664 = vmatprep.subr.mxu0 0.0
  %3665 = vmatpush1.msra.mxu0 0.0
  %3666 = vmatprep.subr.mxu0 0.0
  %3667 = vmatpush1.msra.mxu0 0.0
  %3668 = vmatprep.subr.mxu0 0.0
  %3669 = vmatpush1.msra.mxu0 0.0
  %3670 = vmatprep.subr.mxu0 0.0
  %3671 = vmatpush1.msra.mxu0 0.0
  %3672 = vmatprep.subr.mxu0 0.0
  %3673 = vmatpush1.msra.mxu0 0.0
  %3674 = vmatprep.subr.mxu0 0.0
  %3675 = vmatpush1.msra.mxu0 0.0
  %3676 = vmatprep.subr.mxu0 0.0
  %3677 = vmatpush1.msra.mxu0 0.0
  %3678 = vmatprep.subr.mxu0 0.0
  %3679 = vmatpush1.msra.mxu0 0.0
  %3680 = vmatprep.subr.mxu0 0.0
  %3681 = vmatpush1.msra.mxu0 0.0
  %3682 = vmatprep.subr.mxu0 0.0
  %3683 = vmatpush1.msra.mxu0 0.0
  %3684 = vmatprep.subr.mxu0 0.0
  %3685 = vmatpush1.msra.mxu0 0.0
  %3686 = vmatprep.subr.mxu0 0.0
  %3687 = vmatpush1.msra.mxu0 0.0
  %3688 = vmatprep.mubr.f32.mxu0 0.0
  %3689 = vmatmul.mubr.f32.gmra.mrb[0].mxu0 %v3622
  %v3690 = vpop.f32.mrb[0].mxu0
  %v3691 = vadd.f32 0.0, %v3690
  %v3692 = vpop.f32.mrb[0].mxu0
  %3693 = vdwg.mxu0
  %s3694 = scalar_lea.vmem %s29, 160
  %v3695 = vld [vmem:[%s3694] sm:$0xff]
  %v3696 = vld [vmem:[%s3694 + $0x8] sm:$0xff]
  %v3697 = vld [vmem:[%s3694 + $0x10] sm:$0xff]
  %v3698 = vld [vmem:[%s3694 + $0x18] sm:$0xf]
  %v3700 = vsel %vm352, %v3691, 0
  %v3703 = vsel %vm374, %v3698, 0
  %3705 = vmatprep.subr.mxu0 0.0
  %3706 = vmatpush1.msra.mxu0 %v3695
  %3707 = vmatprep.subr.mxu0 0.0
  %3708 = vmatpush1.msra.mxu0 %v3696
  %3709 = vmatprep.subr.mxu0 0.0
  %3710 = vmatpush1.msra.mxu0 %v3697
  %3711 = vmatprep.subr.mxu0 0.0
  %3712 = vmatpush1.msra.mxu0 %v3703
  %3713 = vmatprep.subr.mxu0 0.0
  %3714 = vmatpush1.msra.mxu0 0.0
  %3715 = vmatprep.subr.mxu0 0.0
  %3716 = vmatpush1.msra.mxu0 0.0
  %3717 = vmatprep.subr.mxu0 0.0
  %3718 = vmatpush1.msra.mxu0 0.0
  %3719 = vmatprep.subr.mxu0 0.0
  %3720 = vmatpush1.msra.mxu0 0.0
  %3721 = vmatprep.subr.mxu0 0.0
  %3722 = vmatpush1.msra.mxu0 0.0
  %3723 = vmatprep.subr.mxu0 0.0
  %3724 = vmatpush1.msra.mxu0 0.0
  %3725 = vmatprep.subr.mxu0 0.0
  %3726 = vmatpush1.msra.mxu0 0.0
  %3727 = vmatprep.subr.mxu0 0.0
  %3728 = vmatpush1.msra.mxu0 0.0
  %3729 = vmatprep.subr.mxu0 0.0
  %3730 = vmatpush1.msra.mxu0 0.0
  %3731 = vmatprep.subr.mxu0 0.0
  %3732 = vmatpush1.msra.mxu0 0.0
  %3733 = vmatprep.subr.mxu0 0.0
  %3734 = vmatpush1.msra.mxu0 0.0
  %3735 = vmatprep.subr.mxu0 0.0
  %3736 = vmatpush1.msra.mxu0 0.0
  %3737 = vmatprep.subr.mxu0 0.0
  %3738 = vmatpush1.msra.mxu0 0.0
  %3739 = vmatprep.subr.mxu0 0.0
  %3740 = vmatpush1.msra.mxu0 0.0
  %3741 = vmatprep.subr.mxu0 0.0
  %3742 = vmatpush1.msra.mxu0 0.0
  %3743 = vmatprep.subr.mxu0 0.0
  %3744 = vmatpush1.msra.mxu0 0.0
  %3745 = vmatprep.subr.mxu0 0.0
  %3746 = vmatpush1.msra.mxu0 0.0
  %3747 = vmatprep.subr.mxu0 0.0
  %3748 = vmatpush1.msra.mxu0 0.0
  %3749 = vmatprep.subr.mxu0 0.0
  %3750 = vmatpush1.msra.mxu0 0.0
  %3751 = vmatprep.subr.mxu0 0.0
  %3752 = vmatpush1.msra.mxu0 0.0
  %3753 = vmatprep.subr.mxu0 0.0
  %3754 = vmatpush1.msra.mxu0 0.0
  %3755 = vmatprep.subr.mxu0 0.0
  %3756 = vmatpush1.msra.mxu0 0.0
  %3757 = vmatprep.subr.mxu0 0.0
  %3758 = vmatpush1.msra.mxu0 0.0
  %3759 = vmatprep.subr.mxu0 0.0
  %3760 = vmatpush1.msra.mxu0 0.0
  %3761 = vmatprep.subr.mxu0 0.0
  %3762 = vmatpush1.msra.mxu0 0.0
  %3763 = vmatprep.subr.mxu0 0.0
  %3764 = vmatpush1.msra.mxu0 0.0
  %3765 = vmatprep.subr.mxu0 0.0
  %3766 = vmatpush1.msra.mxu0 0.0
  %3767 = vmatprep.subr.mxu0 0.0
  %3768 = vmatpush1.msra.mxu0 0.0
  %3769 = vmatprep.mubr.f32.mxu0 0.0
  %3770 = vmatmul.mubr.f32.gmra.mrb[0].mxu0 %v3700
  %v3771 = vpop.f32.mrb[0].mxu0
  %v3772 = vadd.f32 0.0, %v3771
  %v3773 = vpop.f32.mrb[0].mxu0
  %3774 = vdwg.mxu0
  %v3775 = vadd.f32 %v3618, %v3772
  %s3776 = scalar_lea.vmem %s27, 48
  %v3777 = vld [vmem:[%s3776] sm:$0xff]
  %v3779 = vsel %vm352, %v3777, 0
  %3781 = vmatprep.subr.mxu0 0.0
  %3782 = vmatpush1.msra.mxu0 %v2831
  %3783 = vmatprep.subr.mxu0 0.0
  %3784 = vmatpush1.msra.mxu0 %v2832
  %3785 = vmatprep.subr.mxu0 0.0
  %3786 = vmatpush1.msra.mxu0 %v2833
  %3787 = vmatprep.subr.mxu0 0.0
  %3788 = vmatpush1.msra.mxu0 %v2840
  %3789 = vmatprep.subr.mxu0 0.0
  %3790 = vmatpush1.msra.mxu0 0.0
  %3791 = vmatprep.subr.mxu0 0.0
  %3792 = vmatpush1.msra.mxu0 0.0
  %3793 = vmatprep.subr.mxu0 0.0
  %3794 = vmatpush1.msra.mxu0 0.0
  %3795 = vmatprep.subr.mxu0 0.0
  %3796 = vmatpush1.msra.mxu0 0.0
  %3797 = vmatprep.subr.mxu0 0.0
  %3798 = vmatpush1.msra.mxu0 0.0
  %3799 = vmatprep.subr.mxu0 0.0
  %3800 = vmatpush1.msra.mxu0 0.0
  %3801 = vmatprep.subr.mxu0 0.0
  %3802 = vmatpush1.msra.mxu0 0.0
  %3803 = vmatprep.subr.mxu0 0.0
  %3804 = vmatpush1.msra.mxu0 0.0
  %3805 = vmatprep.subr.mxu0 0.0
  %3806 = vmatpush1.msra.mxu0 0.0
  %3807 = vmatprep.subr.mxu0 0.0
  %3808 = vmatpush1.msra.mxu0 0.0
  %3809 = vmatprep.subr.mxu0 0.0
  %3810 = vmatpush1.msra.mxu0 0.0
  %3811 = vmatprep.subr.mxu0 0.0
  %3812 = vmatpush1.msra.mxu0 0.0
  %3813 = vmatprep.subr.mxu0 0.0
  %3814 = vmatpush1.msra.mxu0 0.0
  %3815 = vmatprep.subr.mxu0 0.0
  %3816 = vmatpush1.msra.mxu0 0.0
  %3817 = vmatprep.subr.mxu0 0.0
  %3818 = vmatpush1.msra.mxu0 0.0
  %3819 = vmatprep.subr.mxu0 0.0
  %3820 = vmatpush1.msra.mxu0 0.0
  %3821 = vmatprep.subr.mxu0 0.0
  %3822 = vmatpush1.msra.mxu0 0.0
  %3823 = vmatprep.subr.mxu0 0.0
  %3824 = vmatpush1.msra.mxu0 0.0
  %3825 = vmatprep.subr.mxu0 0.0
  %3826 = vmatpush1.msra.mxu0 0.0
  %3827 = vmatprep.subr.mxu0 0.0
  %3828 = vmatpush1.msra.mxu0 0.0
  %3829 = vmatprep.subr.mxu0 0.0
  %3830 = vmatpush1.msra.mxu0 0.0
  %3831 = vmatprep.subr.mxu0 0.0
  %3832 = vmatpush1.msra.mxu0 0.0
  %3833 = vmatprep.subr.mxu0 0.0
  %3834 = vmatpush1.msra.mxu0 0.0
  %3835 = vmatprep.subr.mxu0 0.0
  %3836 = vmatpush1.msra.mxu0 0.0
  %3837 = vmatprep.subr.mxu0 0.0
  %3838 = vmatpush1.msra.mxu0 0.0
  %3839 = vmatprep.subr.mxu0 0.0
  %3840 = vmatpush1.msra.mxu0 0.0
  %3841 = vmatprep.subr.mxu0 0.0
  %3842 = vmatpush1.msra.mxu0 0.0
  %3843 = vmatprep.subr.mxu0 0.0
  %3844 = vmatpush1.msra.mxu0 0.0
  %3845 = vmatprep.mubr.f32.mxu0 0.0
  %3846 = vmatmul.mubr.f32.gmra.mrb[0].mxu0 %v3779
  %v3847 = vpop.f32.mrb[0].mxu0
  %v3848 = vadd.f32 0.0, %v3847
  %v3849 = vpop.f32.mrb[0].mxu0
  %3850 = vdwg.mxu0
  %s3851 = scalar_lea.vmem %s29, 192
  %v3852 = vld [vmem:[%s3851] sm:$0xff]
  %v3853 = vld [vmem:[%s3851 + $0x8] sm:$0xff]
  %v3854 = vld [vmem:[%s3851 + $0x10] sm:$0xff]
  %v3855 = vld [vmem:[%s3851 + $0x18] sm:$0xf]
  %v3857 = vsel %vm352, %v3848, 0
  %v3860 = vsel %vm374, %v3855, 0
  %3862 = vmatprep.subr.mxu0 0.0
  %3863 = vmatpush1.msra.mxu0 %v3852
  %3864 = vmatprep.subr.mxu0 0.0
  %3865 = vmatpush1.msra.mxu0 %v3853
  %3866 = vmatprep.subr.mxu0 0.0
  %3867 = vmatpush1.msra.mxu0 %v3854
  %3868 = vmatprep.subr.mxu0 0.0
  %3869 = vmatpush1.msra.mxu0 %v3860
  %3870 = vmatprep.subr.mxu0 0.0
  %3871 = vmatpush1.msra.mxu0 0.0
  %3872 = vmatprep.subr.mxu0 0.0
  %3873 = vmatpush1.msra.mxu0 0.0
  %3874 = vmatprep.subr.mxu0 0.0
  %3875 = vmatpush1.msra.mxu0 0.0
  %3876 = vmatprep.subr.mxu0 0.0
  %3877 = vmatpush1.msra.mxu0 0.0
  %3878 = vmatprep.subr.mxu0 0.0
  %3879 = vmatpush1.msra.mxu0 0.0
  %3880 = vmatprep.subr.mxu0 0.0
  %3881 = vmatpush1.msra.mxu0 0.0
  %3882 = vmatprep.subr.mxu0 0.0
  %3883 = vmatpush1.msra.mxu0 0.0
  %3884 = vmatprep.subr.mxu0 0.0
  %3885 = vmatpush1.msra.mxu0 0.0
  %3886 = vmatprep.subr.mxu0 0.0
  %3887 = vmatpush1.msra.mxu0 0.0
  %3888 = vmatprep.subr.mxu0 0.0
  %3889 = vmatpush1.msra.mxu0 0.0
  %3890 = vmatprep.subr.mxu0 0.0
  %3891 = vmatpush1.msra.mxu0 0.0
  %3892 = vmatprep.subr.mxu0 0.0
  %3893 = vmatpush1.msra.mxu0 0.0
  %3894 = vmatprep.subr.mxu0 0.0
  %3895 = vmatpush1.msra.mxu0 0.0
  %3896 = vmatprep.subr.mxu0 0.0
  %3897 = vmatpush1.msra.mxu0 0.0
  %3898 = vmatprep.subr.mxu0 0.0
  %3899 = vmatpush1.msra.mxu0 0.0
  %3900 = vmatprep.subr.mxu0 0.0
  %3901 = vmatpush1.msra.mxu0 0.0
  %3902 = vmatprep.subr.mxu0 0.0
  %3903 = vmatpush1.msra.mxu0 0.0
  %3904 = vmatprep.subr.mxu0 0.0
  %3905 = vmatpush1.msra.mxu0 0.0
  %3906 = vmatprep.subr.mxu0 0.0
  %3907 = vmatpush1.msra.mxu0 0.0
  %3908 = vmatprep.subr.mxu0 0.0
  %3909 = vmatpush1.msra.mxu0 0.0
  %3910 = vmatprep.subr.mxu0 0.0
  %3911 = vmatpush1.msra.mxu0 0.0
  %3912 = vmatprep.subr.mxu0 0.0
  %3913 = vmatpush1.msra.mxu0 0.0
  %3914 = vmatprep.subr.mxu0 0.0
  %3915 = vmatpush1.msra.mxu0 0.0
  %3916 = vmatprep.subr.mxu0 0.0
  %3917 = vmatpush1.msra.mxu0 0.0
  %3918 = vmatprep.subr.mxu0 0.0
  %3919 = vmatpush1.msra.mxu0 0.0
  %3920 = vmatprep.subr.mxu0 0.0
  %3921 = vmatpush1.msra.mxu0 0.0
  %3922 = vmatprep.subr.mxu0 0.0
  %3923 = vmatpush1.msra.mxu0 0.0
  %3924 = vmatprep.subr.mxu0 0.0
  %3925 = vmatpush1.msra.mxu0 0.0
  %3926 = vmatprep.mubr.f32.mxu0 0.0
  %3927 = vmatmul.mubr.f32.gmra.mrb[0].mxu0 %v3857
  %v3928 = vpop.f32.mrb[0].mxu0
  %v3929 = vadd.f32 0.0, %v3928
  %v3930 = vpop.f32.mrb[0].mxu0
  %3931 = vdwg.mxu0
  %v3932 = vadd.f32 %v3775, %v3929
  %v3933 = vld [vmem:[%s31] sm:$0xff]
  %v3934 = vadd.f32 %v3932, %v3933
  %v3935 = vld [vmem:[%s33] sm:$0xff]
  %v3936 = vld [vmem:[%s33 + $0x8] sm:$0xff]
  %v3937 = vld [vmem:[%s33 + $0x10] sm:$0xff]
  %v3938 = vld [vmem:[%s33 + $0x18] sm:$0xf]
  %v3939 = vld [vmem:[%s35] sm:$0xff]
  %v3940 = vld [vmem:[%s35 + $0x8] sm:$0xff]
  %v3941 = vld [vmem:[%s35 + $0x10] sm:$0xff]
  %v3942 = vld [vmem:[%s35 + $0x18] sm:$0xff]
  %vm3943 = vcmask 261120
  %v3945 = vsel %vm3943, %v3934, 0
  %3947 = vmatprep.subr.mxu0 0.0
  %3948 = vmatpush1.msra.mxu0 %v3939
  %3949 = vmatprep.subr.mxu0 0.0
  %3950 = vmatpush1.msra.mxu0 %v3940
  %3951 = vmatprep.subr.mxu0 0.0
  %3952 = vmatpush1.msra.mxu0 %v3941
  %3953 = vmatprep.subr.mxu0 0.0
  %3954 = vmatpush1.msra.mxu0 %v3942
  %3955 = vmatprep.subr.mxu0 0.0
  %3956 = vmatpush1.msra.mxu0 0.0
  %3957 = vmatprep.subr.mxu0 0.0
  %3958 = vmatpush1.msra.mxu0 0.0
  %3959 = vmatprep.subr.mxu0 0.0
  %3960 = vmatpush1.msra.mxu0 0.0
  %3961 = vmatprep.subr.mxu0 0.0
  %3962 = vmatpush1.msra.mxu0 0.0
  %3963 = vmatprep.subr.mxu0 0.0
  %3964 = vmatpush1.msra.mxu0 0.0
  %3965 = vmatprep.subr.mxu0 0.0
  %3966 = vmatpush1.msra.mxu0 0.0
  %3967 = vmatprep.subr.mxu0 0.0
  %3968 = vmatpush1.msra.mxu0 0.0
  %3969 = vmatprep.subr.mxu0 0.0
  %3970 = vmatpush1.msra.mxu0 0.0
  %3971 = vmatprep.subr.mxu0 0.0
  %3972 = vmatpush1.msra.mxu0 0.0
  %3973 = vmatprep.subr.mxu0 0.0
  %3974 = vmatpush1.msra.mxu0 0.0
  %3975 = vmatprep.subr.mxu0 0.0
  %3976 = vmatpush1.msra.mxu0 0.0
  %3977 = vmatprep.subr.mxu0 0.0
  %3978 = vmatpush1.msra.mxu0 0.0
  %3979 = vmatprep.subr.mxu0 0.0
  %3980 = vmatpush1.msra.mxu0 0.0
  %3981 = vmatprep.subr.mxu0 0.0
  %3982 = vmatpush1.msra.mxu0 0.0
  %3983 = vmatprep.subr.mxu0 0.0
  %3984 = vmatpush1.msra.mxu0 0.0
  %3985 = vmatprep.subr.mxu0 0.0
  %3986 = vmatpush1.msra.mxu0 0.0
  %3987 = vmatprep.subr.mxu0 0.0
  %3988 = vmatpush1.msra.mxu0 0.0
  %3989 = vmatprep.subr.mxu0 0.0
  %3990 = vmatpush1.msra.mxu0 0.0
  %3991 = vmatprep.subr.mxu0 0.0
  %3992 = vmatpush1.msra.mxu0 0.0
  %3993 = vmatprep.subr.mxu0 0.0
  %3994 = vmatpush1.msra.mxu0 0.0
  %3995 = vmatprep.subr.mxu0 0.0
  %3996 = vmatpush1.msra.mxu0 0.0
  %3997 = vmatprep.subr.mxu0 0.0
  %3998 = vmatpush1.msra.mxu0 0.0
  %3999 = vmatprep.subr.mxu0 0.0
  %4000 = vmatpush1.msra.mxu0 0.0
  %4001 = vmatprep.subr.mxu0 0.0
  %4002 = vmatpush1.msra.mxu0 0.0
  %4003 = vmatprep.subr.mxu0 0.0
  %4004 = vmatpush1.msra.mxu0 0.0
  %4005 = vmatprep.subr.mxu0 0.0
  %4006 = vmatpush1.msra.mxu0 0.0
  %4007 = vmatprep.subr.mxu0 0.0
  %4008 = vmatpush1.msra.mxu0 0.0
  %4009 = vmatprep.subr.mxu0 0.0
  %4010 = vmatpush1.msra.mxu0 0.0
  %4011 = vmatprep.mubr.f32.mxu0 0.0
  %4012 = vmatmul.mubr.f32.gmra.mrb[0].mxu0 %v3945
  %v4013 = vpop.f32.mrb[0].mxu0
  %v4014 = vadd.f32 0.0, %v4013
  %v4015 = vpop.f32.mrb[0].mxu0
  %4016 = vdwg.mxu0
  %s4017 = scalar_lea.vmem %s33, 32
  %v4018 = vld [vmem:[%s4017] sm:$0xff]
  %v4019 = vld [vmem:[%s4017 + $0x8] sm:$0xff]
  %v4020 = vld [vmem:[%s4017 + $0x10] sm:$0xff]
  %v4021 = vld [vmem:[%s4017 + $0x18] sm:$0xf]
  %s4022 = scalar_lea.vmem %s35, 32
  %v4023 = vld [vmem:[%s4022] sm:$0xff]
  %v4024 = vld [vmem:[%s4022 + $0x8] sm:$0xff]
  %v4025 = vld [vmem:[%s4022 + $0x10] sm:$0xff]
  %v4026 = vld [vmem:[%s4022 + $0x18] sm:$0xff]
  %4027 = vmatprep.subr.mxu0 0.0
  %4028 = vmatpush1.msra.mxu0 %v4023
  %4029 = vmatprep.subr.mxu0 0.0
  %4030 = vmatpush1.msra.mxu0 %v4024
  %4031 = vmatprep.subr.mxu0 0.0
  %4032 = vmatpush1.msra.mxu0 %v4025
  %4033 = vmatprep.subr.mxu0 0.0
  %4034 = vmatpush1.msra.mxu0 %v4026
  %4035 = vmatprep.subr.mxu0 0.0
  %4036 = vmatpush1.msra.mxu0 0.0
  %4037 = vmatprep.subr.mxu0 0.0
  %4038 = vmatpush1.msra.mxu0 0.0
  %4039 = vmatprep.subr.mxu0 0.0
  %4040 = vmatpush1.msra.mxu0 0.0
  %4041 = vmatprep.subr.mxu0 0.0
  %4042 = vmatpush1.msra.mxu0 0.0
  %4043 = vmatprep.subr.mxu0 0.0
  %4044 = vmatpush1.msra.mxu0 0.0
  %4045 = vmatprep.subr.mxu0 0.0
  %4046 = vmatpush1.msra.mxu0 0.0
  %4047 = vmatprep.subr.mxu0 0.0
  %4048 = vmatpush1.msra.mxu0 0.0
  %4049 = vmatprep.subr.mxu0 0.0
  %4050 = vmatpush1.msra.mxu0 0.0
  %4051 = vmatprep.subr.mxu0 0.0
  %4052 = vmatpush1.msra.mxu0 0.0
  %4053 = vmatprep.subr.mxu0 0.0
  %4054 = vmatpush1.msra.mxu0 0.0
  %4055 = vmatprep.subr.mxu0 0.0
  %4056 = vmatpush1.msra.mxu0 0.0
  %4057 = vmatprep.subr.mxu0 0.0
  %4058 = vmatpush1.msra.mxu0 0.0
  %4059 = vmatprep.subr.mxu0 0.0
  %4060 = vmatpush1.msra.mxu0 0.0
  %4061 = vmatprep.subr.mxu0 0.0
  %4062 = vmatpush1.msra.mxu0 0.0
  %4063 = vmatprep.subr.mxu0 0.0
  %4064 = vmatpush1.msra.mxu0 0.0
  %4065 = vmatprep.subr.mxu0 0.0
  %4066 = vmatpush1.msra.mxu0 0.0
  %4067 = vmatprep.subr.mxu0 0.0
  %4068 = vmatpush1.msra.mxu0 0.0
  %4069 = vmatprep.subr.mxu0 0.0
  %4070 = vmatpush1.msra.mxu0 0.0
  %4071 = vmatprep.subr.mxu0 0.0
  %4072 = vmatpush1.msra.mxu0 0.0
  %4073 = vmatprep.subr.mxu0 0.0
  %4074 = vmatpush1.msra.mxu0 0.0
  %4075 = vmatprep.subr.mxu0 0.0
  %4076 = vmatpush1.msra.mxu0 0.0
  %4077 = vmatprep.subr.mxu0 0.0
  %4078 = vmatpush1.msra.mxu0 0.0
  %4079 = vmatprep.subr.mxu0 0.0
  %4080 = vmatpush1.msra.mxu0 0.0
  %4081 = vmatprep.subr.mxu0 0.0
  %4082 = vmatpush1.msra.mxu0 0.0
  %4083 = vmatprep.subr.mxu0 0.0
  %4084 = vmatpush1.msra.mxu0 0.0
  %4085 = vmatprep.subr.mxu0 0.0
  %4086 = vmatpush1.msra.mxu0 0.0
  %4087 = vmatprep.subr.mxu0 0.0
  %4088 = vmatpush1.msra.mxu0 0.0
  %4089 = vmatprep.subr.mxu0 0.0
  %4090 = vmatpush1.msra.mxu0 0.0
  %4091 = vmatprep.mubr.f32.mxu0 0.0
  %4092 = vmatmul.mubr.f32.gmra.mrb[0].mxu0 %v3945
  %v4093 = vpop.f32.mrb[0].mxu0
  %v4094 = vadd.f32 0.0, %v4093
  %v4095 = vpop.f32.mrb[0].mxu0
  %4096 = vdwg.mxu0
  %vm4097 = vcmask 64512
  %v4099 = vsel %vm4097, %v4018, 0
  %v4102 = vsel %vm4097, %v4019, 0
  %v4105 = vsel %vm4097, %v4020, 0
  %v4108 = vsel %vm4097, %v4021, 0
  %4110 = vmatprep.subr.mxu0 0.0
  %4111 = vmatpush1.msra.mxu0 %v4094
  %4112 = vmatprep.subr.mxu0 0.0
  %4113 = vmatpush1.msra.mxu0 0.0
  %4114 = vmatprep.subr.mxu0 0.0
  %4115 = vmatpush1.msra.mxu0 0.0
  %4116 = vmatprep.subr.mxu0 0.0
  %4117 = vmatpush1.msra.mxu0 0.0
  %4118 = vmatprep.subr.mxu0 0.0
  %4119 = vmatpush1.msra.mxu0 0.0
  %4120 = vmatprep.subr.mxu0 0.0
  %4121 = vmatpush1.msra.mxu0 0.0
  %4122 = vmatprep.subr.mxu0 0.0
  %4123 = vmatpush1.msra.mxu0 0.0
  %4124 = vmatprep.subr.mxu0 0.0
  %4125 = vmatpush1.msra.mxu0 0.0
  %4126 = vmatprep.subr.mxu0 0.0
  %4127 = vmatpush1.msra.mxu0 0.0
  %4128 = vmatprep.subr.mxu0 0.0
  %4129 = vmatpush1.msra.mxu0 0.0
  %4130 = vmatprep.subr.mxu0 0.0
  %4131 = vmatpush1.msra.mxu0 0.0
  %4132 = vmatprep.subr.mxu0 0.0
  %4133 = vmatpush1.msra.mxu0 0.0
  %4134 = vmatprep.subr.mxu0 0.0
  %4135 = vmatpush1.msra.mxu0 0.0
  %4136 = vmatprep.subr.mxu0 0.0
  %4137 = vmatpush1.msra.mxu0 0.0
  %4138 = vmatprep.subr.mxu0 0.0
  %4139 = vmatpush1.msra.mxu0 0.0
  %4140 = vmatprep.subr.mxu0 0.0
  %4141 = vmatpush1.msra.mxu0 0.0
  %4142 = vmatprep.subr.mxu0 0.0
  %4143 = vmatpush1.msra.mxu0 0.0
  %4144 = vmatprep.subr.mxu0 0.0
  %4145 = vmatpush1.msra.mxu0 0.0
  %4146 = vmatprep.subr.mxu0 0.0
  %4147 = vmatpush1.msra.mxu0 0.0
  %4148 = vmatprep.subr.mxu0 0.0
  %4149 = vmatpush1.msra.mxu0 0.0
  %4150 = vmatprep.subr.mxu0 0.0
  %4151 = vmatpush1.msra.mxu0 0.0
  %4152 = vmatprep.subr.mxu0 0.0
  %4153 = vmatpush1.msra.mxu0 0.0
  %4154 = vmatprep.subr.mxu0 0.0
  %4155 = vmatpush1.msra.mxu0 0.0
  %4156 = vmatprep.subr.mxu0 0.0
  %4157 = vmatpush1.msra.mxu0 0.0
  %4158 = vmatprep.subr.mxu0 0.0
  %4159 = vmatpush1.msra.mxu0 0.0
  %4160 = vmatprep.subr.mxu0 0.0
  %4161 = vmatpush1.msra.mxu0 0.0
  %4162 = vmatprep.subr.mxu0 0.0
  %4163 = vmatpush1.msra.mxu0 0.0
  %4164 = vmatprep.subr.mxu0 0.0
  %4165 = vmatpush1.msra.mxu0 0.0
  %4166 = vmatprep.subr.mxu0 0.0
  %4167 = vmatpush1.msra.mxu0 0.0
  %4168 = vmatprep.subr.mxu0 0.0
  %4169 = vmatpush1.msra.mxu0 0.0
  %4170 = vmatprep.subr.mxu0 0.0
  %4171 = vmatpush1.msra.mxu0 0.0
  %4172 = vmatprep.subr.mxu0 0.0
  %4173 = vmatpush1.msra.mxu0 0.0
  %4174 = vmatprep.mubr.f32.mxu0 0.0
  %4175 = vmatmul.mubr.f32.gmra.mrb[0].mxu0 %v4099
  %v4176 = vpop.f32.mrb[0].mxu0
  %v4177 = vadd.f32 0.0, %v4176
  %v4178 = vpop.f32.mrb[0].mxu0
  %4179 = vmatprep.mubr.f32.mxu0 0.0
  %4180 = vmatmul.mubr.f32.gmra.mrb[0].mxu0 %v4102
  %v4181 = vpop.f32.mrb[0].mxu0
  %v4182 = vadd.f32 0.0, %v4181
  %v4183 = vpop.f32.mrb[0].mxu0
  %4184 = vmatprep.mubr.f32.mxu0 0.0
  %4185 = vmatmul.mubr.f32.gmra.mrb[0].mxu0 %v4105
  %v4186 = vpop.f32.mrb[0].mxu0
  %v4187 = vadd.f32 0.0, %v4186
  %v4188 = vpop.f32.mrb[0].mxu0
  %4189 = vmatprep.mubr.f32.mxu0 0.0
  %4190 = vmatmul.mubr.f32.gmra.mrb[0].mxu0 %v4108
  %v4191 = vpop.f32.mrb[0].mxu0
  %v4192 = vadd.f32 0.0, %v4191
  %v4193 = vpop.f32.mrb[0].mxu0
  %4194 = vdwg.mxu0
  %v4196 = vsel %vm4097, %v3935, 0
  %v4199 = vsel %vm4097, %v3936, 0
  %v4202 = vsel %vm4097, %v3937, 0
  %v4205 = vsel %vm4097, %v3938, 0
  %4207 = vmatprep.subr.mxu0 0.0
  %4208 = vmatpush1.msra.mxu0 %v4014
  %4209 = vmatprep.subr.mxu0 0.0
  %4210 = vmatpush1.msra.mxu0 0.0
  %4211 = vmatprep.subr.mxu0 0.0
  %4212 = vmatpush1.msra.mxu0 0.0
  %4213 = vmatprep.subr.mxu0 0.0
  %4214 = vmatpush1.msra.mxu0 0.0
  %4215 = vmatprep.subr.mxu0 0.0
  %4216 = vmatpush1.msra.mxu0 0.0
  %4217 = vmatprep.subr.mxu0 0.0
  %4218 = vmatpush1.msra.mxu0 0.0
  %4219 = vmatprep.subr.mxu0 0.0
  %4220 = vmatpush1.msra.mxu0 0.0
  %4221 = vmatprep.subr.mxu0 0.0
  %4222 = vmatpush1.msra.mxu0 0.0
  %4223 = vmatprep.subr.mxu0 0.0
  %4224 = vmatpush1.msra.mxu0 0.0
  %4225 = vmatprep.subr.mxu0 0.0
  %4226 = vmatpush1.msra.mxu0 0.0
  %4227 = vmatprep.subr.mxu0 0.0
  %4228 = vmatpush1.msra.mxu0 0.0
  %4229 = vmatprep.subr.mxu0 0.0
  %4230 = vmatpush1.msra.mxu0 0.0
  %4231 = vmatprep.subr.mxu0 0.0
  %4232 = vmatpush1.msra.mxu0 0.0
  %4233 = vmatprep.subr.mxu0 0.0
  %4234 = vmatpush1.msra.mxu0 0.0
  %4235 = vmatprep.subr.mxu0 0.0
  %4236 = vmatpush1.msra.mxu0 0.0
  %4237 = vmatprep.subr.mxu0 0.0
  %4238 = vmatpush1.msra.mxu0 0.0
  %4239 = vmatprep.subr.mxu0 0.0
  %4240 = vmatpush1.msra.mxu0 0.0
  %4241 = vmatprep.subr.mxu0 0.0
  %4242 = vmatpush1.msra.mxu0 0.0
  %4243 = vmatprep.subr.mxu0 0.0
  %4244 = vmatpush1.msra.mxu0 0.0
  %4245 = vmatprep.subr.mxu0 0.0
  %4246 = vmatpush1.msra.mxu0 0.0
  %4247 = vmatprep.subr.mxu0 0.0
  %4248 = vmatpush1.msra.mxu0 0.0
  %4249 = vmatprep.subr.mxu0 0.0
  %4250 = vmatpush1.msra.mxu0 0.0
  %4251 = vmatprep.subr.mxu0 0.0
  %4252 = vmatpush1.msra.mxu0 0.0
  %4253 = vmatprep.subr.mxu0 0.0
  %4254 = vmatpush1.msra.mxu0 0.0
  %4255 = vmatprep.subr.mxu0 0.0
  %4256 = vmatpush1.msra.mxu0 0.0
  %4257 = vmatprep.subr.mxu0 0.0
  %4258 = vmatpush1.msra.mxu0 0.0
  %4259 = vmatprep.subr.mxu0 0.0
  %4260 = vmatpush1.msra.mxu0 0.0
  %4261 = vmatprep.subr.mxu0 0.0
  %4262 = vmatpush1.msra.mxu0 0.0
  %4263 = vmatprep.subr.mxu0 0.0
  %4264 = vmatpush1.msra.mxu0 0.0
  %4265 = vmatprep.subr.mxu0 0.0
  %4266 = vmatpush1.msra.mxu0 0.0
  %4267 = vmatprep.subr.mxu0 0.0
  %4268 = vmatpush1.msra.mxu0 0.0
  %4269 = vmatprep.subr.mxu0 0.0
  %4270 = vmatpush1.msra.mxu0 0.0
  %4271 = vmatprep.mubr.f32.mxu0 0.0
  %4272 = vmatmul.mubr.f32.gmra.mrb[0].mxu0 %v4196
  %v4273 = vpop.f32.mrb[0].mxu0
  %v4274 = vadd.f32 %v4177, %v4273
  %v4275 = vpop.f32.mrb[0].mxu0
  %4276 = vmatprep.mubr.f32.mxu0 0.0
  %4277 = vmatmul.mubr.f32.gmra.mrb[0].mxu0 %v4199
  %v4278 = vpop.f32.mrb[0].mxu0
  %v4279 = vadd.f32 %v4182, %v4278
  %v4280 = vpop.f32.mrb[0].mxu0
  %4281 = vmatprep.mubr.f32.mxu0 0.0
  %4282 = vmatmul.mubr.f32.gmra.mrb[0].mxu0 %v4202
  %v4283 = vpop.f32.mrb[0].mxu0
  %v4284 = vadd.f32 %v4187, %v4283
  %v4285 = vpop.f32.mrb[0].mxu0
  %4286 = vmatprep.mubr.f32.mxu0 0.0
  %4287 = vmatmul.mubr.f32.gmra.mrb[0].mxu0 %v4205
  %v4288 = vpop.f32.mrb[0].mxu0
  %v4289 = vadd.f32 %v4192, %v4288
  %v4290 = vpop.f32.mrb[0].mxu0
  %4291 = vdwg.mxu0
  %s4292 = scalar_lea.vmem %s33, 64
  %v4293 = vld [vmem:[%s4292] sm:$0xff]
  %v4294 = vld [vmem:[%s4292 + $0x8] sm:$0xff]
  %v4295 = vld [vmem:[%s4292 + $0x10] sm:$0xff]
  %v4296 = vld [vmem:[%s4292 + $0x18] sm:$0xf]
  %s4297 = scalar_lea.vmem %s35, 64
  %v4298 = vld [vmem:[%s4297] sm:$0xff]
  %v4299 = vld [vmem:[%s4297 + $0x8] sm:$0xff]
  %v4300 = vld [vmem:[%s4297 + $0x10] sm:$0xff]
  %v4301 = vld [vmem:[%s4297 + $0x18] sm:$0xff]
  %4302 = vmatprep.subr.mxu0 0.0
  %4303 = vmatpush1.msra.mxu0 %v4298
  %4304 = vmatprep.subr.mxu0 0.0
  %4305 = vmatpush1.msra.mxu0 %v4299
  %4306 = vmatprep.subr.mxu0 0.0
  %4307 = vmatpush1.msra.mxu0 %v4300
  %4308 = vmatprep.subr.mxu0 0.0
  %4309 = vmatpush1.msra.mxu0 %v4301
  %4310 = vmatprep.subr.mxu0 0.0
  %4311 = vmatpush1.msra.mxu0 0.0
  %4312 = vmatprep.subr.mxu0 0.0
  %4313 = vmatpush1.msra.mxu0 0.0
  %4314 = vmatprep.subr.mxu0 0.0
  %4315 = vmatpush1.msra.mxu0 0.0
  %4316 = vmatprep.subr.mxu0 0.0
  %4317 = vmatpush1.msra.mxu0 0.0
  %4318 = vmatprep.subr.mxu0 0.0
  %4319 = vmatpush1.msra.mxu0 0.0
  %4320 = vmatprep.subr.mxu0 0.0
  %4321 = vmatpush1.msra.mxu0 0.0
  %4322 = vmatprep.subr.mxu0 0.0
  %4323 = vmatpush1.msra.mxu0 0.0
  %4324 = vmatprep.subr.mxu0 0.0
  %4325 = vmatpush1.msra.mxu0 0.0
  %4326 = vmatprep.subr.mxu0 0.0
  %4327 = vmatpush1.msra.mxu0 0.0
  %4328 = vmatprep.subr.mxu0 0.0
  %4329 = vmatpush1.msra.mxu0 0.0
  %4330 = vmatprep.subr.mxu0 0.0
  %4331 = vmatpush1.msra.mxu0 0.0
  %4332 = vmatprep.subr.mxu0 0.0
  %4333 = vmatpush1.msra.mxu0 0.0
  %4334 = vmatprep.subr.mxu0 0.0
  %4335 = vmatpush1.msra.mxu0 0.0
  %4336 = vmatprep.subr.mxu0 0.0
  %4337 = vmatpush1.msra.mxu0 0.0
  %4338 = vmatprep.subr.mxu0 0.0
  %4339 = vmatpush1.msra.mxu0 0.0
  %4340 = vmatprep.subr.mxu0 0.0
  %4341 = vmatpush1.msra.mxu0 0.0
  %4342 = vmatprep.subr.mxu0 0.0
  %4343 = vmatpush1.msra.mxu0 0.0
  %4344 = vmatprep.subr.mxu0 0.0
  %4345 = vmatpush1.msra.mxu0 0.0
  %4346 = vmatprep.subr.mxu0 0.0
  %4347 = vmatpush1.msra.mxu0 0.0
  %4348 = vmatprep.subr.mxu0 0.0
  %4349 = vmatpush1.msra.mxu0 0.0
  %4350 = vmatprep.subr.mxu0 0.0
  %4351 = vmatpush1.msra.mxu0 0.0
  %4352 = vmatprep.subr.mxu0 0.0
  %4353 = vmatpush1.msra.mxu0 0.0
  %4354 = vmatprep.subr.mxu0 0.0
  %4355 = vmatpush1.msra.mxu0 0.0
  %4356 = vmatprep.subr.mxu0 0.0
  %4357 = vmatpush1.msra.mxu0 0.0
  %4358 = vmatprep.subr.mxu0 0.0
  %4359 = vmatpush1.msra.mxu0 0.0
  %4360 = vmatprep.subr.mxu0 0.0
  %4361 = vmatpush1.msra.mxu0 0.0
  %4362 = vmatprep.subr.mxu0 0.0
  %4363 = vmatpush1.msra.mxu0 0.0
  %4364 = vmatprep.subr.mxu0 0.0
  %4365 = vmatpush1.msra.mxu0 0.0
  %4366 = vmatprep.mubr.f32.mxu0 0.0
  %4367 = vmatmul.mubr.f32.gmra.mrb[0].mxu0 %v3945
  %v4368 = vpop.f32.mrb[0].mxu0
  %v4369 = vadd.f32 0.0, %v4368
  %v4370 = vpop.f32.mrb[0].mxu0
  %4371 = vdwg.mxu0
  %v4373 = vsel %vm4097, %v4293, 0
  %v4376 = vsel %vm4097, %v4294, 0
  %v4379 = vsel %vm4097, %v4295, 0
  %v4382 = vsel %vm4097, %v4296, 0
  %4384 = vmatprep.subr.mxu0 0.0
  %4385 = vmatpush1.msra.mxu0 %v4369
  %4386 = vmatprep.subr.mxu0 0.0
  %4387 = vmatpush1.msra.mxu0 0.0
  %4388 = vmatprep.subr.mxu0 0.0
  %4389 = vmatpush1.msra.mxu0 0.0
  %4390 = vmatprep.subr.mxu0 0.0
  %4391 = vmatpush1.msra.mxu0 0.0
  %4392 = vmatprep.subr.mxu0 0.0
  %4393 = vmatpush1.msra.mxu0 0.0
  %4394 = vmatprep.subr.mxu0 0.0
  %4395 = vmatpush1.msra.mxu0 0.0
  %4396 = vmatprep.subr.mxu0 0.0
  %4397 = vmatpush1.msra.mxu0 0.0
  %4398 = vmatprep.subr.mxu0 0.0
  %4399 = vmatpush1.msra.mxu0 0.0
  %4400 = vmatprep.subr.mxu0 0.0
  %4401 = vmatpush1.msra.mxu0 0.0
  %4402 = vmatprep.subr.mxu0 0.0
  %4403 = vmatpush1.msra.mxu0 0.0
  %4404 = vmatprep.subr.mxu0 0.0
  %4405 = vmatpush1.msra.mxu0 0.0
  %4406 = vmatprep.subr.mxu0 0.0
  %4407 = vmatpush1.msra.mxu0 0.0
  %4408 = vmatprep.subr.mxu0 0.0
  %4409 = vmatpush1.msra.mxu0 0.0
  %4410 = vmatprep.subr.mxu0 0.0
  %4411 = vmatpush1.msra.mxu0 0.0
  %4412 = vmatprep.subr.mxu0 0.0
  %4413 = vmatpush1.msra.mxu0 0.0
  %4414 = vmatprep.subr.mxu0 0.0
  %4415 = vmatpush1.msra.mxu0 0.0
  %4416 = vmatprep.subr.mxu0 0.0
  %4417 = vmatpush1.msra.mxu0 0.0
  %4418 = vmatprep.subr.mxu0 0.0
  %4419 = vmatpush1.msra.mxu0 0.0
  %4420 = vmatprep.subr.mxu0 0.0
  %4421 = vmatpush1.msra.mxu0 0.0
  %4422 = vmatprep.subr.mxu0 0.0
  %4423 = vmatpush1.msra.mxu0 0.0
  %4424 = vmatprep.subr.mxu0 0.0
  %4425 = vmatpush1.msra.mxu0 0.0
  %4426 = vmatprep.subr.mxu0 0.0
  %4427 = vmatpush1.msra.mxu0 0.0
  %4428 = vmatprep.subr.mxu0 0.0
  %4429 = vmatpush1.msra.mxu0 0.0
  %4430 = vmatprep.subr.mxu0 0.0
  %4431 = vmatpush1.msra.mxu0 0.0
  %4432 = vmatprep.subr.mxu0 0.0
  %4433 = vmatpush1.msra.mxu0 0.0
  %4434 = vmatprep.subr.mxu0 0.0
  %4435 = vmatpush1.msra.mxu0 0.0
  %4436 = vmatprep.subr.mxu0 0.0
  %4437 = vmatpush1.msra.mxu0 0.0
  %4438 = vmatprep.subr.mxu0 0.0
  %4439 = vmatpush1.msra.mxu0 0.0
  %4440 = vmatprep.subr.mxu0 0.0
  %4441 = vmatpush1.msra.mxu0 0.0
  %4442 = vmatprep.subr.mxu0 0.0
  %4443 = vmatpush1.msra.mxu0 0.0
  %4444 = vmatprep.subr.mxu0 0.0
  %4445 = vmatpush1.msra.mxu0 0.0
  %4446 = vmatprep.subr.mxu0 0.0
  %4447 = vmatpush1.msra.mxu0 0.0
  %4448 = vmatprep.mubr.f32.mxu0 0.0
  %4449 = vmatmul.mubr.f32.gmra.mrb[0].mxu0 %v4373
  %v4450 = vpop.f32.mrb[0].mxu0
  %v4451 = vadd.f32 0.0, %v4450
  %v4452 = vpop.f32.mrb[0].mxu0
  %4453 = vmatprep.mubr.f32.mxu0 0.0
  %4454 = vmatmul.mubr.f32.gmra.mrb[0].mxu0 %v4376
  %v4455 = vpop.f32.mrb[0].mxu0
  %v4456 = vadd.f32 0.0, %v4455
  %v4457 = vpop.f32.mrb[0].mxu0
  %4458 = vmatprep.mubr.f32.mxu0 0.0
  %4459 = vmatmul.mubr.f32.gmra.mrb[0].mxu0 %v4379
  %v4460 = vpop.f32.mrb[0].mxu0
  %v4461 = vadd.f32 0.0, %v4460
  %v4462 = vpop.f32.mrb[0].mxu0
  %4463 = vmatprep.mubr.f32.mxu0 0.0
  %4464 = vmatmul.mubr.f32.gmra.mrb[0].mxu0 %v4382
  %v4465 = vpop.f32.mrb[0].mxu0
  %v4466 = vadd.f32 0.0, %v4465
  %v4467 = vpop.f32.mrb[0].mxu0
  %4468 = vdwg.mxu0
  %v4469 = vadd.f32 %v4274, %v4451
  %v4470 = vadd.f32 %v4279, %v4456
  %v4471 = vadd.f32 %v4284, %v4461
  %v4472 = vadd.f32 %v4289, %v4466
  %s4473 = scalar_lea.vmem %s33, 96
  %v4474 = vld [vmem:[%s4473] sm:$0xff]
  %v4475 = vld [vmem:[%s4473 + $0x8] sm:$0xff]
  %v4476 = vld [vmem:[%s4473 + $0x10] sm:$0xff]
  %v4477 = vld [vmem:[%s4473 + $0x18] sm:$0xf]
  %s4478 = scalar_lea.vmem %s35, 96
  %v4479 = vld [vmem:[%s4478] sm:$0xff]
  %v4480 = vld [vmem:[%s4478 + $0x8] sm:$0xff]
  %v4481 = vld [vmem:[%s4478 + $0x10] sm:$0xff]
  %v4482 = vld [vmem:[%s4478 + $0x18] sm:$0xff]
  %4483 = vmatprep.subr.mxu0 0.0
  %4484 = vmatpush1.msra.mxu0 %v4479
  %4485 = vmatprep.subr.mxu0 0.0
  %4486 = vmatpush1.msra.mxu0 %v4480
  %4487 = vmatprep.subr.mxu0 0.0
  %4488 = vmatpush1.msra.mxu0 %v4481
  %4489 = vmatprep.subr.mxu0 0.0
  %4490 = vmatpush1.msra.mxu0 %v4482
  %4491 = vmatprep.subr.mxu0 0.0
  %4492 = vmatpush1.msra.mxu0 0.0
  %4493 = vmatprep.subr.mxu0 0.0
  %4494 = vmatpush1.msra.mxu0 0.0
  %4495 = vmatprep.subr.mxu0 0.0
  %4496 = vmatpush1.msra.mxu0 0.0
  %4497 = vmatprep.subr.mxu0 0.0
  %4498 = vmatpush1.msra.mxu0 0.0
  %4499 = vmatprep.subr.mxu0 0.0
  %4500 = vmatpush1.msra.mxu0 0.0
  %4501 = vmatprep.subr.mxu0 0.0
  %4502 = vmatpush1.msra.mxu0 0.0
  %4503 = vmatprep.subr.mxu0 0.0
  %4504 = vmatpush1.msra.mxu0 0.0
  %4505 = vmatprep.subr.mxu0 0.0
  %4506 = vmatpush1.msra.mxu0 0.0
  %4507 = vmatprep.subr.mxu0 0.0
  %4508 = vmatpush1.msra.mxu0 0.0
  %4509 = vmatprep.subr.mxu0 0.0
  %4510 = vmatpush1.msra.mxu0 0.0
  %4511 = vmatprep.subr.mxu0 0.0
  %4512 = vmatpush1.msra.mxu0 0.0
  %4513 = vmatprep.subr.mxu0 0.0
  %4514 = vmatpush1.msra.mxu0 0.0
  %4515 = vmatprep.subr.mxu0 0.0
  %4516 = vmatpush1.msra.mxu0 0.0
  %4517 = vmatprep.subr.mxu0 0.0
  %4518 = vmatpush1.msra.mxu0 0.0
  %4519 = vmatprep.subr.mxu0 0.0
  %4520 = vmatpush1.msra.mxu0 0.0
  %4521 = vmatprep.subr.mxu0 0.0
  %4522 = vmatpush1.msra.mxu0 0.0
  %4523 = vmatprep.subr.mxu0 0.0
  %4524 = vmatpush1.msra.mxu0 0.0
  %4525 = vmatprep.subr.mxu0 0.0
  %4526 = vmatpush1.msra.mxu0 0.0
  %4527 = vmatprep.subr.mxu0 0.0
  %4528 = vmatpush1.msra.mxu0 0.0
  %4529 = vmatprep.subr.mxu0 0.0
  %4530 = vmatpush1.msra.mxu0 0.0
  %4531 = vmatprep.subr.mxu0 0.0
  %4532 = vmatpush1.msra.mxu0 0.0
  %4533 = vmatprep.subr.mxu0 0.0
  %4534 = vmatpush1.msra.mxu0 0.0
  %4535 = vmatprep.subr.mxu0 0.0
  %4536 = vmatpush1.msra.mxu0 0.0
  %4537 = vmatprep.subr.mxu0 0.0
  %4538 = vmatpush1.msra.mxu0 0.0
  %4539 = vmatprep.subr.mxu0 0.0
  %4540 = vmatpush1.msra.mxu0 0.0
  %4541 = vmatprep.subr.mxu0 0.0
  %4542 = vmatpush1.msra.mxu0 0.0
  %4543 = vmatprep.subr.mxu0 0.0
  %4544 = vmatpush1.msra.mxu0 0.0
  %4545 = vmatprep.subr.mxu0 0.0
  %4546 = vmatpush1.msra.mxu0 0.0
  %4547 = vmatprep.mubr.f32.mxu0 0.0
  %4548 = vmatmul.mubr.f32.gmra.mrb[0].mxu0 %v3945
  %v4549 = vpop.f32.mrb[0].mxu0
  %v4550 = vadd.f32 0.0, %v4549
  %v4551 = vpop.f32.mrb[0].mxu0
  %4552 = vdwg.mxu0
  %v4554 = vsel %vm4097, %v4474, 0
  %v4557 = vsel %vm4097, %v4475, 0
  %v4560 = vsel %vm4097, %v4476, 0
  %v4563 = vsel %vm4097, %v4477, 0
  %4565 = vmatprep.subr.mxu0 0.0
  %4566 = vmatpush1.msra.mxu0 %v4550
  %4567 = vmatprep.subr.mxu0 0.0
  %4568 = vmatpush1.msra.mxu0 0.0
  %4569 = vmatprep.subr.mxu0 0.0
  %4570 = vmatpush1.msra.mxu0 0.0
  %4571 = vmatprep.subr.mxu0 0.0
  %4572 = vmatpush1.msra.mxu0 0.0
  %4573 = vmatprep.subr.mxu0 0.0
  %4574 = vmatpush1.msra.mxu0 0.0
  %4575 = vmatprep.subr.mxu0 0.0
  %4576 = vmatpush1.msra.mxu0 0.0
  %4577 = vmatprep.subr.mxu0 0.0
  %4578 = vmatpush1.msra.mxu0 0.0
  %4579 = vmatprep.subr.mxu0 0.0
  %4580 = vmatpush1.msra.mxu0 0.0
  %4581 = vmatprep.subr.mxu0 0.0
  %4582 = vmatpush1.msra.mxu0 0.0
  %4583 = vmatprep.subr.mxu0 0.0
  %4584 = vmatpush1.msra.mxu0 0.0
  %4585 = vmatprep.subr.mxu0 0.0
  %4586 = vmatpush1.msra.mxu0 0.0
  %4587 = vmatprep.subr.mxu0 0.0
  %4588 = vmatpush1.msra.mxu0 0.0
  %4589 = vmatprep.subr.mxu0 0.0
  %4590 = vmatpush1.msra.mxu0 0.0
  %4591 = vmatprep.subr.mxu0 0.0
  %4592 = vmatpush1.msra.mxu0 0.0
  %4593 = vmatprep.subr.mxu0 0.0
  %4594 = vmatpush1.msra.mxu0 0.0
  %4595 = vmatprep.subr.mxu0 0.0
  %4596 = vmatpush1.msra.mxu0 0.0
  %4597 = vmatprep.subr.mxu0 0.0
  %4598 = vmatpush1.msra.mxu0 0.0
  %4599 = vmatprep.subr.mxu0 0.0
  %4600 = vmatpush1.msra.mxu0 0.0
  %4601 = vmatprep.subr.mxu0 0.0
  %4602 = vmatpush1.msra.mxu0 0.0
  %4603 = vmatprep.subr.mxu0 0.0
  %4604 = vmatpush1.msra.mxu0 0.0
  %4605 = vmatprep.subr.mxu0 0.0
  %4606 = vmatpush1.msra.mxu0 0.0
  %4607 = vmatprep.subr.mxu0 0.0
  %4608 = vmatpush1.msra.mxu0 0.0
  %4609 = vmatprep.subr.mxu0 0.0
  %4610 = vmatpush1.msra.mxu0 0.0
  %4611 = vmatprep.subr.mxu0 0.0
  %4612 = vmatpush1.msra.mxu0 0.0
  %4613 = vmatprep.subr.mxu0 0.0
  %4614 = vmatpush1.msra.mxu0 0.0
  %4615 = vmatprep.subr.mxu0 0.0
  %4616 = vmatpush1.msra.mxu0 0.0
  %4617 = vmatprep.subr.mxu0 0.0
  %4618 = vmatpush1.msra.mxu0 0.0
  %4619 = vmatprep.subr.mxu0 0.0
  %4620 = vmatpush1.msra.mxu0 0.0
  %4621 = vmatprep.subr.mxu0 0.0
  %4622 = vmatpush1.msra.mxu0 0.0
  %4623 = vmatprep.subr.mxu0 0.0
  %4624 = vmatpush1.msra.mxu0 0.0
  %4625 = vmatprep.subr.mxu0 0.0
  %4626 = vmatpush1.msra.mxu0 0.0
  %4627 = vmatprep.subr.mxu0 0.0
  %4628 = vmatpush1.msra.mxu0 0.0
  %4629 = vmatprep.mubr.f32.mxu0 0.0
  %4630 = vmatmul.mubr.f32.gmra.mrb[0].mxu0 %v4554
  %v4631 = vpop.f32.mrb[0].mxu0
  %v4632 = vadd.f32 0.0, %v4631
  %v4633 = vpop.f32.mrb[0].mxu0
  %4634 = vmatprep.mubr.f32.mxu0 0.0
  %4635 = vmatmul.mubr.f32.gmra.mrb[0].mxu0 %v4557
  %v4636 = vpop.f32.mrb[0].mxu0
  %v4637 = vadd.f32 0.0, %v4636
  %v4638 = vpop.f32.mrb[0].mxu0
  %4639 = vmatprep.mubr.f32.mxu0 0.0
  %4640 = vmatmul.mubr.f32.gmra.mrb[0].mxu0 %v4560
  %v4641 = vpop.f32.mrb[0].mxu0
  %v4642 = vadd.f32 0.0, %v4641
  %v4643 = vpop.f32.mrb[0].mxu0
  %4644 = vmatprep.mubr.f32.mxu0 0.0
  %4645 = vmatmul.mubr.f32.gmra.mrb[0].mxu0 %v4563
  %v4646 = vpop.f32.mrb[0].mxu0
  %v4647 = vadd.f32 0.0, %v4646
  %v4648 = vpop.f32.mrb[0].mxu0
  %4649 = vdwg.mxu0
  %v4650 = vadd.f32 %v4469, %v4632
  %v4651 = vadd.f32 %v4470, %v4637
  %v4652 = vadd.f32 %v4471, %v4642
  %v4653 = vadd.f32 %v4472, %v4647
  %s4654 = scalar_lea.vmem %s33, 128
  %v4655 = vld [vmem:[%s4654] sm:$0xff]
  %v4656 = vld [vmem:[%s4654 + $0x8] sm:$0xff]
  %v4657 = vld [vmem:[%s4654 + $0x10] sm:$0xff]
  %v4658 = vld [vmem:[%s4654 + $0x18] sm:$0xf]
  %s4659 = scalar_lea.vmem %s35, 128
  %v4660 = vld [vmem:[%s4659] sm:$0xff]
  %v4661 = vld [vmem:[%s4659 + $0x8] sm:$0xff]
  %v4662 = vld [vmem:[%s4659 + $0x10] sm:$0xff]
  %v4663 = vld [vmem:[%s4659 + $0x18] sm:$0xff]
  %4664 = vmatprep.subr.mxu0 0.0
  %4665 = vmatpush1.msra.mxu0 %v4660
  %4666 = vmatprep.subr.mxu0 0.0
  %4667 = vmatpush1.msra.mxu0 %v4661
  %4668 = vmatprep.subr.mxu0 0.0
  %4669 = vmatpush1.msra.mxu0 %v4662
  %4670 = vmatprep.subr.mxu0 0.0
  %4671 = vmatpush1.msra.mxu0 %v4663
  %4672 = vmatprep.subr.mxu0 0.0
  %4673 = vmatpush1.msra.mxu0 0.0
  %4674 = vmatprep.subr.mxu0 0.0
  %4675 = vmatpush1.msra.mxu0 0.0
  %4676 = vmatprep.subr.mxu0 0.0
  %4677 = vmatpush1.msra.mxu0 0.0
  %4678 = vmatprep.subr.mxu0 0.0
  %4679 = vmatpush1.msra.mxu0 0.0
  %4680 = vmatprep.subr.mxu0 0.0
  %4681 = vmatpush1.msra.mxu0 0.0
  %4682 = vmatprep.subr.mxu0 0.0
  %4683 = vmatpush1.msra.mxu0 0.0
  %4684 = vmatprep.subr.mxu0 0.0
  %4685 = vmatpush1.msra.mxu0 0.0
  %4686 = vmatprep.subr.mxu0 0.0
  %4687 = vmatpush1.msra.mxu0 0.0
  %4688 = vmatprep.subr.mxu0 0.0
  %4689 = vmatpush1.msra.mxu0 0.0
  %4690 = vmatprep.subr.mxu0 0.0
  %4691 = vmatpush1.msra.mxu0 0.0
  %4692 = vmatprep.subr.mxu0 0.0
  %4693 = vmatpush1.msra.mxu0 0.0
  %4694 = vmatprep.subr.mxu0 0.0
  %4695 = vmatpush1.msra.mxu0 0.0
  %4696 = vmatprep.subr.mxu0 0.0
  %4697 = vmatpush1.msra.mxu0 0.0
  %4698 = vmatprep.subr.mxu0 0.0
  %4699 = vmatpush1.msra.mxu0 0.0
  %4700 = vmatprep.subr.mxu0 0.0
  %4701 = vmatpush1.msra.mxu0 0.0
  %4702 = vmatprep.subr.mxu0 0.0
  %4703 = vmatpush1.msra.mxu0 0.0
  %4704 = vmatprep.subr.mxu0 0.0
  %4705 = vmatpush1.msra.mxu0 0.0
  %4706 = vmatprep.subr.mxu0 0.0
  %4707 = vmatpush1.msra.mxu0 0.0
  %4708 = vmatprep.subr.mxu0 0.0
  %4709 = vmatpush1.msra.mxu0 0.0
  %4710 = vmatprep.subr.mxu0 0.0
  %4711 = vmatpush1.msra.mxu0 0.0
  %4712 = vmatprep.subr.mxu0 0.0
  %4713 = vmatpush1.msra.mxu0 0.0
  %4714 = vmatprep.subr.mxu0 0.0
  %4715 = vmatpush1.msra.mxu0 0.0
  %4716 = vmatprep.subr.mxu0 0.0
  %4717 = vmatpush1.msra.mxu0 0.0
  %4718 = vmatprep.subr.mxu0 0.0
  %4719 = vmatpush1.msra.mxu0 0.0
  %4720 = vmatprep.subr.mxu0 0.0
  %4721 = vmatpush1.msra.mxu0 0.0
  %4722 = vmatprep.subr.mxu0 0.0
  %4723 = vmatpush1.msra.mxu0 0.0
  %4724 = vmatprep.subr.mxu0 0.0
  %4725 = vmatpush1.msra.mxu0 0.0
  %4726 = vmatprep.subr.mxu0 0.0
  %4727 = vmatpush1.msra.mxu0 0.0
  %4728 = vmatprep.mubr.f32.mxu0 0.0
  %4729 = vmatmul.mubr.f32.gmra.mrb[0].mxu0 %v3945
  %v4730 = vpop.f32.mrb[0].mxu0
  %v4731 = vadd.f32 0.0, %v4730
  %v4732 = vpop.f32.mrb[0].mxu0
  %4733 = vdwg.mxu0
  %v4735 = vsel %vm4097, %v4655, 0
  %v4738 = vsel %vm4097, %v4656, 0
  %v4741 = vsel %vm4097, %v4657, 0
  %v4744 = vsel %vm4097, %v4658, 0
  %4746 = vmatprep.subr.mxu0 0.0
  %4747 = vmatpush1.msra.mxu0 %v4731
  %4748 = vmatprep.subr.mxu0 0.0
  %4749 = vmatpush1.msra.mxu0 0.0
  %4750 = vmatprep.subr.mxu0 0.0
  %4751 = vmatpush1.msra.mxu0 0.0
  %4752 = vmatprep.subr.mxu0 0.0
  %4753 = vmatpush1.msra.mxu0 0.0
  %4754 = vmatprep.subr.mxu0 0.0
  %4755 = vmatpush1.msra.mxu0 0.0
  %4756 = vmatprep.subr.mxu0 0.0
  %4757 = vmatpush1.msra.mxu0 0.0
  %4758 = vmatprep.subr.mxu0 0.0
  %4759 = vmatpush1.msra.mxu0 0.0
  %4760 = vmatprep.subr.mxu0 0.0
  %4761 = vmatpush1.msra.mxu0 0.0
  %4762 = vmatprep.subr.mxu0 0.0
  %4763 = vmatpush1.msra.mxu0 0.0
  %4764 = vmatprep.subr.mxu0 0.0
  %4765 = vmatpush1.msra.mxu0 0.0
  %4766 = vmatprep.subr.mxu0 0.0
  %4767 = vmatpush1.msra.mxu0 0.0
  %4768 = vmatprep.subr.mxu0 0.0
  %4769 = vmatpush1.msra.mxu0 0.0
  %4770 = vmatprep.subr.mxu0 0.0
  %4771 = vmatpush1.msra.mxu0 0.0
  %4772 = vmatprep.subr.mxu0 0.0
  %4773 = vmatpush1.msra.mxu0 0.0
  %4774 = vmatprep.subr.mxu0 0.0
  %4775 = vmatpush1.msra.mxu0 0.0
  %4776 = vmatprep.subr.mxu0 0.0
  %4777 = vmatpush1.msra.mxu0 0.0
  %4778 = vmatprep.subr.mxu0 0.0
  %4779 = vmatpush1.msra.mxu0 0.0
  %4780 = vmatprep.subr.mxu0 0.0
  %4781 = vmatpush1.msra.mxu0 0.0
  %4782 = vmatprep.subr.mxu0 0.0
  %4783 = vmatpush1.msra.mxu0 0.0
  %4784 = vmatprep.subr.mxu0 0.0
  %4785 = vmatpush1.msra.mxu0 0.0
  %4786 = vmatprep.subr.mxu0 0.0
  %4787 = vmatpush1.msra.mxu0 0.0
  %4788 = vmatprep.subr.mxu0 0.0
  %4789 = vmatpush1.msra.mxu0 0.0
  %4790 = vmatprep.subr.mxu0 0.0
  %4791 = vmatpush1.msra.mxu0 0.0
  %4792 = vmatprep.subr.mxu0 0.0
  %4793 = vmatpush1.msra.mxu0 0.0
  %4794 = vmatprep.subr.mxu0 0.0
  %4795 = vmatpush1.msra.mxu0 0.0
  %4796 = vmatprep.subr.mxu0 0.0
  %4797 = vmatpush1.msra.mxu0 0.0
  %4798 = vmatprep.subr.mxu0 0.0
  %4799 = vmatpush1.msra.mxu0 0.0
  %4800 = vmatprep.subr.mxu0 0.0
  %4801 = vmatpush1.msra.mxu0 0.0
  %4802 = vmatprep.subr.mxu0 0.0
  %4803 = vmatpush1.msra.mxu0 0.0
  %4804 = vmatprep.subr.mxu0 0.0
  %4805 = vmatpush1.msra.mxu0 0.0
  %4806 = vmatprep.subr.mxu0 0.0
  %4807 = vmatpush1.msra.mxu0 0.0
  %4808 = vmatprep.subr.mxu0 0.0
  %4809 = vmatpush1.msra.mxu0 0.0
  %4810 = vmatprep.mubr.f32.mxu0 0.0
  %4811 = vmatmul.mubr.f32.gmra.mrb[0].mxu0 %v4735
  %v4812 = vpop.f32.mrb[0].mxu0
  %v4813 = vadd.f32 0.0, %v4812
  %v4814 = vpop.f32.mrb[0].mxu0
  %4815 = vmatprep.mubr.f32.mxu0 0.0
  %4816 = vmatmul.mubr.f32.gmra.mrb[0].mxu0 %v4738
  %v4817 = vpop.f32.mrb[0].mxu0
  %v4818 = vadd.f32 0.0, %v4817
  %v4819 = vpop.f32.mrb[0].mxu0
  %4820 = vmatprep.mubr.f32.mxu0 0.0
  %4821 = vmatmul.mubr.f32.gmra.mrb[0].mxu0 %v4741
  %v4822 = vpop.f32.mrb[0].mxu0
  %v4823 = vadd.f32 0.0, %v4822
  %v4824 = vpop.f32.mrb[0].mxu0
  %4825 = vmatprep.mubr.f32.mxu0 0.0
  %4826 = vmatmul.mubr.f32.gmra.mrb[0].mxu0 %v4744
  %v4827 = vpop.f32.mrb[0].mxu0
  %v4828 = vadd.f32 0.0, %v4827
  %v4829 = vpop.f32.mrb[0].mxu0
  %4830 = vdwg.mxu0
  %v4831 = vadd.f32 %v4650, %v4813
  %v4832 = vadd.f32 %v4651, %v4818
  %v4833 = vadd.f32 %v4652, %v4823
  %v4834 = vadd.f32 %v4653, %v4828
  %s4835 = scalar_lea.vmem %s33, 160
  %v4836 = vld [vmem:[%s4835] sm:$0xff]
  %v4837 = vld [vmem:[%s4835 + $0x8] sm:$0xff]
  %v4838 = vld [vmem:[%s4835 + $0x10] sm:$0xff]
  %v4839 = vld [vmem:[%s4835 + $0x18] sm:$0xf]
  %s4840 = scalar_lea.vmem %s35, 160
  %v4841 = vld [vmem:[%s4840] sm:$0xff]
  %v4842 = vld [vmem:[%s4840 + $0x8] sm:$0xff]
  %v4843 = vld [vmem:[%s4840 + $0x10] sm:$0xff]
  %v4844 = vld [vmem:[%s4840 + $0x18] sm:$0xff]
  %4845 = vmatprep.subr.mxu0 0.0
  %4846 = vmatpush1.msra.mxu0 %v4841
  %4847 = vmatprep.subr.mxu0 0.0
  %4848 = vmatpush1.msra.mxu0 %v4842
  %4849 = vmatprep.subr.mxu0 0.0
  %4850 = vmatpush1.msra.mxu0 %v4843
  %4851 = vmatprep.subr.mxu0 0.0
  %4852 = vmatpush1.msra.mxu0 %v4844
  %4853 = vmatprep.subr.mxu0 0.0
  %4854 = vmatpush1.msra.mxu0 0.0
  %4855 = vmatprep.subr.mxu0 0.0
  %4856 = vmatpush1.msra.mxu0 0.0
  %4857 = vmatprep.subr.mxu0 0.0
  %4858 = vmatpush1.msra.mxu0 0.0
  %4859 = vmatprep.subr.mxu0 0.0
  %4860 = vmatpush1.msra.mxu0 0.0
  %4861 = vmatprep.subr.mxu0 0.0
  %4862 = vmatpush1.msra.mxu0 0.0
  %4863 = vmatprep.subr.mxu0 0.0
  %4864 = vmatpush1.msra.mxu0 0.0
  %4865 = vmatprep.subr.mxu0 0.0
  %4866 = vmatpush1.msra.mxu0 0.0
  %4867 = vmatprep.subr.mxu0 0.0
  %4868 = vmatpush1.msra.mxu0 0.0
  %4869 = vmatprep.subr.mxu0 0.0
  %4870 = vmatpush1.msra.mxu0 0.0
  %4871 = vmatprep.subr.mxu0 0.0
  %4872 = vmatpush1.msra.mxu0 0.0
  %4873 = vmatprep.subr.mxu0 0.0
  %4874 = vmatpush1.msra.mxu0 0.0
  %4875 = vmatprep.subr.mxu0 0.0
  %4876 = vmatpush1.msra.mxu0 0.0
  %4877 = vmatprep.subr.mxu0 0.0
  %4878 = vmatpush1.msra.mxu0 0.0
  %4879 = vmatprep.subr.mxu0 0.0
  %4880 = vmatpush1.msra.mxu0 0.0
  %4881 = vmatprep.subr.mxu0 0.0
  %4882 = vmatpush1.msra.mxu0 0.0
  %4883 = vmatprep.subr.mxu0 0.0
  %4884 = vmatpush1.msra.mxu0 0.0
  %4885 = vmatprep.subr.mxu0 0.0
  %4886 = vmatpush1.msra.mxu0 0.0
  %4887 = vmatprep.subr.mxu0 0.0
  %4888 = vmatpush1.msra.mxu0 0.0
  %4889 = vmatprep.subr.mxu0 0.0
  %4890 = vmatpush1.msra.mxu0 0.0
  %4891 = vmatprep.subr.mxu0 0.0
  %4892 = vmatpush1.msra.mxu0 0.0
  %4893 = vmatprep.subr.mxu0 0.0
  %4894 = vmatpush1.msra.mxu0 0.0
  %4895 = vmatprep.subr.mxu0 0.0
  %4896 = vmatpush1.msra.mxu0 0.0
  %4897 = vmatprep.subr.mxu0 0.0
  %4898 = vmatpush1.msra.mxu0 0.0
  %4899 = vmatprep.subr.mxu0 0.0
  %4900 = vmatpush1.msra.mxu0 0.0
  %4901 = vmatprep.subr.mxu0 0.0
  %4902 = vmatpush1.msra.mxu0 0.0
  %4903 = vmatprep.subr.mxu0 0.0
  %4904 = vmatpush1.msra.mxu0 0.0
  %4905 = vmatprep.subr.mxu0 0.0
  %4906 = vmatpush1.msra.mxu0 0.0
  %4907 = vmatprep.subr.mxu0 0.0
  %4908 = vmatpush1.msra.mxu0 0.0
  %4909 = vmatprep.mubr.f32.mxu0 0.0
  %4910 = vmatmul.mubr.f32.gmra.mrb[0].mxu0 %v3945
  %v4911 = vpop.f32.mrb[0].mxu0
  %v4912 = vadd.f32 0.0, %v4911
  %v4913 = vpop.f32.mrb[0].mxu0
  %4914 = vdwg.mxu0
  %v4916 = vsel %vm4097, %v4836, 0
  %v4919 = vsel %vm4097, %v4837, 0
  %v4922 = vsel %vm4097, %v4838, 0
  %v4925 = vsel %vm4097, %v4839, 0
  %4927 = vmatprep.subr.mxu0 0.0
  %4928 = vmatpush1.msra.mxu0 %v4912
  %4929 = vmatprep.subr.mxu0 0.0
  %4930 = vmatpush1.msra.mxu0 0.0
  %4931 = vmatprep.subr.mxu0 0.0
  %4932 = vmatpush1.msra.mxu0 0.0
  %4933 = vmatprep.subr.mxu0 0.0
  %4934 = vmatpush1.msra.mxu0 0.0
  %4935 = vmatprep.subr.mxu0 0.0
  %4936 = vmatpush1.msra.mxu0 0.0
  %4937 = vmatprep.subr.mxu0 0.0
  %4938 = vmatpush1.msra.mxu0 0.0
  %4939 = vmatprep.subr.mxu0 0.0
  %4940 = vmatpush1.msra.mxu0 0.0
  %4941 = vmatprep.subr.mxu0 0.0
  %4942 = vmatpush1.msra.mxu0 0.0
  %4943 = vmatprep.subr.mxu0 0.0
  %4944 = vmatpush1.msra.mxu0 0.0
  %4945 = vmatprep.subr.mxu0 0.0
  %4946 = vmatpush1.msra.mxu0 0.0
  %4947 = vmatprep.subr.mxu0 0.0
  %4948 = vmatpush1.msra.mxu0 0.0
  %4949 = vmatprep.subr.mxu0 0.0
  %4950 = vmatpush1.msra.mxu0 0.0
  %4951 = vmatprep.subr.mxu0 0.0
  %4952 = vmatpush1.msra.mxu0 0.0
  %4953 = vmatprep.subr.mxu0 0.0
  %4954 = vmatpush1.msra.mxu0 0.0
  %4955 = vmatprep.subr.mxu0 0.0
  %4956 = vmatpush1.msra.mxu0 0.0
  %4957 = vmatprep.subr.mxu0 0.0
  %4958 = vmatpush1.msra.mxu0 0.0
  %4959 = vmatprep.subr.mxu0 0.0
  %4960 = vmatpush1.msra.mxu0 0.0
  %4961 = vmatprep.subr.mxu0 0.0
  %4962 = vmatpush1.msra.mxu0 0.0
  %4963 = vmatprep.subr.mxu0 0.0
  %4964 = vmatpush1.msra.mxu0 0.0
  %4965 = vmatprep.subr.mxu0 0.0
  %4966 = vmatpush1.msra.mxu0 0.0
  %4967 = vmatprep.subr.mxu0 0.0
  %4968 = vmatpush1.msra.mxu0 0.0
  %4969 = vmatprep.subr.mxu0 0.0
  %4970 = vmatpush1.msra.mxu0 0.0
  %4971 = vmatprep.subr.mxu0 0.0
  %4972 = vmatpush1.msra.mxu0 0.0
  %4973 = vmatprep.subr.mxu0 0.0
  %4974 = vmatpush1.msra.mxu0 0.0
  %4975 = vmatprep.subr.mxu0 0.0
  %4976 = vmatpush1.msra.mxu0 0.0
  %4977 = vmatprep.subr.mxu0 0.0
  %4978 = vmatpush1.msra.mxu0 0.0
  %4979 = vmatprep.subr.mxu0 0.0
  %4980 = vmatpush1.msra.mxu0 0.0
  %4981 = vmatprep.subr.mxu0 0.0
  %4982 = vmatpush1.msra.mxu0 0.0
  %4983 = vmatprep.subr.mxu0 0.0
  %4984 = vmatpush1.msra.mxu0 0.0
  %4985 = vmatprep.subr.mxu0 0.0
  %4986 = vmatpush1.msra.mxu0 0.0
  %4987 = vmatprep.subr.mxu0 0.0
  %4988 = vmatpush1.msra.mxu0 0.0
  %4989 = vmatprep.subr.mxu0 0.0
  %4990 = vmatpush1.msra.mxu0 0.0
  %4991 = vmatprep.mubr.f32.mxu0 0.0
  %4992 = vmatmul.mubr.f32.gmra.mrb[0].mxu0 %v4916
  %v4993 = vpop.f32.mrb[0].mxu0
  %v4994 = vadd.f32 0.0, %v4993
  %v4995 = vpop.f32.mrb[0].mxu0
  %4996 = vmatprep.mubr.f32.mxu0 0.0
  %4997 = vmatmul.mubr.f32.gmra.mrb[0].mxu0 %v4919
  %v4998 = vpop.f32.mrb[0].mxu0
  %v4999 = vadd.f32 0.0, %v4998
  %v5000 = vpop.f32.mrb[0].mxu0
  %5001 = vmatprep.mubr.f32.mxu0 0.0
  %5002 = vmatmul.mubr.f32.gmra.mrb[0].mxu0 %v4922
  %v5003 = vpop.f32.mrb[0].mxu0
  %v5004 = vadd.f32 0.0, %v5003
  %v5005 = vpop.f32.mrb[0].mxu0
  %5006 = vmatprep.mubr.f32.mxu0 0.0
  %5007 = vmatmul.mubr.f32.gmra.mrb[0].mxu0 %v4925
  %v5008 = vpop.f32.mrb[0].mxu0
  %v5009 = vadd.f32 0.0, %v5008
  %v5010 = vpop.f32.mrb[0].mxu0
  %5011 = vdwg.mxu0
  %v5012 = vadd.f32 %v4831, %v4994
  %v5013 = vadd.f32 %v4832, %v4999
  %v5014 = vadd.f32 %v4833, %v5004
  %v5015 = vadd.f32 %v4834, %v5009
  %s5016 = scalar_lea.vmem %s33, 192
  %v5017 = vld [vmem:[%s5016] sm:$0xff]
  %v5018 = vld [vmem:[%s5016 + $0x8] sm:$0xff]
  %v5019 = vld [vmem:[%s5016 + $0x10] sm:$0xff]
  %v5020 = vld [vmem:[%s5016 + $0x18] sm:$0xf]
  %s5021 = scalar_lea.vmem %s35, 192
  %v5022 = vld [vmem:[%s5021] sm:$0xff]
  %v5023 = vld [vmem:[%s5021 + $0x8] sm:$0xff]
  %v5024 = vld [vmem:[%s5021 + $0x10] sm:$0xff]
  %v5025 = vld [vmem:[%s5021 + $0x18] sm:$0xff]
  %5026 = vmatprep.subr.mxu0 0.0
  %5027 = vmatpush1.msra.mxu0 %v5022
  %5028 = vmatprep.subr.mxu0 0.0
  %5029 = vmatpush1.msra.mxu0 %v5023
  %5030 = vmatprep.subr.mxu0 0.0
  %5031 = vmatpush1.msra.mxu0 %v5024
  %5032 = vmatprep.subr.mxu0 0.0
  %5033 = vmatpush1.msra.mxu0 %v5025
  %5034 = vmatprep.subr.mxu0 0.0
  %5035 = vmatpush1.msra.mxu0 0.0
  %5036 = vmatprep.subr.mxu0 0.0
  %5037 = vmatpush1.msra.mxu0 0.0
  %5038 = vmatprep.subr.mxu0 0.0
  %5039 = vmatpush1.msra.mxu0 0.0
  %5040 = vmatprep.subr.mxu0 0.0
  %5041 = vmatpush1.msra.mxu0 0.0
  %5042 = vmatprep.subr.mxu0 0.0
  %5043 = vmatpush1.msra.mxu0 0.0
  %5044 = vmatprep.subr.mxu0 0.0
  %5045 = vmatpush1.msra.mxu0 0.0
  %5046 = vmatprep.subr.mxu0 0.0
  %5047 = vmatpush1.msra.mxu0 0.0
  %5048 = vmatprep.subr.mxu0 0.0
  %5049 = vmatpush1.msra.mxu0 0.0
  %5050 = vmatprep.subr.mxu0 0.0
  %5051 = vmatpush1.msra.mxu0 0.0
  %5052 = vmatprep.subr.mxu0 0.0
  %5053 = vmatpush1.msra.mxu0 0.0
  %5054 = vmatprep.subr.mxu0 0.0
  %5055 = vmatpush1.msra.mxu0 0.0
  %5056 = vmatprep.subr.mxu0 0.0
  %5057 = vmatpush1.msra.mxu0 0.0
  %5058 = vmatprep.subr.mxu0 0.0
  %5059 = vmatpush1.msra.mxu0 0.0
  %5060 = vmatprep.subr.mxu0 0.0
  %5061 = vmatpush1.msra.mxu0 0.0
  %5062 = vmatprep.subr.mxu0 0.0
  %5063 = vmatpush1.msra.mxu0 0.0
  %5064 = vmatprep.subr.mxu0 0.0
  %5065 = vmatpush1.msra.mxu0 0.0
  %5066 = vmatprep.subr.mxu0 0.0
  %5067 = vmatpush1.msra.mxu0 0.0
  %5068 = vmatprep.subr.mxu0 0.0
  %5069 = vmatpush1.msra.mxu0 0.0
  %5070 = vmatprep.subr.mxu0 0.0
  %5071 = vmatpush1.msra.mxu0 0.0
  %5072 = vmatprep.subr.mxu0 0.0
  %5073 = vmatpush1.msra.mxu0 0.0
  %5074 = vmatprep.subr.mxu0 0.0
  %5075 = vmatpush1.msra.mxu0 0.0
  %5076 = vmatprep.subr.mxu0 0.0
  %5077 = vmatpush1.msra.mxu0 0.0
  %5078 = vmatprep.subr.mxu0 0.0
  %5079 = vmatpush1.msra.mxu0 0.0
  %5080 = vmatprep.subr.mxu0 0.0
  %5081 = vmatpush1.msra.mxu0 0.0
  %5082 = vmatprep.subr.mxu0 0.0
  %5083 = vmatpush1.msra.mxu0 0.0
  %5084 = vmatprep.subr.mxu0 0.0
  %5085 = vmatpush1.msra.mxu0 0.0
  %5086 = vmatprep.subr.mxu0 0.0
  %5087 = vmatpush1.msra.mxu0 0.0
  %5088 = vmatprep.subr.mxu0 0.0
  %5089 = vmatpush1.msra.mxu0 0.0
  %5090 = vmatprep.mubr.f32.mxu0 0.0
  %5091 = vmatmul.mubr.f32.gmra.mrb[0].mxu0 %v3945
  %v5092 = vpop.f32.mrb[0].mxu0
  %v5093 = vadd.f32 0.0, %v5092
  %v5094 = vpop.f32.mrb[0].mxu0
  %5095 = vdwg.mxu0
  %v5097 = vsel %vm4097, %v5017, 0
  %v5100 = vsel %vm4097, %v5018, 0
  %v5103 = vsel %vm4097, %v5019, 0
  %v5106 = vsel %vm4097, %v5020, 0
  %5108 = vmatprep.subr.mxu0 0.0
  %5109 = vmatpush1.msra.mxu0 %v5093
  %5110 = vmatprep.subr.mxu0 0.0
  %5111 = vmatpush1.msra.mxu0 0.0
  %5112 = vmatprep.subr.mxu0 0.0
  %5113 = vmatpush1.msra.mxu0 0.0
  %5114 = vmatprep.subr.mxu0 0.0
  %5115 = vmatpush1.msra.mxu0 0.0
  %5116 = vmatprep.subr.mxu0 0.0
  %5117 = vmatpush1.msra.mxu0 0.0
  %5118 = vmatprep.subr.mxu0 0.0
  %5119 = vmatpush1.msra.mxu0 0.0
  %5120 = vmatprep.subr.mxu0 0.0
  %5121 = vmatpush1.msra.mxu0 0.0
  %5122 = vmatprep.subr.mxu0 0.0
  %5123 = vmatpush1.msra.mxu0 0.0
  %5124 = vmatprep.subr.mxu0 0.0
  %5125 = vmatpush1.msra.mxu0 0.0
  %5126 = vmatprep.subr.mxu0 0.0
  %5127 = vmatpush1.msra.mxu0 0.0
  %5128 = vmatprep.subr.mxu0 0.0
  %5129 = vmatpush1.msra.mxu0 0.0
  %5130 = vmatprep.subr.mxu0 0.0
  %5131 = vmatpush1.msra.mxu0 0.0
  %5132 = vmatprep.subr.mxu0 0.0
  %5133 = vmatpush1.msra.mxu0 0.0
  %5134 = vmatprep.subr.mxu0 0.0
  %5135 = vmatpush1.msra.mxu0 0.0
  %5136 = vmatprep.subr.mxu0 0.0
  %5137 = vmatpush1.msra.mxu0 0.0
  %5138 = vmatprep.subr.mxu0 0.0
  %5139 = vmatpush1.msra.mxu0 0.0
  %5140 = vmatprep.subr.mxu0 0.0
  %5141 = vmatpush1.msra.mxu0 0.0
  %5142 = vmatprep.subr.mxu0 0.0
  %5143 = vmatpush1.msra.mxu0 0.0
  %5144 = vmatprep.subr.mxu0 0.0
  %5145 = vmatpush1.msra.mxu0 0.0
  %5146 = vmatprep.subr.mxu0 0.0
  %5147 = vmatpush1.msra.mxu0 0.0
  %5148 = vmatprep.subr.mxu0 0.0
  %5149 = vmatpush1.msra.mxu0 0.0
  %5150 = vmatprep.subr.mxu0 0.0
  %5151 = vmatpush1.msra.mxu0 0.0
  %5152 = vmatprep.subr.mxu0 0.0
  %5153 = vmatpush1.msra.mxu0 0.0
  %5154 = vmatprep.subr.mxu0 0.0
  %5155 = vmatpush1.msra.mxu0 0.0
  %5156 = vmatprep.subr.mxu0 0.0
  %5157 = vmatpush1.msra.mxu0 0.0
  %5158 = vmatprep.subr.mxu0 0.0
  %5159 = vmatpush1.msra.mxu0 0.0
  %5160 = vmatprep.subr.mxu0 0.0
  %5161 = vmatpush1.msra.mxu0 0.0
  %5162 = vmatprep.subr.mxu0 0.0
  %5163 = vmatpush1.msra.mxu0 0.0
  %5164 = vmatprep.subr.mxu0 0.0
  %5165 = vmatpush1.msra.mxu0 0.0
  %5166 = vmatprep.subr.mxu0 0.0
  %5167 = vmatpush1.msra.mxu0 0.0
  %5168 = vmatprep.subr.mxu0 0.0
  %5169 = vmatpush1.msra.mxu0 0.0
  %5170 = vmatprep.subr.mxu0 0.0
  %5171 = vmatpush1.msra.mxu0 0.0
  %5172 = vmatprep.mubr.f32.mxu0 0.0
  %5173 = vmatmul.mubr.f32.gmra.mrb[0].mxu0 %v5097
  %v5174 = vpop.f32.mrb[0].mxu0
  %v5175 = vadd.f32 0.0, %v5174
  %v5176 = vpop.f32.mrb[0].mxu0
  %5177 = vmatprep.mubr.f32.mxu0 0.0
  %5178 = vmatmul.mubr.f32.gmra.mrb[0].mxu0 %v5100
  %v5179 = vpop.f32.mrb[0].mxu0
  %v5180 = vadd.f32 0.0, %v5179
  %v5181 = vpop.f32.mrb[0].mxu0
  %5182 = vmatprep.mubr.f32.mxu0 0.0
  %5183 = vmatmul.mubr.f32.gmra.mrb[0].mxu0 %v5103
  %v5184 = vpop.f32.mrb[0].mxu0
  %v5185 = vadd.f32 0.0, %v5184
  %v5186 = vpop.f32.mrb[0].mxu0
  %5187 = vmatprep.mubr.f32.mxu0 0.0
  %5188 = vmatmul.mubr.f32.gmra.mrb[0].mxu0 %v5106
  %v5189 = vpop.f32.mrb[0].mxu0
  %v5190 = vadd.f32 0.0, %v5189
  %v5191 = vpop.f32.mrb[0].mxu0
  %5192 = vdwg.mxu0
  %v5193 = vadd.f32 %v5012, %v5175
  %v5194 = vadd.f32 %v5013, %v5180
  %v5195 = vadd.f32 %v5014, %v5185
  %v5196 = vadd.f32 %v5015, %v5190
  %v5197 = vld [vmem:[%s37] sm:$0xff]
  %v5198 = vld [vmem:[%s37 + $0x8] sm:$0xff]
  %v5199 = vld [vmem:[%s37 + $0x10] sm:$0xff]
  %v5200 = vld [vmem:[%s37 + $0x18] sm:$0xf]
  %v5201 = vadd.f32 %v5193, %v5197
  %v5202 = vadd.f32 %v5194, %v5198
  %v5203 = vadd.f32 %v5195, %v5199
  %v5204 = vadd.f32 %v5196, %v5200
  %v5205 = vld [vmem:[%s39] sm:$0xff]
  %v5206 = vld [vmem:[%s39 + $0x8] sm:$0xff]
  %v5207 = vld [vmem:[%s39 + $0x10] sm:$0xff]
  %v5208 = vld [vmem:[%s39 + $0x18] sm:$0xff]
  %v5209 = vld [vmem:[%s39 + $0x20] sm:$0xff]
  %v5210 = vld [vmem:[%s39 + $0x28] sm:$0xff]
  %v5211 = vld [vmem:[%s39 + $0x30] sm:$0xf]
  %v5212 = vld [vmem:[%s41] sm:$0xff]
  %v5213 = vld [vmem:[%s41 + $0x8] sm:$0xff]
  %v5214 = vld [vmem:[%s41 + $0x10] sm:$0xff]
  %v5215 = vld [vmem:[%s41 + $0x18] sm:$0xf]
  %v5217 = vsel %vm352, %v5201, 0
  %v5220 = vsel %vm352, %v5202, 0
  %v5223 = vsel %vm352, %v5203, 0
  %v5226 = vsel %vm352, %v5204, 0
  %v5229 = vsel %vm374, %v5215, 0
  %5231 = vmatprep.subr.mxu0 0.0
  %5232 = vmatpush1.msra.mxu0 %v5212
  %5233 = vmatprep.subr.mxu0 0.0
  %5234 = vmatpush1.msra.mxu0 %v5213
  %5235 = vmatprep.subr.mxu0 0.0
  %5236 = vmatpush1.msra.mxu0 %v5214
  %5237 = vmatprep.subr.mxu0 0.0
  %5238 = vmatpush1.msra.mxu0 %v5229
  %5239 = vmatprep.subr.mxu0 0.0
  %5240 = vmatpush1.msra.mxu0 0.0
  %5241 = vmatprep.subr.mxu0 0.0
  %5242 = vmatpush1.msra.mxu0 0.0
  %5243 = vmatprep.subr.mxu0 0.0
  %5244 = vmatpush1.msra.mxu0 0.0
  %5245 = vmatprep.subr.mxu0 0.0
  %5246 = vmatpush1.msra.mxu0 0.0
  %5247 = vmatprep.subr.mxu0 0.0
  %5248 = vmatpush1.msra.mxu0 0.0
  %5249 = vmatprep.subr.mxu0 0.0
  %5250 = vmatpush1.msra.mxu0 0.0
  %5251 = vmatprep.subr.mxu0 0.0
  %5252 = vmatpush1.msra.mxu0 0.0
  %5253 = vmatprep.subr.mxu0 0.0
  %5254 = vmatpush1.msra.mxu0 0.0
  %5255 = vmatprep.subr.mxu0 0.0
  %5256 = vmatpush1.msra.mxu0 0.0
  %5257 = vmatprep.subr.mxu0 0.0
  %5258 = vmatpush1.msra.mxu0 0.0
  %5259 = vmatprep.subr.mxu0 0.0
  %5260 = vmatpush1.msra.mxu0 0.0
  %5261 = vmatprep.subr.mxu0 0.0
  %5262 = vmatpush1.msra.mxu0 0.0
  %5263 = vmatprep.subr.mxu0 0.0
  %5264 = vmatpush1.msra.mxu0 0.0
  %5265 = vmatprep.subr.mxu0 0.0
  %5266 = vmatpush1.msra.mxu0 0.0
  %5267 = vmatprep.subr.mxu0 0.0
  %5268 = vmatpush1.msra.mxu0 0.0
  %5269 = vmatprep.subr.mxu0 0.0
  %5270 = vmatpush1.msra.mxu0 0.0
  %5271 = vmatprep.subr.mxu0 0.0
  %5272 = vmatpush1.msra.mxu0 0.0
  %5273 = vmatprep.subr.mxu0 0.0
  %5274 = vmatpush1.msra.mxu0 0.0
  %5275 = vmatprep.subr.mxu0 0.0
  %5276 = vmatpush1.msra.mxu0 0.0
  %5277 = vmatprep.subr.mxu0 0.0
  %5278 = vmatpush1.msra.mxu0 0.0
  %5279 = vmatprep.subr.mxu0 0.0
  %5280 = vmatpush1.msra.mxu0 0.0
  %5281 = vmatprep.subr.mxu0 0.0
  %5282 = vmatpush1.msra.mxu0 0.0
  %5283 = vmatprep.subr.mxu0 0.0
  %5284 = vmatpush1.msra.mxu0 0.0
  %5285 = vmatprep.subr.mxu0 0.0
  %5286 = vmatpush1.msra.mxu0 0.0
  %5287 = vmatprep.subr.mxu0 0.0
  %5288 = vmatpush1.msra.mxu0 0.0
  %5289 = vmatprep.subr.mxu0 0.0
  %5290 = vmatpush1.msra.mxu0 0.0
  %5291 = vmatprep.subr.mxu0 0.0
  %5292 = vmatpush1.msra.mxu0 0.0
  %5293 = vmatprep.subr.mxu0 0.0
  %5294 = vmatpush1.msra.mxu0 0.0
  %5295 = vmatprep.mubr.f32.mxu0 0.0
  %5296 = vmatmul.mubr.f32.gmra.mrb[0].mxu0 %v5217
  %v5297 = vpop.f32.mrb[0].mxu0
  %v5298 = vadd.f32 0.0, %v5297
  %v5299 = vpop.f32.mrb[0].mxu0
  %5300 = vmatprep.mubr.f32.mxu0 0.0
  %5301 = vmatmul.mubr.f32.gmra.mrb[0].mxu0 %v5220
  %v5302 = vpop.f32.mrb[0].mxu0
  %v5303 = vadd.f32 0.0, %v5302
  %v5304 = vpop.f32.mrb[0].mxu0
  %5305 = vmatprep.mubr.f32.mxu0 0.0
  %5306 = vmatmul.mubr.f32.gmra.mrb[0].mxu0 %v5223
  %v5307 = vpop.f32.mrb[0].mxu0
  %v5308 = vadd.f32 0.0, %v5307
  %v5309 = vpop.f32.mrb[0].mxu0
  %5310 = vmatprep.mubr.f32.mxu0 0.0
  %5311 = vmatmul.mubr.f32.gmra.mrb[0].mxu0 %v5226
  %v5312 = vpop.f32.mrb[0].mxu0
  %v5313 = vadd.f32 0.0, %v5312
  %v5314 = vpop.f32.mrb[0].mxu0
  %5315 = vdwg.mxu0
  %s5316 = scalar_lea.vmem %s39, 56
  %v5317 = vld [vmem:[%s5316] sm:$0xff]
  %v5318 = vld [vmem:[%s5316 + $0x8] sm:$0xff]
  %v5319 = vld [vmem:[%s5316 + $0x10] sm:$0xff]
  %v5320 = vld [vmem:[%s5316 + $0x18] sm:$0xff]
  %v5321 = vld [vmem:[%s5316 + $0x20] sm:$0xff]
  %v5322 = vld [vmem:[%s5316 + $0x28] sm:$0xff]
  %v5323 = vld [vmem:[%s5316 + $0x30] sm:$0xf]
  %s5324 = scalar_lea.vmem %s41, 32
  %v5325 = vld [vmem:[%s5324] sm:$0xff]
  %v5326 = vld [vmem:[%s5324 + $0x8] sm:$0xff]
  %v5327 = vld [vmem:[%s5324 + $0x10] sm:$0xff]
  %v5328 = vld [vmem:[%s5324 + $0x18] sm:$0xf]
  %v5330 = vsel %vm374, %v5328, 0
  %5332 = vmatprep.subr.mxu0 0.0
  %5333 = vmatpush1.msra.mxu0 %v5325
  %5334 = vmatprep.subr.mxu0 0.0
  %5335 = vmatpush1.msra.mxu0 %v5326
  %5336 = vmatprep.subr.mxu0 0.0
  %5337 = vmatpush1.msra.mxu0 %v5327
  %5338 = vmatprep.subr.mxu0 0.0
  %5339 = vmatpush1.msra.mxu0 %v5330
  %5340 = vmatprep.subr.mxu0 0.0
  %5341 = vmatpush1.msra.mxu0 0.0
  %5342 = vmatprep.subr.mxu0 0.0
  %5343 = vmatpush1.msra.mxu0 0.0
  %5344 = vmatprep.subr.mxu0 0.0
  %5345 = vmatpush1.msra.mxu0 0.0
  %5346 = vmatprep.subr.mxu0 0.0
  %5347 = vmatpush1.msra.mxu0 0.0
  %5348 = vmatprep.subr.mxu0 0.0
  %5349 = vmatpush1.msra.mxu0 0.0
  %5350 = vmatprep.subr.mxu0 0.0
  %5351 = vmatpush1.msra.mxu0 0.0
  %5352 = vmatprep.subr.mxu0 0.0
  %5353 = vmatpush1.msra.mxu0 0.0
  %5354 = vmatprep.subr.mxu0 0.0
  %5355 = vmatpush1.msra.mxu0 0.0
  %5356 = vmatprep.subr.mxu0 0.0
  %5357 = vmatpush1.msra.mxu0 0.0
  %5358 = vmatprep.subr.mxu0 0.0
  %5359 = vmatpush1.msra.mxu0 0.0
  %5360 = vmatprep.subr.mxu0 0.0
  %5361 = vmatpush1.msra.mxu0 0.0
  %5362 = vmatprep.subr.mxu0 0.0
  %5363 = vmatpush1.msra.mxu0 0.0
  %5364 = vmatprep.subr.mxu0 0.0
  %5365 = vmatpush1.msra.mxu0 0.0
  %5366 = vmatprep.subr.mxu0 0.0
  %5367 = vmatpush1.msra.mxu0 0.0
  %5368 = vmatprep.subr.mxu0 0.0
  %5369 = vmatpush1.msra.mxu0 0.0
  %5370 = vmatprep.subr.mxu0 0.0
  %5371 = vmatpush1.msra.mxu0 0.0
  %5372 = vmatprep.subr.mxu0 0.0
  %5373 = vmatpush1.msra.mxu0 0.0
  %5374 = vmatprep.subr.mxu0 0.0
  %5375 = vmatpush1.msra.mxu0 0.0
  %5376 = vmatprep.subr.mxu0 0.0
  %5377 = vmatpush1.msra.mxu0 0.0
  %5378 = vmatprep.subr.mxu0 0.0
  %5379 = vmatpush1.msra.mxu0 0.0
  %5380 = vmatprep.subr.mxu0 0.0
  %5381 = vmatpush1.msra.mxu0 0.0
  %5382 = vmatprep.subr.mxu0 0.0
  %5383 = vmatpush1.msra.mxu0 0.0
  %5384 = vmatprep.subr.mxu0 0.0
  %5385 = vmatpush1.msra.mxu0 0.0
  %5386 = vmatprep.subr.mxu0 0.0
  %5387 = vmatpush1.msra.mxu0 0.0
  %5388 = vmatprep.subr.mxu0 0.0
  %5389 = vmatpush1.msra.mxu0 0.0
  %5390 = vmatprep.subr.mxu0 0.0
  %5391 = vmatpush1.msra.mxu0 0.0
  %5392 = vmatprep.subr.mxu0 0.0
  %5393 = vmatpush1.msra.mxu0 0.0
  %5394 = vmatprep.subr.mxu0 0.0
  %5395 = vmatpush1.msra.mxu0 0.0
  %5396 = vmatprep.mubr.f32.mxu0 0.0
  %5397 = vmatmul.mubr.f32.gmra.mrb[0].mxu0 %v5217
  %v5398 = vpop.f32.mrb[0].mxu0
  %v5399 = vadd.f32 0.0, %v5398
  %v5400 = vpop.f32.mrb[0].mxu0
  %5401 = vmatprep.mubr.f32.mxu0 0.0
  %5402 = vmatmul.mubr.f32.gmra.mrb[0].mxu0 %v5220
  %v5403 = vpop.f32.mrb[0].mxu0
  %v5404 = vadd.f32 0.0, %v5403
  %v5405 = vpop.f32.mrb[0].mxu0
  %5406 = vmatprep.mubr.f32.mxu0 0.0
  %5407 = vmatmul.mubr.f32.gmra.mrb[0].mxu0 %v5223
  %v5408 = vpop.f32.mrb[0].mxu0
  %v5409 = vadd.f32 0.0, %v5408
  %v5410 = vpop.f32.mrb[0].mxu0
  %5411 = vmatprep.mubr.f32.mxu0 0.0
  %5412 = vmatmul.mubr.f32.gmra.mrb[0].mxu0 %v5226
  %v5413 = vpop.f32.mrb[0].mxu0
  %v5414 = vadd.f32 0.0, %v5413
  %v5415 = vpop.f32.mrb[0].mxu0
  %5416 = vdwg.mxu0
  %v5418 = vsel %vm352, %v5317, 0
  %v5421 = vsel %vm352, %v5318, 0
  %v5424 = vsel %vm352, %v5319, 0
  %v5427 = vsel %vm352, %v5320, 0
  %v5430 = vsel %vm352, %v5321, 0
  %v5433 = vsel %vm352, %v5322, 0
  %v5436 = vsel %vm352, %v5323, 0
  %v5439 = vsel %vm374, %v5414, 0
  %5441 = vmatprep.subr.mxu0 0.0
  %5442 = vmatpush1.msra.mxu0 %v5399
  %5443 = vmatprep.subr.mxu0 0.0
  %5444 = vmatpush1.msra.mxu0 %v5404
  %5445 = vmatprep.subr.mxu0 0.0
  %5446 = vmatpush1.msra.mxu0 %v5409
  %5447 = vmatprep.subr.mxu0 0.0
  %5448 = vmatpush1.msra.mxu0 %v5439
  %5449 = vmatprep.subr.mxu0 0.0
  %5450 = vmatpush1.msra.mxu0 0.0
  %5451 = vmatprep.subr.mxu0 0.0
  %5452 = vmatpush1.msra.mxu0 0.0
  %5453 = vmatprep.subr.mxu0 0.0
  %5454 = vmatpush1.msra.mxu0 0.0
  %5455 = vmatprep.subr.mxu0 0.0
  %5456 = vmatpush1.msra.mxu0 0.0
  %5457 = vmatprep.subr.mxu0 0.0
  %5458 = vmatpush1.msra.mxu0 0.0
  %5459 = vmatprep.subr.mxu0 0.0
  %5460 = vmatpush1.msra.mxu0 0.0
  %5461 = vmatprep.subr.mxu0 0.0
  %5462 = vmatpush1.msra.mxu0 0.0
  %5463 = vmatprep.subr.mxu0 0.0
  %5464 = vmatpush1.msra.mxu0 0.0
  %5465 = vmatprep.subr.mxu0 0.0
  %5466 = vmatpush1.msra.mxu0 0.0
  %5467 = vmatprep.subr.mxu0 0.0
  %5468 = vmatpush1.msra.mxu0 0.0
  %5469 = vmatprep.subr.mxu0 0.0
  %5470 = vmatpush1.msra.mxu0 0.0
  %5471 = vmatprep.subr.mxu0 0.0
  %5472 = vmatpush1.msra.mxu0 0.0
  %5473 = vmatprep.subr.mxu0 0.0
  %5474 = vmatpush1.msra.mxu0 0.0
  %5475 = vmatprep.subr.mxu0 0.0
  %5476 = vmatpush1.msra.mxu0 0.0
  %5477 = vmatprep.subr.mxu0 0.0
  %5478 = vmatpush1.msra.mxu0 0.0
  %5479 = vmatprep.subr.mxu0 0.0
  %5480 = vmatpush1.msra.mxu0 0.0
  %5481 = vmatprep.subr.mxu0 0.0
  %5482 = vmatpush1.msra.mxu0 0.0
  %5483 = vmatprep.subr.mxu0 0.0
  %5484 = vmatpush1.msra.mxu0 0.0
  %5485 = vmatprep.subr.mxu0 0.0
  %5486 = vmatpush1.msra.mxu0 0.0
  %5487 = vmatprep.subr.mxu0 0.0
  %5488 = vmatpush1.msra.mxu0 0.0
  %5489 = vmatprep.subr.mxu0 0.0
  %5490 = vmatpush1.msra.mxu0 0.0
  %5491 = vmatprep.subr.mxu0 0.0
  %5492 = vmatpush1.msra.mxu0 0.0
  %5493 = vmatprep.subr.mxu0 0.0
  %5494 = vmatpush1.msra.mxu0 0.0
  %5495 = vmatprep.subr.mxu0 0.0
  %5496 = vmatpush1.msra.mxu0 0.0
  %5497 = vmatprep.subr.mxu0 0.0
  %5498 = vmatpush1.msra.mxu0 0.0
  %5499 = vmatprep.subr.mxu0 0.0
  %5500 = vmatpush1.msra.mxu0 0.0
  %5501 = vmatprep.subr.mxu0 0.0
  %5502 = vmatpush1.msra.mxu0 0.0
  %5503 = vmatprep.subr.mxu0 0.0
  %5504 = vmatpush1.msra.mxu0 0.0
  %5505 = vmatprep.mubr.f32.mxu0 0.0
  %5506 = vmatmul.mubr.f32.gmra.mrb[0].mxu0 %v5418
  %v5507 = vpop.f32.mrb[0].mxu0
  %v5508 = vadd.f32 0.0, %v5507
  %v5509 = vpop.f32.mrb[0].mxu0
  %5510 = vmatprep.mubr.f32.mxu0 0.0
  %5511 = vmatmul.mubr.f32.gmra.mrb[0].mxu0 %v5421
  %v5512 = vpop.f32.mrb[0].mxu0
  %v5513 = vadd.f32 0.0, %v5512
  %v5514 = vpop.f32.mrb[0].mxu0
  %5515 = vmatprep.mubr.f32.mxu0 0.0
  %5516 = vmatmul.mubr.f32.gmra.mrb[0].mxu0 %v5424
  %v5517 = vpop.f32.mrb[0].mxu0
  %v5518 = vadd.f32 0.0, %v5517
  %v5519 = vpop.f32.mrb[0].mxu0
  %5520 = vmatprep.mubr.f32.mxu0 0.0
  %5521 = vmatmul.mubr.f32.gmra.mrb[0].mxu0 %v5427
  %v5522 = vpop.f32.mrb[0].mxu0
  %v5523 = vadd.f32 0.0, %v5522
  %v5524 = vpop.f32.mrb[0].mxu0
  %5525 = vmatprep.mubr.f32.mxu0 0.0
  %5526 = vmatmul.mubr.f32.gmra.mrb[0].mxu0 %v5430
  %v5527 = vpop.f32.mrb[0].mxu0
  %v5528 = vadd.f32 0.0, %v5527
  %v5529 = vpop.f32.mrb[0].mxu0
  %5530 = vmatprep.mubr.f32.mxu0 0.0
  %5531 = vmatmul.mubr.f32.gmra.mrb[0].mxu0 %v5433
  %v5532 = vpop.f32.mrb[0].mxu0
  %v5533 = vadd.f32 0.0, %v5532
  %v5534 = vpop.f32.mrb[0].mxu0
  %5535 = vmatprep.mubr.f32.mxu0 0.0
  %5536 = vmatmul.mubr.f32.gmra.mrb[0].mxu0 %v5436
  %v5537 = vpop.f32.mrb[0].mxu0
  %v5538 = vadd.f32 0.0, %v5537
  %v5539 = vpop.f32.mrb[0].mxu0
  %5540 = vdwg.mxu0
  %v5542 = vsel %vm352, %v5205, 0
  %v5545 = vsel %vm352, %v5206, 0
  %v5548 = vsel %vm352, %v5207, 0
  %v5551 = vsel %vm352, %v5208, 0
  %v5554 = vsel %vm352, %v5209, 0
  %v5557 = vsel %vm352, %v5210, 0
  %v5560 = vsel %vm352, %v5211, 0
  %v5563 = vsel %vm374, %v5313, 0
  %5565 = vmatprep.subr.mxu0 0.0
  %5566 = vmatpush1.msra.mxu0 %v5298
  %5567 = vmatprep.subr.mxu0 0.0
  %5568 = vmatpush1.msra.mxu0 %v5303
  %5569 = vmatprep.subr.mxu0 0.0
  %5570 = vmatpush1.msra.mxu0 %v5308
  %5571 = vmatprep.subr.mxu0 0.0
  %5572 = vmatpush1.msra.mxu0 %v5563
  %5573 = vmatprep.subr.mxu0 0.0
  %5574 = vmatpush1.msra.mxu0 0.0
  %5575 = vmatprep.subr.mxu0 0.0
  %5576 = vmatpush1.msra.mxu0 0.0
  %5577 = vmatprep.subr.mxu0 0.0
  %5578 = vmatpush1.msra.mxu0 0.0
  %5579 = vmatprep.subr.mxu0 0.0
  %5580 = vmatpush1.msra.mxu0 0.0
  %5581 = vmatprep.subr.mxu0 0.0
  %5582 = vmatpush1.msra.mxu0 0.0
  %5583 = vmatprep.subr.mxu0 0.0
  %5584 = vmatpush1.msra.mxu0 0.0
  %5585 = vmatprep.subr.mxu0 0.0
  %5586 = vmatpush1.msra.mxu0 0.0
  %5587 = vmatprep.subr.mxu0 0.0
  %5588 = vmatpush1.msra.mxu0 0.0
  %5589 = vmatprep.subr.mxu0 0.0
  %5590 = vmatpush1.msra.mxu0 0.0
  %5591 = vmatprep.subr.mxu0 0.0
  %5592 = vmatpush1.msra.mxu0 0.0
  %5593 = vmatprep.subr.mxu0 0.0
  %5594 = vmatpush1.msra.mxu0 0.0
  %5595 = vmatprep.subr.mxu0 0.0
  %5596 = vmatpush1.msra.mxu0 0.0
  %5597 = vmatprep.subr.mxu0 0.0
  %5598 = vmatpush1.msra.mxu0 0.0
  %5599 = vmatprep.subr.mxu0 0.0
  %5600 = vmatpush1.msra.mxu0 0.0
  %5601 = vmatprep.subr.mxu0 0.0
  %5602 = vmatpush1.msra.mxu0 0.0
  %5603 = vmatprep.subr.mxu0 0.0
  %5604 = vmatpush1.msra.mxu0 0.0
  %5605 = vmatprep.subr.mxu0 0.0
  %5606 = vmatpush1.msra.mxu0 0.0
  %5607 = vmatprep.subr.mxu0 0.0
  %5608 = vmatpush1.msra.mxu0 0.0
  %5609 = vmatprep.subr.mxu0 0.0
  %5610 = vmatpush1.msra.mxu0 0.0
  %5611 = vmatprep.subr.mxu0 0.0
  %5612 = vmatpush1.msra.mxu0 0.0
  %5613 = vmatprep.subr.mxu0 0.0
  %5614 = vmatpush1.msra.mxu0 0.0
  %5615 = vmatprep.subr.mxu0 0.0
  %5616 = vmatpush1.msra.mxu0 0.0
  %5617 = vmatprep.subr.mxu0 0.0
  %5618 = vmatpush1.msra.mxu0 0.0
  %5619 = vmatprep.subr.mxu0 0.0
  %5620 = vmatpush1.msra.mxu0 0.0
  %5621 = vmatprep.subr.mxu0 0.0
  %5622 = vmatpush1.msra.mxu0 0.0
  %5623 = vmatprep.subr.mxu0 0.0
  %5624 = vmatpush1.msra.mxu0 0.0
  %5625 = vmatprep.subr.mxu0 0.0
  %5626 = vmatpush1.msra.mxu0 0.0
  %5627 = vmatprep.subr.mxu0 0.0
  %5628 = vmatpush1.msra.mxu0 0.0
  %5629 = vmatprep.mubr.f32.mxu0 0.0
  %5630 = vmatmul.mubr.f32.gmra.mrb[0].mxu0 %v5542
  %v5631 = vpop.f32.mrb[0].mxu0
  %v5632 = vadd.f32 %v5508, %v5631
  %v5633 = vpop.f32.mrb[0].mxu0
  %5634 = vmatprep.mubr.f32.mxu0 0.0
  %5635 = vmatmul.mubr.f32.gmra.mrb[0].mxu0 %v5545
  %v5636 = vpop.f32.mrb[0].mxu0
  %v5637 = vadd.f32 %v5513, %v5636
  %v5638 = vpop.f32.mrb[0].mxu0
  %5639 = vmatprep.mubr.f32.mxu0 0.0
  %5640 = vmatmul.mubr.f32.gmra.mrb[0].mxu0 %v5548
  %v5641 = vpop.f32.mrb[0].mxu0
  %v5642 = vadd.f32 %v5518, %v5641
  %v5643 = vpop.f32.mrb[0].mxu0
  %5644 = vmatprep.mubr.f32.mxu0 0.0
  %5645 = vmatmul.mubr.f32.gmra.mrb[0].mxu0 %v5551
  %v5646 = vpop.f32.mrb[0].mxu0
  %v5647 = vadd.f32 %v5523, %v5646
  %v5648 = vpop.f32.mrb[0].mxu0
  %5649 = vmatprep.mubr.f32.mxu0 0.0
  %5650 = vmatmul.mubr.f32.gmra.mrb[0].mxu0 %v5554
  %v5651 = vpop.f32.mrb[0].mxu0
  %v5652 = vadd.f32 %v5528, %v5651
  %v5653 = vpop.f32.mrb[0].mxu0
  %5654 = vmatprep.mubr.f32.mxu0 0.0
  %5655 = vmatmul.mubr.f32.gmra.mrb[0].mxu0 %v5557
  %v5656 = vpop.f32.mrb[0].mxu0
  %v5657 = vadd.f32 %v5533, %v5656
  %v5658 = vpop.f32.mrb[0].mxu0
  %5659 = vmatprep.mubr.f32.mxu0 0.0
  %5660 = vmatmul.mubr.f32.gmra.mrb[0].mxu0 %v5560
  %v5661 = vpop.f32.mrb[0].mxu0
  %v5662 = vadd.f32 %v5538, %v5661
  %v5663 = vpop.f32.mrb[0].mxu0
  %5664 = vdwg.mxu0
  %s5665 = scalar_lea.vmem %s39, 112
  %v5666 = vld [vmem:[%s5665] sm:$0xff]
  %v5667 = vld [vmem:[%s5665 + $0x8] sm:$0xff]
  %v5668 = vld [vmem:[%s5665 + $0x10] sm:$0xff]
  %v5669 = vld [vmem:[%s5665 + $0x18] sm:$0xff]
  %v5670 = vld [vmem:[%s5665 + $0x20] sm:$0xff]
  %v5671 = vld [vmem:[%s5665 + $0x28] sm:$0xff]
  %v5672 = vld [vmem:[%s5665 + $0x30] sm:$0xf]
  %s5673 = scalar_lea.vmem %s41, 64
  %v5674 = vld [vmem:[%s5673] sm:$0xff]
  %v5675 = vld [vmem:[%s5673 + $0x8] sm:$0xff]
  %v5676 = vld [vmem:[%s5673 + $0x10] sm:$0xff]
  %v5677 = vld [vmem:[%s5673 + $0x18] sm:$0xf]
  %v5679 = vsel %vm374, %v5677, 0
  %5681 = vmatprep.subr.mxu0 0.0
  %5682 = vmatpush1.msra.mxu0 %v5674
  %5683 = vmatprep.subr.mxu0 0.0
  %5684 = vmatpush1.msra.mxu0 %v5675
  %5685 = vmatprep.subr.mxu0 0.0
  %5686 = vmatpush1.msra.mxu0 %v5676
  %5687 = vmatprep.subr.mxu0 0.0
  %5688 = vmatpush1.msra.mxu0 %v5679
  %5689 = vmatprep.subr.mxu0 0.0
  %5690 = vmatpush1.msra.mxu0 0.0
  %5691 = vmatprep.subr.mxu0 0.0
  %5692 = vmatpush1.msra.mxu0 0.0
  %5693 = vmatprep.subr.mxu0 0.0
  %5694 = vmatpush1.msra.mxu0 0.0
  %5695 = vmatprep.subr.mxu0 0.0
  %5696 = vmatpush1.msra.mxu0 0.0
  %5697 = vmatprep.subr.mxu0 0.0
  %5698 = vmatpush1.msra.mxu0 0.0
  %5699 = vmatprep.subr.mxu0 0.0
  %5700 = vmatpush1.msra.mxu0 0.0
  %5701 = vmatprep.subr.mxu0 0.0
  %5702 = vmatpush1.msra.mxu0 0.0
  %5703 = vmatprep.subr.mxu0 0.0
  %5704 = vmatpush1.msra.mxu0 0.0
  %5705 = vmatprep.subr.mxu0 0.0
  %5706 = vmatpush1.msra.mxu0 0.0
  %5707 = vmatprep.subr.mxu0 0.0
  %5708 = vmatpush1.msra.mxu0 0.0
  %5709 = vmatprep.subr.mxu0 0.0
  %5710 = vmatpush1.msra.mxu0 0.0
  %5711 = vmatprep.subr.mxu0 0.0
  %5712 = vmatpush1.msra.mxu0 0.0
  %5713 = vmatprep.subr.mxu0 0.0
  %5714 = vmatpush1.msra.mxu0 0.0
  %5715 = vmatprep.subr.mxu0 0.0
  %5716 = vmatpush1.msra.mxu0 0.0
  %5717 = vmatprep.subr.mxu0 0.0
  %5718 = vmatpush1.msra.mxu0 0.0
  %5719 = vmatprep.subr.mxu0 0.0
  %5720 = vmatpush1.msra.mxu0 0.0
  %5721 = vmatprep.subr.mxu0 0.0
  %5722 = vmatpush1.msra.mxu0 0.0
  %5723 = vmatprep.subr.mxu0 0.0
  %5724 = vmatpush1.msra.mxu0 0.0
  %5725 = vmatprep.subr.mxu0 0.0
  %5726 = vmatpush1.msra.mxu0 0.0
  %5727 = vmatprep.subr.mxu0 0.0
  %5728 = vmatpush1.msra.mxu0 0.0
  %5729 = vmatprep.subr.mxu0 0.0
  %5730 = vmatpush1.msra.mxu0 0.0
  %5731 = vmatprep.subr.mxu0 0.0
  %5732 = vmatpush1.msra.mxu0 0.0
  %5733 = vmatprep.subr.mxu0 0.0
  %5734 = vmatpush1.msra.mxu0 0.0
  %5735 = vmatprep.subr.mxu0 0.0
  %5736 = vmatpush1.msra.mxu0 0.0
  %5737 = vmatprep.subr.mxu0 0.0
  %5738 = vmatpush1.msra.mxu0 0.0
  %5739 = vmatprep.subr.mxu0 0.0
  %5740 = vmatpush1.msra.mxu0 0.0
  %5741 = vmatprep.subr.mxu0 0.0
  %5742 = vmatpush1.msra.mxu0 0.0
  %5743 = vmatprep.subr.mxu0 0.0
  %5744 = vmatpush1.msra.mxu0 0.0
  %5745 = vmatprep.mubr.f32.mxu0 0.0
  %5746 = vmatmul.mubr.f32.gmra.mrb[0].mxu0 %v5217
  %v5747 = vpop.f32.mrb[0].mxu0
  %v5748 = vadd.f32 0.0, %v5747
  %v5749 = vpop.f32.mrb[0].mxu0
  %5750 = vmatprep.mubr.f32.mxu0 0.0
  %5751 = vmatmul.mubr.f32.gmra.mrb[0].mxu0 %v5220
  %v5752 = vpop.f32.mrb[0].mxu0
  %v5753 = vadd.f32 0.0, %v5752
  %v5754 = vpop.f32.mrb[0].mxu0
  %5755 = vmatprep.mubr.f32.mxu0 0.0
  %5756 = vmatmul.mubr.f32.gmra.mrb[0].mxu0 %v5223
  %v5757 = vpop.f32.mrb[0].mxu0
  %v5758 = vadd.f32 0.0, %v5757
  %v5759 = vpop.f32.mrb[0].mxu0
  %5760 = vmatprep.mubr.f32.mxu0 0.0
  %5761 = vmatmul.mubr.f32.gmra.mrb[0].mxu0 %v5226
  %v5762 = vpop.f32.mrb[0].mxu0
  %v5763 = vadd.f32 0.0, %v5762
  %v5764 = vpop.f32.mrb[0].mxu0
  %5765 = vdwg.mxu0
  %v5767 = vsel %vm352, %v5666, 0
  %v5770 = vsel %vm352, %v5667, 0
  %v5773 = vsel %vm352, %v5668, 0
  %v5776 = vsel %vm352, %v5669, 0
  %v5779 = vsel %vm352, %v5670, 0
  %v5782 = vsel %vm352, %v5671, 0
  %v5785 = vsel %vm352, %v5672, 0
  %v5788 = vsel %vm374, %v5763, 0
  %5790 = vmatprep.subr.mxu0 0.0
  %5791 = vmatpush1.msra.mxu0 %v5748
  %5792 = vmatprep.subr.mxu0 0.0
  %5793 = vmatpush1.msra.mxu0 %v5753
  %5794 = vmatprep.subr.mxu0 0.0
  %5795 = vmatpush1.msra.mxu0 %v5758
  %5796 = vmatprep.subr.mxu0 0.0
  %5797 = vmatpush1.msra.mxu0 %v5788
  %5798 = vmatprep.subr.mxu0 0.0
  %5799 = vmatpush1.msra.mxu0 0.0
  %5800 = vmatprep.subr.mxu0 0.0
  %5801 = vmatpush1.msra.mxu0 0.0
  %5802 = vmatprep.subr.mxu0 0.0
  %5803 = vmatpush1.msra.mxu0 0.0
  %5804 = vmatprep.subr.mxu0 0.0
  %5805 = vmatpush1.msra.mxu0 0.0
  %5806 = vmatprep.subr.mxu0 0.0
  %5807 = vmatpush1.msra.mxu0 0.0
  %5808 = vmatprep.subr.mxu0 0.0
  %5809 = vmatpush1.msra.mxu0 0.0
  %5810 = vmatprep.subr.mxu0 0.0
  %5811 = vmatpush1.msra.mxu0 0.0
  %5812 = vmatprep.subr.mxu0 0.0
  %5813 = vmatpush1.msra.mxu0 0.0
  %5814 = vmatprep.subr.mxu0 0.0
  %5815 = vmatpush1.msra.mxu0 0.0
  %5816 = vmatprep.subr.mxu0 0.0
  %5817 = vmatpush1.msra.mxu0 0.0
  %5818 = vmatprep.subr.mxu0 0.0
  %5819 = vmatpush1.msra.mxu0 0.0
  %5820 = vmatprep.subr.mxu0 0.0
  %5821 = vmatpush1.msra.mxu0 0.0
  %5822 = vmatprep.subr.mxu0 0.0
  %5823 = vmatpush1.msra.mxu0 0.0
  %5824 = vmatprep.subr.mxu0 0.0
  %5825 = vmatpush1.msra.mxu0 0.0
  %5826 = vmatprep.subr.mxu0 0.0
  %5827 = vmatpush1.msra.mxu0 0.0
  %5828 = vmatprep.subr.mxu0 0.0
  %5829 = vmatpush1.msra.mxu0 0.0
  %5830 = vmatprep.subr.mxu0 0.0
  %5831 = vmatpush1.msra.mxu0 0.0
  %5832 = vmatprep.subr.mxu0 0.0
  %5833 = vmatpush1.msra.mxu0 0.0
  %5834 = vmatprep.subr.mxu0 0.0
  %5835 = vmatpush1.msra.mxu0 0.0
  %5836 = vmatprep.subr.mxu0 0.0
  %5837 = vmatpush1.msra.mxu0 0.0
  %5838 = vmatprep.subr.mxu0 0.0
  %5839 = vmatpush1.msra.mxu0 0.0
  %5840 = vmatprep.subr.mxu0 0.0
  %5841 = vmatpush1.msra.mxu0 0.0
  %5842 = vmatprep.subr.mxu0 0.0
  %5843 = vmatpush1.msra.mxu0 0.0
  %5844 = vmatprep.subr.mxu0 0.0
  %5845 = vmatpush1.msra.mxu0 0.0
  %5846 = vmatprep.subr.mxu0 0.0
  %5847 = vmatpush1.msra.mxu0 0.0
  %5848 = vmatprep.subr.mxu0 0.0
  %5849 = vmatpush1.msra.mxu0 0.0
  %5850 = vmatprep.subr.mxu0 0.0
  %5851 = vmatpush1.msra.mxu0 0.0
  %5852 = vmatprep.subr.mxu0 0.0
  %5853 = vmatpush1.msra.mxu0 0.0
  %5854 = vmatprep.mubr.f32.mxu0 0.0
  %5855 = vmatmul.mubr.f32.gmra.mrb[0].mxu0 %v5767
  %v5856 = vpop.f32.mrb[0].mxu0
  %v5857 = vadd.f32 0.0, %v5856
  %v5858 = vpop.f32.mrb[0].mxu0
  %5859 = vmatprep.mubr.f32.mxu0 0.0
  %5860 = vmatmul.mubr.f32.gmra.mrb[0].mxu0 %v5770
  %v5861 = vpop.f32.mrb[0].mxu0
  %v5862 = vadd.f32 0.0, %v5861
  %v5863 = vpop.f32.mrb[0].mxu0
  %5864 = vmatprep.mubr.f32.mxu0 0.0
  %5865 = vmatmul.mubr.f32.gmra.mrb[0].mxu0 %v5773
  %v5866 = vpop.f32.mrb[0].mxu0
  %v5867 = vadd.f32 0.0, %v5866
  %v5868 = vpop.f32.mrb[0].mxu0
  %5869 = vmatprep.mubr.f32.mxu0 0.0
  %5870 = vmatmul.mubr.f32.gmra.mrb[0].mxu0 %v5776
  %v5871 = vpop.f32.mrb[0].mxu0
  %v5872 = vadd.f32 0.0, %v5871
  %v5873 = vpop.f32.mrb[0].mxu0
  %5874 = vmatprep.mubr.f32.mxu0 0.0
  %5875 = vmatmul.mubr.f32.gmra.mrb[0].mxu0 %v5779
  %v5876 = vpop.f32.mrb[0].mxu0
  %v5877 = vadd.f32 0.0, %v5876
  %v5878 = vpop.f32.mrb[0].mxu0
  %5879 = vmatprep.mubr.f32.mxu0 0.0
  %5880 = vmatmul.mubr.f32.gmra.mrb[0].mxu0 %v5782
  %v5881 = vpop.f32.mrb[0].mxu0
  %v5882 = vadd.f32 0.0, %v5881
  %v5883 = vpop.f32.mrb[0].mxu0
  %5884 = vmatprep.mubr.f32.mxu0 0.0
  %5885 = vmatmul.mubr.f32.gmra.mrb[0].mxu0 %v5785
  %v5886 = vpop.f32.mrb[0].mxu0
  %v5887 = vadd.f32 0.0, %v5886
  %v5888 = vpop.f32.mrb[0].mxu0
  %5889 = vdwg.mxu0
  %v5890 = vadd.f32 %v5632, %v5857
  %v5891 = vadd.f32 %v5637, %v5862
  %v5892 = vadd.f32 %v5642, %v5867
  %v5893 = vadd.f32 %v5647, %v5872
  %v5894 = vadd.f32 %v5652, %v5877
  %v5895 = vadd.f32 %v5657, %v5882
  %v5896 = vadd.f32 %v5662, %v5887
  %v5897 = vld [vmem:[%s43] sm:$0xff]
  %v5898 = vld [vmem:[%s43 + $0x8] sm:$0xff]
  %v5899 = vld [vmem:[%s43 + $0x10] sm:$0xff]
  %v5900 = vld [vmem:[%s43 + $0x18] sm:$0xff]
  %v5901 = vld [vmem:[%s43 + $0x20] sm:$0xff]
  %v5902 = vld [vmem:[%s43 + $0x28] sm:$0xff]
  %v5903 = vld [vmem:[%s43 + $0x30] sm:$0xf]
  %5905 = vset.pattern.permute.xlu0 0
  %5906 = vperm.xlu0 %5905, %v5897
  %v5907 = vpop.permute.xlu0 %5906
  %5910 = vset.pattern.permute.xlu0 0
  %5911 = vperm.xlu0 %5910, %v5898
  %v5912 = vpop.permute.xlu0 %5911
  %5915 = vset.pattern.permute.xlu0 0
  %5916 = vperm.xlu0 %5915, %v5899
  %v5917 = vpop.permute.xlu0 %5916
  %5920 = vset.pattern.permute.xlu0 0
  %5921 = vperm.xlu0 %5920, %v5900
  %v5922 = vpop.permute.xlu0 %5921
  %5925 = vset.pattern.permute.xlu0 0
  %5926 = vperm.xlu0 %5925, %v5901
  %v5927 = vpop.permute.xlu0 %5926
  %5930 = vset.pattern.permute.xlu0 0
  %5931 = vperm.xlu0 %5930, %v5902
  %v5932 = vpop.permute.xlu0 %5931
  %5935 = vset.pattern.permute.xlu0 0
  %5936 = vperm.xlu0 %5935, %v5903
  %v5937 = vpop.permute.xlu0 %5936
  %v5939 = vadd.f32 %v5890, %v5907
  %v5940 = vadd.f32 %v5891, %v5912
  %v5941 = vadd.f32 %v5892, %v5917
  %v5942 = vadd.f32 %v5893, %v5922
  %v5943 = vadd.f32 %v5894, %v5927
  %v5944 = vadd.f32 %v5895, %v5932
  %v5945 = vadd.f32 %v5896, %v5937
  %v5946 = vmax.f32 %v5939, 0.0
  %v5947 = vmax.f32 %v5940, 0.0
  %v5948 = vmax.f32 %v5941, 0.0
  %v5949 = vmax.f32 %v5942, 0.0
  %v5950 = vmax.f32 %v5943, 0.0
  %v5951 = vmax.f32 %v5944, 0.0
  %v5952 = vmax.f32 %v5945, 0.0
  %v5953 = vld [vmem:[%s45] sm:$0xff]
  %v5954 = vld [vmem:[%s45 + $0x8] sm:$0xff]
  %v5955 = vld [vmem:[%s45 + $0x10] sm:$0xff]
  %v5956 = vld [vmem:[%s45 + $0x18] sm:$0xff]
  %v5957 = vld [vmem:[%s45 + $0x20] sm:$0xff]
  %v5958 = vld [vmem:[%s45 + $0x28] sm:$0xff]
  %v5959 = vld [vmem:[%s45 + $0x30] sm:$0xff]
  %v5960 = vld [vmem:[%s45 + $0x38] sm:$0xff]
  %v5961 = vld [vmem:[%s45 + $0x40] sm:$0xff]
  %v5962 = vld [vmem:[%s45 + $0x48] sm:$0xff]
  %v5963 = vld [vmem:[%s45 + $0x50] sm:$0xff]
  %v5964 = vld [vmem:[%s45 + $0x58] sm:$0xff]
  %v5965 = vld [vmem:[%s45 + $0x60] sm:$0xf]
  %v5966 = vld [vmem:[%s47] sm:$0xff]
  %v5967 = vld [vmem:[%s47 + $0x8] sm:$0xff]
  %v5968 = vld [vmem:[%s47 + $0x10] sm:$0xff]
  %v5969 = vld [vmem:[%s47 + $0x18] sm:$0xff]
  %v5970 = vld [vmem:[%s47 + $0x20] sm:$0xff]
  %v5971 = vld [vmem:[%s47 + $0x28] sm:$0xff]
  %v5972 = vld [vmem:[%s47 + $0x30] sm:$0xf]
  %vm5973 = vcmask 424960
  %v5975 = vsel %vm5973, %v5946, 0
  %v5978 = vsel %vm5973, %v5947, 0
  %v5981 = vsel %vm5973, %v5948, 0
  %v5984 = vsel %vm5973, %v5949, 0
  %v5987 = vsel %vm5973, %v5950, 0
  %v5990 = vsel %vm5973, %v5951, 0
  %v5993 = vsel %vm5973, %v5952, 0
  %v5996 = vsel %vm374, %v5972, 0
  %5998 = vmatprep.subr.mxu0 0.0
  %5999 = vmatpush1.msra.mxu0 %v5966
  %6000 = vmatprep.subr.mxu0 0.0
  %6001 = vmatpush1.msra.mxu0 %v5967
  %6002 = vmatprep.subr.mxu0 0.0
  %6003 = vmatpush1.msra.mxu0 %v5968
  %6004 = vmatprep.subr.mxu0 0.0
  %6005 = vmatpush1.msra.mxu0 %v5969
  %6006 = vmatprep.subr.mxu0 0.0
  %6007 = vmatpush1.msra.mxu0 %v5970
  %6008 = vmatprep.subr.mxu0 0.0
  %6009 = vmatpush1.msra.mxu0 %v5971
  %6010 = vmatprep.subr.mxu0 0.0
  %6011 = vmatpush1.msra.mxu0 %v5996
  %6012 = vmatprep.subr.mxu0 0.0
  %6013 = vmatpush1.msra.mxu0 0.0
  %6014 = vmatprep.subr.mxu0 0.0
  %6015 = vmatpush1.msra.mxu0 0.0
  %6016 = vmatprep.subr.mxu0 0.0
  %6017 = vmatpush1.msra.mxu0 0.0
  %6018 = vmatprep.subr.mxu0 0.0
  %6019 = vmatpush1.msra.mxu0 0.0
  %6020 = vmatprep.subr.mxu0 0.0
  %6021 = vmatpush1.msra.mxu0 0.0
  %6022 = vmatprep.subr.mxu0 0.0
  %6023 = vmatpush1.msra.mxu0 0.0
  %6024 = vmatprep.subr.mxu0 0.0
  %6025 = vmatpush1.msra.mxu0 0.0
  %6026 = vmatprep.subr.mxu0 0.0
  %6027 = vmatpush1.msra.mxu0 0.0
  %6028 = vmatprep.subr.mxu0 0.0
  %6029 = vmatpush1.msra.mxu0 0.0
  %6030 = vmatprep.subr.mxu0 0.0
  %6031 = vmatpush1.msra.mxu0 0.0
  %6032 = vmatprep.subr.mxu0 0.0
  %6033 = vmatpush1.msra.mxu0 0.0
  %6034 = vmatprep.subr.mxu0 0.0
  %6035 = vmatpush1.msra.mxu0 0.0
  %6036 = vmatprep.subr.mxu0 0.0
  %6037 = vmatpush1.msra.mxu0 0.0
  %6038 = vmatprep.subr.mxu0 0.0
  %6039 = vmatpush1.msra.mxu0 0.0
  %6040 = vmatprep.subr.mxu0 0.0
  %6041 = vmatpush1.msra.mxu0 0.0
  %6042 = vmatprep.subr.mxu0 0.0
  %6043 = vmatpush1.msra.mxu0 0.0
  %6044 = vmatprep.subr.mxu0 0.0
  %6045 = vmatpush1.msra.mxu0 0.0
  %6046 = vmatprep.subr.mxu0 0.0
  %6047 = vmatpush1.msra.mxu0 0.0
  %6048 = vmatprep.subr.mxu0 0.0
  %6049 = vmatpush1.msra.mxu0 0.0
  %6050 = vmatprep.subr.mxu0 0.0
  %6051 = vmatpush1.msra.mxu0 0.0
  %6052 = vmatprep.subr.mxu0 0.0
  %6053 = vmatpush1.msra.mxu0 0.0
  %6054 = vmatprep.subr.mxu0 0.0
  %6055 = vmatpush1.msra.mxu0 0.0
  %6056 = vmatprep.subr.mxu0 0.0
  %6057 = vmatpush1.msra.mxu0 0.0
  %6058 = vmatprep.subr.mxu0 0.0
  %6059 = vmatpush1.msra.mxu0 0.0
  %6060 = vmatprep.subr.mxu0 0.0
  %6061 = vmatpush1.msra.mxu0 0.0
  %6062 = vmatprep.mubr.f32.mxu0 0.0
  %6063 = vmatmul.mubr.f32.gmra.mrb[0].mxu0 %v5975
  %v6064 = vpop.f32.mrb[0].mxu0
  %v6065 = vadd.f32 0.0, %v6064
  %v6066 = vpop.f32.mrb[0].mxu0
  %6067 = vmatprep.mubr.f32.mxu0 0.0
  %6068 = vmatmul.mubr.f32.gmra.mrb[0].mxu0 %v5978
  %v6069 = vpop.f32.mrb[0].mxu0
  %v6070 = vadd.f32 0.0, %v6069
  %v6071 = vpop.f32.mrb[0].mxu0
  %6072 = vmatprep.mubr.f32.mxu0 0.0
  %6073 = vmatmul.mubr.f32.gmra.mrb[0].mxu0 %v5981
  %v6074 = vpop.f32.mrb[0].mxu0
  %v6075 = vadd.f32 0.0, %v6074
  %v6076 = vpop.f32.mrb[0].mxu0
  %6077 = vmatprep.mubr.f32.mxu0 0.0
  %6078 = vmatmul.mubr.f32.gmra.mrb[0].mxu0 %v5984
  %v6079 = vpop.f32.mrb[0].mxu0
  %v6080 = vadd.f32 0.0, %v6079
  %v6081 = vpop.f32.mrb[0].mxu0
  %6082 = vmatprep.mubr.f32.mxu0 0.0
  %6083 = vmatmul.mubr.f32.gmra.mrb[0].mxu0 %v5987
  %v6084 = vpop.f32.mrb[0].mxu0
  %v6085 = vadd.f32 0.0, %v6084
  %v6086 = vpop.f32.mrb[0].mxu0
  %6087 = vmatprep.mubr.f32.mxu0 0.0
  %6088 = vmatmul.mubr.f32.gmra.mrb[0].mxu0 %v5990
  %v6089 = vpop.f32.mrb[0].mxu0
  %v6090 = vadd.f32 0.0, %v6089
  %v6091 = vpop.f32.mrb[0].mxu0
  %6092 = vmatprep.mubr.f32.mxu0 0.0
  %6093 = vmatmul.mubr.f32.gmra.mrb[0].mxu0 %v5993
  %v6094 = vpop.f32.mrb[0].mxu0
  %v6095 = vadd.f32 0.0, %v6094
  %v6096 = vpop.f32.mrb[0].mxu0
  %6097 = vdwg.mxu0
  %s6098 = scalar_lea.vmem %s45, 104
  %v6099 = vld [vmem:[%s6098] sm:$0xff]
  %v6100 = vld [vmem:[%s6098 + $0x8] sm:$0xff]
  %v6101 = vld [vmem:[%s6098 + $0x10] sm:$0xff]
  %v6102 = vld [vmem:[%s6098 + $0x18] sm:$0xff]
  %v6103 = vld [vmem:[%s6098 + $0x20] sm:$0xff]
  %v6104 = vld [vmem:[%s6098 + $0x28] sm:$0xff]
  %v6105 = vld [vmem:[%s6098 + $0x30] sm:$0xff]
  %v6106 = vld [vmem:[%s6098 + $0x38] sm:$0xff]
  %v6107 = vld [vmem:[%s6098 + $0x40] sm:$0xff]
  %v6108 = vld [vmem:[%s6098 + $0x48] sm:$0xff]
  %v6109 = vld [vmem:[%s6098 + $0x50] sm:$0xff]
  %v6110 = vld [vmem:[%s6098 + $0x58] sm:$0xff]
  %v6111 = vld [vmem:[%s6098 + $0x60] sm:$0xf]
  %s6112 = scalar_lea.vmem %s47, 56
  %v6113 = vld [vmem:[%s6112] sm:$0xff]
  %v6114 = vld [vmem:[%s6112 + $0x8] sm:$0xff]
  %v6115 = vld [vmem:[%s6112 + $0x10] sm:$0xff]
  %v6116 = vld [vmem:[%s6112 + $0x18] sm:$0xff]
  %v6117 = vld [vmem:[%s6112 + $0x20] sm:$0xff]
  %v6118 = vld [vmem:[%s6112 + $0x28] sm:$0xff]
  %v6119 = vld [vmem:[%s6112 + $0x30] sm:$0xf]
  %v6121 = vsel %vm374, %v6119, 0
  %6123 = vmatprep.subr.mxu0 0.0
  %6124 = vmatpush1.msra.mxu0 %v6113
  %6125 = vmatprep.subr.mxu0 0.0
  %6126 = vmatpush1.msra.mxu0 %v6114
  %6127 = vmatprep.subr.mxu0 0.0
  %6128 = vmatpush1.msra.mxu0 %v6115
  %6129 = vmatprep.subr.mxu0 0.0
  %6130 = vmatpush1.msra.mxu0 %v6116
  %6131 = vmatprep.subr.mxu0 0.0
  %6132 = vmatpush1.msra.mxu0 %v6117
  %6133 = vmatprep.subr.mxu0 0.0
  %6134 = vmatpush1.msra.mxu0 %v6118
  %6135 = vmatprep.subr.mxu0 0.0
  %6136 = vmatpush1.msra.mxu0 %v6121
  %6137 = vmatprep.subr.mxu0 0.0
  %6138 = vmatpush1.msra.mxu0 0.0
  %6139 = vmatprep.subr.mxu0 0.0
  %6140 = vmatpush1.msra.mxu0 0.0
  %6141 = vmatprep.subr.mxu0 0.0
  %6142 = vmatpush1.msra.mxu0 0.0
  %6143 = vmatprep.subr.mxu0 0.0
  %6144 = vmatpush1.msra.mxu0 0.0
  %6145 = vmatprep.subr.mxu0 0.0
  %6146 = vmatpush1.msra.mxu0 0.0
  %6147 = vmatprep.subr.mxu0 0.0
  %6148 = vmatpush1.msra.mxu0 0.0
  %6149 = vmatprep.subr.mxu0 0.0
  %6150 = vmatpush1.msra.mxu0 0.0
  %6151 = vmatprep.subr.mxu0 0.0
  %6152 = vmatpush1.msra.mxu0 0.0
  %6153 = vmatprep.subr.mxu0 0.0
  %6154 = vmatpush1.msra.mxu0 0.0
  %6155 = vmatprep.subr.mxu0 0.0
  %6156 = vmatpush1.msra.mxu0 0.0
  %6157 = vmatprep.subr.mxu0 0.0
  %6158 = vmatpush1.msra.mxu0 0.0
  %6159 = vmatprep.subr.mxu0 0.0
  %6160 = vmatpush1.msra.mxu0 0.0
  %6161 = vmatprep.subr.mxu0 0.0
  %6162 = vmatpush1.msra.mxu0 0.0
  %6163 = vmatprep.subr.mxu0 0.0
  %6164 = vmatpush1.msra.mxu0 0.0
  %6165 = vmatprep.subr.mxu0 0.0
  %6166 = vmatpush1.msra.mxu0 0.0
  %6167 = vmatprep.subr.mxu0 0.0
  %6168 = vmatpush1.msra.mxu0 0.0
  %6169 = vmatprep.subr.mxu0 0.0
  %6170 = vmatpush1.msra.mxu0 0.0
  %6171 = vmatprep.subr.mxu0 0.0
  %6172 = vmatpush1.msra.mxu0 0.0
  %6173 = vmatprep.subr.mxu0 0.0
  %6174 = vmatpush1.msra.mxu0 0.0
  %6175 = vmatprep.subr.mxu0 0.0
  %6176 = vmatpush1.msra.mxu0 0.0
  %6177 = vmatprep.subr.mxu0 0.0
  %6178 = vmatpush1.msra.mxu0 0.0
  %6179 = vmatprep.subr.mxu0 0.0
  %6180 = vmatpush1.msra.mxu0 0.0
  %6181 = vmatprep.subr.mxu0 0.0
  %6182 = vmatpush1.msra.mxu0 0.0
  %6183 = vmatprep.subr.mxu0 0.0
  %6184 = vmatpush1.msra.mxu0 0.0
  %6185 = vmatprep.subr.mxu0 0.0
  %6186 = vmatpush1.msra.mxu0 0.0
  %6187 = vmatprep.mubr.f32.mxu0 0.0
  %6188 = vmatmul.mubr.f32.gmra.mrb[0].mxu0 %v5975
  %v6189 = vpop.f32.mrb[0].mxu0
  %v6190 = vadd.f32 0.0, %v6189
  %v6191 = vpop.f32.mrb[0].mxu0
  %6192 = vmatprep.mubr.f32.mxu0 0.0
  %6193 = vmatmul.mubr.f32.gmra.mrb[0].mxu0 %v5978
  %v6194 = vpop.f32.mrb[0].mxu0
  %v6195 = vadd.f32 0.0, %v6194
  %v6196 = vpop.f32.mrb[0].mxu0
  %6197 = vmatprep.mubr.f32.mxu0 0.0
  %6198 = vmatmul.mubr.f32.gmra.mrb[0].mxu0 %v5981
  %v6199 = vpop.f32.mrb[0].mxu0
  %v6200 = vadd.f32 0.0, %v6199
  %v6201 = vpop.f32.mrb[0].mxu0
  %6202 = vmatprep.mubr.f32.mxu0 0.0
  %6203 = vmatmul.mubr.f32.gmra.mrb[0].mxu0 %v5984
  %v6204 = vpop.f32.mrb[0].mxu0
  %v6205 = vadd.f32 0.0, %v6204
  %v6206 = vpop.f32.mrb[0].mxu0
  %6207 = vmatprep.mubr.f32.mxu0 0.0
  %6208 = vmatmul.mubr.f32.gmra.mrb[0].mxu0 %v5987
  %v6209 = vpop.f32.mrb[0].mxu0
  %v6210 = vadd.f32 0.0, %v6209
  %v6211 = vpop.f32.mrb[0].mxu0
  %6212 = vmatprep.mubr.f32.mxu0 0.0
  %6213 = vmatmul.mubr.f32.gmra.mrb[0].mxu0 %v5990
  %v6214 = vpop.f32.mrb[0].mxu0
  %v6215 = vadd.f32 0.0, %v6214
  %v6216 = vpop.f32.mrb[0].mxu0
  %6217 = vmatprep.mubr.f32.mxu0 0.0
  %6218 = vmatmul.mubr.f32.gmra.mrb[0].mxu0 %v5993
  %v6219 = vpop.f32.mrb[0].mxu0
  %v6220 = vadd.f32 0.0, %v6219
  %v6221 = vpop.f32.mrb[0].mxu0
  %6222 = vdwg.mxu0
  %v6224 = vsel %vm5973, %v6099, 0
  %v6227 = vsel %vm5973, %v6100, 0
  %v6230 = vsel %vm5973, %v6101, 0
  %v6233 = vsel %vm5973, %v6102, 0
  %v6236 = vsel %vm5973, %v6103, 0
  %v6239 = vsel %vm5973, %v6104, 0
  %v6242 = vsel %vm5973, %v6105, 0
  %v6245 = vsel %vm5973, %v6106, 0
  %v6248 = vsel %vm5973, %v6107, 0
  %v6251 = vsel %vm5973, %v6108, 0
  %v6254 = vsel %vm5973, %v6109, 0
  %v6257 = vsel %vm5973, %v6110, 0
  %v6260 = vsel %vm5973, %v6111, 0
  %v6263 = vsel %vm374, %v6220, 0
  %6265 = vmatprep.subr.mxu0 0.0
  %6266 = vmatpush1.msra.mxu0 %v6190
  %6267 = vmatprep.subr.mxu0 0.0
  %6268 = vmatpush1.msra.mxu0 %v6195
  %6269 = vmatprep.subr.mxu0 0.0
  %6270 = vmatpush1.msra.mxu0 %v6200
  %6271 = vmatprep.subr.mxu0 0.0
  %6272 = vmatpush1.msra.mxu0 %v6205
  %6273 = vmatprep.subr.mxu0 0.0
  %6274 = vmatpush1.msra.mxu0 %v6210
  %6275 = vmatprep.subr.mxu0 0.0
  %6276 = vmatpush1.msra.mxu0 %v6215
  %6277 = vmatprep.subr.mxu0 0.0
  %6278 = vmatpush1.msra.mxu0 %v6263
  %6279 = vmatprep.subr.mxu0 0.0
  %6280 = vmatpush1.msra.mxu0 0.0
  %6281 = vmatprep.subr.mxu0 0.0
  %6282 = vmatpush1.msra.mxu0 0.0
  %6283 = vmatprep.subr.mxu0 0.0
  %6284 = vmatpush1.msra.mxu0 0.0
  %6285 = vmatprep.subr.mxu0 0.0
  %6286 = vmatpush1.msra.mxu0 0.0
  %6287 = vmatprep.subr.mxu0 0.0
  %6288 = vmatpush1.msra.mxu0 0.0
  %6289 = vmatprep.subr.mxu0 0.0
  %6290 = vmatpush1.msra.mxu0 0.0
  %6291 = vmatprep.subr.mxu0 0.0
  %6292 = vmatpush1.msra.mxu0 0.0
  %6293 = vmatprep.subr.mxu0 0.0
  %6294 = vmatpush1.msra.mxu0 0.0
  %6295 = vmatprep.subr.mxu0 0.0
  %6296 = vmatpush1.msra.mxu0 0.0
  %6297 = vmatprep.subr.mxu0 0.0
  %6298 = vmatpush1.msra.mxu0 0.0
  %6299 = vmatprep.subr.mxu0 0.0
  %6300 = vmatpush1.msra.mxu0 0.0
  %6301 = vmatprep.subr.mxu0 0.0
  %6302 = vmatpush1.msra.mxu0 0.0
  %6303 = vmatprep.subr.mxu0 0.0
  %6304 = vmatpush1.msra.mxu0 0.0
  %6305 = vmatprep.subr.mxu0 0.0
  %6306 = vmatpush1.msra.mxu0 0.0
  %6307 = vmatprep.subr.mxu0 0.0
  %6308 = vmatpush1.msra.mxu0 0.0
  %6309 = vmatprep.subr.mxu0 0.0
  %6310 = vmatpush1.msra.mxu0 0.0
  %6311 = vmatprep.subr.mxu0 0.0
  %6312 = vmatpush1.msra.mxu0 0.0
  %6313 = vmatprep.subr.mxu0 0.0
  %6314 = vmatpush1.msra.mxu0 0.0
  %6315 = vmatprep.subr.mxu0 0.0
  %6316 = vmatpush1.msra.mxu0 0.0
  %6317 = vmatprep.subr.mxu0 0.0
  %6318 = vmatpush1.msra.mxu0 0.0
  %6319 = vmatprep.subr.mxu0 0.0
  %6320 = vmatpush1.msra.mxu0 0.0
  %6321 = vmatprep.subr.mxu0 0.0
  %6322 = vmatpush1.msra.mxu0 0.0
  %6323 = vmatprep.subr.mxu0 0.0
  %6324 = vmatpush1.msra.mxu0 0.0
  %6325 = vmatprep.subr.mxu0 0.0
  %6326 = vmatpush1.msra.mxu0 0.0
  %6327 = vmatprep.subr.mxu0 0.0
  %6328 = vmatpush1.msra.mxu0 0.0
  %6329 = vmatprep.mubr.f32.mxu0 0.0
  %6330 = vmatmul.mubr.f32.gmra.mrb[0].mxu0 %v6224
  %v6331 = vpop.f32.mrb[0].mxu0
  %v6332 = vadd.f32 0.0, %v6331
  %v6333 = vpop.f32.mrb[0].mxu0
  %6334 = vmatprep.mubr.f32.mxu0 0.0
  %6335 = vmatmul.mubr.f32.gmra.mrb[0].mxu0 %v6227
  %v6336 = vpop.f32.mrb[0].mxu0
  %v6337 = vadd.f32 0.0, %v6336
  %v6338 = vpop.f32.mrb[0].mxu0
  %6339 = vmatprep.mubr.f32.mxu0 0.0
  %6340 = vmatmul.mubr.f32.gmra.mrb[0].mxu0 %v6230
  %v6341 = vpop.f32.mrb[0].mxu0
  %v6342 = vadd.f32 0.0, %v6341
  %v6343 = vpop.f32.mrb[0].mxu0
  %6344 = vmatprep.mubr.f32.mxu0 0.0
  %6345 = vmatmul.mubr.f32.gmra.mrb[0].mxu0 %v6233
  %v6346 = vpop.f32.mrb[0].mxu0
  %v6347 = vadd.f32 0.0, %v6346
  %v6348 = vpop.f32.mrb[0].mxu0
  %6349 = vmatprep.mubr.f32.mxu0 0.0
  %6350 = vmatmul.mubr.f32.gmra.mrb[0].mxu0 %v6236
  %v6351 = vpop.f32.mrb[0].mxu0
  %v6352 = vadd.f32 0.0, %v6351
  %v6353 = vpop.f32.mrb[0].mxu0
  %6354 = vmatprep.mubr.f32.mxu0 0.0
  %6355 = vmatmul.mubr.f32.gmra.mrb[0].mxu0 %v6239
  %v6356 = vpop.f32.mrb[0].mxu0
  %v6357 = vadd.f32 0.0, %v6356
  %v6358 = vpop.f32.mrb[0].mxu0
  %6359 = vmatprep.mubr.f32.mxu0 0.0
  %6360 = vmatmul.mubr.f32.gmra.mrb[0].mxu0 %v6242
  %v6361 = vpop.f32.mrb[0].mxu0
  %v6362 = vadd.f32 0.0, %v6361
  %v6363 = vpop.f32.mrb[0].mxu0
  %6364 = vmatprep.mubr.f32.mxu0 0.0
  %6365 = vmatmul.mubr.f32.gmra.mrb[0].mxu0 %v6245
  %v6366 = vpop.f32.mrb[0].mxu0
  %v6367 = vadd.f32 0.0, %v6366
  %v6368 = vpop.f32.mrb[0].mxu0
  %6369 = vmatprep.mubr.f32.mxu0 0.0
  %6370 = vmatmul.mubr.f32.gmra.mrb[0].mxu0 %v6248
  %v6371 = vpop.f32.mrb[0].mxu0
  %v6372 = vadd.f32 0.0, %v6371
  %v6373 = vpop.f32.mrb[0].mxu0
  %6374 = vmatprep.mubr.f32.mxu0 0.0
  %6375 = vmatmul.mubr.f32.gmra.mrb[0].mxu0 %v6251
  %v6376 = vpop.f32.mrb[0].mxu0
  %v6377 = vadd.f32 0.0, %v6376
  %v6378 = vpop.f32.mrb[0].mxu0
  %6379 = vmatprep.mubr.f32.mxu0 0.0
  %6380 = vmatmul.mubr.f32.gmra.mrb[0].mxu0 %v6254
  %v6381 = vpop.f32.mrb[0].mxu0
  %v6382 = vadd.f32 0.0, %v6381
  %v6383 = vpop.f32.mrb[0].mxu0
  %6384 = vmatprep.mubr.f32.mxu0 0.0
  %6385 = vmatmul.mubr.f32.gmra.mrb[0].mxu0 %v6257
  %v6386 = vpop.f32.mrb[0].mxu0
  %v6387 = vadd.f32 0.0, %v6386
  %v6388 = vpop.f32.mrb[0].mxu0
  %6389 = vmatprep.mubr.f32.mxu0 0.0
  %6390 = vmatmul.mubr.f32.gmra.mrb[0].mxu0 %v6260
  %v6391 = vpop.f32.mrb[0].mxu0
  %v6392 = vadd.f32 0.0, %v6391
  %v6393 = vpop.f32.mrb[0].mxu0
  %6394 = vdwg.mxu0
  %v6396 = vsel %vm5973, %v5953, 0
  %v6399 = vsel %vm5973, %v5954, 0
  %v6402 = vsel %vm5973, %v5955, 0
  %v6405 = vsel %vm5973, %v5956, 0
  %v6408 = vsel %vm5973, %v5957, 0
  %v6411 = vsel %vm5973, %v5958, 0
  %v6414 = vsel %vm5973, %v5959, 0
  %v6417 = vsel %vm5973, %v5960, 0
  %v6420 = vsel %vm5973, %v5961, 0
  %v6423 = vsel %vm5973, %v5962, 0
  %v6426 = vsel %vm5973, %v5963, 0
  %v6429 = vsel %vm5973, %v5964, 0
  %v6432 = vsel %vm5973, %v5965, 0
  %v6435 = vsel %vm374, %v6095, 0
  %6437 = vmatprep.subr.mxu0 0.0
  %6438 = vmatpush1.msra.mxu0 %v6065
  %6439 = vmatprep.subr.mxu0 0.0
  %6440 = vmatpush1.msra.mxu0 %v6070
  %6441 = vmatprep.subr.mxu0 0.0
  %6442 = vmatpush1.msra.mxu0 %v6075
  %6443 = vmatprep.subr.mxu0 0.0
  %6444 = vmatpush1.msra.mxu0 %v6080
  %6445 = vmatprep.subr.mxu0 0.0
  %6446 = vmatpush1.msra.mxu0 %v6085
  %6447 = vmatprep.subr.mxu0 0.0
  %6448 = vmatpush1.msra.mxu0 %v6090
  %6449 = vmatprep.subr.mxu0 0.0
  %6450 = vmatpush1.msra.mxu0 %v6435
  %6451 = vmatprep.subr.mxu0 0.0
  %6452 = vmatpush1.msra.mxu0 0.0
  %6453 = vmatprep.subr.mxu0 0.0
  %6454 = vmatpush1.msra.mxu0 0.0
  %6455 = vmatprep.subr.mxu0 0.0
  %6456 = vmatpush1.msra.mxu0 0.0
  %6457 = vmatprep.subr.mxu0 0.0
  %6458 = vmatpush1.msra.mxu0 0.0
  %6459 = vmatprep.subr.mxu0 0.0
  %6460 = vmatpush1.msra.mxu0 0.0
  %6461 = vmatprep.subr.mxu0 0.0
  %6462 = vmatpush1.msra.mxu0 0.0
  %6463 = vmatprep.subr.mxu0 0.0
  %6464 = vmatpush1.msra.mxu0 0.0
  %6465 = vmatprep.subr.mxu0 0.0
  %6466 = vmatpush1.msra.mxu0 0.0
  %6467 = vmatprep.subr.mxu0 0.0
  %6468 = vmatpush1.msra.mxu0 0.0
  %6469 = vmatprep.subr.mxu0 0.0
  %6470 = vmatpush1.msra.mxu0 0.0
  %6471 = vmatprep.subr.mxu0 0.0
  %6472 = vmatpush1.msra.mxu0 0.0
  %6473 = vmatprep.subr.mxu0 0.0
  %6474 = vmatpush1.msra.mxu0 0.0
  %6475 = vmatprep.subr.mxu0 0.0
  %6476 = vmatpush1.msra.mxu0 0.0
  %6477 = vmatprep.subr.mxu0 0.0
  %6478 = vmatpush1.msra.mxu0 0.0
  %6479 = vmatprep.subr.mxu0 0.0
  %6480 = vmatpush1.msra.mxu0 0.0
  %6481 = vmatprep.subr.mxu0 0.0
  %6482 = vmatpush1.msra.mxu0 0.0
  %6483 = vmatprep.subr.mxu0 0.0
  %6484 = vmatpush1.msra.mxu0 0.0
  %6485 = vmatprep.subr.mxu0 0.0
  %6486 = vmatpush1.msra.mxu0 0.0
  %6487 = vmatprep.subr.mxu0 0.0
  %6488 = vmatpush1.msra.mxu0 0.0
  %6489 = vmatprep.subr.mxu0 0.0
  %6490 = vmatpush1.msra.mxu0 0.0
  %6491 = vmatprep.subr.mxu0 0.0
  %6492 = vmatpush1.msra.mxu0 0.0
  %6493 = vmatprep.subr.mxu0 0.0
  %6494 = vmatpush1.msra.mxu0 0.0
  %6495 = vmatprep.subr.mxu0 0.0
  %6496 = vmatpush1.msra.mxu0 0.0
  %6497 = vmatprep.subr.mxu0 0.0
  %6498 = vmatpush1.msra.mxu0 0.0
  %6499 = vmatprep.subr.mxu0 0.0
  %6500 = vmatpush1.msra.mxu0 0.0
  %6501 = vmatprep.mubr.f32.mxu0 0.0
  %6502 = vmatmul.mubr.f32.gmra.mrb[0].mxu0 %v6396
  %v6503 = vpop.f32.mrb[0].mxu0
  %v6504 = vadd.f32 %v6332, %v6503
  %v6505 = vpop.f32.mrb[0].mxu0
  %6506 = vmatprep.mubr.f32.mxu0 0.0
  %6507 = vmatmul.mubr.f32.gmra.mrb[0].mxu0 %v6399
  %v6508 = vpop.f32.mrb[0].mxu0
  %v6509 = vadd.f32 %v6337, %v6508
  %v6510 = vpop.f32.mrb[0].mxu0
  %6511 = vmatprep.mubr.f32.mxu0 0.0
  %6512 = vmatmul.mubr.f32.gmra.mrb[0].mxu0 %v6402
  %v6513 = vpop.f32.mrb[0].mxu0
  %v6514 = vadd.f32 %v6342, %v6513
  %v6515 = vpop.f32.mrb[0].mxu0
  %6516 = vmatprep.mubr.f32.mxu0 0.0
  %6517 = vmatmul.mubr.f32.gmra.mrb[0].mxu0 %v6405
  %v6518 = vpop.f32.mrb[0].mxu0
  %v6519 = vadd.f32 %v6347, %v6518
  %v6520 = vpop.f32.mrb[0].mxu0
  %6521 = vmatprep.mubr.f32.mxu0 0.0
  %6522 = vmatmul.mubr.f32.gmra.mrb[0].mxu0 %v6408
  %v6523 = vpop.f32.mrb[0].mxu0
  %v6524 = vadd.f32 %v6352, %v6523
  %v6525 = vpop.f32.mrb[0].mxu0
  %6526 = vmatprep.mubr.f32.mxu0 0.0
  %6527 = vmatmul.mubr.f32.gmra.mrb[0].mxu0 %v6411
  %v6528 = vpop.f32.mrb[0].mxu0
  %v6529 = vadd.f32 %v6357, %v6528
  %v6530 = vpop.f32.mrb[0].mxu0
  %6531 = vmatprep.mubr.f32.mxu0 0.0
  %6532 = vmatmul.mubr.f32.gmra.mrb[0].mxu0 %v6414
  %v6533 = vpop.f32.mrb[0].mxu0
  %v6534 = vadd.f32 %v6362, %v6533
  %v6535 = vpop.f32.mrb[0].mxu0
  %6536 = vmatprep.mubr.f32.mxu0 0.0
  %6537 = vmatmul.mubr.f32.gmra.mrb[0].mxu0 %v6417
  %v6538 = vpop.f32.mrb[0].mxu0
  %v6539 = vadd.f32 %v6367, %v6538
  %v6540 = vpop.f32.mrb[0].mxu0
  %6541 = vmatprep.mubr.f32.mxu0 0.0
  %6542 = vmatmul.mubr.f32.gmra.mrb[0].mxu0 %v6420
  %v6543 = vpop.f32.mrb[0].mxu0
  %v6544 = vadd.f32 %v6372, %v6543
  %v6545 = vpop.f32.mrb[0].mxu0
  %6546 = vmatprep.mubr.f32.mxu0 0.0
  %6547 = vmatmul.mubr.f32.gmra.mrb[0].mxu0 %v6423
  %v6548 = vpop.f32.mrb[0].mxu0
  %v6549 = vadd.f32 %v6377, %v6548
  %v6550 = vpop.f32.mrb[0].mxu0
  %6551 = vmatprep.mubr.f32.mxu0 0.0
  %6552 = vmatmul.mubr.f32.gmra.mrb[0].mxu0 %v6426
  %v6553 = vpop.f32.mrb[0].mxu0
  %v6554 = vadd.f32 %v6382, %v6553
  %v6555 = vpop.f32.mrb[0].mxu0
  %6556 = vmatprep.mubr.f32.mxu0 0.0
  %6557 = vmatmul.mubr.f32.gmra.mrb[0].mxu0 %v6429
  %v6558 = vpop.f32.mrb[0].mxu0
  %v6559 = vadd.f32 %v6387, %v6558
  %v6560 = vpop.f32.mrb[0].mxu0
  %6561 = vmatprep.mubr.f32.mxu0 0.0
  %6562 = vmatmul.mubr.f32.gmra.mrb[0].mxu0 %v6432
  %v6563 = vpop.f32.mrb[0].mxu0
  %v6564 = vadd.f32 %v6392, %v6563
  %v6565 = vpop.f32.mrb[0].mxu0
  %6566 = vdwg.mxu0
  %s6567 = scalar_lea.vmem %s45, 208
  %v6568 = vld [vmem:[%s6567] sm:$0xff]
  %v6569 = vld [vmem:[%s6567 + $0x8] sm:$0xff]
  %v6570 = vld [vmem:[%s6567 + $0x10] sm:$0xff]
  %v6571 = vld [vmem:[%s6567 + $0x18] sm:$0xff]
  %v6572 = vld [vmem:[%s6567 + $0x20] sm:$0xff]
  %v6573 = vld [vmem:[%s6567 + $0x28] sm:$0xff]
  %v6574 = vld [vmem:[%s6567 + $0x30] sm:$0xff]
  %v6575 = vld [vmem:[%s6567 + $0x38] sm:$0xff]
  %v6576 = vld [vmem:[%s6567 + $0x40] sm:$0xff]
  %v6577 = vld [vmem:[%s6567 + $0x48] sm:$0xff]
  %v6578 = vld [vmem:[%s6567 + $0x50] sm:$0xff]
  %v6579 = vld [vmem:[%s6567 + $0x58] sm:$0xff]
  %v6580 = vld [vmem:[%s6567 + $0x60] sm:$0xf]
  %s6581 = scalar_lea.vmem %s47, 112
  %v6582 = vld [vmem:[%s6581] sm:$0xff]
  %v6583 = vld [vmem:[%s6581 + $0x8] sm:$0xff]
  %v6584 = vld [vmem:[%s6581 + $0x10] sm:$0xff]
  %v6585 = vld [vmem:[%s6581 + $0x18] sm:$0xff]
  %v6586 = vld [vmem:[%s6581 + $0x20] sm:$0xff]
  %v6587 = vld [vmem:[%s6581 + $0x28] sm:$0xff]
  %v6588 = vld [vmem:[%s6581 + $0x30] sm:$0xf]
  %v6590 = vsel %vm374, %v6588, 0
  %6592 = vmatprep.subr.mxu0 0.0
  %6593 = vmatpush1.msra.mxu0 %v6582
  %6594 = vmatprep.subr.mxu0 0.0
  %6595 = vmatpush1.msra.mxu0 %v6583
  %6596 = vmatprep.subr.mxu0 0.0
  %6597 = vmatpush1.msra.mxu0 %v6584
  %6598 = vmatprep.subr.mxu0 0.0
  %6599 = vmatpush1.msra.mxu0 %v6585
  %6600 = vmatprep.subr.mxu0 0.0
  %6601 = vmatpush1.msra.mxu0 %v6586
  %6602 = vmatprep.subr.mxu0 0.0
  %6603 = vmatpush1.msra.mxu0 %v6587
  %6604 = vmatprep.subr.mxu0 0.0
  %6605 = vmatpush1.msra.mxu0 %v6590
  %6606 = vmatprep.subr.mxu0 0.0
  %6607 = vmatpush1.msra.mxu0 0.0
  %6608 = vmatprep.subr.mxu0 0.0
  %6609 = vmatpush1.msra.mxu0 0.0
  %6610 = vmatprep.subr.mxu0 0.0
  %6611 = vmatpush1.msra.mxu0 0.0
  %6612 = vmatprep.subr.mxu0 0.0
  %6613 = vmatpush1.msra.mxu0 0.0
  %6614 = vmatprep.subr.mxu0 0.0
  %6615 = vmatpush1.msra.mxu0 0.0
  %6616 = vmatprep.subr.mxu0 0.0
  %6617 = vmatpush1.msra.mxu0 0.0
  %6618 = vmatprep.subr.mxu0 0.0
  %6619 = vmatpush1.msra.mxu0 0.0
  %6620 = vmatprep.subr.mxu0 0.0
  %6621 = vmatpush1.msra.mxu0 0.0
  %6622 = vmatprep.subr.mxu0 0.0
  %6623 = vmatpush1.msra.mxu0 0.0
  %6624 = vmatprep.subr.mxu0 0.0
  %6625 = vmatpush1.msra.mxu0 0.0
  %6626 = vmatprep.subr.mxu0 0.0
  %6627 = vmatpush1.msra.mxu0 0.0
  %6628 = vmatprep.subr.mxu0 0.0
  %6629 = vmatpush1.msra.mxu0 0.0
  %6630 = vmatprep.subr.mxu0 0.0
  %6631 = vmatpush1.msra.mxu0 0.0
  %6632 = vmatprep.subr.mxu0 0.0
  %6633 = vmatpush1.msra.mxu0 0.0
  %6634 = vmatprep.subr.mxu0 0.0
  %6635 = vmatpush1.msra.mxu0 0.0
  %6636 = vmatprep.subr.mxu0 0.0
  %6637 = vmatpush1.msra.mxu0 0.0
  %6638 = vmatprep.subr.mxu0 0.0
  %6639 = vmatpush1.msra.mxu0 0.0
  %6640 = vmatprep.subr.mxu0 0.0
  %6641 = vmatpush1.msra.mxu0 0.0
  %6642 = vmatprep.subr.mxu0 0.0
  %6643 = vmatpush1.msra.mxu0 0.0
  %6644 = vmatprep.subr.mxu0 0.0
  %6645 = vmatpush1.msra.mxu0 0.0
  %6646 = vmatprep.subr.mxu0 0.0
  %6647 = vmatpush1.msra.mxu0 0.0
  %6648 = vmatprep.subr.mxu0 0.0
  %6649 = vmatpush1.msra.mxu0 0.0
  %6650 = vmatprep.subr.mxu0 0.0
  %6651 = vmatpush1.msra.mxu0 0.0
  %6652 = vmatprep.subr.mxu0 0.0
  %6653 = vmatpush1.msra.mxu0 0.0
  %6654 = vmatprep.subr.mxu0 0.0
  %6655 = vmatpush1.msra.mxu0 0.0
  %6656 = vmatprep.mubr.f32.mxu0 0.0
  %6657 = vmatmul.mubr.f32.gmra.mrb[0].mxu0 %v5975
  %v6658 = vpop.f32.mrb[0].mxu0
  %v6659 = vadd.f32 0.0, %v6658
  %v6660 = vpop.f32.mrb[0].mxu0
  %6661 = vmatprep.mubr.f32.mxu0 0.0
  %6662 = vmatmul.mubr.f32.gmra.mrb[0].mxu0 %v5978
  %v6663 = vpop.f32.mrb[0].mxu0
  %v6664 = vadd.f32 0.0, %v6663
  %v6665 = vpop.f32.mrb[0].mxu0
  %6666 = vmatprep.mubr.f32.mxu0 0.0
  %6667 = vmatmul.mubr.f32.gmra.mrb[0].mxu0 %v5981
  %v6668 = vpop.f32.mrb[0].mxu0
  %v6669 = vadd.f32 0.0, %v6668
  %v6670 = vpop.f32.mrb[0].mxu0
  %6671 = vmatprep.mubr.f32.mxu0 0.0
  %6672 = vmatmul.mubr.f32.gmra.mrb[0].mxu0 %v5984
  %v6673 = vpop.f32.mrb[0].mxu0
  %v6674 = vadd.f32 0.0, %v6673
  %v6675 = vpop.f32.mrb[0].mxu0
  %6676 = vmatprep.mubr.f32.mxu0 0.0
  %6677 = vmatmul.mubr.f32.gmra.mrb[0].mxu0 %v5987
  %v6678 = vpop.f32.mrb[0].mxu0
  %v6679 = vadd.f32 0.0, %v6678
  %v6680 = vpop.f32.mrb[0].mxu0
  %6681 = vmatprep.mubr.f32.mxu0 0.0
  %6682 = vmatmul.mubr.f32.gmra.mrb[0].mxu0 %v5990
  %v6683 = vpop.f32.mrb[0].mxu0
  %v6684 = vadd.f32 0.0, %v6683
  %v6685 = vpop.f32.mrb[0].mxu0
  %6686 = vmatprep.mubr.f32.mxu0 0.0
  %6687 = vmatmul.mubr.f32.gmra.mrb[0].mxu0 %v5993
  %v6688 = vpop.f32.mrb[0].mxu0
  %v6689 = vadd.f32 0.0, %v6688
  %v6690 = vpop.f32.mrb[0].mxu0
  %6691 = vdwg.mxu0
  %v6693 = vsel %vm5973, %v6568, 0
  %v6696 = vsel %vm5973, %v6569, 0
  %v6699 = vsel %vm5973, %v6570, 0
  %v6702 = vsel %vm5973, %v6571, 0
  %v6705 = vsel %vm5973, %v6572, 0
  %v6708 = vsel %vm5973, %v6573, 0
  %v6711 = vsel %vm5973, %v6574, 0
  %v6714 = vsel %vm5973, %v6575, 0
  %v6717 = vsel %vm5973, %v6576, 0
  %v6720 = vsel %vm5973, %v6577, 0
  %v6723 = vsel %vm5973, %v6578, 0
  %v6726 = vsel %vm5973, %v6579, 0
  %v6729 = vsel %vm5973, %v6580, 0
  %v6732 = vsel %vm374, %v6689, 0
  %6734 = vmatprep.subr.mxu0 0.0
  %6735 = vmatpush1.msra.mxu0 %v6659
  %6736 = vmatprep.subr.mxu0 0.0
  %6737 = vmatpush1.msra.mxu0 %v6664
  %6738 = vmatprep.subr.mxu0 0.0
  %6739 = vmatpush1.msra.mxu0 %v6669
  %6740 = vmatprep.subr.mxu0 0.0
  %6741 = vmatpush1.msra.mxu0 %v6674
  %6742 = vmatprep.subr.mxu0 0.0
  %6743 = vmatpush1.msra.mxu0 %v6679
  %6744 = vmatprep.subr.mxu0 0.0
  %6745 = vmatpush1.msra.mxu0 %v6684
  %6746 = vmatprep.subr.mxu0 0.0
  %6747 = vmatpush1.msra.mxu0 %v6732
  %6748 = vmatprep.subr.mxu0 0.0
  %6749 = vmatpush1.msra.mxu0 0.0
  %6750 = vmatprep.subr.mxu0 0.0
  %6751 = vmatpush1.msra.mxu0 0.0
  %6752 = vmatprep.subr.mxu0 0.0
  %6753 = vmatpush1.msra.mxu0 0.0
  %6754 = vmatprep.subr.mxu0 0.0
  %6755 = vmatpush1.msra.mxu0 0.0
  %6756 = vmatprep.subr.mxu0 0.0
  %6757 = vmatpush1.msra.mxu0 0.0
  %6758 = vmatprep.subr.mxu0 0.0
  %6759 = vmatpush1.msra.mxu0 0.0
  %6760 = vmatprep.subr.mxu0 0.0
  %6761 = vmatpush1.msra.mxu0 0.0
  %6762 = vmatprep.subr.mxu0 0.0
  %6763 = vmatpush1.msra.mxu0 0.0
  %6764 = vmatprep.subr.mxu0 0.0
  %6765 = vmatpush1.msra.mxu0 0.0
  %6766 = vmatprep.subr.mxu0 0.0
  %6767 = vmatpush1.msra.mxu0 0.0
  %6768 = vmatprep.subr.mxu0 0.0
  %6769 = vmatpush1.msra.mxu0 0.0
  %6770 = vmatprep.subr.mxu0 0.0
  %6771 = vmatpush1.msra.mxu0 0.0
  %6772 = vmatprep.subr.mxu0 0.0
  %6773 = vmatpush1.msra.mxu0 0.0
  %6774 = vmatprep.subr.mxu0 0.0
  %6775 = vmatpush1.msra.mxu0 0.0
  %6776 = vmatprep.subr.mxu0 0.0
  %6777 = vmatpush1.msra.mxu0 0.0
  %6778 = vmatprep.subr.mxu0 0.0
  %6779 = vmatpush1.msra.mxu0 0.0
  %6780 = vmatprep.subr.mxu0 0.0
  %6781 = vmatpush1.msra.mxu0 0.0
  %6782 = vmatprep.subr.mxu0 0.0
  %6783 = vmatpush1.msra.mxu0 0.0
  %6784 = vmatprep.subr.mxu0 0.0
  %6785 = vmatpush1.msra.mxu0 0.0
  %6786 = vmatprep.subr.mxu0 0.0
  %6787 = vmatpush1.msra.mxu0 0.0
  %6788 = vmatprep.subr.mxu0 0.0
  %6789 = vmatpush1.msra.mxu0 0.0
  %6790 = vmatprep.subr.mxu0 0.0
  %6791 = vmatpush1.msra.mxu0 0.0
  %6792 = vmatprep.subr.mxu0 0.0
  %6793 = vmatpush1.msra.mxu0 0.0
  %6794 = vmatprep.subr.mxu0 0.0
  %6795 = vmatpush1.msra.mxu0 0.0
  %6796 = vmatprep.subr.mxu0 0.0
  %6797 = vmatpush1.msra.mxu0 0.0
  %6798 = vmatprep.mubr.f32.mxu0 0.0
  %6799 = vmatmul.mubr.f32.gmra.mrb[0].mxu0 %v6693
  %v6800 = vpop.f32.mrb[0].mxu0
  %v6801 = vadd.f32 0.0, %v6800
  %v6802 = vpop.f32.mrb[0].mxu0
  %6803 = vmatprep.mubr.f32.mxu0 0.0
  %6804 = vmatmul.mubr.f32.gmra.mrb[0].mxu0 %v6696
  %v6805 = vpop.f32.mrb[0].mxu0
  %v6806 = vadd.f32 0.0, %v6805
  %v6807 = vpop.f32.mrb[0].mxu0
  %6808 = vmatprep.mubr.f32.mxu0 0.0
  %6809 = vmatmul.mubr.f32.gmra.mrb[0].mxu0 %v6699
  %v6810 = vpop.f32.mrb[0].mxu0
  %v6811 = vadd.f32 0.0, %v6810
  %v6812 = vpop.f32.mrb[0].mxu0
  %6813 = vmatprep.mubr.f32.mxu0 0.0
  %6814 = vmatmul.mubr.f32.gmra.mrb[0].mxu0 %v6702
  %v6815 = vpop.f32.mrb[0].mxu0
  %v6816 = vadd.f32 0.0, %v6815
  %v6817 = vpop.f32.mrb[0].mxu0
  %6818 = vmatprep.mubr.f32.mxu0 0.0
  %6819 = vmatmul.mubr.f32.gmra.mrb[0].mxu0 %v6705
  %v6820 = vpop.f32.mrb[0].mxu0
  %v6821 = vadd.f32 0.0, %v6820
  %v6822 = vpop.f32.mrb[0].mxu0
  %6823 = vmatprep.mubr.f32.mxu0 0.0
  %6824 = vmatmul.mubr.f32.gmra.mrb[0].mxu0 %v6708
  %v6825 = vpop.f32.mrb[0].mxu0
  %v6826 = vadd.f32 0.0, %v6825
  %v6827 = vpop.f32.mrb[0].mxu0
  %6828 = vmatprep.mubr.f32.mxu0 0.0
  %6829 = vmatmul.mubr.f32.gmra.mrb[0].mxu0 %v6711
  %v6830 = vpop.f32.mrb[0].mxu0
  %v6831 = vadd.f32 0.0, %v6830
  %v6832 = vpop.f32.mrb[0].mxu0
  %6833 = vmatprep.mubr.f32.mxu0 0.0
  %6834 = vmatmul.mubr.f32.gmra.mrb[0].mxu0 %v6714
  %v6835 = vpop.f32.mrb[0].mxu0
  %v6836 = vadd.f32 0.0, %v6835
  %v6837 = vpop.f32.mrb[0].mxu0
  %6838 = vmatprep.mubr.f32.mxu0 0.0
  %6839 = vmatmul.mubr.f32.gmra.mrb[0].mxu0 %v6717
  %v6840 = vpop.f32.mrb[0].mxu0
  %v6841 = vadd.f32 0.0, %v6840
  %v6842 = vpop.f32.mrb[0].mxu0
  %6843 = vmatprep.mubr.f32.mxu0 0.0
  %6844 = vmatmul.mubr.f32.gmra.mrb[0].mxu0 %v6720
  %v6845 = vpop.f32.mrb[0].mxu0
  %v6846 = vadd.f32 0.0, %v6845
  %v6847 = vpop.f32.mrb[0].mxu0
  %6848 = vmatprep.mubr.f32.mxu0 0.0
  %6849 = vmatmul.mubr.f32.gmra.mrb[0].mxu0 %v6723
  %v6850 = vpop.f32.mrb[0].mxu0
  %v6851 = vadd.f32 0.0, %v6850
  %v6852 = vpop.f32.mrb[0].mxu0
  %6853 = vmatprep.mubr.f32.mxu0 0.0
  %6854 = vmatmul.mubr.f32.gmra.mrb[0].mxu0 %v6726
  %v6855 = vpop.f32.mrb[0].mxu0
  %v6856 = vadd.f32 0.0, %v6855
  %v6857 = vpop.f32.mrb[0].mxu0
  %6858 = vmatprep.mubr.f32.mxu0 0.0
  %6859 = vmatmul.mubr.f32.gmra.mrb[0].mxu0 %v6729
  %v6860 = vpop.f32.mrb[0].mxu0
  %v6861 = vadd.f32 0.0, %v6860
  %v6862 = vpop.f32.mrb[0].mxu0
  %6863 = vdwg.mxu0
  %v6864 = vadd.f32 %v6504, %v6801
  %v6865 = vadd.f32 %v6509, %v6806
  %v6866 = vadd.f32 %v6514, %v6811
  %v6867 = vadd.f32 %v6519, %v6816
  %v6868 = vadd.f32 %v6524, %v6821
  %v6869 = vadd.f32 %v6529, %v6826
  %v6870 = vadd.f32 %v6534, %v6831
  %v6871 = vadd.f32 %v6539, %v6836
  %v6872 = vadd.f32 %v6544, %v6841
  %v6873 = vadd.f32 %v6549, %v6846
  %v6874 = vadd.f32 %v6554, %v6851
  %v6875 = vadd.f32 %v6559, %v6856
  %v6876 = vadd.f32 %v6564, %v6861
  %v6877 = vld [vmem:[%s49] sm:$0xff]
  %v6878 = vld [vmem:[%s49 + $0x8] sm:$0xff]
  %v6879 = vld [vmem:[%s49 + $0x10] sm:$0xff]
  %v6880 = vld [vmem:[%s49 + $0x18] sm:$0xff]
  %v6881 = vld [vmem:[%s49 + $0x20] sm:$0xff]
  %v6882 = vld [vmem:[%s49 + $0x28] sm:$0xff]
  %v6883 = vld [vmem:[%s49 + $0x30] sm:$0xff]
  %v6884 = vld [vmem:[%s49 + $0x38] sm:$0xff]
  %v6885 = vld [vmem:[%s49 + $0x40] sm:$0xff]
  %v6886 = vld [vmem:[%s49 + $0x48] sm:$0xff]
  %v6887 = vld [vmem:[%s49 + $0x50] sm:$0xff]
  %v6888 = vld [vmem:[%s49 + $0x58] sm:$0xff]
  %v6889 = vld [vmem:[%s49 + $0x60] sm:$0xf]
  %6891 = vset.pattern.permute.xlu0 0
  %6892 = vperm.xlu0 %6891, %v6877
  %v6893 = vpop.permute.xlu0 %6892
  %6896 = vset.pattern.permute.xlu0 0
  %6897 = vperm.xlu0 %6896, %v6878
  %v6898 = vpop.permute.xlu0 %6897
  %6901 = vset.pattern.permute.xlu0 0
  %6902 = vperm.xlu0 %6901, %v6879
  %v6903 = vpop.permute.xlu0 %6902
  %6906 = vset.pattern.permute.xlu0 0
  %6907 = vperm.xlu0 %6906, %v6880
  %v6908 = vpop.permute.xlu0 %6907
  %6911 = vset.pattern.permute.xlu0 0
  %6912 = vperm.xlu0 %6911, %v6881
  %v6913 = vpop.permute.xlu0 %6912
  %6916 = vset.pattern.permute.xlu0 0
  %6917 = vperm.xlu0 %6916, %v6882
  %v6918 = vpop.permute.xlu0 %6917
  %6921 = vset.pattern.permute.xlu0 0
  %6922 = vperm.xlu0 %6921, %v6883
  %v6923 = vpop.permute.xlu0 %6922
  %6926 = vset.pattern.permute.xlu0 0
  %6927 = vperm.xlu0 %6926, %v6884
  %v6928 = vpop.permute.xlu0 %6927
  %6931 = vset.pattern.permute.xlu0 0
  %6932 = vperm.xlu0 %6931, %v6885
  %v6933 = vpop.permute.xlu0 %6932
  %6936 = vset.pattern.permute.xlu0 0
  %6937 = vperm.xlu0 %6936, %v6886
  %v6938 = vpop.permute.xlu0 %6937
  %6941 = vset.pattern.permute.xlu0 0
  %6942 = vperm.xlu0 %6941, %v6887
  %v6943 = vpop.permute.xlu0 %6942
  %6946 = vset.pattern.permute.xlu0 0
  %6947 = vperm.xlu0 %6946, %v6888
  %v6948 = vpop.permute.xlu0 %6947
  %6951 = vset.pattern.permute.xlu0 0
  %6952 = vperm.xlu0 %6951, %v6889
  %v6953 = vpop.permute.xlu0 %6952
  %v6955 = vadd.f32 %v6864, %v6893
  %v6956 = vadd.f32 %v6865, %v6898
  %v6957 = vadd.f32 %v6866, %v6903
  %v6958 = vadd.f32 %v6867, %v6908
  %v6959 = vadd.f32 %v6868, %v6913
  %v6960 = vadd.f32 %v6869, %v6918
  %v6961 = vadd.f32 %v6870, %v6923
  %v6962 = vadd.f32 %v6871, %v6928
  %v6963 = vadd.f32 %v6872, %v6933
  %v6964 = vadd.f32 %v6873, %v6938
  %v6965 = vadd.f32 %v6874, %v6943
  %v6966 = vadd.f32 %v6875, %v6948
  %v6967 = vadd.f32 %v6876, %v6953
  %v6968 = vmax.f32 %v6955, 0.0
  %v6969 = vmax.f32 %v6956, 0.0
  %v6970 = vmax.f32 %v6957, 0.0
  %v6971 = vmax.f32 %v6958, 0.0
  %v6972 = vmax.f32 %v6959, 0.0
  %v6973 = vmax.f32 %v6960, 0.0
  %v6974 = vmax.f32 %v6961, 0.0
  %v6975 = vmax.f32 %v6962, 0.0
  %v6976 = vmax.f32 %v6963, 0.0
  %v6977 = vmax.f32 %v6964, 0.0
  %v6978 = vmax.f32 %v6965, 0.0
  %v6979 = vmax.f32 %v6966, 0.0
  %v6980 = vmax.f32 %v6967, 0.0
  %v6981 = vld [vmem:[%s51] sm:$0xff]
  %v6982 = vld [vmem:[%s51 + $0x8] sm:$0xff]
  %v6983 = vld [vmem:[%s51 + $0x10] sm:$0xff]
  %v6984 = vld [vmem:[%s51 + $0x18] sm:$0xff]
  %v6985 = vld [vmem:[%s51 + $0x20] sm:$0xff]
  %v6986 = vld [vmem:[%s51 + $0x28] sm:$0xff]
  %v6987 = vld [vmem:[%s51 + $0x30] sm:$0xff]
  %v6988 = vld [vmem:[%s51 + $0x38] sm:$0xff]
  %v6989 = vld [vmem:[%s51 + $0x40] sm:$0xff]
  %v6990 = vld [vmem:[%s51 + $0x48] sm:$0xff]
  %v6991 = vld [vmem:[%s51 + $0x50] sm:$0xff]
  %v6992 = vld [vmem:[%s51 + $0x58] sm:$0xff]
  %v6993 = vld [vmem:[%s51 + $0x60] sm:$0xff]
  %v6994 = vld [vmem:[%s51 + $0x68] sm:$0xff]
  %v6995 = vld [vmem:[%s51 + $0x70] sm:$0xff]
  %v6996 = vld [vmem:[%s51 + $0x78] sm:$0xff]
  %v6997 = vld [vmem:[%s51 + $0x80] sm:$0xff]
  %v6998 = vld [vmem:[%s51 + $0x88] sm:$0xff]
  %v6999 = vld [vmem:[%s51 + $0x90] sm:$0xff]
  %v7000 = vld [vmem:[%s51 + $0x98] sm:$0xff]
  %v7001 = vld [vmem:[%s51 + $0xa0] sm:$0xff]
  %v7002 = vld [vmem:[%s51 + $0xa8] sm:$0xff]
  %v7003 = vld [vmem:[%s51 + $0xb0] sm:$0xff]
  %v7004 = vld [vmem:[%s51 + $0xb8] sm:$0xff]
  %v7005 = vld [vmem:[%s51 + $0xc0] sm:$0xf]
  %v7006 = vld [vmem:[%s53] sm:$0xff]
  %v7007 = vld [vmem:[%s53 + $0x8] sm:$0xff]
  %v7008 = vld [vmem:[%s53 + $0x10] sm:$0xff]
  %v7009 = vld [vmem:[%s53 + $0x18] sm:$0xff]
  %v7010 = vld [vmem:[%s53 + $0x20] sm:$0xff]
  %v7011 = vld [vmem:[%s53 + $0x28] sm:$0xff]
  %v7012 = vld [vmem:[%s53 + $0x30] sm:$0xff]
  %v7013 = vld [vmem:[%s53 + $0x38] sm:$0xff]
  %v7014 = vld [vmem:[%s53 + $0x40] sm:$0xff]
  %v7015 = vld [vmem:[%s53 + $0x48] sm:$0xff]
  %v7016 = vld [vmem:[%s53 + $0x50] sm:$0xff]
  %v7017 = vld [vmem:[%s53 + $0x58] sm:$0xff]
  %v7018 = vld [vmem:[%s53 + $0x60] sm:$0xff]
  %v7019 = vld [vmem:[%s53 + $0x68] sm:$0xff]
  %v7020 = vld [vmem:[%s53 + $0x70] sm:$0xff]
  %v7021 = vld [vmem:[%s53 + $0x78] sm:$0xff]
  %v7022 = vld [vmem:[%s53 + $0x80] sm:$0xff]
  %v7023 = vld [vmem:[%s53 + $0x88] sm:$0xff]
  %v7024 = vld [vmem:[%s53 + $0x90] sm:$0xff]
  %v7025 = vld [vmem:[%s53 + $0x98] sm:$0xff]
  %v7026 = vld [vmem:[%s53 + $0xa0] sm:$0xff]
  %v7027 = vld [vmem:[%s53 + $0xa8] sm:$0xff]
  %v7028 = vld [vmem:[%s53 + $0xb0] sm:$0xff]
  %v7029 = vld [vmem:[%s53 + $0xb8] sm:$0xff]
  %v7030 = vld [vmem:[%s53 + $0xc0] sm:$0xf]
  %v7031 = vld [vmem:[%s53 + $0xc8] sm:$0xf]
  %vm7032 = vcmask 818176
  %v7034 = vsel %vm7032, %v6968, 0
  %v7037 = vsel %vm7032, %v6969, 0
  %v7040 = vsel %vm7032, %v6970, 0
  %v7043 = vsel %vm7032, %v6971, 0
  %v7046 = vsel %vm7032, %v6972, 0
  %v7049 = vsel %vm7032, %v6973, 0
  %v7052 = vsel %vm7032, %v6974, 0
  %v7055 = vsel %vm7032, %v6975, 0
  %v7058 = vsel %vm7032, %v6976, 0
  %v7061 = vsel %vm7032, %v6977, 0
  %v7064 = vsel %vm7032, %v6978, 0
  %v7067 = vsel %vm7032, %v6979, 0
  %v7070 = vsel %vm7032, %v6980, 0
  %v7073 = vsel %vm374, %v7030, 0
  %v7076 = vsel %vm374, %v7031, 0
  %7078 = vmatprep.subr.mxu0 %v7007
  %7079 = vmatpush1.msra.mxu0 %v7006
  %7080 = vmatprep.subr.mxu0 %v7009
  %7081 = vmatpush1.msra.mxu0 %v7008
  %7082 = vmatprep.subr.mxu0 %v7011
  %7083 = vmatpush1.msra.mxu0 %v7010
  %7084 = vmatprep.subr.mxu0 %v7013
  %7085 = vmatpush1.msra.mxu0 %v7012
  %7086 = vmatprep.subr.mxu0 %v7015
  %7087 = vmatpush1.msra.mxu0 %v7014
  %7088 = vmatprep.subr.mxu0 %v7017
  %7089 = vmatpush1.msra.mxu0 %v7016
  %7090 = vmatprep.subr.mxu0 %v7019
  %7091 = vmatpush1.msra.mxu0 %v7018
  %7092 = vmatprep.subr.mxu0 %v7021
  %7093 = vmatpush1.msra.mxu0 %v7020
  %7094 = vmatprep.subr.mxu0 %v7023
  %7095 = vmatpush1.msra.mxu0 %v7022
  %7096 = vmatprep.subr.mxu0 %v7025
  %7097 = vmatpush1.msra.mxu0 %v7024
  %7098 = vmatprep.subr.mxu0 %v7027
  %7099 = vmatpush1.msra.mxu0 %v7026
  %7100 = vmatprep.subr.mxu0 %v7029
  %7101 = vmatpush1.msra.mxu0 %v7028
  %7102 = vmatprep.subr.mxu0 %v7076
  %7103 = vmatpush1.msra.mxu0 %v7073
  %7104 = vmatprep.subr.mxu0 0.0
  %7105 = vmatpush1.msra.mxu0 0.0
  %7106 = vmatprep.subr.mxu0 0.0
  %7107 = vmatpush1.msra.mxu0 0.0
  %7108 = vmatprep.subr.mxu0 0.0
  %7109 = vmatpush1.msra.mxu0 0.0
  %7110 = vmatprep.subr.mxu0 0.0
  %7111 = vmatpush1.msra.mxu0 0.0
  %7112 = vmatprep.subr.mxu0 0.0
  %7113 = vmatpush1.msra.mxu0 0.0
  %7114 = vmatprep.subr.mxu0 0.0
  %7115 = vmatpush1.msra.mxu0 0.0
  %7116 = vmatprep.subr.mxu0 0.0
  %7117 = vmatpush1.msra.mxu0 0.0
  %7118 = vmatprep.subr.mxu0 0.0
  %7119 = vmatpush1.msra.mxu0 0.0
  %7120 = vmatprep.subr.mxu0 0.0
  %7121 = vmatpush1.msra.mxu0 0.0
  %7122 = vmatprep.subr.mxu0 0.0
  %7123 = vmatpush1.msra.mxu0 0.0
  %7124 = vmatprep.subr.mxu0 0.0
  %7125 = vmatpush1.msra.mxu0 0.0
  %7126 = vmatprep.subr.mxu0 0.0
  %7127 = vmatpush1.msra.mxu0 0.0
  %7128 = vmatprep.subr.mxu0 0.0
  %7129 = vmatpush1.msra.mxu0 0.0
  %7130 = vmatprep.subr.mxu0 0.0
  %7131 = vmatpush1.msra.mxu0 0.0
  %7132 = vmatprep.subr.mxu0 0.0
  %7133 = vmatpush1.msra.mxu0 0.0
  %7134 = vmatprep.subr.mxu0 0.0
  %7135 = vmatpush1.msra.mxu0 0.0
  %7136 = vmatprep.subr.mxu0 0.0
  %7137 = vmatpush1.msra.mxu0 0.0
  %7138 = vmatprep.subr.mxu0 0.0
  %7139 = vmatpush1.msra.mxu0 0.0
  %7140 = vmatprep.subr.mxu0 0.0
  %7141 = vmatpush1.msra.mxu0 0.0
  %7142 = vmatprep.mubr.f32.mxu0 0.0
  %7143 = vmatmul.mubr.f32.gmra.mrb[0].mxu0 %v7034
  %v7144 = vpop.f32.mrb[0].mxu0
  %v7145 = vadd.f32 0.0, %v7144
  %v7146 = vpop.f32.mrb[0].mxu0
  %v7147 = vadd.f32 0.0, %v7146
  %7148 = vmatprep.mubr.f32.mxu0 0.0
  %7149 = vmatmul.mubr.f32.gmra.mrb[0].mxu0 %v7037
  %v7150 = vpop.f32.mrb[0].mxu0
  %v7151 = vadd.f32 0.0, %v7150
  %v7152 = vpop.f32.mrb[0].mxu0
  %v7153 = vadd.f32 0.0, %v7152
  %7154 = vmatprep.mubr.f32.mxu0 0.0
  %7155 = vmatmul.mubr.f32.gmra.mrb[0].mxu0 %v7040
  %v7156 = vpop.f32.mrb[0].mxu0
  %v7157 = vadd.f32 0.0, %v7156
  %v7158 = vpop.f32.mrb[0].mxu0
  %v7159 = vadd.f32 0.0, %v7158
  %7160 = vmatprep.mubr.f32.mxu0 0.0
  %7161 = vmatmul.mubr.f32.gmra.mrb[0].mxu0 %v7043
  %v7162 = vpop.f32.mrb[0].mxu0
  %v7163 = vadd.f32 0.0, %v7162
  %v7164 = vpop.f32.mrb[0].mxu0
  %v7165 = vadd.f32 0.0, %v7164
  %7166 = vmatprep.mubr.f32.mxu0 0.0
  %7167 = vmatmul.mubr.f32.gmra.mrb[0].mxu0 %v7046
  %v7168 = vpop.f32.mrb[0].mxu0
  %v7169 = vadd.f32 0.0, %v7168
  %v7170 = vpop.f32.mrb[0].mxu0
  %v7171 = vadd.f32 0.0, %v7170
  %7172 = vmatprep.mubr.f32.mxu0 0.0
  %7173 = vmatmul.mubr.f32.gmra.mrb[0].mxu0 %v7049
  %v7174 = vpop.f32.mrb[0].mxu0
  %v7175 = vadd.f32 0.0, %v7174
  %v7176 = vpop.f32.mrb[0].mxu0
  %v7177 = vadd.f32 0.0, %v7176
  %7178 = vmatprep.mubr.f32.mxu0 0.0
  %7179 = vmatmul.mubr.f32.gmra.mrb[0].mxu0 %v7052
  %v7180 = vpop.f32.mrb[0].mxu0
  %v7181 = vadd.f32 0.0, %v7180
  %v7182 = vpop.f32.mrb[0].mxu0
  %v7183 = vadd.f32 0.0, %v7182
  %7184 = vmatprep.mubr.f32.mxu0 0.0
  %7185 = vmatmul.mubr.f32.gmra.mrb[0].mxu0 %v7055
  %v7186 = vpop.f32.mrb[0].mxu0
  %v7187 = vadd.f32 0.0, %v7186
  %v7188 = vpop.f32.mrb[0].mxu0
  %v7189 = vadd.f32 0.0, %v7188
  %7190 = vmatprep.mubr.f32.mxu0 0.0
  %7191 = vmatmul.mubr.f32.gmra.mrb[0].mxu0 %v7058
  %v7192 = vpop.f32.mrb[0].mxu0
  %v7193 = vadd.f32 0.0, %v7192
  %v7194 = vpop.f32.mrb[0].mxu0
  %v7195 = vadd.f32 0.0, %v7194
  %7196 = vmatprep.mubr.f32.mxu0 0.0
  %7197 = vmatmul.mubr.f32.gmra.mrb[0].mxu0 %v7061
  %v7198 = vpop.f32.mrb[0].mxu0
  %v7199 = vadd.f32 0.0, %v7198
  %v7200 = vpop.f32.mrb[0].mxu0
  %v7201 = vadd.f32 0.0, %v7200
  %7202 = vmatprep.mubr.f32.mxu0 0.0
  %7203 = vmatmul.mubr.f32.gmra.mrb[0].mxu0 %v7064
  %v7204 = vpop.f32.mrb[0].mxu0
  %v7205 = vadd.f32 0.0, %v7204
  %v7206 = vpop.f32.mrb[0].mxu0
  %v7207 = vadd.f32 0.0, %v7206
  %7208 = vmatprep.mubr.f32.mxu0 0.0
  %7209 = vmatmul.mubr.f32.gmra.mrb[0].mxu0 %v7067
  %v7210 = vpop.f32.mrb[0].mxu0
  %v7211 = vadd.f32 0.0, %v7210
  %v7212 = vpop.f32.mrb[0].mxu0
  %v7213 = vadd.f32 0.0, %v7212
  %7214 = vmatprep.mubr.f32.mxu0 0.0
  %7215 = vmatmul.mubr.f32.gmra.mrb[0].mxu0 %v7070
  %v7216 = vpop.f32.mrb[0].mxu0
  %v7217 = vadd.f32 0.0, %v7216
  %v7218 = vpop.f32.mrb[0].mxu0
  %v7219 = vadd.f32 0.0, %v7218
  %7220 = vdwg.mxu0
  %s7221 = scalar_lea.vmem %s51, 200
  %v7222 = vld [vmem:[%s7221] sm:$0xff]
  %v7223 = vld [vmem:[%s7221 + $0x8] sm:$0xff]
  %v7224 = vld [vmem:[%s7221 + $0x10] sm:$0xff]
  %v7225 = vld [vmem:[%s7221 + $0x18] sm:$0xff]
  %v7226 = vld [vmem:[%s7221 + $0x20] sm:$0xff]
  %v7227 = vld [vmem:[%s7221 + $0x28] sm:$0xff]
  %v7228 = vld [vmem:[%s7221 + $0x30] sm:$0xff]
  %v7229 = vld [vmem:[%s7221 + $0x38] sm:$0xff]
  %v7230 = vld [vmem:[%s7221 + $0x40] sm:$0xff]
  %v7231 = vld [vmem:[%s7221 + $0x48] sm:$0xff]
  %v7232 = vld [vmem:[%s7221 + $0x50] sm:$0xff]
  %v7233 = vld [vmem:[%s7221 + $0x58] sm:$0xff]
  %v7234 = vld [vmem:[%s7221 + $0x60] sm:$0xff]
  %v7235 = vld [vmem:[%s7221 + $0x68] sm:$0xff]
  %v7236 = vld [vmem:[%s7221 + $0x70] sm:$0xff]
  %v7237 = vld [vmem:[%s7221 + $0x78] sm:$0xff]
  %v7238 = vld [vmem:[%s7221 + $0x80] sm:$0xff]
  %v7239 = vld [vmem:[%s7221 + $0x88] sm:$0xff]
  %v7240 = vld [vmem:[%s7221 + $0x90] sm:$0xff]
  %v7241 = vld [vmem:[%s7221 + $0x98] sm:$0xff]
  %v7242 = vld [vmem:[%s7221 + $0xa0] sm:$0xff]
  %v7243 = vld [vmem:[%s7221 + $0xa8] sm:$0xff]
  %v7244 = vld [vmem:[%s7221 + $0xb0] sm:$0xff]
  %v7245 = vld [vmem:[%s7221 + $0xb8] sm:$0xff]
  %v7246 = vld [vmem:[%s7221 + $0xc0] sm:$0xf]
  %s7247 = scalar_lea.vmem %s53, 208
  %v7248 = vld [vmem:[%s7247] sm:$0xff]
  %v7249 = vld [vmem:[%s7247 + $0x8] sm:$0xff]
  %v7250 = vld [vmem:[%s7247 + $0x10] sm:$0xff]
  %v7251 = vld [vmem:[%s7247 + $0x18] sm:$0xff]
  %v7252 = vld [vmem:[%s7247 + $0x20] sm:$0xff]
  %v7253 = vld [vmem:[%s7247 + $0x28] sm:$0xff]
  %v7254 = vld [vmem:[%s7247 + $0x30] sm:$0xff]
  %v7255 = vld [vmem:[%s7247 + $0x38] sm:$0xff]
  %v7256 = vld [vmem:[%s7247 + $0x40] sm:$0xff]
  %v7257 = vld [vmem:[%s7247 + $0x48] sm:$0xff]
  %v7258 = vld [vmem:[%s7247 + $0x50] sm:$0xff]
  %v7259 = vld [vmem:[%s7247 + $0x58] sm:$0xff]
  %v7260 = vld [vmem:[%s7247 + $0x60] sm:$0xff]
  %v7261 = vld [vmem:[%s7247 + $0x68] sm:$0xff]
  %v7262 = vld [vmem:[%s7247 + $0x70] sm:$0xff]
  %v7263 = vld [vmem:[%s7247 + $0x78] sm:$0xff]
  %v7264 = vld [vmem:[%s7247 + $0x80] sm:$0xff]
  %v7265 = vld [vmem:[%s7247 + $0x88] sm:$0xff]
  %v7266 = vld [vmem:[%s7247 + $0x90] sm:$0xff]
  %v7267 = vld [vmem:[%s7247 + $0x98] sm:$0xff]
  %v7268 = vld [vmem:[%s7247 + $0xa0] sm:$0xff]
  %v7269 = vld [vmem:[%s7247 + $0xa8] sm:$0xff]
  %v7270 = vld [vmem:[%s7247 + $0xb0] sm:$0xff]
  %v7271 = vld [vmem:[%s7247 + $0xb8] sm:$0xff]
  %v7272 = vld [vmem:[%s7247 + $0xc0] sm:$0xf]
  %v7273 = vld [vmem:[%s7247 + $0xc8] sm:$0xf]
  %v7275 = vsel %vm374, %v7272, 0
  %v7278 = vsel %vm374, %v7273, 0
  %7280 = vmatprep.subr.mxu0 %v7249
  %7281 = vmatpush1.msra.mxu0 %v7248
  %7282 = vmatprep.subr.mxu0 %v7251
  %7283 = vmatpush1.msra.mxu0 %v7250
  %7284 = vmatprep.subr.mxu0 %v7253
  %7285 = vmatpush1.msra.mxu0 %v7252
  %7286 = vmatprep.subr.mxu0 %v7255
  %7287 = vmatpush1.msra.mxu0 %v7254
  %7288 = vmatprep.subr.mxu0 %v7257
  %7289 = vmatpush1.msra.mxu0 %v7256
  %7290 = vmatprep.subr.mxu0 %v7259
  %7291 = vmatpush1.msra.mxu0 %v7258
  %7292 = vmatprep.subr.mxu0 %v7261
  %7293 = vmatpush1.msra.mxu0 %v7260
  %7294 = vmatprep.subr.mxu0 %v7263
  %7295 = vmatpush1.msra.mxu0 %v7262
  %7296 = vmatprep.subr.mxu0 %v7265
  %7297 = vmatpush1.msra.mxu0 %v7264
  %7298 = vmatprep.subr.mxu0 %v7267
  %7299 = vmatpush1.msra.mxu0 %v7266
  %7300 = vmatprep.subr.mxu0 %v7269
  %7301 = vmatpush1.msra.mxu0 %v7268
  %7302 = vmatprep.subr.mxu0 %v7271
  %7303 = vmatpush1.msra.mxu0 %v7270
  %7304 = vmatprep.subr.mxu0 %v7278
  %7305 = vmatpush1.msra.mxu0 %v7275
  %7306 = vmatprep.subr.mxu0 0.0
  %7307 = vmatpush1.msra.mxu0 0.0
  %7308 = vmatprep.subr.mxu0 0.0
  %7309 = vmatpush1.msra.mxu0 0.0
  %7310 = vmatprep.subr.mxu0 0.0
  %7311 = vmatpush1.msra.mxu0 0.0
  %7312 = vmatprep.subr.mxu0 0.0
  %7313 = vmatpush1.msra.mxu0 0.0
  %7314 = vmatprep.subr.mxu0 0.0
  %7315 = vmatpush1.msra.mxu0 0.0
  %7316 = vmatprep.subr.mxu0 0.0
  %7317 = vmatpush1.msra.mxu0 0.0
  %7318 = vmatprep.subr.mxu0 0.0
  %7319 = vmatpush1.msra.mxu0 0.0
  %7320 = vmatprep.subr.mxu0 0.0
  %7321 = vmatpush1.msra.mxu0 0.0
  %7322 = vmatprep.subr.mxu0 0.0
  %7323 = vmatpush1.msra.mxu0 0.0
  %7324 = vmatprep.subr.mxu0 0.0
  %7325 = vmatpush1.msra.mxu0 0.0
  %7326 = vmatprep.subr.mxu0 0.0
  %7327 = vmatpush1.msra.mxu0 0.0
  %7328 = vmatprep.subr.mxu0 0.0
  %7329 = vmatpush1.msra.mxu0 0.0
  %7330 = vmatprep.subr.mxu0 0.0
  %7331 = vmatpush1.msra.mxu0 0.0
  %7332 = vmatprep.subr.mxu0 0.0
  %7333 = vmatpush1.msra.mxu0 0.0
  %7334 = vmatprep.subr.mxu0 0.0
  %7335 = vmatpush1.msra.mxu0 0.0
  %7336 = vmatprep.subr.mxu0 0.0
  %7337 = vmatpush1.msra.mxu0 0.0
  %7338 = vmatprep.subr.mxu0 0.0
  %7339 = vmatpush1.msra.mxu0 0.0
  %7340 = vmatprep.subr.mxu0 0.0
  %7341 = vmatpush1.msra.mxu0 0.0
  %7342 = vmatprep.subr.mxu0 0.0
  %7343 = vmatpush1.msra.mxu0 0.0
  %7344 = vmatprep.mubr.f32.mxu0 0.0
  %7345 = vmatmul.mubr.f32.gmra.mrb[0].mxu0 %v7034
  %v7346 = vpop.f32.mrb[0].mxu0
  %v7347 = vadd.f32 0.0, %v7346
  %v7348 = vpop.f32.mrb[0].mxu0
  %v7349 = vadd.f32 0.0, %v7348
  %7350 = vmatprep.mubr.f32.mxu0 0.0
  %7351 = vmatmul.mubr.f32.gmra.mrb[0].mxu0 %v7037
  %v7352 = vpop.f32.mrb[0].mxu0
  %v7353 = vadd.f32 0.0, %v7352
  %v7354 = vpop.f32.mrb[0].mxu0
  %v7355 = vadd.f32 0.0, %v7354
  %7356 = vmatprep.mubr.f32.mxu0 0.0
  %7357 = vmatmul.mubr.f32.gmra.mrb[0].mxu0 %v7040
  %v7358 = vpop.f32.mrb[0].mxu0
  %v7359 = vadd.f32 0.0, %v7358
  %v7360 = vpop.f32.mrb[0].mxu0
  %v7361 = vadd.f32 0.0, %v7360
  %7362 = vmatprep.mubr.f32.mxu0 0.0
  %7363 = vmatmul.mubr.f32.gmra.mrb[0].mxu0 %v7043
  %v7364 = vpop.f32.mrb[0].mxu0
  %v7365 = vadd.f32 0.0, %v7364
  %v7366 = vpop.f32.mrb[0].mxu0
  %v7367 = vadd.f32 0.0, %v7366
  %7368 = vmatprep.mubr.f32.mxu0 0.0
  %7369 = vmatmul.mubr.f32.gmra.mrb[0].mxu0 %v7046
  %v7370 = vpop.f32.mrb[0].mxu0
  %v7371 = vadd.f32 0.0, %v7370
  %v7372 = vpop.f32.mrb[0].mxu0
  %v7373 = vadd.f32 0.0, %v7372
  %7374 = vmatprep.mubr.f32.mxu0 0.0
  %7375 = vmatmul.mubr.f32.gmra.mrb[0].mxu0 %v7049
  %v7376 = vpop.f32.mrb[0].mxu0
  %v7377 = vadd.f32 0.0, %v7376
  %v7378 = vpop.f32.mrb[0].mxu0
  %v7379 = vadd.f32 0.0, %v7378
  %7380 = vmatprep.mubr.f32.mxu0 0.0
  %7381 = vmatmul.mubr.f32.gmra.mrb[0].mxu0 %v7052
  %v7382 = vpop.f32.mrb[0].mxu0
  %v7383 = vadd.f32 0.0, %v7382
  %v7384 = vpop.f32.mrb[0].mxu0
  %v7385 = vadd.f32 0.0, %v7384
  %7386 = vmatprep.mubr.f32.mxu0 0.0
  %7387 = vmatmul.mubr.f32.gmra.mrb[0].mxu0 %v7055
  %v7388 = vpop.f32.mrb[0].mxu0
  %v7389 = vadd.f32 0.0, %v7388
  %v7390 = vpop.f32.mrb[0].mxu0
  %v7391 = vadd.f32 0.0, %v7390
  %7392 = vmatprep.mubr.f32.mxu0 0.0
  %7393 = vmatmul.mubr.f32.gmra.mrb[0].mxu0 %v7058
  %v7394 = vpop.f32.mrb[0].mxu0
  %v7395 = vadd.f32 0.0, %v7394
  %v7396 = vpop.f32.mrb[0].mxu0
  %v7397 = vadd.f32 0.0, %v7396
  %7398 = vmatprep.mubr.f32.mxu0 0.0
  %7399 = vmatmul.mubr.f32.gmra.mrb[0].mxu0 %v7061
  %v7400 = vpop.f32.mrb[0].mxu0
  %v7401 = vadd.f32 0.0, %v7400
  %v7402 = vpop.f32.mrb[0].mxu0
  %v7403 = vadd.f32 0.0, %v7402
  %7404 = vmatprep.mubr.f32.mxu0 0.0
  %7405 = vmatmul.mubr.f32.gmra.mrb[0].mxu0 %v7064
  %v7406 = vpop.f32.mrb[0].mxu0
  %v7407 = vadd.f32 0.0, %v7406
  %v7408 = vpop.f32.mrb[0].mxu0
  %v7409 = vadd.f32 0.0, %v7408
  %7410 = vmatprep.mubr.f32.mxu0 0.0
  %7411 = vmatmul.mubr.f32.gmra.mrb[0].mxu0 %v7067
  %v7412 = vpop.f32.mrb[0].mxu0
  %v7413 = vadd.f32 0.0, %v7412
  %v7414 = vpop.f32.mrb[0].mxu0
  %v7415 = vadd.f32 0.0, %v7414
  %7416 = vmatprep.mubr.f32.mxu0 0.0
  %7417 = vmatmul.mubr.f32.gmra.mrb[0].mxu0 %v7070
  %v7418 = vpop.f32.mrb[0].mxu0
  %v7419 = vadd.f32 0.0, %v7418
  %v7420 = vpop.f32.mrb[0].mxu0
  %v7421 = vadd.f32 0.0, %v7420
  %7422 = vdwg.mxu0
  %v7424 = vsel %vm7032, %v7222, 0
  %v7427 = vsel %vm7032, %v7223, 0
  %v7430 = vsel %vm7032, %v7224, 0
  %v7433 = vsel %vm7032, %v7225, 0
  %v7436 = vsel %vm7032, %v7226, 0
  %v7439 = vsel %vm7032, %v7227, 0
  %v7442 = vsel %vm7032, %v7228, 0
  %v7445 = vsel %vm7032, %v7229, 0
  %v7448 = vsel %vm7032, %v7230, 0
  %v7451 = vsel %vm7032, %v7231, 0
  %v7454 = vsel %vm7032, %v7232, 0
  %v7457 = vsel %vm7032, %v7233, 0
  %v7460 = vsel %vm7032, %v7234, 0
  %v7463 = vsel %vm7032, %v7235, 0
  %v7466 = vsel %vm7032, %v7236, 0
  %v7469 = vsel %vm7032, %v7237, 0
  %v7472 = vsel %vm7032, %v7238, 0
  %v7475 = vsel %vm7032, %v7239, 0
  %v7478 = vsel %vm7032, %v7240, 0
  %v7481 = vsel %vm7032, %v7241, 0
  %v7484 = vsel %vm7032, %v7242, 0
  %v7487 = vsel %vm7032, %v7243, 0
  %v7490 = vsel %vm7032, %v7244, 0
  %v7493 = vsel %vm7032, %v7245, 0
  %v7496 = vsel %vm7032, %v7246, 0
  %v7499 = vsel %vm374, %v7419, 0
  %v7502 = vsel %vm374, %v7421, 0
  %7504 = vmatprep.subr.mxu0 %v7349
  %7505 = vmatpush1.msra.mxu0 %v7347
  %7506 = vmatprep.subr.mxu0 %v7355
  %7507 = vmatpush1.msra.mxu0 %v7353
  %7508 = vmatprep.subr.mxu0 %v7361
  %7509 = vmatpush1.msra.mxu0 %v7359
  %7510 = vmatprep.subr.mxu0 %v7367
  %7511 = vmatpush1.msra.mxu0 %v7365
  %7512 = vmatprep.subr.mxu0 %v7373
  %7513 = vmatpush1.msra.mxu0 %v7371
  %7514 = vmatprep.subr.mxu0 %v7379
  %7515 = vmatpush1.msra.mxu0 %v7377
  %7516 = vmatprep.subr.mxu0 %v7385
  %7517 = vmatpush1.msra.mxu0 %v7383
  %7518 = vmatprep.subr.mxu0 %v7391
  %7519 = vmatpush1.msra.mxu0 %v7389
  %7520 = vmatprep.subr.mxu0 %v7397
  %7521 = vmatpush1.msra.mxu0 %v7395
  %7522 = vmatprep.subr.mxu0 %v7403
  %7523 = vmatpush1.msra.mxu0 %v7401
  %7524 = vmatprep.subr.mxu0 %v7409
  %7525 = vmatpush1.msra.mxu0 %v7407
  %7526 = vmatprep.subr.mxu0 %v7415
  %7527 = vmatpush1.msra.mxu0 %v7413
  %7528 = vmatprep.subr.mxu0 %v7502
  %7529 = vmatpush1.msra.mxu0 %v7499
  %7530 = vmatprep.subr.mxu0 0.0
  %7531 = vmatpush1.msra.mxu0 0.0
  %7532 = vmatprep.subr.mxu0 0.0
  %7533 = vmatpush1.msra.mxu0 0.0
  %7534 = vmatprep.subr.mxu0 0.0
  %7535 = vmatpush1.msra.mxu0 0.0
  %7536 = vmatprep.subr.mxu0 0.0
  %7537 = vmatpush1.msra.mxu0 0.0
  %7538 = vmatprep.subr.mxu0 0.0
  %7539 = vmatpush1.msra.mxu0 0.0
  %7540 = vmatprep.subr.mxu0 0.0
  %7541 = vmatpush1.msra.mxu0 0.0
  %7542 = vmatprep.subr.mxu0 0.0
  %7543 = vmatpush1.msra.mxu0 0.0
  %7544 = vmatprep.subr.mxu0 0.0
  %7545 = vmatpush1.msra.mxu0 0.0
  %7546 = vmatprep.subr.mxu0 0.0
  %7547 = vmatpush1.msra.mxu0 0.0
  %7548 = vmatprep.subr.mxu0 0.0
  %7549 = vmatpush1.msra.mxu0 0.0
  %7550 = vmatprep.subr.mxu0 0.0
  %7551 = vmatpush1.msra.mxu0 0.0
  %7552 = vmatprep.subr.mxu0 0.0
  %7553 = vmatpush1.msra.mxu0 0.0
  %7554 = vmatprep.subr.mxu0 0.0
  %7555 = vmatpush1.msra.mxu0 0.0
  %7556 = vmatprep.subr.mxu0 0.0
  %7557 = vmatpush1.msra.mxu0 0.0
  %7558 = vmatprep.subr.mxu0 0.0
  %7559 = vmatpush1.msra.mxu0 0.0
  %7560 = vmatprep.subr.mxu0 0.0
  %7561 = vmatpush1.msra.mxu0 0.0
  %7562 = vmatprep.subr.mxu0 0.0
  %7563 = vmatpush1.msra.mxu0 0.0
  %7564 = vmatprep.subr.mxu0 0.0
  %7565 = vmatpush1.msra.mxu0 0.0
  %7566 = vmatprep.subr.mxu0 0.0
  %7567 = vmatpush1.msra.mxu0 0.0
  %7568 = vmatprep.mubr.f32.mxu0 0.0
  %7569 = vmatmul.mubr.f32.gmra.mrb[0].mxu0 %v7424
  %v7570 = vpop.f32.mrb[0].mxu0
  %v7571 = vadd.f32 0.0, %v7570
  %v7572 = vpop.f32.mrb[0].mxu0
  %v7573 = vadd.f32 0.0, %v7572
  %7574 = vmatprep.mubr.f32.mxu0 0.0
  %7575 = vmatmul.mubr.f32.gmra.mrb[0].mxu0 %v7427
  %v7576 = vpop.f32.mrb[0].mxu0
  %v7577 = vadd.f32 0.0, %v7576
  %v7578 = vpop.f32.mrb[0].mxu0
  %v7579 = vadd.f32 0.0, %v7578
  %7580 = vmatprep.mubr.f32.mxu0 0.0
  %7581 = vmatmul.mubr.f32.gmra.mrb[0].mxu0 %v7430
  %v7582 = vpop.f32.mrb[0].mxu0
  %v7583 = vadd.f32 0.0, %v7582
  %v7584 = vpop.f32.mrb[0].mxu0
  %v7585 = vadd.f32 0.0, %v7584
  %7586 = vmatprep.mubr.f32.mxu0 0.0
  %7587 = vmatmul.mubr.f32.gmra.mrb[0].mxu0 %v7433
  %v7588 = vpop.f32.mrb[0].mxu0
  %v7589 = vadd.f32 0.0, %v7588
  %v7590 = vpop.f32.mrb[0].mxu0
  %v7591 = vadd.f32 0.0, %v7590
  %7592 = vmatprep.mubr.f32.mxu0 0.0
  %7593 = vmatmul.mubr.f32.gmra.mrb[0].mxu0 %v7436
  %v7594 = vpop.f32.mrb[0].mxu0
  %v7595 = vadd.f32 0.0, %v7594
  %v7596 = vpop.f32.mrb[0].mxu0
  %v7597 = vadd.f32 0.0, %v7596
  %7598 = vmatprep.mubr.f32.mxu0 0.0
  %7599 = vmatmul.mubr.f32.gmra.mrb[0].mxu0 %v7439
  %v7600 = vpop.f32.mrb[0].mxu0
  %v7601 = vadd.f32 0.0, %v7600
  %v7602 = vpop.f32.mrb[0].mxu0
  %v7603 = vadd.f32 0.0, %v7602
  %7604 = vmatprep.mubr.f32.mxu0 0.0
  %7605 = vmatmul.mubr.f32.gmra.mrb[0].mxu0 %v7442
  %v7606 = vpop.f32.mrb[0].mxu0
  %v7607 = vadd.f32 0.0, %v7606
  %v7608 = vpop.f32.mrb[0].mxu0
  %v7609 = vadd.f32 0.0, %v7608
  %7610 = vmatprep.mubr.f32.mxu0 0.0
  %7611 = vmatmul.mubr.f32.gmra.mrb[0].mxu0 %v7445
  %v7612 = vpop.f32.mrb[0].mxu0
  %v7613 = vadd.f32 0.0, %v7612
  %v7614 = vpop.f32.mrb[0].mxu0
  %v7615 = vadd.f32 0.0, %v7614
  %7616 = vmatprep.mubr.f32.mxu0 0.0
  %7617 = vmatmul.mubr.f32.gmra.mrb[0].mxu0 %v7448
  %v7618 = vpop.f32.mrb[0].mxu0
  %v7619 = vadd.f32 0.0, %v7618
  %v7620 = vpop.f32.mrb[0].mxu0
  %v7621 = vadd.f32 0.0, %v7620
  %7622 = vmatprep.mubr.f32.mxu0 0.0
  %7623 = vmatmul.mubr.f32.gmra.mrb[0].mxu0 %v7451
  %v7624 = vpop.f32.mrb[0].mxu0
  %v7625 = vadd.f32 0.0, %v7624
  %v7626 = vpop.f32.mrb[0].mxu0
  %v7627 = vadd.f32 0.0, %v7626
  %7628 = vmatprep.mubr.f32.mxu0 0.0
  %7629 = vmatmul.mubr.f32.gmra.mrb[0].mxu0 %v7454
  %v7630 = vpop.f32.mrb[0].mxu0
  %v7631 = vadd.f32 0.0, %v7630
  %v7632 = vpop.f32.mrb[0].mxu0
  %v7633 = vadd.f32 0.0, %v7632
  %7634 = vmatprep.mubr.f32.mxu0 0.0
  %7635 = vmatmul.mubr.f32.gmra.mrb[0].mxu0 %v7457
  %v7636 = vpop.f32.mrb[0].mxu0
  %v7637 = vadd.f32 0.0, %v7636
  %v7638 = vpop.f32.mrb[0].mxu0
  %v7639 = vadd.f32 0.0, %v7638
  %7640 = vmatprep.mubr.f32.mxu0 0.0
  %7641 = vmatmul.mubr.f32.gmra.mrb[0].mxu0 %v7460
  %v7642 = vpop.f32.mrb[0].mxu0
  %v7643 = vadd.f32 0.0, %v7642
  %v7644 = vpop.f32.mrb[0].mxu0
  %v7645 = vadd.f32 0.0, %v7644
  %7646 = vmatprep.mubr.f32.mxu0 0.0
  %7647 = vmatmul.mubr.f32.gmra.mrb[0].mxu0 %v7463
  %v7648 = vpop.f32.mrb[0].mxu0
  %v7649 = vadd.f32 0.0, %v7648
  %v7650 = vpop.f32.mrb[0].mxu0
  %v7651 = vadd.f32 0.0, %v7650
  %7652 = vmatprep.mubr.f32.mxu0 0.0
  %7653 = vmatmul.mubr.f32.gmra.mrb[0].mxu0 %v7466
  %v7654 = vpop.f32.mrb[0].mxu0
  %v7655 = vadd.f32 0.0, %v7654
  %v7656 = vpop.f32.mrb[0].mxu0
  %v7657 = vadd.f32 0.0, %v7656
  %7658 = vmatprep.mubr.f32.mxu0 0.0
  %7659 = vmatmul.mubr.f32.gmra.mrb[0].mxu0 %v7469
  %v7660 = vpop.f32.mrb[0].mxu0
  %v7661 = vadd.f32 0.0, %v7660
  %v7662 = vpop.f32.mrb[0].mxu0
  %v7663 = vadd.f32 0.0, %v7662
  %7664 = vmatprep.mubr.f32.mxu0 0.0
  %7665 = vmatmul.mubr.f32.gmra.mrb[0].mxu0 %v7472
  %v7666 = vpop.f32.mrb[0].mxu0
  %v7667 = vadd.f32 0.0, %v7666
  %v7668 = vpop.f32.mrb[0].mxu0
  %v7669 = vadd.f32 0.0, %v7668
  %7670 = vmatprep.mubr.f32.mxu0 0.0
  %7671 = vmatmul.mubr.f32.gmra.mrb[0].mxu0 %v7475
  %v7672 = vpop.f32.mrb[0].mxu0
  %v7673 = vadd.f32 0.0, %v7672
  %v7674 = vpop.f32.mrb[0].mxu0
  %v7675 = vadd.f32 0.0, %v7674
  %7676 = vmatprep.mubr.f32.mxu0 0.0
  %7677 = vmatmul.mubr.f32.gmra.mrb[0].mxu0 %v7478
  %v7678 = vpop.f32.mrb[0].mxu0
  %v7679 = vadd.f32 0.0, %v7678
  %v7680 = vpop.f32.mrb[0].mxu0
  %v7681 = vadd.f32 0.0, %v7680
  %7682 = vmatprep.mubr.f32.mxu0 0.0
  %7683 = vmatmul.mubr.f32.gmra.mrb[0].mxu0 %v7481
  %v7684 = vpop.f32.mrb[0].mxu0
  %v7685 = vadd.f32 0.0, %v7684
  %v7686 = vpop.f32.mrb[0].mxu0
  %v7687 = vadd.f32 0.0, %v7686
  %7688 = vmatprep.mubr.f32.mxu0 0.0
  %7689 = vmatmul.mubr.f32.gmra.mrb[0].mxu0 %v7484
  %v7690 = vpop.f32.mrb[0].mxu0
  %v7691 = vadd.f32 0.0, %v7690
  %v7692 = vpop.f32.mrb[0].mxu0
  %v7693 = vadd.f32 0.0, %v7692
  %7694 = vmatprep.mubr.f32.mxu0 0.0
  %7695 = vmatmul.mubr.f32.gmra.mrb[0].mxu0 %v7487
  %v7696 = vpop.f32.mrb[0].mxu0
  %v7697 = vadd.f32 0.0, %v7696
  %v7698 = vpop.f32.mrb[0].mxu0
  %v7699 = vadd.f32 0.0, %v7698
  %7700 = vmatprep.mubr.f32.mxu0 0.0
  %7701 = vmatmul.mubr.f32.gmra.mrb[0].mxu0 %v7490
  %v7702 = vpop.f32.mrb[0].mxu0
  %v7703 = vadd.f32 0.0, %v7702
  %v7704 = vpop.f32.mrb[0].mxu0
  %v7705 = vadd.f32 0.0, %v7704
  %7706 = vmatprep.mubr.f32.mxu0 0.0
  %7707 = vmatmul.mubr.f32.gmra.mrb[0].mxu0 %v7493
  %v7708 = vpop.f32.mrb[0].mxu0
  %v7709 = vadd.f32 0.0, %v7708
  %v7710 = vpop.f32.mrb[0].mxu0
  %v7711 = vadd.f32 0.0, %v7710
  %7712 = vmatprep.mubr.f32.mxu0 0.0
  %7713 = vmatmul.mubr.f32.gmra.mrb[0].mxu0 %v7496
  %v7714 = vpop.f32.mrb[0].mxu0
  %v7715 = vadd.f32 0.0, %v7714
  %v7716 = vpop.f32.mrb[0].mxu0
  %v7717 = vadd.f32 0.0, %v7716
  %7718 = vdwg.mxu0
  %v7720 = vsel %vm7032, %v6981, 0
  %v7723 = vsel %vm7032, %v6982, 0
  %v7726 = vsel %vm7032, %v6983, 0
  %v7729 = vsel %vm7032, %v6984, 0
  %v7732 = vsel %vm7032, %v6985, 0
  %v7735 = vsel %vm7032, %v6986, 0
  %v7738 = vsel %vm7032, %v6987, 0
  %v7741 = vsel %vm7032, %v6988, 0
  %v7744 = vsel %vm7032, %v6989, 0
  %v7747 = vsel %vm7032, %v6990, 0
  %v7750 = vsel %vm7032, %v6991, 0
  %v7753 = vsel %vm7032, %v6992, 0
  %v7756 = vsel %vm7032, %v6993, 0
  %v7759 = vsel %vm7032, %v6994, 0
  %v7762 = vsel %vm7032, %v6995, 0
  %v7765 = vsel %vm7032, %v6996, 0
  %v7768 = vsel %vm7032, %v6997, 0
  %v7771 = vsel %vm7032, %v6998, 0
  %v7774 = vsel %vm7032, %v6999, 0
  %v7777 = vsel %vm7032, %v7000, 0
  %v7780 = vsel %vm7032, %v7001, 0
  %v7783 = vsel %vm7032, %v7002, 0
  %v7786 = vsel %vm7032, %v7003, 0
  %v7789 = vsel %vm7032, %v7004, 0
  %v7792 = vsel %vm7032, %v7005, 0
  %v7795 = vsel %vm374, %v7217, 0
  %v7798 = vsel %vm374, %v7219, 0
  %7800 = vmatprep.subr.mxu0 %v7147
  %7801 = vmatpush1.msra.mxu0 %v7145
  %7802 = vmatprep.subr.mxu0 %v7153
  %7803 = vmatpush1.msra.mxu0 %v7151
  %7804 = vmatprep.subr.mxu0 %v7159
  %7805 = vmatpush1.msra.mxu0 %v7157
  %7806 = vmatprep.subr.mxu0 %v7165
  %7807 = vmatpush1.msra.mxu0 %v7163
  %7808 = vmatprep.subr.mxu0 %v7171
  %7809 = vmatpush1.msra.mxu0 %v7169
  %7810 = vmatprep.subr.mxu0 %v7177
  %7811 = vmatpush1.msra.mxu0 %v7175
  %7812 = vmatprep.subr.mxu0 %v7183
  %7813 = vmatpush1.msra.mxu0 %v7181
  %7814 = vmatprep.subr.mxu0 %v7189
  %7815 = vmatpush1.msra.mxu0 %v7187
  %7816 = vmatprep.subr.mxu0 %v7195
  %7817 = vmatpush1.msra.mxu0 %v7193
  %7818 = vmatprep.subr.mxu0 %v7201
  %7819 = vmatpush1.msra.mxu0 %v7199
  %7820 = vmatprep.subr.mxu0 %v7207
  %7821 = vmatpush1.msra.mxu0 %v7205
  %7822 = vmatprep.subr.mxu0 %v7213
  %7823 = vmatpush1.msra.mxu0 %v7211
  %7824 = vmatprep.subr.mxu0 %v7798
  %7825 = vmatpush1.msra.mxu0 %v7795
  %7826 = vmatprep.subr.mxu0 0.0
  %7827 = vmatpush1.msra.mxu0 0.0
  %7828 = vmatprep.subr.mxu0 0.0
  %7829 = vmatpush1.msra.mxu0 0.0
  %7830 = vmatprep.subr.mxu0 0.0
  %7831 = vmatpush1.msra.mxu0 0.0
  %7832 = vmatprep.subr.mxu0 0.0
  %7833 = vmatpush1.msra.mxu0 0.0
  %7834 = vmatprep.subr.mxu0 0.0
  %7835 = vmatpush1.msra.mxu0 0.0
  %7836 = vmatprep.subr.mxu0 0.0
  %7837 = vmatpush1.msra.mxu0 0.0
  %7838 = vmatprep.subr.mxu0 0.0
  %7839 = vmatpush1.msra.mxu0 0.0
  %7840 = vmatprep.subr.mxu0 0.0
  %7841 = vmatpush1.msra.mxu0 0.0
  %7842 = vmatprep.subr.mxu0 0.0
  %7843 = vmatpush1.msra.mxu0 0.0
  %7844 = vmatprep.subr.mxu0 0.0
  %7845 = vmatpush1.msra.mxu0 0.0
  %7846 = vmatprep.subr.mxu0 0.0
  %7847 = vmatpush1.msra.mxu0 0.0
  %7848 = vmatprep.subr.mxu0 0.0
  %7849 = vmatpush1.msra.mxu0 0.0
  %7850 = vmatprep.subr.mxu0 0.0
  %7851 = vmatpush1.msra.mxu0 0.0
  %7852 = vmatprep.subr.mxu0 0.0
  %7853 = vmatpush1.msra.mxu0 0.0
  %7854 = vmatprep.subr.mxu0 0.0
  %7855 = vmatpush1.msra.mxu0 0.0
  %7856 = vmatprep.subr.mxu0 0.0
  %7857 = vmatpush1.msra.mxu0 0.0
  %7858 = vmatprep.subr.mxu0 0.0
  %7859 = vmatpush1.msra.mxu0 0.0
  %7860 = vmatprep.subr.mxu0 0.0
  %7861 = vmatpush1.msra.mxu0 0.0
  %7862 = vmatprep.subr.mxu0 0.0
  %7863 = vmatpush1.msra.mxu0 0.0
  %7864 = vmatprep.mubr.f32.mxu0 0.0
  %7865 = vmatmul.mubr.f32.gmra.mrb[0].mxu0 %v7720
  %v7866 = vpop.f32.mrb[0].mxu0
  %v7867 = vadd.f32 %v7571, %v7866
  %v7868 = vpop.f32.mrb[0].mxu0
  %v7869 = vadd.f32 %v7573, %v7868
  %7870 = vmatprep.mubr.f32.mxu0 0.0
  %7871 = vmatmul.mubr.f32.gmra.mrb[0].mxu0 %v7723
  %v7872 = vpop.f32.mrb[0].mxu0
  %v7873 = vadd.f32 %v7577, %v7872
  %v7874 = vpop.f32.mrb[0].mxu0
  %v7875 = vadd.f32 %v7579, %v7874
  %7876 = vmatprep.mubr.f32.mxu0 0.0
  %7877 = vmatmul.mubr.f32.gmra.mrb[0].mxu0 %v7726
  %v7878 = vpop.f32.mrb[0].mxu0
  %v7879 = vadd.f32 %v7583, %v7878
  %v7880 = vpop.f32.mrb[0].mxu0
  %v7881 = vadd.f32 %v7585, %v7880
  %7882 = vmatprep.mubr.f32.mxu0 0.0
  %7883 = vmatmul.mubr.f32.gmra.mrb[0].mxu0 %v7729
  %v7884 = vpop.f32.mrb[0].mxu0
  %v7885 = vadd.f32 %v7589, %v7884
  %v7886 = vpop.f32.mrb[0].mxu0
  %v7887 = vadd.f32 %v7591, %v7886
  %7888 = vmatprep.mubr.f32.mxu0 0.0
  %7889 = vmatmul.mubr.f32.gmra.mrb[0].mxu0 %v7732
  %v7890 = vpop.f32.mrb[0].mxu0
  %v7891 = vadd.f32 %v7595, %v7890
  %v7892 = vpop.f32.mrb[0].mxu0
  %v7893 = vadd.f32 %v7597, %v7892
  %7894 = vmatprep.mubr.f32.mxu0 0.0
  %7895 = vmatmul.mubr.f32.gmra.mrb[0].mxu0 %v7735
  %v7896 = vpop.f32.mrb[0].mxu0
  %v7897 = vadd.f32 %v7601, %v7896
  %v7898 = vpop.f32.mrb[0].mxu0
  %v7899 = vadd.f32 %v7603, %v7898
  %7900 = vmatprep.mubr.f32.mxu0 0.0
  %7901 = vmatmul.mubr.f32.gmra.mrb[0].mxu0 %v7738
  %v7902 = vpop.f32.mrb[0].mxu0
  %v7903 = vadd.f32 %v7607, %v7902
  %v7904 = vpop.f32.mrb[0].mxu0
  %v7905 = vadd.f32 %v7609, %v7904
  %7906 = vmatprep.mubr.f32.mxu0 0.0
  %7907 = vmatmul.mubr.f32.gmra.mrb[0].mxu0 %v7741
  %v7908 = vpop.f32.mrb[0].mxu0
  %v7909 = vadd.f32 %v7613, %v7908
  %v7910 = vpop.f32.mrb[0].mxu0
  %v7911 = vadd.f32 %v7615, %v7910
  %7912 = vmatprep.mubr.f32.mxu0 0.0
  %7913 = vmatmul.mubr.f32.gmra.mrb[0].mxu0 %v7744
  %v7914 = vpop.f32.mrb[0].mxu0
  %v7915 = vadd.f32 %v7619, %v7914
  %v7916 = vpop.f32.mrb[0].mxu0
  %v7917 = vadd.f32 %v7621, %v7916
  %7918 = vmatprep.mubr.f32.mxu0 0.0
  %7919 = vmatmul.mubr.f32.gmra.mrb[0].mxu0 %v7747
  %v7920 = vpop.f32.mrb[0].mxu0
  %v7921 = vadd.f32 %v7625, %v7920
  %v7922 = vpop.f32.mrb[0].mxu0
  %v7923 = vadd.f32 %v7627, %v7922
  %7924 = vmatprep.mubr.f32.mxu0 0.0
  %7925 = vmatmul.mubr.f32.gmra.mrb[0].mxu0 %v7750
  %v7926 = vpop.f32.mrb[0].mxu0
  %v7927 = vadd.f32 %v7631, %v7926
  %v7928 = vpop.f32.mrb[0].mxu0
  %v7929 = vadd.f32 %v7633, %v7928
  %7930 = vmatprep.mubr.f32.mxu0 0.0
  %7931 = vmatmul.mubr.f32.gmra.mrb[0].mxu0 %v7753
  %v7932 = vpop.f32.mrb[0].mxu0
  %v7933 = vadd.f32 %v7637, %v7932
  %v7934 = vpop.f32.mrb[0].mxu0
  %v7935 = vadd.f32 %v7639, %v7934
  %7936 = vmatprep.mubr.f32.mxu0 0.0
  %7937 = vmatmul.mubr.f32.gmra.mrb[0].mxu0 %v7756
  %v7938 = vpop.f32.mrb[0].mxu0
  %v7939 = vadd.f32 %v7643, %v7938
  %v7940 = vpop.f32.mrb[0].mxu0
  %v7941 = vadd.f32 %v7645, %v7940
  %7942 = vmatprep.mubr.f32.mxu0 0.0
  %7943 = vmatmul.mubr.f32.gmra.mrb[0].mxu0 %v7759
  %v7944 = vpop.f32.mrb[0].mxu0
  %v7945 = vadd.f32 %v7649, %v7944
  %v7946 = vpop.f32.mrb[0].mxu0
  %v7947 = vadd.f32 %v7651, %v7946
  %7948 = vmatprep.mubr.f32.mxu0 0.0
  %7949 = vmatmul.mubr.f32.gmra.mrb[0].mxu0 %v7762
  %v7950 = vpop.f32.mrb[0].mxu0
  %v7951 = vadd.f32 %v7655, %v7950
  %v7952 = vpop.f32.mrb[0].mxu0
  %v7953 = vadd.f32 %v7657, %v7952
  %7954 = vmatprep.mubr.f32.mxu0 0.0
  %7955 = vmatmul.mubr.f32.gmra.mrb[0].mxu0 %v7765
  %v7956 = vpop.f32.mrb[0].mxu0
  %v7957 = vadd.f32 %v7661, %v7956
  %v7958 = vpop.f32.mrb[0].mxu0
  %v7959 = vadd.f32 %v7663, %v7958
  %7960 = vmatprep.mubr.f32.mxu0 0.0
  %7961 = vmatmul.mubr.f32.gmra.mrb[0].mxu0 %v7768
  %v7962 = vpop.f32.mrb[0].mxu0
  %v7963 = vadd.f32 %v7667, %v7962
  %v7964 = vpop.f32.mrb[0].mxu0
  %v7965 = vadd.f32 %v7669, %v7964
  %7966 = vmatprep.mubr.f32.mxu0 0.0
  %7967 = vmatmul.mubr.f32.gmra.mrb[0].mxu0 %v7771
  %v7968 = vpop.f32.mrb[0].mxu0
  %v7969 = vadd.f32 %v7673, %v7968
  %v7970 = vpop.f32.mrb[0].mxu0
  %v7971 = vadd.f32 %v7675, %v7970
  %7972 = vmatprep.mubr.f32.mxu0 0.0
  %7973 = vmatmul.mubr.f32.gmra.mrb[0].mxu0 %v7774
  %v7974 = vpop.f32.mrb[0].mxu0
  %v7975 = vadd.f32 %v7679, %v7974
  %v7976 = vpop.f32.mrb[0].mxu0
  %v7977 = vadd.f32 %v7681, %v7976
  %7978 = vmatprep.mubr.f32.mxu0 0.0
  %7979 = vmatmul.mubr.f32.gmra.mrb[0].mxu0 %v7777
  %v7980 = vpop.f32.mrb[0].mxu0
  %v7981 = vadd.f32 %v7685, %v7980
  %v7982 = vpop.f32.mrb[0].mxu0
  %v7983 = vadd.f32 %v7687, %v7982
  %7984 = vmatprep.mubr.f32.mxu0 0.0
  %7985 = vmatmul.mubr.f32.gmra.mrb[0].mxu0 %v7780
  %v7986 = vpop.f32.mrb[0].mxu0
  %v7987 = vadd.f32 %v7691, %v7986
  %v7988 = vpop.f32.mrb[0].mxu0
  %v7989 = vadd.f32 %v7693, %v7988
  %7990 = vmatprep.mubr.f32.mxu0 0.0
  %7991 = vmatmul.mubr.f32.gmra.mrb[0].mxu0 %v7783
  %v7992 = vpop.f32.mrb[0].mxu0
  %v7993 = vadd.f32 %v7697, %v7992
  %v7994 = vpop.f32.mrb[0].mxu0
  %v7995 = vadd.f32 %v7699, %v7994
  %7996 = vmatprep.mubr.f32.mxu0 0.0
  %7997 = vmatmul.mubr.f32.gmra.mrb[0].mxu0 %v7786
  %v7998 = vpop.f32.mrb[0].mxu0
  %v7999 = vadd.f32 %v7703, %v7998
  %v8000 = vpop.f32.mrb[0].mxu0
  %v8001 = vadd.f32 %v7705, %v8000
  %8002 = vmatprep.mubr.f32.mxu0 0.0
  %8003 = vmatmul.mubr.f32.gmra.mrb[0].mxu0 %v7789
  %v8004 = vpop.f32.mrb[0].mxu0
  %v8005 = vadd.f32 %v7709, %v8004
  %v8006 = vpop.f32.mrb[0].mxu0
  %v8007 = vadd.f32 %v7711, %v8006
  %8008 = vmatprep.mubr.f32.mxu0 0.0
  %8009 = vmatmul.mubr.f32.gmra.mrb[0].mxu0 %v7792
  %v8010 = vpop.f32.mrb[0].mxu0
  %v8011 = vadd.f32 %v7715, %v8010
  %v8012 = vpop.f32.mrb[0].mxu0
  %v8013 = vadd.f32 %v7717, %v8012
  %8014 = vdwg.mxu0
  %s8015 = scalar_lea.vmem %s51, 400
  %v8016 = vld [vmem:[%s8015] sm:$0xff]
  %v8017 = vld [vmem:[%s8015 + $0x8] sm:$0xff]
  %v8018 = vld [vmem:[%s8015 + $0x10] sm:$0xff]
  %v8019 = vld [vmem:[%s8015 + $0x18] sm:$0xff]
  %v8020 = vld [vmem:[%s8015 + $0x20] sm:$0xff]
  %v8021 = vld [vmem:[%s8015 + $0x28] sm:$0xff]
  %v8022 = vld [vmem:[%s8015 + $0x30] sm:$0xff]
  %v8023 = vld [vmem:[%s8015 + $0x38] sm:$0xff]
  %v8024 = vld [vmem:[%s8015 + $0x40] sm:$0xff]
  %v8025 = vld [vmem:[%s8015 + $0x48] sm:$0xff]
  %v8026 = vld [vmem:[%s8015 + $0x50] sm:$0xff]
  %v8027 = vld [vmem:[%s8015 + $0x58] sm:$0xff]
  %v8028 = vld [vmem:[%s8015 + $0x60] sm:$0xff]
  %v8029 = vld [vmem:[%s8015 + $0x68] sm:$0xff]
  %v8030 = vld [vmem:[%s8015 + $0x70] sm:$0xff]
  %v8031 = vld [vmem:[%s8015 + $0x78] sm:$0xff]
  %v8032 = vld [vmem:[%s8015 + $0x80] sm:$0xff]
  %v8033 = vld [vmem:[%s8015 + $0x88] sm:$0xff]
  %v8034 = vld [vmem:[%s8015 + $0x90] sm:$0xff]
  %v8035 = vld [vmem:[%s8015 + $0x98] sm:$0xff]
  %v8036 = vld [vmem:[%s8015 + $0xa0] sm:$0xff]
  %v8037 = vld [vmem:[%s8015 + $0xa8] sm:$0xff]
  %v8038 = vld [vmem:[%s8015 + $0xb0] sm:$0xff]
  %v8039 = vld [vmem:[%s8015 + $0xb8] sm:$0xff]
  %v8040 = vld [vmem:[%s8015 + $0xc0] sm:$0xf]
  %s8041 = scalar_lea.vmem %s53, 416
  %v8042 = vld [vmem:[%s8041] sm:$0xff]
  %v8043 = vld [vmem:[%s8041 + $0x8] sm:$0xff]
  %v8044 = vld [vmem:[%s8041 + $0x10] sm:$0xff]
  %v8045 = vld [vmem:[%s8041 + $0x18] sm:$0xff]
  %v8046 = vld [vmem:[%s8041 + $0x20] sm:$0xff]
  %v8047 = vld [vmem:[%s8041 + $0x28] sm:$0xff]
  %v8048 = vld [vmem:[%s8041 + $0x30] sm:$0xff]
  %v8049 = vld [vmem:[%s8041 + $0x38] sm:$0xff]
  %v8050 = vld [vmem:[%s8041 + $0x40] sm:$0xff]
  %v8051 = vld [vmem:[%s8041 + $0x48] sm:$0xff]
  %v8052 = vld [vmem:[%s8041 + $0x50] sm:$0xff]
  %v8053 = vld [vmem:[%s8041 + $0x58] sm:$0xff]
  %v8054 = vld [vmem:[%s8041 + $0x60] sm:$0xff]
  %v8055 = vld [vmem:[%s8041 + $0x68] sm:$0xff]
  %v8056 = vld [vmem:[%s8041 + $0x70] sm:$0xff]
  %v8057 = vld [vmem:[%s8041 + $0x78] sm:$0xff]
  %v8058 = vld [vmem:[%s8041 + $0x80] sm:$0xff]
  %v8059 = vld [vmem:[%s8041 + $0x88] sm:$0xff]
  %v8060 = vld [vmem:[%s8041 + $0x90] sm:$0xff]
  %v8061 = vld [vmem:[%s8041 + $0x98] sm:$0xff]
  %v8062 = vld [vmem:[%s8041 + $0xa0] sm:$0xff]
  %v8063 = vld [vmem:[%s8041 + $0xa8] sm:$0xff]
  %v8064 = vld [vmem:[%s8041 + $0xb0] sm:$0xff]
  %v8065 = vld [vmem:[%s8041 + $0xb8] sm:$0xff]
  %v8066 = vld [vmem:[%s8041 + $0xc0] sm:$0xf]
  %v8067 = vld [vmem:[%s8041 + $0xc8] sm:$0xf]
  %v8069 = vsel %vm374, %v8066, 0
  %v8072 = vsel %vm374, %v8067, 0
  %8074 = vmatprep.subr.mxu0 %v8043
  %8075 = vmatpush1.msra.mxu0 %v8042
  %8076 = vmatprep.subr.mxu0 %v8045
  %8077 = vmatpush1.msra.mxu0 %v8044
  %8078 = vmatprep.subr.mxu0 %v8047
  %8079 = vmatpush1.msra.mxu0 %v8046
  %8080 = vmatprep.subr.mxu0 %v8049
  %8081 = vmatpush1.msra.mxu0 %v8048
  %8082 = vmatprep.subr.mxu0 %v8051
  %8083 = vmatpush1.msra.mxu0 %v8050
  %8084 = vmatprep.subr.mxu0 %v8053
  %8085 = vmatpush1.msra.mxu0 %v8052
  %8086 = vmatprep.subr.mxu0 %v8055
  %8087 = vmatpush1.msra.mxu0 %v8054
  %8088 = vmatprep.subr.mxu0 %v8057
  %8089 = vmatpush1.msra.mxu0 %v8056
  %8090 = vmatprep.subr.mxu0 %v8059
  %8091 = vmatpush1.msra.mxu0 %v8058
  %8092 = vmatprep.subr.mxu0 %v8061
  %8093 = vmatpush1.msra.mxu0 %v8060
  %8094 = vmatprep.subr.mxu0 %v8063
  %8095 = vmatpush1.msra.mxu0 %v8062
  %8096 = vmatprep.subr.mxu0 %v8065
  %8097 = vmatpush1.msra.mxu0 %v8064
  %8098 = vmatprep.subr.mxu0 %v8072
  %8099 = vmatpush1.msra.mxu0 %v8069
  %8100 = vmatprep.subr.mxu0 0.0
  %8101 = vmatpush1.msra.mxu0 0.0
  %8102 = vmatprep.subr.mxu0 0.0
  %8103 = vmatpush1.msra.mxu0 0.0
  %8104 = vmatprep.subr.mxu0 0.0
  %8105 = vmatpush1.msra.mxu0 0.0
  %8106 = vmatprep.subr.mxu0 0.0
  %8107 = vmatpush1.msra.mxu0 0.0
  %8108 = vmatprep.subr.mxu0 0.0
  %8109 = vmatpush1.msra.mxu0 0.0
  %8110 = vmatprep.subr.mxu0 0.0
  %8111 = vmatpush1.msra.mxu0 0.0
  %8112 = vmatprep.subr.mxu0 0.0
  %8113 = vmatpush1.msra.mxu0 0.0
  %8114 = vmatprep.subr.mxu0 0.0
  %8115 = vmatpush1.msra.mxu0 0.0
  %8116 = vmatprep.subr.mxu0 0.0
  %8117 = vmatpush1.msra.mxu0 0.0
  %8118 = vmatprep.subr.mxu0 0.0
  %8119 = vmatpush1.msra.mxu0 0.0
  %8120 = vmatprep.subr.mxu0 0.0
  %8121 = vmatpush1.msra.mxu0 0.0
  %8122 = vmatprep.subr.mxu0 0.0
  %8123 = vmatpush1.msra.mxu0 0.0
  %8124 = vmatprep.subr.mxu0 0.0
  %8125 = vmatpush1.msra.mxu0 0.0
  %8126 = vmatprep.subr.mxu0 0.0
  %8127 = vmatpush1.msra.mxu0 0.0
  %8128 = vmatprep.subr.mxu0 0.0
  %8129 = vmatpush1.msra.mxu0 0.0
  %8130 = vmatprep.subr.mxu0 0.0
  %8131 = vmatpush1.msra.mxu0 0.0
  %8132 = vmatprep.subr.mxu0 0.0
  %8133 = vmatpush1.msra.mxu0 0.0
  %8134 = vmatprep.subr.mxu0 0.0
  %8135 = vmatpush1.msra.mxu0 0.0
  %8136 = vmatprep.subr.mxu0 0.0
  %8137 = vmatpush1.msra.mxu0 0.0
  %8138 = vmatprep.mubr.f32.mxu0 0.0
  %8139 = vmatmul.mubr.f32.gmra.mrb[0].mxu0 %v7034
  %v8140 = vpop.f32.mrb[0].mxu0
  %v8141 = vadd.f32 0.0, %v8140
  %v8142 = vpop.f32.mrb[0].mxu0
  %v8143 = vadd.f32 0.0, %v8142
  %8144 = vmatprep.mubr.f32.mxu0 0.0
  %8145 = vmatmul.mubr.f32.gmra.mrb[0].mxu0 %v7037
  %v8146 = vpop.f32.mrb[0].mxu0
  %v8147 = vadd.f32 0.0, %v8146
  %v8148 = vpop.f32.mrb[0].mxu0
  %v8149 = vadd.f32 0.0, %v8148
  %8150 = vmatprep.mubr.f32.mxu0 0.0
  %8151 = vmatmul.mubr.f32.gmra.mrb[0].mxu0 %v7040
  %v8152 = vpop.f32.mrb[0].mxu0
  %v8153 = vadd.f32 0.0, %v8152
  %v8154 = vpop.f32.mrb[0].mxu0
  %v8155 = vadd.f32 0.0, %v8154
  %8156 = vmatprep.mubr.f32.mxu0 0.0
  %8157 = vmatmul.mubr.f32.gmra.mrb[0].mxu0 %v7043
  %v8158 = vpop.f32.mrb[0].mxu0
  %v8159 = vadd.f32 0.0, %v8158
  %v8160 = vpop.f32.mrb[0].mxu0
  %v8161 = vadd.f32 0.0, %v8160
  %8162 = vmatprep.mubr.f32.mxu0 0.0
  %8163 = vmatmul.mubr.f32.gmra.mrb[0].mxu0 %v7046
  %v8164 = vpop.f32.mrb[0].mxu0
  %v8165 = vadd.f32 0.0, %v8164
  %v8166 = vpop.f32.mrb[0].mxu0
  %v8167 = vadd.f32 0.0, %v8166
  %8168 = vmatprep.mubr.f32.mxu0 0.0
  %8169 = vmatmul.mubr.f32.gmra.mrb[0].mxu0 %v7049
  %v8170 = vpop.f32.mrb[0].mxu0
  %v8171 = vadd.f32 0.0, %v8170
  %v8172 = vpop.f32.mrb[0].mxu0
  %v8173 = vadd.f32 0.0, %v8172
  %8174 = vmatprep.mubr.f32.mxu0 0.0
  %8175 = vmatmul.mubr.f32.gmra.mrb[0].mxu0 %v7052
  %v8176 = vpop.f32.mrb[0].mxu0
  %v8177 = vadd.f32 0.0, %v8176
  %v8178 = vpop.f32.mrb[0].mxu0
  %v8179 = vadd.f32 0.0, %v8178
  %8180 = vmatprep.mubr.f32.mxu0 0.0
  %8181 = vmatmul.mubr.f32.gmra.mrb[0].mxu0 %v7055
  %v8182 = vpop.f32.mrb[0].mxu0
  %v8183 = vadd.f32 0.0, %v8182
  %v8184 = vpop.f32.mrb[0].mxu0
  %v8185 = vadd.f32 0.0, %v8184
  %8186 = vmatprep.mubr.f32.mxu0 0.0
  %8187 = vmatmul.mubr.f32.gmra.mrb[0].mxu0 %v7058
  %v8188 = vpop.f32.mrb[0].mxu0
  %v8189 = vadd.f32 0.0, %v8188
  %v8190 = vpop.f32.mrb[0].mxu0
  %v8191 = vadd.f32 0.0, %v8190
  %8192 = vmatprep.mubr.f32.mxu0 0.0
  %8193 = vmatmul.mubr.f32.gmra.mrb[0].mxu0 %v7061
  %v8194 = vpop.f32.mrb[0].mxu0
  %v8195 = vadd.f32 0.0, %v8194
  %v8196 = vpop.f32.mrb[0].mxu0
  %v8197 = vadd.f32 0.0, %v8196
  %8198 = vmatprep.mubr.f32.mxu0 0.0
  %8199 = vmatmul.mubr.f32.gmra.mrb[0].mxu0 %v7064
  %v8200 = vpop.f32.mrb[0].mxu0
  %v8201 = vadd.f32 0.0, %v8200
  %v8202 = vpop.f32.mrb[0].mxu0
  %v8203 = vadd.f32 0.0, %v8202
  %8204 = vmatprep.mubr.f32.mxu0 0.0
  %8205 = vmatmul.mubr.f32.gmra.mrb[0].mxu0 %v7067
  %v8206 = vpop.f32.mrb[0].mxu0
  %v8207 = vadd.f32 0.0, %v8206
  %v8208 = vpop.f32.mrb[0].mxu0
  %v8209 = vadd.f32 0.0, %v8208
  %8210 = vmatprep.mubr.f32.mxu0 0.0
  %8211 = vmatmul.mubr.f32.gmra.mrb[0].mxu0 %v7070
  %v8212 = vpop.f32.mrb[0].mxu0
  %v8213 = vadd.f32 0.0, %v8212
  %v8214 = vpop.f32.mrb[0].mxu0
  %v8215 = vadd.f32 0.0, %v8214
  %8216 = vdwg.mxu0
  %v8218 = vsel %vm7032, %v8016, 0
  %v8221 = vsel %vm7032, %v8017, 0
  %v8224 = vsel %vm7032, %v8018, 0
  %v8227 = vsel %vm7032, %v8019, 0
  %v8230 = vsel %vm7032, %v8020, 0
  %v8233 = vsel %vm7032, %v8021, 0
  %v8236 = vsel %vm7032, %v8022, 0
  %v8239 = vsel %vm7032, %v8023, 0
  %v8242 = vsel %vm7032, %v8024, 0
  %v8245 = vsel %vm7032, %v8025, 0
  %v8248 = vsel %vm7032, %v8026, 0
  %v8251 = vsel %vm7032, %v8027, 0
  %v8254 = vsel %vm7032, %v8028, 0
  %v8257 = vsel %vm7032, %v8029, 0
  %v8260 = vsel %vm7032, %v8030, 0
  %v8263 = vsel %vm7032, %v8031, 0
  %v8266 = vsel %vm7032, %v8032, 0
  %v8269 = vsel %vm7032, %v8033, 0
  %v8272 = vsel %vm7032, %v8034, 0
  %v8275 = vsel %vm7032, %v8035, 0
  %v8278 = vsel %vm7032, %v8036, 0
  %v8281 = vsel %vm7032, %v8037, 0
  %v8284 = vsel %vm7032, %v8038, 0
  %v8287 = vsel %vm7032, %v8039, 0
  %v8290 = vsel %vm7032, %v8040, 0
  %v8293 = vsel %vm374, %v8213, 0
  %v8296 = vsel %vm374, %v8215, 0
  %8298 = vmatprep.subr.mxu0 %v8143
  %8299 = vmatpush1.msra.mxu0 %v8141
  %8300 = vmatprep.subr.mxu0 %v8149
  %8301 = vmatpush1.msra.mxu0 %v8147
  %8302 = vmatprep.subr.mxu0 %v8155
  %8303 = vmatpush1.msra.mxu0 %v8153
  %8304 = vmatprep.subr.mxu0 %v8161
  %8305 = vmatpush1.msra.mxu0 %v8159
  %8306 = vmatprep.subr.mxu0 %v8167
  %8307 = vmatpush1.msra.mxu0 %v8165
  %8308 = vmatprep.subr.mxu0 %v8173
  %8309 = vmatpush1.msra.mxu0 %v8171
  %8310 = vmatprep.subr.mxu0 %v8179
  %8311 = vmatpush1.msra.mxu0 %v8177
  %8312 = vmatprep.subr.mxu0 %v8185
  %8313 = vmatpush1.msra.mxu0 %v8183
  %8314 = vmatprep.subr.mxu0 %v8191
  %8315 = vmatpush1.msra.mxu0 %v8189
  %8316 = vmatprep.subr.mxu0 %v8197
  %8317 = vmatpush1.msra.mxu0 %v8195
  %8318 = vmatprep.subr.mxu0 %v8203
  %8319 = vmatpush1.msra.mxu0 %v8201
  %8320 = vmatprep.subr.mxu0 %v8209
  %8321 = vmatpush1.msra.mxu0 %v8207
  %8322 = vmatprep.subr.mxu0 %v8296
  %8323 = vmatpush1.msra.mxu0 %v8293
  %8324 = vmatprep.subr.mxu0 0.0
  %8325 = vmatpush1.msra.mxu0 0.0
  %8326 = vmatprep.subr.mxu0 0.0
  %8327 = vmatpush1.msra.mxu0 0.0
  %8328 = vmatprep.subr.mxu0 0.0
  %8329 = vmatpush1.msra.mxu0 0.0
  %8330 = vmatprep.subr.mxu0 0.0
  %8331 = vmatpush1.msra.mxu0 0.0
  %8332 = vmatprep.subr.mxu0 0.0
  %8333 = vmatpush1.msra.mxu0 0.0
  %8334 = vmatprep.subr.mxu0 0.0
  %8335 = vmatpush1.msra.mxu0 0.0
  %8336 = vmatprep.subr.mxu0 0.0
  %8337 = vmatpush1.msra.mxu0 0.0
  %8338 = vmatprep.subr.mxu0 0.0
  %8339 = vmatpush1.msra.mxu0 0.0
  %8340 = vmatprep.subr.mxu0 0.0
  %8341 = vmatpush1.msra.mxu0 0.0
  %8342 = vmatprep.subr.mxu0 0.0
  %8343 = vmatpush1.msra.mxu0 0.0
  %8344 = vmatprep.subr.mxu0 0.0
  %8345 = vmatpush1.msra.mxu0 0.0
  %8346 = vmatprep.subr.mxu0 0.0
  %8347 = vmatpush1.msra.mxu0 0.0
  %8348 = vmatprep.subr.mxu0 0.0
  %8349 = vmatpush1.msra.mxu0 0.0
  %8350 = vmatprep.subr.mxu0 0.0
  %8351 = vmatpush1.msra.mxu0 0.0
  %8352 = vmatprep.subr.mxu0 0.0
  %8353 = vmatpush1.msra.mxu0 0.0
  %8354 = vmatprep.subr.mxu0 0.0
  %8355 = vmatpush1.msra.mxu0 0.0
  %8356 = vmatprep.subr.mxu0 0.0
  %8357 = vmatpush1.msra.mxu0 0.0
  %8358 = vmatprep.subr.mxu0 0.0
  %8359 = vmatpush1.msra.mxu0 0.0
  %8360 = vmatprep.subr.mxu0 0.0
  %8361 = vmatpush1.msra.mxu0 0.0
  %8362 = vmatprep.mubr.f32.mxu0 0.0
  %8363 = vmatmul.mubr.f32.gmra.mrb[0].mxu0 %v8218
  %v8364 = vpop.f32.mrb[0].mxu0
  %v8365 = vadd.f32 0.0, %v8364
  %v8366 = vpop.f32.mrb[0].mxu0
  %v8367 = vadd.f32 0.0, %v8366
  %8368 = vmatprep.mubr.f32.mxu0 0.0
  %8369 = vmatmul.mubr.f32.gmra.mrb[0].mxu0 %v8221
  %v8370 = vpop.f32.mrb[0].mxu0
  %v8371 = vadd.f32 0.0, %v8370
  %v8372 = vpop.f32.mrb[0].mxu0
  %v8373 = vadd.f32 0.0, %v8372
  %8374 = vmatprep.mubr.f32.mxu0 0.0
  %8375 = vmatmul.mubr.f32.gmra.mrb[0].mxu0 %v8224
  %v8376 = vpop.f32.mrb[0].mxu0
  %v8377 = vadd.f32 0.0, %v8376
  %v8378 = vpop.f32.mrb[0].mxu0
  %v8379 = vadd.f32 0.0, %v8378
  %8380 = vmatprep.mubr.f32.mxu0 0.0
  %8381 = vmatmul.mubr.f32.gmra.mrb[0].mxu0 %v8227
  %v8382 = vpop.f32.mrb[0].mxu0
  %v8383 = vadd.f32 0.0, %v8382
  %v8384 = vpop.f32.mrb[0].mxu0
  %v8385 = vadd.f32 0.0, %v8384
  %8386 = vmatprep.mubr.f32.mxu0 0.0
  %8387 = vmatmul.mubr.f32.gmra.mrb[0].mxu0 %v8230
  %v8388 = vpop.f32.mrb[0].mxu0
  %v8389 = vadd.f32 0.0, %v8388
  %v8390 = vpop.f32.mrb[0].mxu0
  %v8391 = vadd.f32 0.0, %v8390
  %8392 = vmatprep.mubr.f32.mxu0 0.0
  %8393 = vmatmul.mubr.f32.gmra.mrb[0].mxu0 %v8233
  %v8394 = vpop.f32.mrb[0].mxu0
  %v8395 = vadd.f32 0.0, %v8394
  %v8396 = vpop.f32.mrb[0].mxu0
  %v8397 = vadd.f32 0.0, %v8396
  %8398 = vmatprep.mubr.f32.mxu0 0.0
  %8399 = vmatmul.mubr.f32.gmra.mrb[0].mxu0 %v8236
  %v8400 = vpop.f32.mrb[0].mxu0
  %v8401 = vadd.f32 0.0, %v8400
  %v8402 = vpop.f32.mrb[0].mxu0
  %v8403 = vadd.f32 0.0, %v8402
  %8404 = vmatprep.mubr.f32.mxu0 0.0
  %8405 = vmatmul.mubr.f32.gmra.mrb[0].mxu0 %v8239
  %v8406 = vpop.f32.mrb[0].mxu0
  %v8407 = vadd.f32 0.0, %v8406
  %v8408 = vpop.f32.mrb[0].mxu0
  %v8409 = vadd.f32 0.0, %v8408
  %8410 = vmatprep.mubr.f32.mxu0 0.0
  %8411 = vmatmul.mubr.f32.gmra.mrb[0].mxu0 %v8242
  %v8412 = vpop.f32.mrb[0].mxu0
  %v8413 = vadd.f32 0.0, %v8412
  %v8414 = vpop.f32.mrb[0].mxu0
  %v8415 = vadd.f32 0.0, %v8414
  %8416 = vmatprep.mubr.f32.mxu0 0.0
  %8417 = vmatmul.mubr.f32.gmra.mrb[0].mxu0 %v8245
  %v8418 = vpop.f32.mrb[0].mxu0
  %v8419 = vadd.f32 0.0, %v8418
  %v8420 = vpop.f32.mrb[0].mxu0
  %v8421 = vadd.f32 0.0, %v8420
  %8422 = vmatprep.mubr.f32.mxu0 0.0
  %8423 = vmatmul.mubr.f32.gmra.mrb[0].mxu0 %v8248
  %v8424 = vpop.f32.mrb[0].mxu0
  %v8425 = vadd.f32 0.0, %v8424
  %v8426 = vpop.f32.mrb[0].mxu0
  %v8427 = vadd.f32 0.0, %v8426
  %8428 = vmatprep.mubr.f32.mxu0 0.0
  %8429 = vmatmul.mubr.f32.gmra.mrb[0].mxu0 %v8251
  %v8430 = vpop.f32.mrb[0].mxu0
  %v8431 = vadd.f32 0.0, %v8430
  %v8432 = vpop.f32.mrb[0].mxu0
  %v8433 = vadd.f32 0.0, %v8432
  %8434 = vmatprep.mubr.f32.mxu0 0.0
  %8435 = vmatmul.mubr.f32.gmra.mrb[0].mxu0 %v8254
  %v8436 = vpop.f32.mrb[0].mxu0
  %v8437 = vadd.f32 0.0, %v8436
  %v8438 = vpop.f32.mrb[0].mxu0
  %v8439 = vadd.f32 0.0, %v8438
  %8440 = vmatprep.mubr.f32.mxu0 0.0
  %8441 = vmatmul.mubr.f32.gmra.mrb[0].mxu0 %v8257
  %v8442 = vpop.f32.mrb[0].mxu0
  %v8443 = vadd.f32 0.0, %v8442
  %v8444 = vpop.f32.mrb[0].mxu0
  %v8445 = vadd.f32 0.0, %v8444
  %8446 = vmatprep.mubr.f32.mxu0 0.0
  %8447 = vmatmul.mubr.f32.gmra.mrb[0].mxu0 %v8260
  %v8448 = vpop.f32.mrb[0].mxu0
  %v8449 = vadd.f32 0.0, %v8448
  %v8450 = vpop.f32.mrb[0].mxu0
  %v8451 = vadd.f32 0.0, %v8450
  %8452 = vmatprep.mubr.f32.mxu0 0.0
  %8453 = vmatmul.mubr.f32.gmra.mrb[0].mxu0 %v8263
  %v8454 = vpop.f32.mrb[0].mxu0
  %v8455 = vadd.f32 0.0, %v8454
  %v8456 = vpop.f32.mrb[0].mxu0
  %v8457 = vadd.f32 0.0, %v8456
  %8458 = vmatprep.mubr.f32.mxu0 0.0
  %8459 = vmatmul.mubr.f32.gmra.mrb[0].mxu0 %v8266
  %v8460 = vpop.f32.mrb[0].mxu0
  %v8461 = vadd.f32 0.0, %v8460
  %v8462 = vpop.f32.mrb[0].mxu0
  %v8463 = vadd.f32 0.0, %v8462
  %8464 = vmatprep.mubr.f32.mxu0 0.0
  %8465 = vmatmul.mubr.f32.gmra.mrb[0].mxu0 %v8269
  %v8466 = vpop.f32.mrb[0].mxu0
  %v8467 = vadd.f32 0.0, %v8466
  %v8468 = vpop.f32.mrb[0].mxu0
  %v8469 = vadd.f32 0.0, %v8468
  %8470 = vmatprep.mubr.f32.mxu0 0.0
  %8471 = vmatmul.mubr.f32.gmra.mrb[0].mxu0 %v8272
  %v8472 = vpop.f32.mrb[0].mxu0
  %v8473 = vadd.f32 0.0, %v8472
  %v8474 = vpop.f32.mrb[0].mxu0
  %v8475 = vadd.f32 0.0, %v8474
  %8476 = vmatprep.mubr.f32.mxu0 0.0
  %8477 = vmatmul.mubr.f32.gmra.mrb[0].mxu0 %v8275
  %v8478 = vpop.f32.mrb[0].mxu0
  %v8479 = vadd.f32 0.0, %v8478
  %v8480 = vpop.f32.mrb[0].mxu0
  %v8481 = vadd.f32 0.0, %v8480
  %8482 = vmatprep.mubr.f32.mxu0 0.0
  %8483 = vmatmul.mubr.f32.gmra.mrb[0].mxu0 %v8278
  %v8484 = vpop.f32.mrb[0].mxu0
  %v8485 = vadd.f32 0.0, %v8484
  %v8486 = vpop.f32.mrb[0].mxu0
  %v8487 = vadd.f32 0.0, %v8486
  %8488 = vmatprep.mubr.f32.mxu0 0.0
  %8489 = vmatmul.mubr.f32.gmra.mrb[0].mxu0 %v8281
  %v8490 = vpop.f32.mrb[0].mxu0
  %v8491 = vadd.f32 0.0, %v8490
  %v8492 = vpop.f32.mrb[0].mxu0
  %v8493 = vadd.f32 0.0, %v8492
  %8494 = vmatprep.mubr.f32.mxu0 0.0
  %8495 = vmatmul.mubr.f32.gmra.mrb[0].mxu0 %v8284
  %v8496 = vpop.f32.mrb[0].mxu0
  %v8497 = vadd.f32 0.0, %v8496
  %v8498 = vpop.f32.mrb[0].mxu0
  %v8499 = vadd.f32 0.0, %v8498
  %8500 = vmatprep.mubr.f32.mxu0 0.0
  %8501 = vmatmul.mubr.f32.gmra.mrb[0].mxu0 %v8287
  %v8502 = vpop.f32.mrb[0].mxu0
  %v8503 = vadd.f32 0.0, %v8502
  %v8504 = vpop.f32.mrb[0].mxu0
  %v8505 = vadd.f32 0.0, %v8504
  %8506 = vmatprep.mubr.f32.mxu0 0.0
  %8507 = vmatmul.mubr.f32.gmra.mrb[0].mxu0 %v8290
  %v8508 = vpop.f32.mrb[0].mxu0
  %v8509 = vadd.f32 0.0, %v8508
  %v8510 = vpop.f32.mrb[0].mxu0
  %v8511 = vadd.f32 0.0, %v8510
  %8512 = vdwg.mxu0
  %v8513 = vadd.f32 %v7867, %v8365
  %v8514 = vadd.f32 %v7869, %v8367
  %v8515 = vadd.f32 %v7873, %v8371
  %v8516 = vadd.f32 %v7875, %v8373
  %v8517 = vadd.f32 %v7879, %v8377
  %v8518 = vadd.f32 %v7881, %v8379
  %v8519 = vadd.f32 %v7885, %v8383
  %v8520 = vadd.f32 %v7887, %v8385
  %v8521 = vadd.f32 %v7891, %v8389
  %v8522 = vadd.f32 %v7893, %v8391
  %v8523 = vadd.f32 %v7897, %v8395
  %v8524 = vadd.f32 %v7899, %v8397
  %v8525 = vadd.f32 %v7903, %v8401
  %v8526 = vadd.f32 %v7905, %v8403
  %v8527 = vadd.f32 %v7909, %v8407
  %v8528 = vadd.f32 %v7911, %v8409
  %v8529 = vadd.f32 %v7915, %v8413
  %v8530 = vadd.f32 %v7917, %v8415
  %v8531 = vadd.f32 %v7921, %v8419
  %v8532 = vadd.f32 %v7923, %v8421
  %v8533 = vadd.f32 %v7927, %v8425
  %v8534 = vadd.f32 %v7929, %v8427
  %v8535 = vadd.f32 %v7933, %v8431
  %v8536 = vadd.f32 %v7935, %v8433
  %v8537 = vadd.f32 %v7939, %v8437
  %v8538 = vadd.f32 %v7941, %v8439
  %v8539 = vadd.f32 %v7945, %v8443
  %v8540 = vadd.f32 %v7947, %v8445
  %v8541 = vadd.f32 %v7951, %v8449
  %v8542 = vadd.f32 %v7953, %v8451
  %v8543 = vadd.f32 %v7957, %v8455
  %v8544 = vadd.f32 %v7959, %v8457
  %v8545 = vadd.f32 %v7963, %v8461
  %v8546 = vadd.f32 %v7965, %v8463
  %v8547 = vadd.f32 %v7969, %v8467
  %v8548 = vadd.f32 %v7971, %v8469
  %v8549 = vadd.f32 %v7975, %v8473
  %v8550 = vadd.f32 %v7977, %v8475
  %v8551 = vadd.f32 %v7981, %v8479
  %v8552 = vadd.f32 %v7983, %v8481
  %v8553 = vadd.f32 %v7987, %v8485
  %v8554 = vadd.f32 %v7989, %v8487
  %v8555 = vadd.f32 %v7993, %v8491
  %v8556 = vadd.f32 %v7995, %v8493
  %v8557 = vadd.f32 %v7999, %v8497
  %v8558 = vadd.f32 %v8001, %v8499
  %v8559 = vadd.f32 %v8005, %v8503
  %v8560 = vadd.f32 %v8007, %v8505
  %v8561 = vadd.f32 %v8011, %v8509
  %v8562 = vadd.f32 %v8013, %v8511
  %v8563 = vld [vmem:[%s55] sm:$0xff]
  %v8564 = vld [vmem:[%s55 + $0x8] sm:$0xff]
  %v8565 = vld [vmem:[%s55 + $0x10] sm:$0xff]
  %v8566 = vld [vmem:[%s55 + $0x18] sm:$0xff]
  %v8567 = vld [vmem:[%s55 + $0x20] sm:$0xff]
  %v8568 = vld [vmem:[%s55 + $0x28] sm:$0xff]
  %v8569 = vld [vmem:[%s55 + $0x30] sm:$0xff]
  %v8570 = vld [vmem:[%s55 + $0x38] sm:$0xff]
  %v8571 = vld [vmem:[%s55 + $0x40] sm:$0xff]
  %v8572 = vld [vmem:[%s55 + $0x48] sm:$0xff]
  %v8573 = vld [vmem:[%s55 + $0x50] sm:$0xff]
  %v8574 = vld [vmem:[%s55 + $0x58] sm:$0xff]
  %v8575 = vld [vmem:[%s55 + $0x60] sm:$0xff]
  %v8576 = vld [vmem:[%s55 + $0x68] sm:$0xff]
  %v8577 = vld [vmem:[%s55 + $0x70] sm:$0xff]
  %v8578 = vld [vmem:[%s55 + $0x78] sm:$0xff]
  %v8579 = vld [vmem:[%s55 + $0x80] sm:$0xff]
  %v8580 = vld [vmem:[%s55 + $0x88] sm:$0xff]
  %v8581 = vld [vmem:[%s55 + $0x90] sm:$0xff]
  %v8582 = vld [vmem:[%s55 + $0x98] sm:$0xff]
  %v8583 = vld [vmem:[%s55 + $0xa0] sm:$0xff]
  %v8584 = vld [vmem:[%s55 + $0xa8] sm:$0xff]
  %v8585 = vld [vmem:[%s55 + $0xb0] sm:$0xff]
  %v8586 = vld [vmem:[%s55 + $0xb8] sm:$0xff]
  %v8587 = vld [vmem:[%s55 + $0xc0] sm:$0xf]
  %8589 = vset.pattern.permute.xlu0 0
  %8590 = vperm.xlu0 %8589, %v8563
  %v8591 = vpop.permute.xlu0 %8590
  %8594 = vset.pattern.permute.xlu0 0
  %8595 = vperm.xlu0 %8594, %v8564
  %v8596 = vpop.permute.xlu0 %8595
  %8599 = vset.pattern.permute.xlu0 0
  %8600 = vperm.xlu0 %8599, %v8565
  %v8601 = vpop.permute.xlu0 %8600
  %8604 = vset.pattern.permute.xlu0 0
  %8605 = vperm.xlu0 %8604, %v8566
  %v8606 = vpop.permute.xlu0 %8605
  %8609 = vset.pattern.permute.xlu0 0
  %8610 = vperm.xlu0 %8609, %v8567
  %v8611 = vpop.permute.xlu0 %8610
  %8614 = vset.pattern.permute.xlu0 0
  %8615 = vperm.xlu0 %8614, %v8568
  %v8616 = vpop.permute.xlu0 %8615
  %8619 = vset.pattern.permute.xlu0 0
  %8620 = vperm.xlu0 %8619, %v8569
  %v8621 = vpop.permute.xlu0 %8620
  %8624 = vset.pattern.permute.xlu0 0
  %8625 = vperm.xlu0 %8624, %v8570
  %v8626 = vpop.permute.xlu0 %8625
  %8629 = vset.pattern.permute.xlu0 0
  %8630 = vperm.xlu0 %8629, %v8571
  %v8631 = vpop.permute.xlu0 %8630
  %8634 = vset.pattern.permute.xlu0 0
  %8635 = vperm.xlu0 %8634, %v8572
  %v8636 = vpop.permute.xlu0 %8635
  %8639 = vset.pattern.permute.xlu0 0
  %8640 = vperm.xlu0 %8639, %v8573
  %v8641 = vpop.permute.xlu0 %8640
  %8644 = vset.pattern.permute.xlu0 0
  %8645 = vperm.xlu0 %8644, %v8574
  %v8646 = vpop.permute.xlu0 %8645
  %8649 = vset.pattern.permute.xlu0 0
  %8650 = vperm.xlu0 %8649, %v8575
  %v8651 = vpop.permute.xlu0 %8650
  %8654 = vset.pattern.permute.xlu0 0
  %8655 = vperm.xlu0 %8654, %v8576
  %v8656 = vpop.permute.xlu0 %8655
  %8659 = vset.pattern.permute.xlu0 0
  %8660 = vperm.xlu0 %8659, %v8577
  %v8661 = vpop.permute.xlu0 %8660
  %8664 = vset.pattern.permute.xlu0 0
  %8665 = vperm.xlu0 %8664, %v8578
  %v8666 = vpop.permute.xlu0 %8665
  %8669 = vset.pattern.permute.xlu0 0
  %8670 = vperm.xlu0 %8669, %v8579
  %v8671 = vpop.permute.xlu0 %8670
  %8674 = vset.pattern.permute.xlu0 0
  %8675 = vperm.xlu0 %8674, %v8580
  %v8676 = vpop.permute.xlu0 %8675
  %8679 = vset.pattern.permute.xlu0 0
  %8680 = vperm.xlu0 %8679, %v8581
  %v8681 = vpop.permute.xlu0 %8680
  %8684 = vset.pattern.permute.xlu0 0
  %8685 = vperm.xlu0 %8684, %v8582
  %v8686 = vpop.permute.xlu0 %8685
  %8689 = vset.pattern.permute.xlu0 0
  %8690 = vperm.xlu0 %8689, %v8583
  %v8691 = vpop.permute.xlu0 %8690
  %8694 = vset.pattern.permute.xlu0 0
  %8695 = vperm.xlu0 %8694, %v8584
  %v8696 = vpop.permute.xlu0 %8695
  %8699 = vset.pattern.permute.xlu0 0
  %8700 = vperm.xlu0 %8699, %v8585
  %v8701 = vpop.permute.xlu0 %8700
  %8704 = vset.pattern.permute.xlu0 0
  %8705 = vperm.xlu0 %8704, %v8586
  %v8706 = vpop.permute.xlu0 %8705
  %8709 = vset.pattern.permute.xlu0 0
  %8710 = vperm.xlu0 %8709, %v8587
  %v8711 = vpop.permute.xlu0 %8710
  %v8713 = vadd.f32 %v8513, %v8591
  %v8714 = vadd.f32 %v8514, %v8591
  %v8715 = vadd.f32 %v8515, %v8596
  %v8716 = vadd.f32 %v8516, %v8596
  %v8717 = vadd.f32 %v8517, %v8601
  %v8718 = vadd.f32 %v8518, %v8601
  %v8719 = vadd.f32 %v8519, %v8606
  %v8720 = vadd.f32 %v8520, %v8606
  %v8721 = vadd.f32 %v8521, %v8611
  %v8722 = vadd.f32 %v8522, %v8611
  %v8723 = vadd.f32 %v8523, %v8616
  %v8724 = vadd.f32 %v8524, %v8616
  %v8725 = vadd.f32 %v8525, %v8621
  %v8726 = vadd.f32 %v8526, %v8621
  %v8727 = vadd.f32 %v8527, %v8626
  %v8728 = vadd.f32 %v8528, %v8626
  %v8729 = vadd.f32 %v8529, %v8631
  %v8730 = vadd.f32 %v8530, %v8631
  %v8731 = vadd.f32 %v8531, %v8636
  %v8732 = vadd.f32 %v8532, %v8636
  %v8733 = vadd.f32 %v8533, %v8641
  %v8734 = vadd.f32 %v8534, %v8641
  %v8735 = vadd.f32 %v8535, %v8646
  %v8736 = vadd.f32 %v8536, %v8646
  %v8737 = vadd.f32 %v8537, %v8651
  %v8738 = vadd.f32 %v8538, %v8651
  %v8739 = vadd.f32 %v8539, %v8656
  %v8740 = vadd.f32 %v8540, %v8656
  %v8741 = vadd.f32 %v8541, %v8661
  %v8742 = vadd.f32 %v8542, %v8661
  %v8743 = vadd.f32 %v8543, %v8666
  %v8744 = vadd.f32 %v8544, %v8666
  %v8745 = vadd.f32 %v8545, %v8671
  %v8746 = vadd.f32 %v8546, %v8671
  %v8747 = vadd.f32 %v8547, %v8676
  %v8748 = vadd.f32 %v8548, %v8676
  %v8749 = vadd.f32 %v8549, %v8681
  %v8750 = vadd.f32 %v8550, %v8681
  %v8751 = vadd.f32 %v8551, %v8686
  %v8752 = vadd.f32 %v8552, %v8686
  %v8753 = vadd.f32 %v8553, %v8691
  %v8754 = vadd.f32 %v8554, %v8691
  %v8755 = vadd.f32 %v8555, %v8696
  %v8756 = vadd.f32 %v8556, %v8696
  %v8757 = vadd.f32 %v8557, %v8701
  %v8758 = vadd.f32 %v8558, %v8701
  %v8759 = vadd.f32 %v8559, %v8706
  %v8760 = vadd.f32 %v8560, %v8706
  %v8761 = vadd.f32 %v8561, %v8711
  %v8762 = vadd.f32 %v8562, %v8711
  %v8763 = vmax.f32 %v8713, 0.0
  %v8764 = vmax.f32 %v8714, 0.0
  %v8765 = vmax.f32 %v8715, 0.0
  %v8766 = vmax.f32 %v8716, 0.0
  %v8767 = vmax.f32 %v8717, 0.0
  %v8768 = vmax.f32 %v8718, 0.0
  %v8769 = vmax.f32 %v8719, 0.0
  %v8770 = vmax.f32 %v8720, 0.0
  %v8771 = vmax.f32 %v8721, 0.0
  %v8772 = vmax.f32 %v8722, 0.0
  %v8773 = vmax.f32 %v8723, 0.0
  %v8774 = vmax.f32 %v8724, 0.0
  %v8775 = vmax.f32 %v8725, 0.0
  %v8776 = vmax.f32 %v8726, 0.0
  %v8777 = vmax.f32 %v8727, 0.0
  %v8778 = vmax.f32 %v8728, 0.0
  %v8779 = vmax.f32 %v8729, 0.0
  %v8780 = vmax.f32 %v8730, 0.0
  %v8781 = vmax.f32 %v8731, 0.0
  %v8782 = vmax.f32 %v8732, 0.0
  %v8783 = vmax.f32 %v8733, 0.0
  %v8784 = vmax.f32 %v8734, 0.0
  %v8785 = vmax.f32 %v8735, 0.0
  %v8786 = vmax.f32 %v8736, 0.0
  %v8787 = vmax.f32 %v8737, 0.0
  %v8788 = vmax.f32 %v8738, 0.0
  %v8789 = vmax.f32 %v8739, 0.0
  %v8790 = vmax.f32 %v8740, 0.0
  %v8791 = vmax.f32 %v8741, 0.0
  %v8792 = vmax.f32 %v8742, 0.0
  %v8793 = vmax.f32 %v8743, 0.0
  %v8794 = vmax.f32 %v8744, 0.0
  %v8795 = vmax.f32 %v8745, 0.0
  %v8796 = vmax.f32 %v8746, 0.0
  %v8797 = vmax.f32 %v8747, 0.0
  %v8798 = vmax.f32 %v8748, 0.0
  %v8799 = vmax.f32 %v8749, 0.0
  %v8800 = vmax.f32 %v8750, 0.0
  %v8801 = vmax.f32 %v8751, 0.0
  %v8802 = vmax.f32 %v8752, 0.0
  %v8803 = vmax.f32 %v8753, 0.0
  %v8804 = vmax.f32 %v8754, 0.0
  %v8805 = vmax.f32 %v8755, 0.0
  %v8806 = vmax.f32 %v8756, 0.0
  %v8807 = vmax.f32 %v8757, 0.0
  %v8808 = vmax.f32 %v8758, 0.0
  %v8809 = vmax.f32 %v8759, 0.0
  %v8810 = vmax.f32 %v8760, 0.0
  %v8811 = vmax.f32 %v8761, 0.0
  %v8812 = vmax.f32 %v8762, 0.0
  %v8813 = vld [vmem:[%s57] sm:$0xff]
  %v8814 = vld [vmem:[%s57 + $0x8] sm:$0xff]
  %v8815 = vld [vmem:[%s57 + $0x10] sm:$0xff]
  %v8816 = vld [vmem:[%s57 + $0x18] sm:$0xff]
  %v8817 = vld [vmem:[%s57 + $0x20] sm:$0xff]
  %v8818 = vld [vmem:[%s57 + $0x28] sm:$0xff]
  %v8819 = vld [vmem:[%s57 + $0x30] sm:$0xf]
  %v8820 = vld [vmem:[%s57 + $0x38] sm:$0xf]
  %vm8821 = vcmask 556032
  %v8823 = vsel %vm8821, %v8814, 0
  %v8826 = vsel %vm8821, %v8816, 0
  %v8829 = vsel %vm8821, %v8818, 0
  %v8832 = vsel %vm8821, %v8820, 0
  %v8835 = vsel %vm374, %v8811, 0
  %v8838 = vsel %vm374, %v8812, 0
  %8840 = vmatprep.subr.mxu0 %v8764
  %8841 = vmatpush1.msra.mxu0 %v8763
  %8842 = vmatprep.subr.mxu0 %v8766
  %8843 = vmatpush1.msra.mxu0 %v8765
  %8844 = vmatprep.subr.mxu0 %v8768
  %8845 = vmatpush1.msra.mxu0 %v8767
  %8846 = vmatprep.subr.mxu0 %v8770
  %8847 = vmatpush1.msra.mxu0 %v8769
  %8848 = vmatprep.subr.mxu0 %v8772
  %8849 = vmatpush1.msra.mxu0 %v8771
  %8850 = vmatprep.subr.mxu0 %v8774
  %8851 = vmatpush1.msra.mxu0 %v8773
  %8852 = vmatprep.subr.mxu0 %v8776
  %8853 = vmatpush1.msra.mxu0 %v8775
  %8854 = vmatprep.subr.mxu0 %v8778
  %8855 = vmatpush1.msra.mxu0 %v8777
  %8856 = vmatprep.subr.mxu0 %v8780
  %8857 = vmatpush1.msra.mxu0 %v8779
  %8858 = vmatprep.subr.mxu0 %v8782
  %8859 = vmatpush1.msra.mxu0 %v8781
  %8860 = vmatprep.subr.mxu0 %v8784
  %8861 = vmatpush1.msra.mxu0 %v8783
  %8862 = vmatprep.subr.mxu0 %v8786
  %8863 = vmatpush1.msra.mxu0 %v8785
  %8864 = vmatprep.subr.mxu0 %v8788
  %8865 = vmatpush1.msra.mxu0 %v8787
  %8866 = vmatprep.subr.mxu0 %v8790
  %8867 = vmatpush1.msra.mxu0 %v8789
  %8868 = vmatprep.subr.mxu0 %v8792
  %8869 = vmatpush1.msra.mxu0 %v8791
  %8870 = vmatprep.subr.mxu0 %v8794
  %8871 = vmatpush1.msra.mxu0 %v8793
  %8872 = vmatprep.subr.mxu0 %v8796
  %8873 = vmatpush1.msra.mxu0 %v8795
  %8874 = vmatprep.subr.mxu0 %v8798
  %8875 = vmatpush1.msra.mxu0 %v8797
  %8876 = vmatprep.subr.mxu0 %v8800
  %8877 = vmatpush1.msra.mxu0 %v8799
  %8878 = vmatprep.subr.mxu0 %v8802
  %8879 = vmatpush1.msra.mxu0 %v8801
  %8880 = vmatprep.subr.mxu0 %v8804
  %8881 = vmatpush1.msra.mxu0 %v8803
  %8882 = vmatprep.subr.mxu0 %v8806
  %8883 = vmatpush1.msra.mxu0 %v8805
  %8884 = vmatprep.subr.mxu0 %v8808
  %8885 = vmatpush1.msra.mxu0 %v8807
  %8886 = vmatprep.subr.mxu0 %v8810
  %8887 = vmatpush1.msra.mxu0 %v8809
  %8888 = vmatprep.subr.mxu0 %v8838
  %8889 = vmatpush1.msra.mxu0 %v8835
  %8890 = vmatprep.subr.mxu0 0.0
  %8891 = vmatpush1.msra.mxu0 0.0
  %8892 = vmatprep.subr.mxu0 0.0
  %8893 = vmatpush1.msra.mxu0 0.0
  %8894 = vmatprep.subr.mxu0 0.0
  %8895 = vmatpush1.msra.mxu0 0.0
  %8896 = vmatprep.subr.mxu0 0.0
  %8897 = vmatpush1.msra.mxu0 0.0
  %8898 = vmatprep.subr.mxu0 0.0
  %8899 = vmatpush1.msra.mxu0 0.0
  %8900 = vmatprep.subr.mxu0 0.0
  %8901 = vmatpush1.msra.mxu0 0.0
  %8902 = vmatprep.subr.mxu0 0.0
  %8903 = vmatpush1.msra.mxu0 0.0
  %8904 = vmatprep.mubr.f32.mxu0 %v8823
  %8905 = vmatmul.mubr.f32.gmra.mrb[0].mxu0 %v8813
  %v8906 = vpop.f32.mrb[0].mxu0
  %v8907 = vadd.f32 0.0, %v8906
  %v8908 = vpop.f32.mrb[0].mxu0
  %v8909 = vadd.f32 0.0, %v8908
  %8910 = vmatprep.mubr.f32.mxu0 %v8826
  %8911 = vmatmul.mubr.f32.gmra.mrb[0].mxu0 %v8815
  %v8912 = vpop.f32.mrb[0].mxu0
  %v8913 = vadd.f32 0.0, %v8912
  %v8914 = vpop.f32.mrb[0].mxu0
  %v8915 = vadd.f32 0.0, %v8914
  %8916 = vmatprep.mubr.f32.mxu0 %v8829
  %8917 = vmatmul.mubr.f32.gmra.mrb[0].mxu0 %v8817
  %v8918 = vpop.f32.mrb[0].mxu0
  %v8919 = vadd.f32 0.0, %v8918
  %v8920 = vpop.f32.mrb[0].mxu0
  %v8921 = vadd.f32 0.0, %v8920
  %8922 = vmatprep.mubr.f32.mxu0 %v8832
  %8923 = vmatmul.mubr.f32.gmra.mrb[0].mxu0 %v8819
  %v8924 = vpop.f32.mrb[0].mxu0
  %v8925 = vadd.f32 0.0, %v8924
  %v8926 = vpop.f32.mrb[0].mxu0
  %v8927 = vadd.f32 0.0, %v8926
  %8928 = vdwg.mxu0
  %v8929 = vld [vmem:[%s59] sm:$0xff]
  %v8930 = vld [vmem:[%s59 + $0x8] sm:$0xff]
  %v8931 = vld [vmem:[%s59 + $0x10] sm:$0xff]
  %v8932 = vld [vmem:[%s59 + $0x18] sm:$0xff]
  %v8933 = vld [vmem:[%s59 + $0x20] sm:$0xff]
  %v8934 = vld [vmem:[%s59 + $0x28] sm:$0xff]
  %v8935 = vld [vmem:[%s59 + $0x30] sm:$0xff]
  %v8936 = vld [vmem:[%s59 + $0x38] sm:$0xff]
  %v8937 = vld [vmem:[%s59 + $0x40] sm:$0xff]
  %v8938 = vld [vmem:[%s59 + $0x48] sm:$0xff]
  %v8939 = vld [vmem:[%s59 + $0x50] sm:$0xff]
  %v8940 = vld [vmem:[%s59 + $0x58] sm:$0xff]
  %v8941 = vld [vmem:[%s59 + $0x60] sm:$0xff]
  %v8942 = vld [vmem:[%s59 + $0x68] sm:$0xff]
  %v8943 = vld [vmem:[%s59 + $0x70] sm:$0xff]
  %v8944 = vld [vmem:[%s59 + $0x78] sm:$0xff]
  %v8945 = vld [vmem:[%s59 + $0x80] sm:$0xff]
  %v8946 = vld [vmem:[%s59 + $0x88] sm:$0xff]
  %v8947 = vld [vmem:[%s59 + $0x90] sm:$0xff]
  %v8948 = vld [vmem:[%s59 + $0x98] sm:$0xff]
  %v8949 = vld [vmem:[%s59 + $0xa0] sm:$0xff]
  %v8950 = vld [vmem:[%s59 + $0xa8] sm:$0xff]
  %v8951 = vld [vmem:[%s59 + $0xb0] sm:$0xff]
  %v8952 = vld [vmem:[%s59 + $0xb8] sm:$0xff]
  %v8953 = vld [vmem:[%s59 + $0xc0] sm:$0xf]
  %s8954 = scalar_lea.vmem %s57, 64
  %v8955 = vld [vmem:[%s8954] sm:$0xff]
  %v8956 = vld [vmem:[%s8954 + $0x8] sm:$0xff]
  %v8957 = vld [vmem:[%s8954 + $0x10] sm:$0xff]
  %v8958 = vld [vmem:[%s8954 + $0x18] sm:$0xff]
  %v8959 = vld [vmem:[%s8954 + $0x20] sm:$0xff]
  %v8960 = vld [vmem:[%s8954 + $0x28] sm:$0xff]
  %v8961 = vld [vmem:[%s8954 + $0x30] sm:$0xf]
  %v8962 = vld [vmem:[%s8954 + $0x38] sm:$0xf]
  %v8964 = vsel %vm8821, %v8956, 0
  %v8967 = vsel %vm8821, %v8958, 0
  %v8970 = vsel %vm8821, %v8960, 0
  %v8973 = vsel %vm8821, %v8962, 0
  %8975 = vmatprep.subr.mxu0 %v8764
  %8976 = vmatpush1.msra.mxu0 %v8763
  %8977 = vmatprep.subr.mxu0 %v8766
  %8978 = vmatpush1.msra.mxu0 %v8765
  %8979 = vmatprep.subr.mxu0 %v8768
  %8980 = vmatpush1.msra.mxu0 %v8767
  %8981 = vmatprep.subr.mxu0 %v8770
  %8982 = vmatpush1.msra.mxu0 %v8769
  %8983 = vmatprep.subr.mxu0 %v8772
  %8984 = vmatpush1.msra.mxu0 %v8771
  %8985 = vmatprep.subr.mxu0 %v8774
  %8986 = vmatpush1.msra.mxu0 %v8773
  %8987 = vmatprep.subr.mxu0 %v8776
  %8988 = vmatpush1.msra.mxu0 %v8775
  %8989 = vmatprep.subr.mxu0 %v8778
  %8990 = vmatpush1.msra.mxu0 %v8777
  %8991 = vmatprep.subr.mxu0 %v8780
  %8992 = vmatpush1.msra.mxu0 %v8779
  %8993 = vmatprep.subr.mxu0 %v8782
  %8994 = vmatpush1.msra.mxu0 %v8781
  %8995 = vmatprep.subr.mxu0 %v8784
  %8996 = vmatpush1.msra.mxu0 %v8783
  %8997 = vmatprep.subr.mxu0 %v8786
  %8998 = vmatpush1.msra.mxu0 %v8785
  %8999 = vmatprep.subr.mxu0 %v8788
  %9000 = vmatpush1.msra.mxu0 %v8787
  %9001 = vmatprep.subr.mxu0 %v8790
  %9002 = vmatpush1.msra.mxu0 %v8789
  %9003 = vmatprep.subr.mxu0 %v8792
  %9004 = vmatpush1.msra.mxu0 %v8791
  %9005 = vmatprep.subr.mxu0 %v8794
  %9006 = vmatpush1.msra.mxu0 %v8793
  %9007 = vmatprep.subr.mxu0 %v8796
  %9008 = vmatpush1.msra.mxu0 %v8795
  %9009 = vmatprep.subr.mxu0 %v8798
  %9010 = vmatpush1.msra.mxu0 %v8797
  %9011 = vmatprep.subr.mxu0 %v8800
  %9012 = vmatpush1.msra.mxu0 %v8799
  %9013 = vmatprep.subr.mxu0 %v8802
  %9014 = vmatpush1.msra.mxu0 %v8801
  %9015 = vmatprep.subr.mxu0 %v8804
  %9016 = vmatpush1.msra.mxu0 %v8803
  %9017 = vmatprep.subr.mxu0 %v8806
  %9018 = vmatpush1.msra.mxu0 %v8805
  %9019 = vmatprep.subr.mxu0 %v8808
  %9020 = vmatpush1.msra.mxu0 %v8807
  %9021 = vmatprep.subr.mxu0 %v8810
  %9022 = vmatpush1.msra.mxu0 %v8809
  %9023 = vmatprep.subr.mxu0 %v8838
  %9024 = vmatpush1.msra.mxu0 %v8835
  %9025 = vmatprep.subr.mxu0 0.0
  %9026 = vmatpush1.msra.mxu0 0.0
  %9027 = vmatprep.subr.mxu0 0.0
  %9028 = vmatpush1.msra.mxu0 0.0
  %9029 = vmatprep.subr.mxu0 0.0
  %9030 = vmatpush1.msra.mxu0 0.0
  %9031 = vmatprep.subr.mxu0 0.0
  %9032 = vmatpush1.msra.mxu0 0.0
  %9033 = vmatprep.subr.mxu0 0.0
  %9034 = vmatpush1.msra.mxu0 0.0
  %9035 = vmatprep.subr.mxu0 0.0
  %9036 = vmatpush1.msra.mxu0 0.0
  %9037 = vmatprep.subr.mxu0 0.0
  %9038 = vmatpush1.msra.mxu0 0.0
  %9039 = vmatprep.mubr.f32.mxu0 %v8964
  %9040 = vmatmul.mubr.f32.gmra.mrb[0].mxu0 %v8955
  %v9041 = vpop.f32.mrb[0].mxu0
  %v9042 = vadd.f32 0.0, %v9041
  %v9043 = vpop.f32.mrb[0].mxu0
  %v9044 = vadd.f32 0.0, %v9043
  %9045 = vmatprep.mubr.f32.mxu0 %v8967
  %9046 = vmatmul.mubr.f32.gmra.mrb[0].mxu0 %v8957
  %v9047 = vpop.f32.mrb[0].mxu0
  %v9048 = vadd.f32 0.0, %v9047
  %v9049 = vpop.f32.mrb[0].mxu0
  %v9050 = vadd.f32 0.0, %v9049
  %9051 = vmatprep.mubr.f32.mxu0 %v8970
  %9052 = vmatmul.mubr.f32.gmra.mrb[0].mxu0 %v8959
  %v9053 = vpop.f32.mrb[0].mxu0
  %v9054 = vadd.f32 0.0, %v9053
  %v9055 = vpop.f32.mrb[0].mxu0
  %v9056 = vadd.f32 0.0, %v9055
  %9057 = vmatprep.mubr.f32.mxu0 %v8973
  %9058 = vmatmul.mubr.f32.gmra.mrb[0].mxu0 %v8961
  %v9059 = vpop.f32.mrb[0].mxu0
  %v9060 = vadd.f32 0.0, %v9059
  %v9061 = vpop.f32.mrb[0].mxu0
  %v9062 = vadd.f32 0.0, %v9061
  %9063 = vdwg.mxu0
  %s9064 = scalar_lea.vmem %s59, 200
  %v9065 = vld [vmem:[%s9064] sm:$0xff]
  %v9066 = vld [vmem:[%s9064 + $0x8] sm:$0xff]
  %v9067 = vld [vmem:[%s9064 + $0x10] sm:$0xff]
  %v9068 = vld [vmem:[%s9064 + $0x18] sm:$0xff]
  %v9069 = vld [vmem:[%s9064 + $0x20] sm:$0xff]
  %v9070 = vld [vmem:[%s9064 + $0x28] sm:$0xff]
  %v9071 = vld [vmem:[%s9064 + $0x30] sm:$0xff]
  %v9072 = vld [vmem:[%s9064 + $0x38] sm:$0xff]
  %v9073 = vld [vmem:[%s9064 + $0x40] sm:$0xff]
  %v9074 = vld [vmem:[%s9064 + $0x48] sm:$0xff]
  %v9075 = vld [vmem:[%s9064 + $0x50] sm:$0xff]
  %v9076 = vld [vmem:[%s9064 + $0x58] sm:$0xff]
  %v9077 = vld [vmem:[%s9064 + $0x60] sm:$0xff]
  %v9078 = vld [vmem:[%s9064 + $0x68] sm:$0xff]
  %v9079 = vld [vmem:[%s9064 + $0x70] sm:$0xff]
  %v9080 = vld [vmem:[%s9064 + $0x78] sm:$0xff]
  %v9081 = vld [vmem:[%s9064 + $0x80] sm:$0xff]
  %v9082 = vld [vmem:[%s9064 + $0x88] sm:$0xff]
  %v9083 = vld [vmem:[%s9064 + $0x90] sm:$0xff]
  %v9084 = vld [vmem:[%s9064 + $0x98] sm:$0xff]
  %v9085 = vld [vmem:[%s9064 + $0xa0] sm:$0xff]
  %v9086 = vld [vmem:[%s9064 + $0xa8] sm:$0xff]
  %v9087 = vld [vmem:[%s9064 + $0xb0] sm:$0xff]
  %v9088 = vld [vmem:[%s9064 + $0xb8] sm:$0xff]
  %v9089 = vld [vmem:[%s9064 + $0xc0] sm:$0xf]
  %v9091 = vsel %vm8821, %v9044, 0
  %v9094 = vsel %vm8821, %v9050, 0
  %v9097 = vsel %vm8821, %v9056, 0
  %v9100 = vsel %vm8821, %v9062, 0
  %v9103 = vsel %vm374, %v9089, 0
  %9105 = vmatprep.subr.mxu0 0.0
  %9106 = vmatpush1.msra.mxu0 %v9065
  %9107 = vmatprep.subr.mxu0 0.0
  %9108 = vmatpush1.msra.mxu0 %v9066
  %9109 = vmatprep.subr.mxu0 0.0
  %9110 = vmatpush1.msra.mxu0 %v9067
  %9111 = vmatprep.subr.mxu0 0.0
  %9112 = vmatpush1.msra.mxu0 %v9068
  %9113 = vmatprep.subr.mxu0 0.0
  %9114 = vmatpush1.msra.mxu0 %v9069
  %9115 = vmatprep.subr.mxu0 0.0
  %9116 = vmatpush1.msra.mxu0 %v9070
  %9117 = vmatprep.subr.mxu0 0.0
  %9118 = vmatpush1.msra.mxu0 %v9071
  %9119 = vmatprep.subr.mxu0 0.0
  %9120 = vmatpush1.msra.mxu0 %v9072
  %9121 = vmatprep.subr.mxu0 0.0
  %9122 = vmatpush1.msra.mxu0 %v9073
  %9123 = vmatprep.subr.mxu0 0.0
  %9124 = vmatpush1.msra.mxu0 %v9074
  %9125 = vmatprep.subr.mxu0 0.0
  %9126 = vmatpush1.msra.mxu0 %v9075
  %9127 = vmatprep.subr.mxu0 0.0
  %9128 = vmatpush1.msra.mxu0 %v9076
  %9129 = vmatprep.subr.mxu0 0.0
  %9130 = vmatpush1.msra.mxu0 %v9077
  %9131 = vmatprep.subr.mxu0 0.0
  %9132 = vmatpush1.msra.mxu0 %v9078
  %9133 = vmatprep.subr.mxu0 0.0
  %9134 = vmatpush1.msra.mxu0 %v9079
  %9135 = vmatprep.subr.mxu0 0.0
  %9136 = vmatpush1.msra.mxu0 %v9080
  %9137 = vmatprep.subr.mxu0 0.0
  %9138 = vmatpush1.msra.mxu0 %v9081
  %9139 = vmatprep.subr.mxu0 0.0
  %9140 = vmatpush1.msra.mxu0 %v9082
  %9141 = vmatprep.subr.mxu0 0.0
  %9142 = vmatpush1.msra.mxu0 %v9083
  %9143 = vmatprep.subr.mxu0 0.0
  %9144 = vmatpush1.msra.mxu0 %v9084
  %9145 = vmatprep.subr.mxu0 0.0
  %9146 = vmatpush1.msra.mxu0 %v9085
  %9147 = vmatprep.subr.mxu0 0.0
  %9148 = vmatpush1.msra.mxu0 %v9086
  %9149 = vmatprep.subr.mxu0 0.0
  %9150 = vmatpush1.msra.mxu0 %v9087
  %9151 = vmatprep.subr.mxu0 0.0
  %9152 = vmatpush1.msra.mxu0 %v9088
  %9153 = vmatprep.subr.mxu0 0.0
  %9154 = vmatpush1.msra.mxu0 %v9103
  %9155 = vmatprep.subr.mxu0 0.0
  %9156 = vmatpush1.msra.mxu0 0.0
  %9157 = vmatprep.subr.mxu0 0.0
  %9158 = vmatpush1.msra.mxu0 0.0
  %9159 = vmatprep.subr.mxu0 0.0
  %9160 = vmatpush1.msra.mxu0 0.0
  %9161 = vmatprep.subr.mxu0 0.0
  %9162 = vmatpush1.msra.mxu0 0.0
  %9163 = vmatprep.subr.mxu0 0.0
  %9164 = vmatpush1.msra.mxu0 0.0
  %9165 = vmatprep.subr.mxu0 0.0
  %9166 = vmatpush1.msra.mxu0 0.0
  %9167 = vmatprep.subr.mxu0 0.0
  %9168 = vmatpush1.msra.mxu0 0.0
  %9169 = vmatprep.mubr.f32.mxu0 %v9091
  %9170 = vmatmul.mubr.f32.gmra.mrb[0].mxu0 %v9042
  %v9171 = vpop.f32.mrb[0].mxu0
  %v9172 = vadd.f32 0.0, %v9171
  %v9173 = vpop.f32.mrb[0].mxu0
  %9174 = vmatprep.mubr.f32.mxu0 %v9094
  %9175 = vmatmul.mubr.f32.gmra.mrb[0].mxu0 %v9048
  %v9176 = vpop.f32.mrb[0].mxu0
  %v9177 = vadd.f32 0.0, %v9176
  %v9178 = vpop.f32.mrb[0].mxu0
  %9179 = vmatprep.mubr.f32.mxu0 %v9097
  %9180 = vmatmul.mubr.f32.gmra.mrb[0].mxu0 %v9054
  %v9181 = vpop.f32.mrb[0].mxu0
  %v9182 = vadd.f32 0.0, %v9181
  %v9183 = vpop.f32.mrb[0].mxu0
  %9184 = vmatprep.mubr.f32.mxu0 %v9100
  %9185 = vmatmul.mubr.f32.gmra.mrb[0].mxu0 %v9060
  %v9186 = vpop.f32.mrb[0].mxu0
  %v9187 = vadd.f32 0.0, %v9186
  %v9188 = vpop.f32.mrb[0].mxu0
  %9189 = vdwg.mxu0
  %v9191 = vsel %vm8821, %v8909, 0
  %v9194 = vsel %vm8821, %v8915, 0
  %v9197 = vsel %vm8821, %v8921, 0
  %v9200 = vsel %vm8821, %v8927, 0
  %v9203 = vsel %vm374, %v8953, 0
  %9205 = vmatprep.subr.mxu0 0.0
  %9206 = vmatpush1.msra.mxu0 %v8929
  %9207 = vmatprep.subr.mxu0 0.0
  %9208 = vmatpush1.msra.mxu0 %v8930
  %9209 = vmatprep.subr.mxu0 0.0
  %9210 = vmatpush1.msra.mxu0 %v8931
  %9211 = vmatprep.subr.mxu0 0.0
  %9212 = vmatpush1.msra.mxu0 %v8932
  %9213 = vmatprep.subr.mxu0 0.0
  %9214 = vmatpush1.msra.mxu0 %v8933
  %9215 = vmatprep.subr.mxu0 0.0
  %9216 = vmatpush1.msra.mxu0 %v8934
  %9217 = vmatprep.subr.mxu0 0.0
  %9218 = vmatpush1.msra.mxu0 %v8935
  %9219 = vmatprep.subr.mxu0 0.0
  %9220 = vmatpush1.msra.mxu0 %v8936
  %9221 = vmatprep.subr.mxu0 0.0
  %9222 = vmatpush1.msra.mxu0 %v8937
  %9223 = vmatprep.subr.mxu0 0.0
  %9224 = vmatpush1.msra.mxu0 %v8938
  %9225 = vmatprep.subr.mxu0 0.0
  %9226 = vmatpush1.msra.mxu0 %v8939
  %9227 = vmatprep.subr.mxu0 0.0
  %9228 = vmatpush1.msra.mxu0 %v8940
  %9229 = vmatprep.subr.mxu0 0.0
  %9230 = vmatpush1.msra.mxu0 %v8941
  %9231 = vmatprep.subr.mxu0 0.0
  %9232 = vmatpush1.msra.mxu0 %v8942
  %9233 = vmatprep.subr.mxu0 0.0
  %9234 = vmatpush1.msra.mxu0 %v8943
  %9235 = vmatprep.subr.mxu0 0.0
  %9236 = vmatpush1.msra.mxu0 %v8944
  %9237 = vmatprep.subr.mxu0 0.0
  %9238 = vmatpush1.msra.mxu0 %v8945
  %9239 = vmatprep.subr.mxu0 0.0
  %9240 = vmatpush1.msra.mxu0 %v8946
  %9241 = vmatprep.subr.mxu0 0.0
  %9242 = vmatpush1.msra.mxu0 %v8947
  %9243 = vmatprep.subr.mxu0 0.0
  %9244 = vmatpush1.msra.mxu0 %v8948
  %9245 = vmatprep.subr.mxu0 0.0
  %9246 = vmatpush1.msra.mxu0 %v8949
  %9247 = vmatprep.subr.mxu0 0.0
  %9248 = vmatpush1.msra.mxu0 %v8950
  %9249 = vmatprep.subr.mxu0 0.0
  %9250 = vmatpush1.msra.mxu0 %v8951
  %9251 = vmatprep.subr.mxu0 0.0
  %9252 = vmatpush1.msra.mxu0 %v8952
  %9253 = vmatprep.subr.mxu0 0.0
  %9254 = vmatpush1.msra.mxu0 %v9203
  %9255 = vmatprep.subr.mxu0 0.0
  %9256 = vmatpush1.msra.mxu0 0.0
  %9257 = vmatprep.subr.mxu0 0.0
  %9258 = vmatpush1.msra.mxu0 0.0
  %9259 = vmatprep.subr.mxu0 0.0
  %9260 = vmatpush1.msra.mxu0 0.0
  %9261 = vmatprep.subr.mxu0 0.0
  %9262 = vmatpush1.msra.mxu0 0.0
  %9263 = vmatprep.subr.mxu0 0.0
  %9264 = vmatpush1.msra.mxu0 0.0
  %9265 = vmatprep.subr.mxu0 0.0
  %9266 = vmatpush1.msra.mxu0 0.0
  %9267 = vmatprep.subr.mxu0 0.0
  %9268 = vmatpush1.msra.mxu0 0.0
  %9269 = vmatprep.mubr.f32.mxu0 %v9191
  %9270 = vmatmul.mubr.f32.gmra.mrb[0].mxu0 %v8907
  %v9271 = vpop.f32.mrb[0].mxu0
  %v9272 = vadd.f32 %v9172, %v9271
  %v9273 = vpop.f32.mrb[0].mxu0
  %9274 = vmatprep.mubr.f32.mxu0 %v9194
  %9275 = vmatmul.mubr.f32.gmra.mrb[0].mxu0 %v8913
  %v9276 = vpop.f32.mrb[0].mxu0
  %v9277 = vadd.f32 %v9177, %v9276
  %v9278 = vpop.f32.mrb[0].mxu0
  %9279 = vmatprep.mubr.f32.mxu0 %v9197
  %9280 = vmatmul.mubr.f32.gmra.mrb[0].mxu0 %v8919
  %v9281 = vpop.f32.mrb[0].mxu0
  %v9282 = vadd.f32 %v9182, %v9281
  %v9283 = vpop.f32.mrb[0].mxu0
  %9284 = vmatprep.mubr.f32.mxu0 %v9200
  %9285 = vmatmul.mubr.f32.gmra.mrb[0].mxu0 %v8925
  %v9286 = vpop.f32.mrb[0].mxu0
  %v9287 = vadd.f32 %v9187, %v9286
  %v9288 = vpop.f32.mrb[0].mxu0
  %9289 = vdwg.mxu0
  %s9290 = scalar_lea.vmem %s57, 128
  %v9291 = vld [vmem:[%s9290] sm:$0xff]
  %v9292 = vld [vmem:[%s9290 + $0x8] sm:$0xff]
  %v9293 = vld [vmem:[%s9290 + $0x10] sm:$0xff]
  %v9294 = vld [vmem:[%s9290 + $0x18] sm:$0xff]
  %v9295 = vld [vmem:[%s9290 + $0x20] sm:$0xff]
  %v9296 = vld [vmem:[%s9290 + $0x28] sm:$0xff]
  %v9297 = vld [vmem:[%s9290 + $0x30] sm:$0xf]
  %v9298 = vld [vmem:[%s9290 + $0x38] sm:$0xf]
  %v9300 = vsel %vm8821, %v9292, 0
  %v9303 = vsel %vm8821, %v9294, 0
  %v9306 = vsel %vm8821, %v9296, 0
  %v9309 = vsel %vm8821, %v9298, 0
  %9311 = vmatprep.subr.mxu0 %v8764
  %9312 = vmatpush1.msra.mxu0 %v8763
  %9313 = vmatprep.subr.mxu0 %v8766
  %9314 = vmatpush1.msra.mxu0 %v8765
  %9315 = vmatprep.subr.mxu0 %v8768
  %9316 = vmatpush1.msra.mxu0 %v8767
  %9317 = vmatprep.subr.mxu0 %v8770
  %9318 = vmatpush1.msra.mxu0 %v8769
  %9319 = vmatprep.subr.mxu0 %v8772
  %9320 = vmatpush1.msra.mxu0 %v8771
  %9321 = vmatprep.subr.mxu0 %v8774
  %9322 = vmatpush1.msra.mxu0 %v8773
  %9323 = vmatprep.subr.mxu0 %v8776
  %9324 = vmatpush1.msra.mxu0 %v8775
  %9325 = vmatprep.subr.mxu0 %v8778
  %9326 = vmatpush1.msra.mxu0 %v8777
  %9327 = vmatprep.subr.mxu0 %v8780
  %9328 = vmatpush1.msra.mxu0 %v8779
  %9329 = vmatprep.subr.mxu0 %v8782
  %9330 = vmatpush1.msra.mxu0 %v8781
  %9331 = vmatprep.subr.mxu0 %v8784
  %9332 = vmatpush1.msra.mxu0 %v8783
  %9333 = vmatprep.subr.mxu0 %v8786
  %9334 = vmatpush1.msra.mxu0 %v8785
  %9335 = vmatprep.subr.mxu0 %v8788
  %9336 = vmatpush1.msra.mxu0 %v8787
  %9337 = vmatprep.subr.mxu0 %v8790
  %9338 = vmatpush1.msra.mxu0 %v8789
  %9339 = vmatprep.subr.mxu0 %v8792
  %9340 = vmatpush1.msra.mxu0 %v8791
  %9341 = vmatprep.subr.mxu0 %v8794
  %9342 = vmatpush1.msra.mxu0 %v8793
  %9343 = vmatprep.subr.mxu0 %v8796
  %9344 = vmatpush1.msra.mxu0 %v8795
  %9345 = vmatprep.subr.mxu0 %v8798
  %9346 = vmatpush1.msra.mxu0 %v8797
  %9347 = vmatprep.subr.mxu0 %v8800
  %9348 = vmatpush1.msra.mxu0 %v8799
  %9349 = vmatprep.subr.mxu0 %v8802
  %9350 = vmatpush1.msra.mxu0 %v8801
  %9351 = vmatprep.subr.mxu0 %v8804
  %9352 = vmatpush1.msra.mxu0 %v8803
  %9353 = vmatprep.subr.mxu0 %v8806
  %9354 = vmatpush1.msra.mxu0 %v8805
  %9355 = vmatprep.subr.mxu0 %v8808
  %9356 = vmatpush1.msra.mxu0 %v8807
  %9357 = vmatprep.subr.mxu0 %v8810
  %9358 = vmatpush1.msra.mxu0 %v8809
  %9359 = vmatprep.subr.mxu0 %v8838
  %9360 = vmatpush1.msra.mxu0 %v8835
  %9361 = vmatprep.subr.mxu0 0.0
  %9362 = vmatpush1.msra.mxu0 0.0
  %9363 = vmatprep.subr.mxu0 0.0
  %9364 = vmatpush1.msra.mxu0 0.0
  %9365 = vmatprep.subr.mxu0 0.0
  %9366 = vmatpush1.msra.mxu0 0.0
  %9367 = vmatprep.subr.mxu0 0.0
  %9368 = vmatpush1.msra.mxu0 0.0
  %9369 = vmatprep.subr.mxu0 0.0
  %9370 = vmatpush1.msra.mxu0 0.0
  %9371 = vmatprep.subr.mxu0 0.0
  %9372 = vmatpush1.msra.mxu0 0.0
  %9373 = vmatprep.subr.mxu0 0.0
  %9374 = vmatpush1.msra.mxu0 0.0
  %9375 = vmatprep.mubr.f32.mxu0 %v9300
  %9376 = vmatmul.mubr.f32.gmra.mrb[0].mxu0 %v9291
  %v9377 = vpop.f32.mrb[0].mxu0
  %v9378 = vadd.f32 0.0, %v9377
  %v9379 = vpop.f32.mrb[0].mxu0
  %v9380 = vadd.f32 0.0, %v9379
  %9381 = vmatprep.mubr.f32.mxu0 %v9303
  %9382 = vmatmul.mubr.f32.gmra.mrb[0].mxu0 %v9293
  %v9383 = vpop.f32.mrb[0].mxu0
  %v9384 = vadd.f32 0.0, %v9383
  %v9385 = vpop.f32.mrb[0].mxu0
  %v9386 = vadd.f32 0.0, %v9385
  %9387 = vmatprep.mubr.f32.mxu0 %v9306
  %9388 = vmatmul.mubr.f32.gmra.mrb[0].mxu0 %v9295
  %v9389 = vpop.f32.mrb[0].mxu0
  %v9390 = vadd.f32 0.0, %v9389
  %v9391 = vpop.f32.mrb[0].mxu0
  %v9392 = vadd.f32 0.0, %v9391
  %9393 = vmatprep.mubr.f32.mxu0 %v9309
  %9394 = vmatmul.mubr.f32.gmra.mrb[0].mxu0 %v9297
  %v9395 = vpop.f32.mrb[0].mxu0
  %v9396 = vadd.f32 0.0, %v9395
  %v9397 = vpop.f32.mrb[0].mxu0
  %v9398 = vadd.f32 0.0, %v9397
  %9399 = vdwg.mxu0
  %s9400 = scalar_lea.vmem %s59, 400
  %v9401 = vld [vmem:[%s9400] sm:$0xff]
  %v9402 = vld [vmem:[%s9400 + $0x8] sm:$0xff]
  %v9403 = vld [vmem:[%s9400 + $0x10] sm:$0xff]
  %v9404 = vld [vmem:[%s9400 + $0x18] sm:$0xff]
  %v9405 = vld [vmem:[%s9400 + $0x20] sm:$0xff]
  %v9406 = vld [vmem:[%s9400 + $0x28] sm:$0xff]
  %v9407 = vld [vmem:[%s9400 + $0x30] sm:$0xff]
  %v9408 = vld [vmem:[%s9400 + $0x38] sm:$0xff]
  %v9409 = vld [vmem:[%s9400 + $0x40] sm:$0xff]
  %v9410 = vld [vmem:[%s9400 + $0x48] sm:$0xff]
  %v9411 = vld [vmem:[%s9400 + $0x50] sm:$0xff]
  %v9412 = vld [vmem:[%s9400 + $0x58] sm:$0xff]
  %v9413 = vld [vmem:[%s9400 + $0x60] sm:$0xff]
  %v9414 = vld [vmem:[%s9400 + $0x68] sm:$0xff]
  %v9415 = vld [vmem:[%s9400 + $0x70] sm:$0xff]
  %v9416 = vld [vmem:[%s9400 + $0x78] sm:$0xff]
  %v9417 = vld [vmem:[%s9400 + $0x80] sm:$0xff]
  %v9418 = vld [vmem:[%s9400 + $0x88] sm:$0xff]
  %v9419 = vld [vmem:[%s9400 + $0x90] sm:$0xff]
  %v9420 = vld [vmem:[%s9400 + $0x98] sm:$0xff]
  %v9421 = vld [vmem:[%s9400 + $0xa0] sm:$0xff]
  %v9422 = vld [vmem:[%s9400 + $0xa8] sm:$0xff]
  %v9423 = vld [vmem:[%s9400 + $0xb0] sm:$0xff]
  %v9424 = vld [vmem:[%s9400 + $0xb8] sm:$0xff]
  %v9425 = vld [vmem:[%s9400 + $0xc0] sm:$0xf]
  %v9427 = vsel %vm8821, %v9380, 0
  %v9430 = vsel %vm8821, %v9386, 0
  %v9433 = vsel %vm8821, %v9392, 0
  %v9436 = vsel %vm8821, %v9398, 0
  %v9439 = vsel %vm374, %v9425, 0
  %9441 = vmatprep.subr.mxu0 0.0
  %9442 = vmatpush1.msra.mxu0 %v9401
  %9443 = vmatprep.subr.mxu0 0.0
  %9444 = vmatpush1.msra.mxu0 %v9402
  %9445 = vmatprep.subr.mxu0 0.0
  %9446 = vmatpush1.msra.mxu0 %v9403
  %9447 = vmatprep.subr.mxu0 0.0
  %9448 = vmatpush1.msra.mxu0 %v9404
  %9449 = vmatprep.subr.mxu0 0.0
  %9450 = vmatpush1.msra.mxu0 %v9405
  %9451 = vmatprep.subr.mxu0 0.0
  %9452 = vmatpush1.msra.mxu0 %v9406
  %9453 = vmatprep.subr.mxu0 0.0
  %9454 = vmatpush1.msra.mxu0 %v9407
  %9455 = vmatprep.subr.mxu0 0.0
  %9456 = vmatpush1.msra.mxu0 %v9408
  %9457 = vmatprep.subr.mxu0 0.0
  %9458 = vmatpush1.msra.mxu0 %v9409
  %9459 = vmatprep.subr.mxu0 0.0
  %9460 = vmatpush1.msra.mxu0 %v9410
  %9461 = vmatprep.subr.mxu0 0.0
  %9462 = vmatpush1.msra.mxu0 %v9411
  %9463 = vmatprep.subr.mxu0 0.0
  %9464 = vmatpush1.msra.mxu0 %v9412
  %9465 = vmatprep.subr.mxu0 0.0
  %9466 = vmatpush1.msra.mxu0 %v9413
  %9467 = vmatprep.subr.mxu0 0.0
  %9468 = vmatpush1.msra.mxu0 %v9414
  %9469 = vmatprep.subr.mxu0 0.0
  %9470 = vmatpush1.msra.mxu0 %v9415
  %9471 = vmatprep.subr.mxu0 0.0
  %9472 = vmatpush1.msra.mxu0 %v9416
  %9473 = vmatprep.subr.mxu0 0.0
  %9474 = vmatpush1.msra.mxu0 %v9417
  %9475 = vmatprep.subr.mxu0 0.0
  %9476 = vmatpush1.msra.mxu0 %v9418
  %9477 = vmatprep.subr.mxu0 0.0
  %9478 = vmatpush1.msra.mxu0 %v9419
  %9479 = vmatprep.subr.mxu0 0.0
  %9480 = vmatpush1.msra.mxu0 %v9420
  %9481 = vmatprep.subr.mxu0 0.0
  %9482 = vmatpush1.msra.mxu0 %v9421
  %9483 = vmatprep.subr.mxu0 0.0
  %9484 = vmatpush1.msra.mxu0 %v9422
  %9485 = vmatprep.subr.mxu0 0.0
  %9486 = vmatpush1.msra.mxu0 %v9423
  %9487 = vmatprep.subr.mxu0 0.0
  %9488 = vmatpush1.msra.mxu0 %v9424
  %9489 = vmatprep.subr.mxu0 0.0
  %9490 = vmatpush1.msra.mxu0 %v9439
  %9491 = vmatprep.subr.mxu0 0.0
  %9492 = vmatpush1.msra.mxu0 0.0
  %9493 = vmatprep.subr.mxu0 0.0
  %9494 = vmatpush1.msra.mxu0 0.0
  %9495 = vmatprep.subr.mxu0 0.0
  %9496 = vmatpush1.msra.mxu0 0.0
  %9497 = vmatprep.subr.mxu0 0.0
  %9498 = vmatpush1.msra.mxu0 0.0
  %9499 = vmatprep.subr.mxu0 0.0
  %9500 = vmatpush1.msra.mxu0 0.0
  %9501 = vmatprep.subr.mxu0 0.0
  %9502 = vmatpush1.msra.mxu0 0.0
  %9503 = vmatprep.subr.mxu0 0.0
  %9504 = vmatpush1.msra.mxu0 0.0
  %9505 = vmatprep.mubr.f32.mxu0 %v9427
  %9506 = vmatmul.mubr.f32.gmra.mrb[0].mxu0 %v9378
  %v9507 = vpop.f32.mrb[0].mxu0
  %v9508 = vadd.f32 0.0, %v9507
  %v9509 = vpop.f32.mrb[0].mxu0
  %9510 = vmatprep.mubr.f32.mxu0 %v9430
  %9511 = vmatmul.mubr.f32.gmra.mrb[0].mxu0 %v9384
  %v9512 = vpop.f32.mrb[0].mxu0
  %v9513 = vadd.f32 0.0, %v9512
  %v9514 = vpop.f32.mrb[0].mxu0
  %9515 = vmatprep.mubr.f32.mxu0 %v9433
  %9516 = vmatmul.mubr.f32.gmra.mrb[0].mxu0 %v9390
  %v9517 = vpop.f32.mrb[0].mxu0
  %v9518 = vadd.f32 0.0, %v9517
  %v9519 = vpop.f32.mrb[0].mxu0
  %9520 = vmatprep.mubr.f32.mxu0 %v9436
  %9521 = vmatmul.mubr.f32.gmra.mrb[0].mxu0 %v9396
  %v9522 = vpop.f32.mrb[0].mxu0
  %v9523 = vadd.f32 0.0, %v9522
  %v9524 = vpop.f32.mrb[0].mxu0
  %9525 = vdwg.mxu0
  %v9526 = vadd.f32 %v9272, %v9508
  %v9527 = vadd.f32 %v9277, %v9513
  %v9528 = vadd.f32 %v9282, %v9518
  %v9529 = vadd.f32 %v9287, %v9523
  %v9530 = vld [vmem:[%s61] sm:$0xff]
  %v9531 = vld [vmem:[%s61 + $0x8] sm:$0xff]
  %v9532 = vld [vmem:[%s61 + $0x10] sm:$0xff]
  %v9533 = vld [vmem:[%s61 + $0x18] sm:$0xf]
  %9535 = vset.pattern.permute.xlu0 0
  %9536 = vperm.xlu0 %9535, %v9530
  %v9537 = vpop.permute.xlu0 %9536
  %9540 = vset.pattern.permute.xlu0 0
  %9541 = vperm.xlu0 %9540, %v9531
  %v9542 = vpop.permute.xlu0 %9541
  %9545 = vset.pattern.permute.xlu0 0
  %9546 = vperm.xlu0 %9545, %v9532
  %v9547 = vpop.permute.xlu0 %9546
  %9550 = vset.pattern.permute.xlu0 0
  %9551 = vperm.xlu0 %9550, %v9533
  %v9552 = vpop.permute.xlu0 %9551
  %v9554 = vadd.f32 %v9526, %v9537
  %v9555 = vadd.f32 %v9527, %v9542
  %v9556 = vadd.f32 %v9528, %v9547
  %v9557 = vadd.f32 %v9529, %v9552
  %9558 = vst [vmem:[%s63] sm:$0xff] %v9554
  %9559 = vst [vmem:[%s63 + $0x8] sm:$0xff] %v9555
  %9560 = vst [vmem:[%s63 + $0x10] sm:$0xff] %v9556
  %9561 = vst [vmem:[%s63 + $0x18] sm:$0xf] %v9557
  // Predicated region
  $region126: #{autoencoder_forward.1} parent=0 // pred_check
    _
  $region127: #{autoencoder_forward.1} parent=0 // pred_check_branch
    %9563 = sbr.rel (0) target = $region129
  $region128: #{autoencoder_forward.1} parent=0 // pred_region
    _
  $region129: #{autoencoder_forward.1} parent=0 // pred_fallthru
    _
  // Predicated region
  $region130: #{autoencoder_forward.1} parent=0 // pred_check
    _
  $region131: #{autoencoder_forward.1} parent=0 // pred_check_branch
    %9565 = sbr.rel (0) target = $region133
  $region132: #{autoencoder_forward.1} parent=0 // pred_region
    _
  $region133: #{autoencoder_forward.1} parent=0 // pred_fallthru
    _

</llo_original>
